<compile_context>
chip_gen: v5e
topology: v5e:2x2
jax: 0.10.0
libtpu: 0.0.40
codegen_flags: <defaults>
</compile_context>

<pallas_src>
import functools

import jax
import jax.numpy as jnp
from jax.experimental import pallas as pl
from jax.experimental.pallas import tpu as pltpu

BN_EPS = 1e-5
MXU_DTYPE = jnp.bfloat16      # set to jnp.float32 for bit-faithful f32 matmuls
NUM_STAGES = 4                # deepest branch (conv2d); shorter branches identity-padded


# ---------------------------------------------------------------------------
# Fused OSBlock kernel: one grid step = one sample, all intermediates in VMEM.
# ---------------------------------------------------------------------------
def _osblock_kernel(x_ref, msk_ref, w1_ref, b1_ref, wpw_ref, wdw_ref, bst_ref,
                    gw1_ref, gb1_ref, gw2_ref, gb2_ref, w3_ref, wd_ref, bo_ref,
                    o_ref, *, H, W, has_downsample):
    HW = H * W
    Cin = x_ref.shape[2]
    C = w1_ref.shape[1]                       # packed channels = 4 * mid = out_channels
    Cout = o_ref.shape[2]

    xf = x_ref[...].reshape(HW, Cin)          # f32 activations, [HW, Cin]
    xb = xf.astype(MXU_DTYPE)                 # one bf16 cast, reused by conv1 + downsample

    # conv1: 1x1 + BN(fold) + ReLU; weight tiled 4x so x1 is born packed/replicated [HW, C]
    h = jnp.dot(xb, w1_ref[...], preferred_element_type=jnp.float32)
    h = jnp.maximum(h + b1_ref[...], 0.0)

    # {0,1} zero-padding border masks; broadcast hoisted once, reused by all 4 stages
    m = msk_ref[...]                                       # [HW, 4]
    m_l = jnp.broadcast_to(m[:, 0:1], (HW, C))             # w > 0
    m_r = jnp.broadcast_to(m[:, 1:2], (HW, C))             # w < W-1
    m_t = jnp.broadcast_to(m[:, 2:3], (HW, C))             # h > 0
    m_b = jnp.broadcast_to(m[:, 3:4], (HW, C))             # h < H-1

    # 4 packed LightConv3x3 stages: block-diag 1x1 -> depthwise 3x3 -> BN bias -> ReLU.
    # Flattened [HW, C] layout: every halo shift is a sublane roll (XLU) + mask (VPU).
    for d in range(NUM_STAGES):                             # static unroll (4 stages)
        y = jnp.dot(h.astype(MXU_DTYPE), wpw_ref[d],
                    preferred_element_type=jnp.float32)     # [HW, C]
        w9 = wdw_ref[d]                                      # [9, C], BN scale folded
        y_l = pltpu.roll(y, 1, axis=0) * m_l                 # y[h, w-1]
        y_r = pltpu.roll(y, HW - 1, axis=0) * m_r            # y[h, w+1]
        t_top = y_l * w9[0] + y * w9[1] + y_r * w9[2]        # taps reading row h-1
        t_mid = y_l * w9[3] + y * w9[4] + y_r * w9[5]
        t_bot = y_l * w9[6] + y * w9[7] + y_r * w9[8]        # taps reading row h+1
        acc = (t_mid
               + pltpu.roll(t_top, W, axis=0) * m_t
               + pltpu.roll(t_bot, HW - W, axis=0) * m_b)
        h = jnp.maximum(acc + bst_ref[d], 0.0)

    # ChannelGate: shared MLP applied block-diagonally to the 4 packed branch groups.
    mean = jnp.mean(h, axis=0, keepdims=True)                # [1, C]
    v = jnp.dot(mean, gw1_ref[...], preferred_element_type=jnp.float32) + gb1_ref[...]
    v = jnp.maximum(v, 0.0)
    z = jnp.dot(v, gw2_ref[...], preferred_element_type=jnp.float32) + gb2_ref[...]
    gated = h * jax.nn.sigmoid(z)                            # exact sigmoid, [HW, C]

    # conv3 on the branch sum (sum folded into the 4x-stacked weight, K = C = 128)
    # + downsample (or exact identity residual) + combined BN bias + ReLU.
    y = jnp.dot(gated.astype(MXU_DTYPE), w3_ref[...], preferred_element_type=jnp.float32)
    if has_downsample:
        y = y + jnp.dot(xb, wd_ref[...], preferred_element_type=jnp.float32)
    else:
        y = y + xf                                           # Cin == Cout
    o_ref[...] = jnp.maximum(y + bo_ref[...], 0.0).reshape(1, HW, Cout)


def _full_spec(a):
    nd = a.ndim
    return pl.BlockSpec(a.shape, lambda n: (0,) * nd)        # weights resident across steps


def osblock_forward(x_nchw, K, *, has_downsample):
    N, Cin, H, W = x_nchw.shape
    HW = H * W
    assert HW % 8 == 0, "H*W must be a multiple of 8 (sublane tiling)"
    C = K['w1p'].shape[1]
    Cout = K['w3s'].shape[1]

    x = jnp.transpose(x_nchw, (0, 2, 3, 1)).reshape(N, HW, Cin)   # NCHW -> [N, HW, Cin]

    # Border masks for the depthwise zero padding, per flattened spatial position:
    # [not-first-col, not-last-col, not-first-row, not-last-row] as {0,1} floats.
    i = jnp.arange(HW)
    col = i % W
    masks = jnp.stack([col != 0, col != W - 1, i >= W, i < HW - W],
                      axis=1).astype(jnp.float32)                 # [HW, 4]

    weights = (masks, K['w1p'], K['b1p'], K['wpw'], K['wdw'], K['bst'],
               K['gw1'], K['gb1'], K['gw2'], K['gb2'], K['w3s'], K['wd'], K['bsum'])

    flops = (2 * N * HW * (Cin * C + NUM_STAGES * C * C + C * Cout
                           + (Cin * Cout if has_downsample else 0))
             + N * HW * NUM_STAGES * C * 34)                      # + depthwise/epilogue VPU
    bytes_accessed = (int(x.size) * 4 + N * HW * Cout * 4
                      + sum(int(v.size) * v.dtype.itemsize for v in weights))

    out = pl.pallas_call(
        functools.partial(_osblock_kernel, H=H, W=W, has_downsample=has_downsample),
        out_shape=jax.ShapeDtypeStruct((N, HW, Cout), jnp.float32),
        grid=(N,),
        in_specs=[pl.BlockSpec((1, HW, Cin), lambda n: (n, 0, 0))]
        + [_full_spec(w) for w in weights],
        out_specs=pl.BlockSpec((1, HW, Cout), lambda n: (n, 0, 0)),
        compiler_params=pltpu.CompilerParams(dimension_semantics=("parallel",)),
        cost_estimate=pl.CostEstimate(flops=int(flops), transcendentals=int(N * C),
                                      bytes_accessed=int(bytes_accessed)),
    )(x, *weights)
    return jnp.transpose(out.reshape(N, H, W, Cout), (0, 3, 1, 2))   # NHWC -> NCHW


# ---------------------------------------------------------------------------
# Parameters (deterministic synthetic init, PyTorch weight layouts)
# ---------------------------------------------------------------------------
def _make_bn(key, c):
    kg, kb, km, kv = jax.random.split(key, 4)
    gamma = 1.0 + 0.1 * jax.random.normal(kg, (c,), jnp.float32)
    beta = 0.1 * jax.random.normal(kb, (c,), jnp.float32)
    mean = 0.1 * jax.random.normal(km, (c,), jnp.float32)
    var = jnp.abs(1.0 + 0.1 * jax.random.normal(kv, (c,), jnp.float32))
    scale = gamma / jnp.sqrt(var + BN_EPS)
    bias = beta - mean * scale
    return scale, bias


def make_params(key, cin, cout):
    mid = cout // 4
    cr = mid // 16                      # ChannelGate reduction=16
    keys = iter(jax.random.split(key, 64))

    def rnd(shape, s=0.2):
        return s * jax.random.normal(next(keys), shape, jnp.float32)

    def light():
        return {'pw': rnd((mid, mid)),             # conv1x1 weight [Cout, Cin]
                'dw': rnd((mid, 3, 3)),            # depthwise weight [C, 3, 3]
                'bn': _make_bn(next(keys), mid)}

    return {
        'conv1_w': rnd((mid, cin)), 'conv1_bn': _make_bn(next(keys), mid),
        '2a': [light()],
        '2b': [light() for _ in range(2)],
        '2c': [light() for _ in range(3)],
        '2d': [light() for _ in range(4)],
        'g_w1': rnd((cr, mid)), 'g_b1': rnd((cr,)),
        'g_w2': rnd((mid, cr)), 'g_b2': rnd((mid,)),
        'conv3_w': rnd((cout, mid)), 'conv3_bn': _make_bn(next(keys), cout),
        'down_w': rnd((cout, cin)), 'down_bn': _make_bn(next(keys), cout),
    }


def _block_diag(blocks):
    r = sum(b.shape[0] for b in blocks)
    c = sum(b.shape[1] for b in blocks)
    out = jnp.zeros((r, c), blocks[0].dtype)
    ro = co = 0
    for b in blocks:
        out = out.at[ro:ro + b.shape[0], co:co + b.shape[1]].set(b)
        ro += b.shape[0]
        co += b.shape[1]
    return out


def prep_params(P, *, has_downsample):
    """Kernel-ready params: BN scales folded into weights, the 4 branches lane-packed
    (block-diag pointwise / concatenated depthwise, identity-padded to 4 stages), gate MLP
    block-diagonalized, conv3 weight 4x-stacked, MXU operands pre-cast to bf16."""
    mid = P['conv1_w'].shape[0]
    s1, b1 = P['conv1_bn']
    s3, b3 = P['conv3_bn']
    sd, bd = P['down_bn']

    w1_eff = P['conv1_w'].T * s1[None, :]                       # [Cin, mid]
    branches = [P['2a'], P['2b'], P['2c'], P['2d']]
    eye = jnp.eye(mid, dtype=jnp.float32)
    id_dw = jnp.zeros((9, mid), jnp.float32).at[4].set(1.0)     # center tap = 1

    wpw, wdw, bst = [], [], []
    for d in range(NUM_STAGES):
        pw_blocks, dw_blocks, b_blocks = [], [], []
        for lps in branches:
            if d < len(lps):
                lp = lps[d]
                s, b = lp['bn']
                pw_blocks.append(lp['pw'].T)                                   # [mid, mid]
                dw_blocks.append(jnp.transpose(lp['dw'], (1, 2, 0)).reshape(9, mid)
                                 * s[None, :])
                b_blocks.append(b)
            else:                                               # identity pass-through stage
                pw_blocks.append(eye)
                dw_blocks.append(id_dw)
                b_blocks.append(jnp.zeros((mid,), jnp.float32))
        wpw.append(_block_diag(pw_blocks))
        wdw.append(jnp.concatenate(dw_blocks, axis=1))
        bst.append(jnp.concatenate(b_blocks, axis=0))

    w3_eff = P['conv3_w'].T * s3[None, :]                       # [mid, Cout]
    if has_downsample:
        wd = (P['down_w'].T * sd[None, :]).astype(MXU_DTYPE)    # [Cin, Cout]
        bsum = b3 + bd
    else:
        cin = P['conv1_w'].shape[1]
        wd = jnp.zeros((cin, w3_eff.shape[1]), MXU_DTYPE)       # placeholder (unused)
        bsum = b3

    return {
        'w1p': jnp.tile(w1_eff, (1, 4)).astype(MXU_DTYPE),      # [Cin, C]
        'b1p': jnp.tile(b1, (4,))[None, :],                     # [1, C]
        'wpw': jnp.stack(wpw, 0).astype(MXU_DTYPE),             # [4, C, C] block-diagonal
        'wdw': jnp.stack(wdw, 0),                               # [4, 9, C]
        'bst': jnp.stack(bst, 0),                               # [4, C]
        'gw1': _block_diag([P['g_w1'].T] * 4),                  # [C, 4*cr]
        'gb1': jnp.tile(P['g_b1'], (4,))[None, :],              # [1, 4*cr]
        'gw2': _block_diag([P['g_w2'].T] * 4),                  # [4*cr, C]
        'gb2': jnp.tile(P['g_b2'], (4,))[None, :],              # [1, C]
        'w3s': jnp.tile(w3_eff, (4, 1)).astype(MXU_DTYPE),      # [C, Cout] (4x vstack)
        'wd': wd,
        'bsum': bsum[None, :],                                  # [1, Cout]
    }


# ---------------------------------------------------------------------------
# Pure-JAX f32 reference (mirrors the PyTorch forward) for validation
# ---------------------------------------------------------------------------
def ref_forward(x_nchw, P, *, has_downsample):
    x = jnp.transpose(x_nchw, (0, 2, 3, 1))
    residual = x

    def c1x1(h, w, scale, bias, relu):
        y = jnp.einsum('nhwc,dc->nhwd', h, w) * scale + bias
        return jnp.maximum(y, 0.0) if relu else y

    def dw(h, wdw, scale, bias):
        N, H, W, C = h.shape
        hp = jnp.pad(h, ((0, 0), (1, 1), (1, 1), (0, 0)))
        acc = jnp.zeros_like(h)
        for ki in range(3):
            for kj in range(3):
                acc = acc + hp[:, ki:ki + H, kj:kj + W, :] * wdw[:, ki, kj]
        return jnp.maximum(acc * scale + bias, 0.0)

    s1, b1 = P['conv1_bn']
    x1 = c1x1(x, P['conv1_w'], s1, b1, True)

    def branch(h, lps):
        for lp in lps:
            h = c1x1(h, lp['pw'], 1.0, 0.0, False)
            s, b = lp['bn']
            h = dw(h, lp['dw'], s, b)
        return h

    x2a = branch(x1, P['2a']); x2b = branch(x1, P['2b'])
    x2c = branch(x1, P['2c']); x2d = branch(x1, P['2d'])

    def gate(h):
        m = jnp.mean(h, axis=(1, 2))
        v = jnp.maximum(m @ P['g_w1'].T + P['g_b1'], 0.0)
        g = jax.nn.sigmoid(v @ P['g_w2'].T + P['g_b2'])
        return h * g[:, None, None, :]

    x2 = gate(x2a) + gate(x2b) + gate(x2c) + gate(x2d)

    s3, b3 = P['conv3_bn']
    x3 = c1x1(x2, P['conv3_w'], s3, b3, False)
    if has_downsample:
        sd, bd = P['down_bn']
        residual = c1x1(residual, P['down_w'], sd, bd, False)
    return jnp.transpose(jnp.maximum(x3 + residual, 0.0), (0, 3, 1, 2))


# ---------------------------------------------------------------------------
# Test harness
# ---------------------------------------------------------------------------
def _check(N, Cin, Cout, H, W, key, has_downsample):
    kx, kp = jax.random.split(key)
    x = jax.random.normal(kx, (N, Cin, H, W), jnp.float32)
    P = make_params(kp, Cin, Cout)
    K = prep_params(P, has_downsample=has_downsample)

    fwd = jax.jit(functools.partial(osblock_forward, has_downsample=has_downsample))
    out = jax.block_until_ready(fwd(x, K))
    ref = jax.block_until_ready(ref_forward(x, P, has_downsample=has_downsample))

    assert out.shape == (N, Cout, H, W)
    err = float(jnp.max(jnp.abs(out - ref)))
    rel = err / max(1.0, float(jnp.max(jnp.abs(ref))))
    # Tolerance accounts for bf16 MXU operands vs a pure-f32 reference.
    tol = 5e-2 if MXU_DTYPE == jnp.bfloat16 else 1e-2
    if not (err == err) or rel > tol:
        raise AssertionError(
            f"Pallas/reference mismatch (downsample={has_downsample}): "
            f"abs={err:.4g} rel={rel:.4g}")


if __name__ == "__main__":
    key = jax.random.PRNGKey(0)
    k1, k2 = jax.random.split(key)
    # in_channels != out_channels: downsample path (mid=32, packed C=128, gate dim 2).
    _check(2, 64, 128, 16, 16, k1, has_downsample=True)
    # in_channels == out_channels: PyTorch skips downsample -> exact identity residual.
    _check(2, 128, 128, 16, 16, k2, has_downsample=False)
    print("KERNEL_OK")
</pallas_src>

<mosaic_0001>
module attributes {stable_mosaic.version = 11 : i64} {
  func.func @_osblock_kernel(%arg0: i32, %arg1: memref<1x256x64xf32, #tpu.memory_space<vmem>>, %arg2: memref<256x4xf32, #tpu.memory_space<vmem>>, %arg3: memref<64x128xbf16, #tpu.memory_space<vmem>>, %arg4: memref<1x128xf32, #tpu.memory_space<vmem>>, %arg5: memref<4x128x128xbf16, #tpu.memory_space<vmem>>, %arg6: memref<4x9x128xf32, #tpu.memory_space<vmem>>, %arg7: memref<4x128xf32, #tpu.memory_space<vmem>>, %arg8: memref<128x8xf32, #tpu.memory_space<vmem>>, %arg9: memref<1x8xf32, #tpu.memory_space<vmem>>, %arg10: memref<8x128xf32, #tpu.memory_space<vmem>>, %arg11: memref<1x128xf32, #tpu.memory_space<vmem>>, %arg12: memref<128x128xbf16, #tpu.memory_space<vmem>>, %arg13: memref<64x128xbf16, #tpu.memory_space<vmem>>, %arg14: memref<1x128xf32, #tpu.memory_space<vmem>>, %arg15: memref<1x256x128xf32, #tpu.memory_space<vmem>>) attributes {dimension_semantics = [#tpu.dimension_semantics<parallel>], iteration_bounds = array<i64: 2>, scalar_prefetch = 0 : i64, scratch_operands = 0 : i64, tpu.core_type = #tpu.core_type<tc>, window_params = [{transform_indices = @transform_0, window_bounds = array<i64: 1, 256, 64>}, {pipeline_mode = #tpu.pipeline_mode<synchronous>, transform_indices = @transform_1, window_bounds = array<i64: 256, 4>}, {pipeline_mode = #tpu.pipeline_mode<synchronous>, transform_indices = @transform_2, window_bounds = array<i64: 64, 128>}, {pipeline_mode = #tpu.pipeline_mode<synchronous>, transform_indices = @transform_3, window_bounds = array<i64: 1, 128>}, {pipeline_mode = #tpu.pipeline_mode<synchronous>, transform_indices = @transform_4, window_bounds = array<i64: 4, 128, 128>}, {pipeline_mode = #tpu.pipeline_mode<synchronous>, transform_indices = @transform_5, window_bounds = array<i64: 4, 9, 128>}, {pipeline_mode = #tpu.pipeline_mode<synchronous>, transform_indices = @transform_6, window_bounds = array<i64: 4, 128>}, {pipeline_mode = #tpu.pipeline_mode<synchronous>, transform_indices = @transform_7, window_bounds = array<i64: 128, 8>}, {pipeline_mode = #tpu.pipeline_mode<synchronous>, transform_indices = @transform_8, window_bounds = array<i64: 1, 8>}, {pipeline_mode = #tpu.pipeline_mode<synchronous>, transform_indices = @transform_9, window_bounds = array<i64: 8, 128>}, {pipeline_mode = #tpu.pipeline_mode<synchronous>, transform_indices = @transform_10, window_bounds = array<i64: 1, 128>}, {pipeline_mode = #tpu.pipeline_mode<synchronous>, transform_indices = @transform_11, window_bounds = array<i64: 128, 128>}, {pipeline_mode = #tpu.pipeline_mode<synchronous>, transform_indices = @transform_12, window_bounds = array<i64: 64, 128>}, {pipeline_mode = #tpu.pipeline_mode<synchronous>, transform_indices = @transform_13, window_bounds = array<i64: 1, 128>}, {transform_indices = @transform_14, window_bounds = array<i64: 1, 256, 128>}]} {
    %c0 = arith.constant 0 : index
    %c0_0 = arith.constant 0 : index
    %c0_1 = arith.constant 0 : index
    %0 = vector.load %arg1[%c0, %c0_0, %c0_1] : memref<1x256x64xf32, #tpu.memory_space<vmem>>, vector<1x256x64xf32>
    %1 = vector.shape_cast %0 : vector<1x256x64xf32> to vector<256x64xf32>
    %2 = arith.truncf %1 : vector<256x64xf32> to vector<256x64xbf16>
    %c0_2 = arith.constant 0 : index
    %c0_3 = arith.constant 0 : index
    %3 = vector.load %arg3[%c0_2, %c0_3] : memref<64x128xbf16, #tpu.memory_space<vmem>>, vector<64x128xbf16>
    %cst = arith.constant dense<0.000000e+00> : vector<256x128xf32>
    %4 = tpu.matmul %2, %3, %cst {dimension_numbers = #tpu.dot_dimension_numbers<[1], [0], [0], [1], [0, 0, 1, 1], [], []>} : vector<256x64xbf16>, vector<64x128xbf16>, vector<256x128xf32> -> vector<256x128xf32>
    %c0_4 = arith.constant 0 : index
    %c0_5 = arith.constant 0 : index
    %5 = vector.load %arg4[%c0_4, %c0_5] : memref<1x128xf32, #tpu.memory_space<vmem>>, vector<1x128xf32>
    %6 = vector.broadcast %5 : vector<1x128xf32> to vector<256x128xf32>
    %7 = arith.addf %4, %6 : vector<256x128xf32>
    %cst_6 = arith.constant 0.000000e+00 : f32
    %8 = vector.broadcast %cst_6 : f32 to vector<256x128xf32>
    %9 = arith.maximumf %7, %8 : vector<256x128xf32>
    %c0_7 = arith.constant 0 : index
    %c0_8 = arith.constant 0 : index
    %10 = vector.load %arg2[%c0_7, %c0_8] : memref<256x4xf32, #tpu.memory_space<vmem>>, vector<256x4xf32>
    %11 = vector.extract_strided_slice %10 {offsets = [0, 0], sizes = [256, 1], strides = [1, 1]} : vector<256x4xf32> to vector<256x1xf32>
    %12 = vector.shape_cast %11 : vector<256x1xf32> to vector<256x1xf32>
    %13 = vector.broadcast %12 : vector<256x1xf32> to vector<256x128xf32>
    %14 = vector.extract_strided_slice %10 {offsets = [0, 1], sizes = [256, 1], strides = [1, 1]} : vector<256x4xf32> to vector<256x1xf32>
    %15 = vector.shape_cast %14 : vector<256x1xf32> to vector<256x1xf32>
    %16 = vector.broadcast %15 : vector<256x1xf32> to vector<256x128xf32>
    %17 = vector.extract_strided_slice %10 {offsets = [0, 2], sizes = [256, 1], strides = [1, 1]} : vector<256x4xf32> to vector<256x1xf32>
    %18 = vector.shape_cast %17 : vector<256x1xf32> to vector<256x1xf32>
    %19 = vector.broadcast %18 : vector<256x1xf32> to vector<256x128xf32>
    %20 = vector.extract_strided_slice %10 {offsets = [0, 3], sizes = [256, 1], strides = [1, 1]} : vector<256x4xf32> to vector<256x1xf32>
    %21 = vector.shape_cast %20 : vector<256x1xf32> to vector<256x1xf32>
    %22 = vector.broadcast %21 : vector<256x1xf32> to vector<256x128xf32>
    %23 = arith.truncf %9 : vector<256x128xf32> to vector<256x128xbf16>
    %c0_9 = arith.constant 0 : index
    %c0_10 = arith.constant 0 : index
    %c0_11 = arith.constant 0 : index
    %24 = vector.load %arg5[%c0_9, %c0_10, %c0_11] : memref<4x128x128xbf16, #tpu.memory_space<vmem>>, vector<1x128x128xbf16>
    %25 = vector.shape_cast %24 : vector<1x128x128xbf16> to vector<128x128xbf16>
    %cst_12 = arith.constant dense<0.000000e+00> : vector<256x128xf32>
    %26 = tpu.matmul %23, %25, %cst_12 {dimension_numbers = #tpu.dot_dimension_numbers<[1], [0], [0], [1], [0, 0, 1, 1], [], []>} : vector<256x128xbf16>, vector<128x128xbf16>, vector<256x128xf32> -> vector<256x128xf32>
    %c0_13 = arith.constant 0 : index
    %c0_14 = arith.constant 0 : index
    %c0_15 = arith.constant 0 : index
    %27 = vector.load %arg6[%c0_13, %c0_14, %c0_15] : memref<4x9x128xf32, #tpu.memory_space<vmem>>, vector<1x9x128xf32>
    %28 = vector.shape_cast %27 : vector<1x9x128xf32> to vector<9x128xf32>
    %c1_i32 = arith.constant 1 : i32
    %29 = tpu.dynamic_rotate %26 by %c1_i32 dim 0 : vector<256x128xf32>, i32 -> vector<256x128xf32>
    %30 = arith.mulf %29, %13 : vector<256x128xf32>
    %c255_i32 = arith.constant 255 : i32
    %31 = tpu.dynamic_rotate %26 by %c255_i32 dim 0 : vector<256x128xf32>, i32 -> vector<256x128xf32>
    %32 = arith.mulf %31, %16 : vector<256x128xf32>
    %33 = vector.extract_strided_slice %28 {offsets = [0, 0], sizes = [1, 128], strides = [1, 1]} : vector<9x128xf32> to vector<1x128xf32>
    %34 = vector.shape_cast %33 : vector<1x128xf32> to vector<128xf32>
    %35 = vector.shape_cast %34 : vector<128xf32> to vector<1x128xf32>
    %36 = vector.broadcast %35 : vector<1x128xf32> to vector<256x128xf32>
    %37 = arith.mulf %30, %36 : vector<256x128xf32>
    %38 = vector.extract_strided_slice %28 {offsets = [1, 0], sizes = [1, 128], strides = [1, 1]} : vector<9x128xf32> to vector<1x128xf32>
    %39 = vector.shape_cast %38 : vector<1x128xf32> to vector<128xf32>
    %40 = vector.shape_cast %39 : vector<128xf32> to vector<1x128xf32>
    %41 = vector.broadcast %40 : vector<1x128xf32> to vector<256x128xf32>
    %42 = arith.mulf %26, %41 : vector<256x128xf32>
    %43 = arith.addf %37, %42 : vector<256x128xf32>
    %44 = vector.extract_strided_slice %28 {offsets = [2, 0], sizes = [1, 128], strides = [1, 1]} : vector<9x128xf32> to vector<1x128xf32>
    %45 = vector.shape_cast %44 : vector<1x128xf32> to vector<128xf32>
    %46 = vector.shape_cast %45 : vector<128xf32> to vector<1x128xf32>
    %47 = vector.broadcast %46 : vector<1x128xf32> to vector<256x128xf32>
    %48 = arith.mulf %32, %47 : vector<256x128xf32>
    %49 = arith.addf %43, %48 : vector<256x128xf32>
    %50 = vector.extract_strided_slice %28 {offsets = [3, 0], sizes = [1, 128], strides = [1, 1]} : vector<9x128xf32> to vector<1x128xf32>
    %51 = vector.shape_cast %50 : vector<1x128xf32> to vector<128xf32>
    %52 = vector.shape_cast %51 : vector<128xf32> to vector<1x128xf32>
    %53 = vector.broadcast %52 : vector<1x128xf32> to vector<256x128xf32>
    %54 = arith.mulf %30, %53 : vector<256x128xf32>
    %55 = vector.extract_strided_slice %28 {offsets = [4, 0], sizes = [1, 128], strides = [1, 1]} : vector<9x128xf32> to vector<1x128xf32>
    %56 = vector.shape_cast %55 : vector<1x128xf32> to vector<128xf32>
    %57 = vector.shape_cast %56 : vector<128xf32> to vector<1x128xf32>
    %58 = vector.broadcast %57 : vector<1x128xf32> to vector<256x128xf32>
    %59 = arith.mulf %26, %58 : vector<256x128xf32>
    %60 = arith.addf %54, %59 : vector<256x128xf32>
    %61 = vector.extract_strided_slice %28 {offsets = [5, 0], sizes = [1, 128], strides = [1, 1]} : vector<9x128xf32> to vector<1x128xf32>
    %62 = vector.shape_cast %61 : vector<1x128xf32> to vector<128xf32>
    %63 = vector.shape_cast %62 : vector<128xf32> to vector<1x128xf32>
    %64 = vector.broadcast %63 : vector<1x128xf32> to vector<256x128xf32>
    %65 = arith.mulf %32, %64 : vector<256x128xf32>
    %66 = arith.addf %60, %65 : vector<256x128xf32>
    %67 = vector.extract_strided_slice %28 {offsets = [6, 0], sizes = [1, 128], strides = [1, 1]} : vector<9x128xf32> to vector<1x128xf32>
    %68 = vector.shape_cast %67 : vector<1x128xf32> to vector<128xf32>
    %69 = vector.shape_cast %68 : vector<128xf32> to vector<1x128xf32>
    %70 = vector.broadcast %69 : vector<1x128xf32> to vector<256x128xf32>
    %71 = arith.mulf %30, %70 : vector<256x128xf32>
    %72 = vector.extract_strided_slice %28 {offsets = [7, 0], sizes = [1, 128], strides = [1, 1]} : vector<9x128xf32> to vector<1x128xf32>
    %73 = vector.shape_cast %72 : vector<1x128xf32> to vector<128xf32>
    %74 = vector.shape_cast %73 : vector<128xf32> to vector<1x128xf32>
    %75 = vector.broadcast %74 : vector<1x128xf32> to vector<256x128xf32>
    %76 = arith.mulf %26, %75 : vector<256x128xf32>
    %77 = arith.addf %71, %76 : vector<256x128xf32>
    %78 = vector.extract_strided_slice %28 {offsets = [8, 0], sizes = [1, 128], strides = [1, 1]} : vector<9x128xf32> to vector<1x128xf32>
    %79 = vector.shape_cast %78 : vector<1x128xf32> to vector<128xf32>
    %80 = vector.shape_cast %79 : vector<128xf32> to vector<1x128xf32>
    %81 = vector.broadcast %80 : vector<1x128xf32> to vector<256x128xf32>
    %82 = arith.mulf %32, %81 : vector<256x128xf32>
    %83 = arith.addf %77, %82 : vector<256x128xf32>
    %c16_i32 = arith.constant 16 : i32
    %84 = tpu.dynamic_rotate %49 by %c16_i32 dim 0 : vector<256x128xf32>, i32 -> vector<256x128xf32>
    %85 = arith.mulf %84, %19 : vector<256x128xf32>
    %86 = arith.addf %66, %85 : vector<256x128xf32>
    %c240_i32 = arith.constant 240 : i32
    %87 = tpu.dynamic_rotate %83 by %c240_i32 dim 0 : vector<256x128xf32>, i32 -> vector<256x128xf32>
    %88 = arith.mulf %87, %22 : vector<256x128xf32>
    %89 = arith.addf %86, %88 : vector<256x128xf32>
    %c0_16 = arith.constant 0 : index
    %c0_17 = arith.constant 0 : index
    %90 = vector.load %arg7[%c0_16, %c0_17] : memref<4x128xf32, #tpu.memory_space<vmem>>, vector<1x128xf32>
    %91 = vector.shape_cast %90 : vector<1x128xf32> to vector<128xf32>
    %92 = vector.shape_cast %91 : vector<128xf32> to vector<1x128xf32>
    %93 = vector.broadcast %92 : vector<1x128xf32> to vector<256x128xf32>
    %94 = arith.addf %89, %93 : vector<256x128xf32>
    %cst_18 = arith.constant 0.000000e+00 : f32
    %95 = vector.broadcast %cst_18 : f32 to vector<256x128xf32>
    %96 = arith.maximumf %94, %95 : vector<256x128xf32>
    %97 = arith.truncf %96 : vector<256x128xf32> to vector<256x128xbf16>
    %c1 = arith.constant 1 : index
    %c0_19 = arith.constant 0 : index
    %c0_20 = arith.constant 0 : index
    %98 = vector.load %arg5[%c1, %c0_19, %c0_20] : memref<4x128x128xbf16, #tpu.memory_space<vmem>>, vector<1x128x128xbf16>
    %99 = vector.shape_cast %98 : vector<1x128x128xbf16> to vector<128x128xbf16>
    %cst_21 = arith.constant dense<0.000000e+00> : vector<256x128xf32>
    %100 = tpu.matmul %97, %99, %cst_21 {dimension_numbers = #tpu.dot_dimension_numbers<[1], [0], [0], [1], [0, 0, 1, 1], [], []>} : vector<256x128xbf16>, vector<128x128xbf16>, vector<256x128xf32> -> vector<256x128xf32>
    %c1_22 = arith.constant 1 : index
    %c0_23 = arith.constant 0 : index
    %c0_24 = arith.constant 0 : index
    %101 = vector.load %arg6[%c1_22, %c0_23, %c0_24] : memref<4x9x128xf32, #tpu.memory_space<vmem>>, vector<1x9x128xf32>
    %102 = vector.shape_cast %101 : vector<1x9x128xf32> to vector<9x128xf32>
    %c1_i32_25 = arith.constant 1 : i32
    %103 = tpu.dynamic_rotate %100 by %c1_i32_25 dim 0 : vector<256x128xf32>, i32 -> vector<256x128xf32>
    %104 = arith.mulf %103, %13 : vector<256x128xf32>
    %c255_i32_26 = arith.constant 255 : i32
    %105 = tpu.dynamic_rotate %100 by %c255_i32_26 dim 0 : vector<256x128xf32>, i32 -> vector<256x128xf32>
    %106 = arith.mulf %105, %16 : vector<256x128xf32>
    %107 = vector.extract_strided_slice %102 {offsets = [0, 0], sizes = [1, 128], strides = [1, 1]} : vector<9x128xf32> to vector<1x128xf32>
    %108 = vector.shape_cast %107 : vector<1x128xf32> to vector<128xf32>
    %109 = vector.shape_cast %108 : vector<128xf32> to vector<1x128xf32>
    %110 = vector.broadcast %109 : vector<1x128xf32> to vector<256x128xf32>
    %111 = arith.mulf %104, %110 : vector<256x128xf32>
    %112 = vector.extract_strided_slice %102 {offsets = [1, 0], sizes = [1, 128], strides = [1, 1]} : vector<9x128xf32> to vector<1x128xf32>
    %113 = vector.shape_cast %112 : vector<1x128xf32> to vector<128xf32>
    %114 = vector.shape_cast %113 : vector<128xf32> to vector<1x128xf32>
    %115 = vector.broadcast %114 : vector<1x128xf32> to vector<256x128xf32>
    %116 = arith.mulf %100, %115 : vector<256x128xf32>
    %117 = arith.addf %111, %116 : vector<256x128xf32>
    %118 = vector.extract_strided_slice %102 {offsets = [2, 0], sizes = [1, 128], strides = [1, 1]} : vector<9x128xf32> to vector<1x128xf32>
    %119 = vector.shape_cast %118 : vector<1x128xf32> to vector<128xf32>
    %120 = vector.shape_cast %119 : vector<128xf32> to vector<1x128xf32>
    %121 = vector.broadcast %120 : vector<1x128xf32> to vector<256x128xf32>
    %122 = arith.mulf %106, %121 : vector<256x128xf32>
    %123 = arith.addf %117, %122 : vector<256x128xf32>
    %124 = vector.extract_strided_slice %102 {offsets = [3, 0], sizes = [1, 128], strides = [1, 1]} : vector<9x128xf32> to vector<1x128xf32>
    %125 = vector.shape_cast %124 : vector<1x128xf32> to vector<128xf32>
    %126 = vector.shape_cast %125 : vector<128xf32> to vector<1x128xf32>
    %127 = vector.broadcast %126 : vector<1x128xf32> to vector<256x128xf32>
    %128 = arith.mulf %104, %127 : vector<256x128xf32>
    %129 = vector.extract_strided_slice %102 {offsets = [4, 0], sizes = [1, 128], strides = [1, 1]} : vector<9x128xf32> to vector<1x128xf32>
    %130 = vector.shape_cast %129 : vector<1x128xf32> to vector<128xf32>
    %131 = vector.shape_cast %130 : vector<128xf32> to vector<1x128xf32>
    %132 = vector.broadcast %131 : vector<1x128xf32> to vector<256x128xf32>
    %133 = arith.mulf %100, %132 : vector<256x128xf32>
    %134 = arith.addf %128, %133 : vector<256x128xf32>
    %135 = vector.extract_strided_slice %102 {offsets = [5, 0], sizes = [1, 128], strides = [1, 1]} : vector<9x128xf32> to vector<1x128xf32>
    %136 = vector.shape_cast %135 : vector<1x128xf32> to vector<128xf32>
    %137 = vector.shape_cast %136 : vector<128xf32> to vector<1x128xf32>
    %138 = vector.broadcast %137 : vector<1x128xf32> to vector<256x128xf32>
    %139 = arith.mulf %106, %138 : vector<256x128xf32>
    %140 = arith.addf %134, %139 : vector<256x128xf32>
    %141 = vector.extract_strided_slice %102 {offsets = [6, 0], sizes = [1, 128], strides = [1, 1]} : vector<9x128xf32> to vector<1x128xf32>
    %142 = vector.shape_cast %141 : vector<1x128xf32> to vector<128xf32>
    %143 = vector.shape_cast %142 : vector<128xf32> to vector<1x128xf32>
    %144 = vector.broadcast %143 : vector<1x128xf32> to vector<256x128xf32>
    %145 = arith.mulf %104, %144 : vector<256x128xf32>
    %146 = vector.extract_strided_slice %102 {offsets = [7, 0], sizes = [1, 128], strides = [1, 1]} : vector<9x128xf32> to vector<1x128xf32>
    %147 = vector.shape_cast %146 : vector<1x128xf32> to vector<128xf32>
    %148 = vector.shape_cast %147 : vector<128xf32> to vector<1x128xf32>
    %149 = vector.broadcast %148 : vector<1x128xf32> to vector<256x128xf32>
    %150 = arith.mulf %100, %149 : vector<256x128xf32>
    %151 = arith.addf %145, %150 : vector<256x128xf32>
    %152 = vector.extract_strided_slice %102 {offsets = [8, 0], sizes = [1, 128], strides = [1, 1]} : vector<9x128xf32> to vector<1x128xf32>
    %153 = vector.shape_cast %152 : vector<1x128xf32> to vector<128xf32>
    %154 = vector.shape_cast %153 : vector<128xf32> to vector<1x128xf32>
    %155 = vector.broadcast %154 : vector<1x128xf32> to vector<256x128xf32>
    %156 = arith.mulf %106, %155 : vector<256x128xf32>
    %157 = arith.addf %151, %156 : vector<256x128xf32>
    %c16_i32_27 = arith.constant 16 : i32
    %158 = tpu.dynamic_rotate %123 by %c16_i32_27 dim 0 : vector<256x128xf32>, i32 -> vector<256x128xf32>
    %159 = arith.mulf %158, %19 : vector<256x128xf32>
    %160 = arith.addf %140, %159 : vector<256x128xf32>
    %c240_i32_28 = arith.constant 240 : i32
    %161 = tpu.dynamic_rotate %157 by %c240_i32_28 dim 0 : vector<256x128xf32>, i32 -> vector<256x128xf32>
    %162 = arith.mulf %161, %22 : vector<256x128xf32>
    %163 = arith.addf %160, %162 : vector<256x128xf32>
    %c1_29 = arith.constant 1 : index
    %c0_30 = arith.constant 0 : index
    %164 = vector.load %arg7[%c1_29, %c0_30] : memref<4x128xf32, #tpu.memory_space<vmem>>, vector<1x128xf32>
    %165 = vector.shape_cast %164 : vector<1x128xf32> to vector<128xf32>
    %166 = vector.shape_cast %165 : vector<128xf32> to vector<1x128xf32>
    %167 = vector.broadcast %166 : vector<1x128xf32> to vector<256x128xf32>
    %168 = arith.addf %163, %167 : vector<256x128xf32>
    %cst_31 = arith.constant 0.000000e+00 : f32
    %169 = vector.broadcast %cst_31 : f32 to vector<256x128xf32>
    %170 = arith.maximumf %168, %169 : vector<256x128xf32>
    %171 = arith.truncf %170 : vector<256x128xf32> to vector<256x128xbf16>
    %c2 = arith.constant 2 : index
    %c0_32 = arith.constant 0 : index
    %c0_33 = arith.constant 0 : index
    %172 = vector.load %arg5[%c2, %c0_32, %c0_33] : memref<4x128x128xbf16, #tpu.memory_space<vmem>>, vector<1x128x128xbf16>
    %173 = vector.shape_cast %172 : vector<1x128x128xbf16> to vector<128x128xbf16>
    %cst_34 = arith.constant dense<0.000000e+00> : vector<256x128xf32>
    %174 = tpu.matmul %171, %173, %cst_34 {dimension_numbers = #tpu.dot_dimension_numbers<[1], [0], [0], [1], [0, 0, 1, 1], [], []>} : vector<256x128xbf16>, vector<128x128xbf16>, vector<256x128xf32> -> vector<256x128xf32>
    %c2_35 = arith.constant 2 : index
    %c0_36 = arith.constant 0 : index
    %c0_37 = arith.constant 0 : index
    %175 = vector.load %arg6[%c2_35, %c0_36, %c0_37] : memref<4x9x128xf32, #tpu.memory_space<vmem>>, vector<1x9x128xf32>
    %176 = vector.shape_cast %175 : vector<1x9x128xf32> to vector<9x128xf32>
    %c1_i32_38 = arith.constant 1 : i32
    %177 = tpu.dynamic_rotate %174 by %c1_i32_38 dim 0 : vector<256x128xf32>, i32 -> vector<256x128xf32>
    %178 = arith.mulf %177, %13 : vector<256x128xf32>
    %c255_i32_39 = arith.constant 255 : i32
    %179 = tpu.dynamic_rotate %174 by %c255_i32_39 dim 0 : vector<256x128xf32>, i32 -> vector<256x128xf32>
    %180 = arith.mulf %179, %16 : vector<256x128xf32>
    %181 = vector.extract_strided_slice %176 {offsets = [0, 0], sizes = [1, 128], strides = [1, 1]} : vector<9x128xf32> to vector<1x128xf32>
    %182 = vector.shape_cast %181 : vector<1x128xf32> to vector<128xf32>
    %183 = vector.shape_cast %182 : vector<128xf32> to vector<1x128xf32>
    %184 = vector.broadcast %183 : vector<1x128xf32> to vector<256x128xf32>
    %185 = arith.mulf %178, %184 : vector<256x128xf32>
    %186 = vector.extract_strided_slice %176 {offsets = [1, 0], sizes = [1, 128], strides = [1, 1]} : vector<9x128xf32> to vector<1x128xf32>
    %187 = vector.shape_cast %186 : vector<1x128xf32> to vector<128xf32>
    %188 = vector.shape_cast %187 : vector<128xf32> to vector<1x128xf32>
    %189 = vector.broadcast %188 : vector<1x128xf32> to vector<256x128xf32>
    %190 = arith.mulf %174, %189 : vector<256x128xf32>
    %191 = arith.addf %185, %190 : vector<256x128xf32>
    %192 = vector.extract_strided_slice %176 {offsets = [2, 0], sizes = [1, 128], strides = [1, 1]} : vector<9x128xf32> to vector<1x128xf32>
    %193 = vector.shape_cast %192 : vector<1x128xf32> to vector<128xf32>
    %194 = vector.shape_cast %193 : vector<128xf32> to vector<1x128xf32>
    %195 = vector.broadcast %194 : vector<1x128xf32> to vector<256x128xf32>
    %196 = arith.mulf %180, %195 : vector<256x128xf32>
    %197 = arith.addf %191, %196 : vector<256x128xf32>
    %198 = vector.extract_strided_slice %176 {offsets = [3, 0], sizes = [1, 128], strides = [1, 1]} : vector<9x128xf32> to vector<1x128xf32>
    %199 = vector.shape_cast %198 : vector<1x128xf32> to vector<128xf32>
    %200 = vector.shape_cast %199 : vector<128xf32> to vector<1x128xf32>
    %201 = vector.broadcast %200 : vector<1x128xf32> to vector<256x128xf32>
    %202 = arith.mulf %178, %201 : vector<256x128xf32>
    %203 = vector.extract_strided_slice %176 {offsets = [4, 0], sizes = [1, 128], strides = [1, 1]} : vector<9x128xf32> to vector<1x128xf32>
    %204 = vector.shape_cast %203 : vector<1x128xf32> to vector<128xf32>
    %205 = vector.shape_cast %204 : vector<128xf32> to vector<1x128xf32>
    %206 = vector.broadcast %205 : vector<1x128xf32> to vector<256x128xf32>
    %207 = arith.mulf %174, %206 : vector<256x128xf32>
    %208 = arith.addf %202, %207 : vector<256x128xf32>
    %209 = vector.extract_strided_slice %176 {offsets = [5, 0], sizes = [1, 128], strides = [1, 1]} : vector<9x128xf32> to vector<1x128xf32>
    %210 = vector.shape_cast %209 : vector<1x128xf32> to vector<128xf32>
    %211 = vector.shape_cast %210 : vector<128xf32> to vector<1x128xf32>
    %212 = vector.broadcast %211 : vector<1x128xf32> to vector<256x128xf32>
    %213 = arith.mulf %180, %212 : vector<256x128xf32>
    %214 = arith.addf %208, %213 : vector<256x128xf32>
    %215 = vector.extract_strided_slice %176 {offsets = [6, 0], sizes = [1, 128], strides = [1, 1]} : vector<9x128xf32> to vector<1x128xf32>
    %216 = vector.shape_cast %215 : vector<1x128xf32> to vector<128xf32>
    %217 = vector.shape_cast %216 : vector<128xf32> to vector<1x128xf32>
    %218 = vector.broadcast %217 : vector<1x128xf32> to vector<256x128xf32>
    %219 = arith.mulf %178, %218 : vector<256x128xf32>
    %220 = vector.extract_strided_slice %176 {offsets = [7, 0], sizes = [1, 128], strides = [1, 1]} : vector<9x128xf32> to vector<1x128xf32>
    %221 = vector.shape_cast %220 : vector<1x128xf32> to vector<128xf32>
    %222 = vector.shape_cast %221 : vector<128xf32> to vector<1x128xf32>
    %223 = vector.broadcast %222 : vector<1x128xf32> to vector<256x128xf32>
    %224 = arith.mulf %174, %223 : vector<256x128xf32>
    %225 = arith.addf %219, %224 : vector<256x128xf32>
    %226 = vector.extract_strided_slice %176 {offsets = [8, 0], sizes = [1, 128], strides = [1, 1]} : vector<9x128xf32> to vector<1x128xf32>
    %227 = vector.shape_cast %226 : vector<1x128xf32> to vector<128xf32>
    %228 = vector.shape_cast %227 : vector<128xf32> to vector<1x128xf32>
    %229 = vector.broadcast %228 : vector<1x128xf32> to vector<256x128xf32>
    %230 = arith.mulf %180, %229 : vector<256x128xf32>
    %231 = arith.addf %225, %230 : vector<256x128xf32>
    %c16_i32_40 = arith.constant 16 : i32
    %232 = tpu.dynamic_rotate %197 by %c16_i32_40 dim 0 : vector<256x128xf32>, i32 -> vector<256x128xf32>
    %233 = arith.mulf %232, %19 : vector<256x128xf32>
    %234 = arith.addf %214, %233 : vector<256x128xf32>
    %c240_i32_41 = arith.constant 240 : i32
    %235 = tpu.dynamic_rotate %231 by %c240_i32_41 dim 0 : vector<256x128xf32>, i32 -> vector<256x128xf32>
    %236 = arith.mulf %235, %22 : vector<256x128xf32>
    %237 = arith.addf %234, %236 : vector<256x128xf32>
    %c2_42 = arith.constant 2 : index
    %c0_43 = arith.constant 0 : index
    %238 = vector.load %arg7[%c2_42, %c0_43] : memref<4x128xf32, #tpu.memory_space<vmem>>, vector<1x128xf32>
    %239 = vector.shape_cast %238 : vector<1x128xf32> to vector<128xf32>
    %240 = vector.shape_cast %239 : vector<128xf32> to vector<1x128xf32>
    %241 = vector.broadcast %240 : vector<1x128xf32> to vector<256x128xf32>
    %242 = arith.addf %237, %241 : vector<256x128xf32>
    %cst_44 = arith.constant 0.000000e+00 : f32
    %243 = vector.broadcast %cst_44 : f32 to vector<256x128xf32>
    %244 = arith.maximumf %242, %243 : vector<256x128xf32>
    %245 = arith.truncf %244 : vector<256x128xf32> to vector<256x128xbf16>
    %c3 = arith.constant 3 : index
    %c0_45 = arith.constant 0 : index
    %c0_46 = arith.constant 0 : index
    %246 = vector.load %arg5[%c3, %c0_45, %c0_46] : memref<4x128x128xbf16, #tpu.memory_space<vmem>>, vector<1x128x128xbf16>
    %247 = vector.shape_cast %246 : vector<1x128x128xbf16> to vector<128x128xbf16>
    %cst_47 = arith.constant dense<0.000000e+00> : vector<256x128xf32>
    %248 = tpu.matmul %245, %247, %cst_47 {dimension_numbers = #tpu.dot_dimension_numbers<[1], [0], [0], [1], [0, 0, 1, 1], [], []>} : vector<256x128xbf16>, vector<128x128xbf16>, vector<256x128xf32> -> vector<256x128xf32>
    %c3_48 = arith.constant 3 : index
    %c0_49 = arith.constant 0 : index
    %c0_50 = arith.constant 0 : index
    %249 = vector.load %arg6[%c3_48, %c0_49, %c0_50] : memref<4x9x128xf32, #tpu.memory_space<vmem>>, vector<1x9x128xf32>
    %250 = vector.shape_cast %249 : vector<1x9x128xf32> to vector<9x128xf32>
    %c1_i32_51 = arith.constant 1 : i32
    %251 = tpu.dynamic_rotate %248 by %c1_i32_51 dim 0 : vector<256x128xf32>, i32 -> vector<256x128xf32>
    %252 = arith.mulf %251, %13 : vector<256x128xf32>
    %c255_i32_52 = arith.constant 255 : i32
    %253 = tpu.dynamic_rotate %248 by %c255_i32_52 dim 0 : vector<256x128xf32>, i32 -> vector<256x128xf32>
    %254 = arith.mulf %253, %16 : vector<256x128xf32>
    %255 = vector.extract_strided_slice %250 {offsets = [0, 0], sizes = [1, 128], strides = [1, 1]} : vector<9x128xf32> to vector<1x128xf32>
    %256 = vector.shape_cast %255 : vector<1x128xf32> to vector<128xf32>
    %257 = vector.shape_cast %256 : vector<128xf32> to vector<1x128xf32>
    %258 = vector.broadcast %257 : vector<1x128xf32> to vector<256x128xf32>
    %259 = arith.mulf %252, %258 : vector<256x128xf32>
    %260 = vector.extract_strided_slice %250 {offsets = [1, 0], sizes = [1, 128], strides = [1, 1]} : vector<9x128xf32> to vector<1x128xf32>
    %261 = vector.shape_cast %260 : vector<1x128xf32> to vector<128xf32>
    %262 = vector.shape_cast %261 : vector<128xf32> to vector<1x128xf32>
    %263 = vector.broadcast %262 : vector<1x128xf32> to vector<256x128xf32>
    %264 = arith.mulf %248, %263 : vector<256x128xf32>
    %265 = arith.addf %259, %264 : vector<256x128xf32>
    %266 = vector.extract_strided_slice %250 {offsets = [2, 0], sizes = [1, 128], strides = [1, 1]} : vector<9x128xf32> to vector<1x128xf32>
    %267 = vector.shape_cast %266 : vector<1x128xf32> to vector<128xf32>
    %268 = vector.shape_cast %267 : vector<128xf32> to vector<1x128xf32>
    %269 = vector.broadcast %268 : vector<1x128xf32> to vector<256x128xf32>
    %270 = arith.mulf %254, %269 : vector<256x128xf32>
    %271 = arith.addf %265, %270 : vector<256x128xf32>
    %272 = vector.extract_strided_slice %250 {offsets = [3, 0], sizes = [1, 128], strides = [1, 1]} : vector<9x128xf32> to vector<1x128xf32>
    %273 = vector.shape_cast %272 : vector<1x128xf32> to vector<128xf32>
    %274 = vector.shape_cast %273 : vector<128xf32> to vector<1x128xf32>
    %275 = vector.broadcast %274 : vector<1x128xf32> to vector<256x128xf32>
    %276 = arith.mulf %252, %275 : vector<256x128xf32>
    %277 = vector.extract_strided_slice %250 {offsets = [4, 0], sizes = [1, 128], strides = [1, 1]} : vector<9x128xf32> to vector<1x128xf32>
    %278 = vector.shape_cast %277 : vector<1x128xf32> to vector<128xf32>
    %279 = vector.shape_cast %278 : vector<128xf32> to vector<1x128xf32>
    %280 = vector.broadcast %279 : vector<1x128xf32> to vector<256x128xf32>
    %281 = arith.mulf %248, %280 : vector<256x128xf32>
    %282 = arith.addf %276, %281 : vector<256x128xf32>
    %283 = vector.extract_strided_slice %250 {offsets = [5, 0], sizes = [1, 128], strides = [1, 1]} : vector<9x128xf32> to vector<1x128xf32>
    %284 = vector.shape_cast %283 : vector<1x128xf32> to vector<128xf32>
    %285 = vector.shape_cast %284 : vector<128xf32> to vector<1x128xf32>
    %286 = vector.broadcast %285 : vector<1x128xf32> to vector<256x128xf32>
    %287 = arith.mulf %254, %286 : vector<256x128xf32>
    %288 = arith.addf %282, %287 : vector<256x128xf32>
    %289 = vector.extract_strided_slice %250 {offsets = [6, 0], sizes = [1, 128], strides = [1, 1]} : vector<9x128xf32> to vector<1x128xf32>
    %290 = vector.shape_cast %289 : vector<1x128xf32> to vector<128xf32>
    %291 = vector.shape_cast %290 : vector<128xf32> to vector<1x128xf32>
    %292 = vector.broadcast %291 : vector<1x128xf32> to vector<256x128xf32>
    %293 = arith.mulf %252, %292 : vector<256x128xf32>
    %294 = vector.extract_strided_slice %250 {offsets = [7, 0], sizes = [1, 128], strides = [1, 1]} : vector<9x128xf32> to vector<1x128xf32>
    %295 = vector.shape_cast %294 : vector<1x128xf32> to vector<128xf32>
    %296 = vector.shape_cast %295 : vector<128xf32> to vector<1x128xf32>
    %297 = vector.broadcast %296 : vector<1x128xf32> to vector<256x128xf32>
    %298 = arith.mulf %248, %297 : vector<256x128xf32>
    %299 = arith.addf %293, %298 : vector<256x128xf32>
    %300 = vector.extract_strided_slice %250 {offsets = [8, 0], sizes = [1, 128], strides = [1, 1]} : vector<9x128xf32> to vector<1x128xf32>
    %301 = vector.shape_cast %300 : vector<1x128xf32> to vector<128xf32>
    %302 = vector.shape_cast %301 : vector<128xf32> to vector<1x128xf32>
    %303 = vector.broadcast %302 : vector<1x128xf32> to vector<256x128xf32>
    %304 = arith.mulf %254, %303 : vector<256x128xf32>
    %305 = arith.addf %299, %304 : vector<256x128xf32>
    %c16_i32_53 = arith.constant 16 : i32
    %306 = tpu.dynamic_rotate %271 by %c16_i32_53 dim 0 : vector<256x128xf32>, i32 -> vector<256x128xf32>
    %307 = arith.mulf %306, %19 : vector<256x128xf32>
    %308 = arith.addf %288, %307 : vector<256x128xf32>
    %c240_i32_54 = arith.constant 240 : i32
    %309 = tpu.dynamic_rotate %305 by %c240_i32_54 dim 0 : vector<256x128xf32>, i32 -> vector<256x128xf32>
    %310 = arith.mulf %309, %22 : vector<256x128xf32>
    %311 = arith.addf %308, %310 : vector<256x128xf32>
    %c3_55 = arith.constant 3 : index
    %c0_56 = arith.constant 0 : index
    %312 = vector.load %arg7[%c3_55, %c0_56] : memref<4x128xf32, #tpu.memory_space<vmem>>, vector<1x128xf32>
    %313 = vector.shape_cast %312 : vector<1x128xf32> to vector<128xf32>
    %314 = vector.shape_cast %313 : vector<128xf32> to vector<1x128xf32>
    %315 = vector.broadcast %314 : vector<1x128xf32> to vector<256x128xf32>
    %316 = arith.addf %311, %315 : vector<256x128xf32>
    %cst_57 = arith.constant 0.000000e+00 : f32
    %317 = vector.broadcast %cst_57 : f32 to vector<256x128xf32>
    %318 = arith.maximumf %316, %317 : vector<256x128xf32>
    %cst_58 = arith.constant dense<0.000000e+00> : vector<128xf32>
    %319 = vector.multi_reduction <add>, %318, %cst_58 [0] : vector<256x128xf32> to vector<128xf32>
    %320 = vector.shape_cast %319 : vector<128xf32> to vector<1x128xf32>
    %cst_59 = arith.constant 2.560000e+02 : f32
    %321 = vector.broadcast %cst_59 : f32 to vector<1x128xf32>
    %322 = arith.divf %320, %321 : vector<1x128xf32>
    %c0_60 = arith.constant 0 : index
    %c0_61 = arith.constant 0 : index
    %323 = vector.load %arg8[%c0_60, %c0_61] : memref<128x8xf32, #tpu.memory_space<vmem>>, vector<128x8xf32>
    %cst_62 = arith.constant dense<0.000000e+00> : vector<1x8xf32>
    %324 = tpu.matmul %322, %323, %cst_62 {dimension_numbers = #tpu.dot_dimension_numbers<[1], [0], [0], [1], [0, 0, 1, 1], [], []>} : vector<1x128xf32>, vector<128x8xf32>, vector<1x8xf32> -> vector<1x8xf32>
    %c0_63 = arith.constant 0 : index
    %c0_64 = arith.constant 0 : index
    %325 = vector.load %arg9[%c0_63, %c0_64] : memref<1x8xf32, #tpu.memory_space<vmem>>, vector<1x8xf32>
    %326 = arith.addf %324, %325 : vector<1x8xf32>
    %cst_65 = arith.constant 0.000000e+00 : f32
    %327 = vector.broadcast %cst_65 : f32 to vector<1x8xf32>
    %328 = arith.maximumf %326, %327 : vector<1x8xf32>
    %c0_66 = arith.constant 0 : index
    %c0_67 = arith.constant 0 : index
    %329 = vector.load %arg10[%c0_66, %c0_67] : memref<8x128xf32, #tpu.memory_space<vmem>>, vector<8x128xf32>
    %cst_68 = arith.constant dense<0.000000e+00> : vector<1x128xf32>
    %330 = tpu.matmul %328, %329, %cst_68 {dimension_numbers = #tpu.dot_dimension_numbers<[1], [0], [0], [1], [0, 0, 1, 1], [], []>} : vector<1x8xf32>, vector<8x128xf32>, vector<1x128xf32> -> vector<1x128xf32>
    %c0_69 = arith.constant 0 : index
    %c0_70 = arith.constant 0 : index
    %331 = vector.load %arg11[%c0_69, %c0_70] : memref<1x128xf32, #tpu.memory_space<vmem>>, vector<1x128xf32>
    %332 = arith.addf %330, %331 : vector<1x128xf32>
    %333 = arith.negf %332 : vector<1x128xf32>
    %334 = math.exp %333 : vector<1x128xf32>
    %cst_71 = arith.constant 1.000000e+00 : f32
    %335 = vector.broadcast %cst_71 : f32 to vector<1x128xf32>
    %336 = arith.addf %335, %334 : vector<1x128xf32>
    %337 = arith.divf %335, %336 : vector<1x128xf32>
    %338 = vector.broadcast %337 : vector<1x128xf32> to vector<256x128xf32>
    %339 = arith.mulf %318, %338 : vector<256x128xf32>
    %340 = arith.truncf %339 : vector<256x128xf32> to vector<256x128xbf16>
    %c0_72 = arith.constant 0 : index
    %c0_73 = arith.constant 0 : index
    %341 = vector.load %arg12[%c0_72, %c0_73] : memref<128x128xbf16, #tpu.memory_space<vmem>>, vector<128x128xbf16>
    %cst_74 = arith.constant dense<0.000000e+00> : vector<256x128xf32>
    %342 = tpu.matmul %340, %341, %cst_74 {dimension_numbers = #tpu.dot_dimension_numbers<[1], [0], [0], [1], [0, 0, 1, 1], [], []>} : vector<256x128xbf16>, vector<128x128xbf16>, vector<256x128xf32> -> vector<256x128xf32>
    %c0_75 = arith.constant 0 : index
    %c0_76 = arith.constant 0 : index
    %343 = vector.load %arg13[%c0_75, %c0_76] : memref<64x128xbf16, #tpu.memory_space<vmem>>, vector<64x128xbf16>
    %cst_77 = arith.constant dense<0.000000e+00> : vector<256x128xf32>
    %344 = tpu.matmul %2, %343, %cst_77 {dimension_numbers = #tpu.dot_dimension_numbers<[1], [0], [0], [1], [0, 0, 1, 1], [], []>} : vector<256x64xbf16>, vector<64x128xbf16>, vector<256x128xf32> -> vector<256x128xf32>
    %345 = arith.addf %342, %344 : vector<256x128xf32>
    %c0_78 = arith.constant 0 : index
    %c0_79 = arith.constant 0 : index
    %346 = vector.load %arg14[%c0_78, %c0_79] : memref<1x128xf32, #tpu.memory_space<vmem>>, vector<1x128xf32>
    %347 = vector.broadcast %346 : vector<1x128xf32> to vector<256x128xf32>
    %348 = arith.addf %345, %347 : vector<256x128xf32>
    %cst_80 = arith.constant 0.000000e+00 : f32
    %349 = vector.broadcast %cst_80 : f32 to vector<256x128xf32>
    %350 = arith.maximumf %348, %349 : vector<256x128xf32>
    %351 = vector.shape_cast %350 : vector<256x128xf32> to vector<1x256x128xf32>
    %c0_81 = arith.constant 0 : index
    %c0_82 = arith.constant 0 : index
    %c0_83 = arith.constant 0 : index
    %352 = vector.load %arg15[%c0_81, %c0_82, %c0_83] : memref<1x256x128xf32, #tpu.memory_space<vmem>>, vector<1x256x128xf32>
    tpu.vector_store %arg15[%c0_81, %c0_82, %c0_83], %351 {strides = array<i32>} : memref<1x256x128xf32, #tpu.memory_space<vmem>>, vector<1x256x128xf32>,
    return
  }
  func.func @transform_0(%arg0: i32) -> (i32, i32, i32) {
    %c0_i32 = arith.constant 0 : i32
    %c0_i32_0 = arith.constant 0 : i32
    %c0_i32_1 = arith.constant 0 : i32
    return %arg0, %c0_i32, %c0_i32_0 : i32, i32, i32
  }
  func.func @transform_1(%arg0: i32) -> (i32, i32) {
    %c0_i32 = arith.constant 0 : i32
    %c0_i32_0 = arith.constant 0 : i32
    %c0_i32_1 = arith.constant 0 : i32
    return %c0_i32, %c0_i32_0 : i32, i32
  }
  func.func @transform_2(%arg0: i32) -> (i32, i32) {
    %c0_i32 = arith.constant 0 : i32
    %c0_i32_0 = arith.constant 0 : i32
    %c0_i32_1 = arith.constant 0 : i32
    return %c0_i32, %c0_i32_0 : i32, i32
  }
  func.func @transform_3(%arg0: i32) -> (i32, i32) {
    %c0_i32 = arith.constant 0 : i32
    %c0_i32_0 = arith.constant 0 : i32
    %c0_i32_1 = arith.constant 0 : i32
    return %c0_i32, %c0_i32_0 : i32, i32
  }
  func.func @transform_4(%arg0: i32) -> (i32, i32, i32) {
    %c0_i32 = arith.constant 0 : i32
    %c0_i32_0 = arith.constant 0 : i32
    %c0_i32_1 = arith.constant 0 : i32
    %c0_i32_2 = arith.constant 0 : i32
    return %c0_i32, %c0_i32_0, %c0_i32_1 : i32, i32, i32
  }
  func.func @transform_5(%arg0: i32) -> (i32, i32, i32) {
    %c0_i32 = arith.constant 0 : i32
    %c0_i32_0 = arith.constant 0 : i32
    %c0_i32_1 = arith.constant 0 : i32
    %c0_i32_2 = arith.constant 0 : i32
    return %c0_i32, %c0_i32_0, %c0_i32_1 : i32, i32, i32
  }
  func.func @transform_6(%arg0: i32) -> (i32, i32) {
    %c0_i32 = arith.constant 0 : i32
    %c0_i32_0 = arith.constant 0 : i32
    %c0_i32_1 = arith.constant 0 : i32
    return %c0_i32, %c0_i32_0 : i32, i32
  }
  func.func @transform_7(%arg0: i32) -> (i32, i32) {
    %c0_i32 = arith.constant 0 : i32
    %c0_i32_0 = arith.constant 0 : i32
    %c0_i32_1 = arith.constant 0 : i32
    return %c0_i32, %c0_i32_0 : i32, i32
  }
  func.func @transform_8(%arg0: i32) -> (i32, i32) {
    %c0_i32 = arith.constant 0 : i32
    %c0_i32_0 = arith.constant 0 : i32
    %c0_i32_1 = arith.constant 0 : i32
    return %c0_i32, %c0_i32_0 : i32, i32
  }
  func.func @transform_9(%arg0: i32) -> (i32, i32) {
    %c0_i32 = arith.constant 0 : i32
    %c0_i32_0 = arith.constant 0 : i32
    %c0_i32_1 = arith.constant 0 : i32
    return %c0_i32, %c0_i32_0 : i32, i32
  }
  func.func @transform_10(%arg0: i32) -> (i32, i32) {
    %c0_i32 = arith.constant 0 : i32
    %c0_i32_0 = arith.constant 0 : i32
    %c0_i32_1 = arith.constant 0 : i32
    return %c0_i32, %c0_i32_0 : i32, i32
  }
  func.func @transform_11(%arg0: i32) -> (i32, i32) {
    %c0_i32 = arith.constant 0 : i32
    %c0_i32_0 = arith.constant 0 : i32
    %c0_i32_1 = arith.constant 0 : i32
    return %c0_i32, %c0_i32_0 : i32, i32
  }
  func.func @transform_12(%arg0: i32) -> (i32, i32) {
    %c0_i32 = arith.constant 0 : i32
    %c0_i32_0 = arith.constant 0 : i32
    %c0_i32_1 = arith.constant 0 : i32
    return %c0_i32, %c0_i32_0 : i32, i32
  }
  func.func @transform_13(%arg0: i32) -> (i32, i32) {
    %c0_i32 = arith.constant 0 : i32
    %c0_i32_0 = arith.constant 0 : i32
    %c0_i32_1 = arith.constant 0 : i32
    return %c0_i32, %c0_i32_0 : i32, i32
  }
  func.func @transform_14(%arg0: i32) -> (i32, i32, i32) {
    %c0_i32 = arith.constant 0 : i32
    %c0_i32_0 = arith.constant 0 : i32
    %c0_i32_1 = arith.constant 0 : i32
    return %arg0, %c0_i32, %c0_i32_0 : i32, i32, i32
  }
}

</mosaic_0001>

<llo_original>
// kernel: osblock_forward.1
$region0: #{osblock_forward.1}
  #allocation0 [shape = 'u32[]', space=smem, size = 0x4, offset = 0x4, fixed_abs, tag = 'smem constant byte address 0x4 - core index']
  #allocation1 [shape = 'u32[72,128]{1,0:T(1,128)}', space=vmem, size = 0x9000, scoped, tag = 'internal scratch']
  %s0 = inlined_call_operand.vmem [shape: f32[2,256,64], index: 0, kind: input, shape index: {}]
  %s1 = inlined_call_operand.vmem [shape: f32[256,4], index: 1, kind: input, shape index: {}]
  %s2 = inlined_call_operand.hbm [shape: bf16[64,128], index: 2, kind: input, shape index: {}]
  %s3 = inlined_call_operand.vmem [shape: f32[1,128], index: 3, kind: input, shape index: {}]
  %s4 = inlined_call_operand.hbm [shape: bf16[4,128,128], index: 4, kind: input, shape index: {}]
  %s5 = inlined_call_operand.vmem [shape: f32[4,9,128], index: 5, kind: input, shape index: {}]
  %s6 = inlined_call_operand.vmem [shape: f32[4,128], index: 6, kind: input, shape index: {}]
  %s7 = inlined_call_operand.vmem [shape: f32[128,8], index: 7, kind: input, shape index: {}]
  %s8 = inlined_call_operand.vmem [shape: f32[1,8], index: 8, kind: input, shape index: {}]
  %s9 = inlined_call_operand.hbm [shape: f32[8,128], index: 9, kind: input, shape index: {}]
  %s10 = inlined_call_operand.vmem [shape: f32[1,128], index: 10, kind: input, shape index: {}]
  %s11 = inlined_call_operand.hbm [shape: bf16[128,128], index: 11, kind: input, shape index: {}]
  %s12 = inlined_call_operand.hbm [shape: bf16[64,128], index: 12, kind: input, shape index: {}]
  %s13 = inlined_call_operand.hbm [shape: f32[1,128], index: 13, kind: input, shape index: {}]
  %s14 = inlined_call_operand.hbm [shape: f32[2,256,128], index: 14, kind: output, shape index: {}]
  %s15 = sld [smem:[#allocation0]]
  $region113: #{osblock_forward.1} parent=0
    _
  %s17 = ssub.s32 1, %s15
  %s18 = scalar_select 0, %s17, %s15
  $region1: #{osblock_forward.1} parent=0
    #allocation2 [shape = 'u8[16384]{0}', space=vmem, size = 0x4000, scoped, tag = 'input window, operand 2, single buffered']
    #allocation3 [shape = 's32[2]{0}', space=sflag, size = 0x8, scoped, tag = 'scoped memory for osblock_forward.1']
    #allocation4 [shape = 's32[2]{0}', space=sflag, size = 0x8, scoped, tag = 'scoped memory for osblock_forward.1']
    #allocation5 [shape = 'u8[131072]{0}', space=vmem, size = 0x20000, scoped, tag = 'input window, operand 4, single buffered']
    #allocation6 [shape = 's32[1]{0}', space=sflag, size = 0x4, scoped, tag = 'scoped memory for osblock_forward.1']
    #allocation7 [shape = 'u8[4096]{0}', space=vmem, size = 0x1000, scoped, tag = 'input window, operand 9, single buffered']
    #allocation8 [shape = 'u8[32768]{0}', space=vmem, size = 0x8000, scoped, tag = 'input window, operand 11, single buffered']
    #allocation9 [shape = 's32[1]{0}', space=sflag, size = 0x4, scoped, tag = 'scoped memory for osblock_forward.1']
    #allocation10 [shape = 'u8[16384]{0}', space=vmem, size = 0x4000, scoped, tag = 'input window, operand 12, single buffered']
    #allocation11 [shape = 'u8[512]{0}', space=vmem, size = 0x400, scoped, tag = 'input window, operand 13, single buffered']
    #allocation12 [shape = 's32[1]{0}', space=sflag, size = 0x4, scoped, tag = 'scoped memory for osblock_forward.1']
    #allocation13 [shape = 'u8[262144]{0}', space=vmem, size = 0x40000, scoped, tag = 'output window, operand 0']
    %19 = vsyncpa [#allocation3], 0
    %20 = vsyncpa [#allocation6], 0
    %21 = vsyncpa [#allocation9], 0
    %22 = vsyncpa [#allocation12], 0
    %23 = vsyncpa [#allocation4], 0
    %s24 = scalar_lea.sflag [#allocation4], 1
    %25 = vsyncpa %s24, 0
    loop: start=0, step=1, limit=4
    $region2: #{osblock_forward.1} parent=1 // loop_pre_header
      _
    $region3: #{osblock_forward.1} parent=1 // loop_header
      %s27 = sphi 0, %s31
      %p28 = scmp.ge.s32.totalorder %s27, 4
      %s37 = sphi 0, %s39
      %s40 = sphi 0, %s37
      %s41 = sphi 0, %s40
      %s57 = sphi 0, %s41
      %s61 = sphi 0, %s61
      %s63 = sphi 0, %s61
      %s64 = sphi 0, %s63
      %s78 = sphi 0, %s64
      %s82 = sphi 0, %s82
      %s84 = sphi 0, %s82
      %s85 = sphi 0, %s84
      %s99 = sphi 0, %s85
      %s103 = sphi 0, %s103
      %s105 = sphi 0, %s103
      %s106 = sphi 0, %s105
      %s120 = sphi 0, %s106
      %s124 = sphi 0, %s124
      %s126 = sphi 0, %s124
      %s127 = sphi 0, %s126
      %s141 = sphi 0, %s127
      %s145 = sphi 0, %s145
      %s147 = sphi 0, %s145
      %s148 = sphi 0, %s147
      %s162 = sphi 0, %s148
      %s166 = sphi 0, %s166
      %s168 = sphi 0, %s166
      %s169 = sphi 0, %s168
      %s183 = sphi 0, %s169
      %s187 = sphi 0, %s187
      %s189 = sphi 0, %s187
      %s190 = sphi 0, %s189
      %s204 = sphi 0, %s190
      %s208 = sphi 0, %s208
      %s210 = sphi 0, %s208
      %s211 = sphi 0, %s210
      %s225 = sphi 0, %s211
      %s229 = sphi 0, %s229
      %s231 = sphi 0, %s229
      %s232 = sphi 0, %s231
      %s246 = sphi 0, %s232
      %s250 = sphi 0, %s250
      %s252 = sphi 0, %s250
      %s253 = sphi 0, %s252
      %s267 = sphi 0, %s253
      %s271 = sphi 0, %s271
      %s273 = sphi 0, %s271
      %s274 = sphi 0, %s273
      %s288 = sphi 0, %s274
      %s292 = sphi 0, %s292
      %s294 = sphi 0, %s292
      %s295 = sphi 0, %s294
      %s309 = sphi 0, %s295
      %s313 = sphi 0, %s313
      %s315 = sphi 0, %s313
      %s316 = sphi 0, %s315
      %s330 = sphi 0, %s316
      %s336 = sphi 0, %s338
      %s339 = sphi 0, %s336
      %s340 = sphi 0, %s339
      %s356 = sphi 0, %s340
    $region4: #{osblock_forward.1} parent=1 // loop_header_branch
      %30 = sbr.rel (%p28) target = $region8
    $region5: #{osblock_forward.1} parent=1 // loop_body
      %s32 = ssub.s32 %s27, 1
      %s33 = ssub.s32 %s27, 2
      %s34 = sadd.s32 %s27, 1
      %s35 = ssub.s32 %s27, %s34
      %p36 = scmp.eq.s32.totalorder %s35, 0
      %s38 = sadd.s32 %s37, 1
      %s39 = scalar_select %p36, %s37, %s38
      %p42 = pneg %p36
      %p43 = scmp.eq.s32.totalorder %s27, 1
      %p44 = por %p42, %p43
      %p45 = scmp.ne.s32.totalorder %s37, %s40
      %p46 = scmp.eq.s32.totalorder %s27, 0
      %p47 = por %p45, %p46
      %p48 = scmp.ne.s32.totalorder %s37, %s40
      %p49 = scmp.eq.s32.totalorder %s32, 1
      %p50 = por %p48, %p49
      %p51 = scmp.ne.s32.totalorder %s40, %s41
      %p52 = scmp.eq.s32.totalorder %s32, 0
      %p53 = por %p51, %p52
      %p54 = scmp.ne.s32.totalorder %s40, %s41
      %p55 = scmp.eq.s32.totalorder %s33, 1
      %p56 = por %p54, %p55
      %p58 = scmp.ne.s32.totalorder %s41, %s57
      %p59 = scmp.eq.s32.totalorder %s33, 0
      %p60 = por %p58, %p59
      %s62 = sadd.s32 %s61, 1
      %p65 = scmp.eq.s32.totalorder %s27, 1
      %p66 = scmp.ne.s32.totalorder %s61, %s63
      %p67 = scmp.eq.s32.totalorder %s27, 0
      %p68 = por %p66, %p67
      %p69 = scmp.ne.s32.totalorder %s61, %s63
      %p70 = scmp.eq.s32.totalorder %s32, 1
      %p71 = por %p69, %p70
      %p72 = scmp.ne.s32.totalorder %s63, %s64
      %p73 = scmp.eq.s32.totalorder %s32, 0
      %p74 = por %p72, %p73
      %p75 = scmp.ne.s32.totalorder %s63, %s64
      %p76 = scmp.eq.s32.totalorder %s33, 1
      %p77 = por %p75, %p76
      %p79 = scmp.ne.s32.totalorder %s64, %s78
      %p80 = scmp.eq.s32.totalorder %s33, 0
      %p81 = por %p79, %p80
      %s83 = sadd.s32 %s82, 1
      %p86 = scmp.eq.s32.totalorder %s27, 1
      %p87 = scmp.ne.s32.totalorder %s82, %s84
      %p88 = scmp.eq.s32.totalorder %s27, 0
      %p89 = por %p87, %p88
      %p90 = scmp.ne.s32.totalorder %s82, %s84
      %p91 = scmp.eq.s32.totalorder %s32, 1
      %p92 = por %p90, %p91
      %p93 = scmp.ne.s32.totalorder %s84, %s85
      %p94 = scmp.eq.s32.totalorder %s32, 0
      %p95 = por %p93, %p94
      %p96 = scmp.ne.s32.totalorder %s84, %s85
      %p97 = scmp.eq.s32.totalorder %s33, 1
      %p98 = por %p96, %p97
      %p100 = scmp.ne.s32.totalorder %s85, %s99
      %p101 = scmp.eq.s32.totalorder %s33, 0
      %p102 = por %p100, %p101
      %s104 = sadd.s32 %s103, 1
      %p107 = scmp.eq.s32.totalorder %s27, 1
      %p108 = scmp.ne.s32.totalorder %s103, %s105
      %p109 = scmp.eq.s32.totalorder %s27, 0
      %p110 = por %p108, %p109
      %p111 = scmp.ne.s32.totalorder %s103, %s105
      %p112 = scmp.eq.s32.totalorder %s32, 1
      %p113 = por %p111, %p112
      %p114 = scmp.ne.s32.totalorder %s105, %s106
      %p115 = scmp.eq.s32.totalorder %s32, 0
      %p116 = por %p114, %p115
      %p117 = scmp.ne.s32.totalorder %s105, %s106
      %p118 = scmp.eq.s32.totalorder %s33, 1
      %p119 = por %p117, %p118
      %p121 = scmp.ne.s32.totalorder %s106, %s120
      %p122 = scmp.eq.s32.totalorder %s33, 0
      %p123 = por %p121, %p122
      %s125 = sadd.s32 %s124, 1
      %p128 = scmp.eq.s32.totalorder %s27, 1
      %p129 = scmp.ne.s32.totalorder %s124, %s126
      %p130 = scmp.eq.s32.totalorder %s27, 0
      %p131 = por %p129, %p130
      %p132 = scmp.ne.s32.totalorder %s124, %s126
      %p133 = scmp.eq.s32.totalorder %s32, 1
      %p134 = por %p132, %p133
      %p135 = scmp.ne.s32.totalorder %s126, %s127
      %p136 = scmp.eq.s32.totalorder %s32, 0
      %p137 = por %p135, %p136
      %p138 = scmp.ne.s32.totalorder %s126, %s127
      %p139 = scmp.eq.s32.totalorder %s33, 1
      %p140 = por %p138, %p139
      %p142 = scmp.ne.s32.totalorder %s127, %s141
      %p143 = scmp.eq.s32.totalorder %s33, 0
      %p144 = por %p142, %p143
      %s146 = sadd.s32 %s145, 1
      %p149 = scmp.eq.s32.totalorder %s27, 1
      %p150 = scmp.ne.s32.totalorder %s145, %s147
      %p151 = scmp.eq.s32.totalorder %s27, 0
      %p152 = por %p150, %p151
      %p153 = scmp.ne.s32.totalorder %s145, %s147
      %p154 = scmp.eq.s32.totalorder %s32, 1
      %p155 = por %p153, %p154
      %p156 = scmp.ne.s32.totalorder %s147, %s148
      %p157 = scmp.eq.s32.totalorder %s32, 0
      %p158 = por %p156, %p157
      %p159 = scmp.ne.s32.totalorder %s147, %s148
      %p160 = scmp.eq.s32.totalorder %s33, 1
      %p161 = por %p159, %p160
      %p163 = scmp.ne.s32.totalorder %s148, %s162
      %p164 = scmp.eq.s32.totalorder %s33, 0
      %p165 = por %p163, %p164
      %s167 = sadd.s32 %s166, 1
      %p170 = scmp.eq.s32.totalorder %s27, 1
      %p171 = scmp.ne.s32.totalorder %s166, %s168
      %p172 = scmp.eq.s32.totalorder %s27, 0
      %p173 = por %p171, %p172
      %p174 = scmp.ne.s32.totalorder %s166, %s168
      %p175 = scmp.eq.s32.totalorder %s32, 1
      %p176 = por %p174, %p175
      %p177 = scmp.ne.s32.totalorder %s168, %s169
      %p178 = scmp.eq.s32.totalorder %s32, 0
      %p179 = por %p177, %p178
      %p180 = scmp.ne.s32.totalorder %s168, %s169
      %p181 = scmp.eq.s32.totalorder %s33, 1
      %p182 = por %p180, %p181
      %p184 = scmp.ne.s32.totalorder %s169, %s183
      %p185 = scmp.eq.s32.totalorder %s33, 0
      %p186 = por %p184, %p185
      %s188 = sadd.s32 %s187, 1
      %p191 = scmp.eq.s32.totalorder %s27, 1
      %p192 = scmp.ne.s32.totalorder %s187, %s189
      %p193 = scmp.eq.s32.totalorder %s27, 0
      %p194 = por %p192, %p193
      %p195 = scmp.ne.s32.totalorder %s187, %s189
      %p196 = scmp.eq.s32.totalorder %s32, 1
      %p197 = por %p195, %p196
      %p198 = scmp.ne.s32.totalorder %s189, %s190
      %p199 = scmp.eq.s32.totalorder %s32, 0
      %p200 = por %p198, %p199
      %p201 = scmp.ne.s32.totalorder %s189, %s190
      %p202 = scmp.eq.s32.totalorder %s33, 1
      %p203 = por %p201, %p202
      %p205 = scmp.ne.s32.totalorder %s190, %s204
      %p206 = scmp.eq.s32.totalorder %s33, 0
      %p207 = por %p205, %p206
      %s209 = sadd.s32 %s208, 1
      %p212 = scmp.eq.s32.totalorder %s27, 1
      %p213 = scmp.ne.s32.totalorder %s208, %s210
      %p214 = scmp.eq.s32.totalorder %s27, 0
      %p215 = por %p213, %p214
      %p216 = scmp.ne.s32.totalorder %s208, %s210
      %p217 = scmp.eq.s32.totalorder %s32, 1
      %p218 = por %p216, %p217
      %p219 = scmp.ne.s32.totalorder %s210, %s211
      %p220 = scmp.eq.s32.totalorder %s32, 0
      %p221 = por %p219, %p220
      %p222 = scmp.ne.s32.totalorder %s210, %s211
      %p223 = scmp.eq.s32.totalorder %s33, 1
      %p224 = por %p222, %p223
      %p226 = scmp.ne.s32.totalorder %s211, %s225
      %p227 = scmp.eq.s32.totalorder %s33, 0
      %p228 = por %p226, %p227
      %s230 = sadd.s32 %s229, 1
      %p233 = scmp.eq.s32.totalorder %s27, 1
      %p234 = scmp.ne.s32.totalorder %s229, %s231
      %p235 = scmp.eq.s32.totalorder %s27, 0
      %p236 = por %p234, %p235
      %p237 = scmp.ne.s32.totalorder %s229, %s231
      %p238 = scmp.eq.s32.totalorder %s32, 1
      %p239 = por %p237, %p238
      %p240 = scmp.ne.s32.totalorder %s231, %s232
      %p241 = scmp.eq.s32.totalorder %s32, 0
      %p242 = por %p240, %p241
      %p243 = scmp.ne.s32.totalorder %s231, %s232
      %p244 = scmp.eq.s32.totalorder %s33, 1
      %p245 = por %p243, %p244
      %p247 = scmp.ne.s32.totalorder %s232, %s246
      %p248 = scmp.eq.s32.totalorder %s33, 0
      %p249 = por %p247, %p248
      %s251 = sadd.s32 %s250, 1
      %p254 = scmp.eq.s32.totalorder %s27, 1
      %p255 = scmp.ne.s32.totalorder %s250, %s252
      %p256 = scmp.eq.s32.totalorder %s27, 0
      %p257 = por %p255, %p256
      %p258 = scmp.ne.s32.totalorder %s250, %s252
      %p259 = scmp.eq.s32.totalorder %s32, 1
      %p260 = por %p258, %p259
      %p261 = scmp.ne.s32.totalorder %s252, %s253
      %p262 = scmp.eq.s32.totalorder %s32, 0
      %p263 = por %p261, %p262
      %p264 = scmp.ne.s32.totalorder %s252, %s253
      %p265 = scmp.eq.s32.totalorder %s33, 1
      %p266 = por %p264, %p265
      %p268 = scmp.ne.s32.totalorder %s253, %s267
      %p269 = scmp.eq.s32.totalorder %s33, 0
      %p270 = por %p268, %p269
      %s272 = sadd.s32 %s271, 1
      %p275 = scmp.eq.s32.totalorder %s27, 1
      %p276 = scmp.ne.s32.totalorder %s271, %s273
      %p277 = scmp.eq.s32.totalorder %s27, 0
      %p278 = por %p276, %p277
      %p279 = scmp.ne.s32.totalorder %s271, %s273
      %p280 = scmp.eq.s32.totalorder %s32, 1
      %p281 = por %p279, %p280
      %p282 = scmp.ne.s32.totalorder %s273, %s274
      %p283 = scmp.eq.s32.totalorder %s32, 0
      %p284 = por %p282, %p283
      %p285 = scmp.ne.s32.totalorder %s273, %s274
      %p286 = scmp.eq.s32.totalorder %s33, 1
      %p287 = por %p285, %p286
      %p289 = scmp.ne.s32.totalorder %s274, %s288
      %p290 = scmp.eq.s32.totalorder %s33, 0
      %p291 = por %p289, %p290
      %s293 = sadd.s32 %s292, 1
      %p296 = scmp.eq.s32.totalorder %s27, 1
      %p297 = scmp.ne.s32.totalorder %s292, %s294
      %p298 = scmp.eq.s32.totalorder %s27, 0
      %p299 = por %p297, %p298
      %p300 = scmp.ne.s32.totalorder %s292, %s294
      %p301 = scmp.eq.s32.totalorder %s32, 1
      %p302 = por %p300, %p301
      %p303 = scmp.ne.s32.totalorder %s294, %s295
      %p304 = scmp.eq.s32.totalorder %s32, 0
      %p305 = por %p303, %p304
      %p306 = scmp.ne.s32.totalorder %s294, %s295
      %p307 = scmp.eq.s32.totalorder %s33, 1
      %p308 = por %p306, %p307
      %p310 = scmp.ne.s32.totalorder %s295, %s309
      %p311 = scmp.eq.s32.totalorder %s33, 0
      %p312 = por %p310, %p311
      %s314 = sadd.s32 %s313, 1
      %p317 = scmp.eq.s32.totalorder %s27, 1
      %p318 = scmp.ne.s32.totalorder %s313, %s315
      %p319 = scmp.eq.s32.totalorder %s27, 0
      %p320 = por %p318, %p319
      %p321 = scmp.ne.s32.totalorder %s313, %s315
      %p322 = scmp.eq.s32.totalorder %s32, 1
      %p323 = por %p321, %p322
      %p324 = scmp.ne.s32.totalorder %s315, %s316
      %p325 = scmp.eq.s32.totalorder %s32, 0
      %p326 = por %p324, %p325
      %p327 = scmp.ne.s32.totalorder %s315, %s316
      %p328 = scmp.eq.s32.totalorder %s33, 1
      %p329 = por %p327, %p328
      %p331 = scmp.ne.s32.totalorder %s316, %s330
      %p332 = scmp.eq.s32.totalorder %s33, 0
      %p333 = por %p331, %p332
      %s334 = ssub.s32 %s27, %s34
      %p335 = scmp.eq.s32.totalorder %s334, 0
      %s337 = sadd.s32 %s336, 1
      %s338 = scalar_select %p335, %s336, %s337
      %p341 = pneg %p335
      %p342 = scmp.eq.s32.totalorder %s27, 1
      %p343 = por %p341, %p342
      %p344 = scmp.ne.s32.totalorder %s336, %s339
      %p345 = scmp.eq.s32.totalorder %s27, 0
      %p346 = por %p344, %p345
      %p347 = scmp.ne.s32.totalorder %s336, %s339
      %p348 = scmp.eq.s32.totalorder %s32, 1
      %p349 = por %p347, %p348
      %p350 = scmp.ne.s32.totalorder %s339, %s340
      %p351 = scmp.eq.s32.totalorder %s32, 0
      %p352 = por %p350, %p351
      %p353 = scmp.ne.s32.totalorder %s339, %s340
      %p354 = scmp.eq.s32.totalorder %s33, 1
      %p355 = por %p353, %p354
      %p357 = scmp.ne.s32.totalorder %s340, %s356
      %p358 = scmp.eq.s32.totalorder %s33, 0
      %p359 = por %p357, %p358
      %p360 = scmp.le.s32.totalorder 1, %s27
      %p361 = scmp.lt.s32.totalorder %s27, 3
      %p362 = pnand %p360, %p361
      %p363 = pneg %p362
      // Predicated region
      $region9: #{osblock_forward.1} parent=5 // pred_check
        _
      $region10: #{osblock_forward.1} parent=5 // pred_check_branch
        %365 = sbr.rel (%p362) target = $region12
      $region11: #{osblock_forward.1} parent=5 // pred_region
        %s366 = ssub.s32 %s27, 1
        // Predicated region
        $region13: #{osblock_forward.1} parent=11 // pred_check
          %p367 = pneg %p74
        $region14: #{osblock_forward.1} parent=11 // pred_check_branch
          %369 = sbr.rel (%p367) target = $region16
        $region15: #{osblock_forward.1} parent=11 // pred_region
          _
        $region16: #{osblock_forward.1} parent=11 // pred_fallthru
          _
        // Predicated region
        $region17: #{osblock_forward.1} parent=11 // pred_check
          %p370 = pneg %p95
        $region18: #{osblock_forward.1} parent=11 // pred_check_branch
          %372 = sbr.rel (%p370) target = $region20
        $region19: #{osblock_forward.1} parent=11 // pred_region
          %374 = vsyncadd [#allocation3], 0
          %s375 = sshll.u32 %s2, 4
          %s376 = int_to_ptr.hbm [resolvable:$true] %s375
          %s377 = sshll.u32 [#allocation2], 4
          %s378 = int_to_ptr.vmem [resolvable:$true] %s377
          %383 = dma.hbm_to_vmem [thread:$0]  %s376, 512, %s378, [#allocation3], 64, 64, 4
        $region20: #{osblock_forward.1} parent=11 // pred_fallthru
          _
        // Predicated region
        $region21: #{osblock_forward.1} parent=11 // pred_check
          %p384 = pneg %p116
        $region22: #{osblock_forward.1} parent=11 // pred_check_branch
          %386 = sbr.rel (%p384) target = $region24
        $region23: #{osblock_forward.1} parent=11 // pred_region
          _
        $region24: #{osblock_forward.1} parent=11 // pred_fallthru
          _
        // Predicated region
        $region25: #{osblock_forward.1} parent=11 // pred_check
          %p387 = pneg %p137
        $region26: #{osblock_forward.1} parent=11 // pred_check_branch
          %389 = sbr.rel (%p387) target = $region28
        $region27: #{osblock_forward.1} parent=11 // pred_region
          %391 = vsyncadd [#allocation6], 0
          %s392 = sshll.u32 %s4, 4
          %s393 = int_to_ptr.hbm [resolvable:$true] %s392
          %s394 = sshll.u32 [#allocation5], 4
          %s395 = int_to_ptr.vmem [resolvable:$true] %s394
          %400 = dma.hbm_to_vmem [thread:$0]  %s393, 4096, %s395, [#allocation6], 64, 64, 4
        $region28: #{osblock_forward.1} parent=11 // pred_fallthru
          _
        // Predicated region
        $region29: #{osblock_forward.1} parent=11 // pred_check
          %p401 = pneg %p158
        $region30: #{osblock_forward.1} parent=11 // pred_check_branch
          %403 = sbr.rel (%p401) target = $region32
        $region31: #{osblock_forward.1} parent=11 // pred_region
          _
        $region32: #{osblock_forward.1} parent=11 // pred_fallthru
          _
        // Predicated region
        $region33: #{osblock_forward.1} parent=11 // pred_check
          %p404 = pneg %p179
        $region34: #{osblock_forward.1} parent=11 // pred_check_branch
          %406 = sbr.rel (%p404) target = $region36
        $region35: #{osblock_forward.1} parent=11 // pred_region
          _
        $region36: #{osblock_forward.1} parent=11 // pred_fallthru
          _
        // Predicated region
        $region37: #{osblock_forward.1} parent=11 // pred_check
          %p407 = pneg %p200
        $region38: #{osblock_forward.1} parent=11 // pred_check_branch
          %409 = sbr.rel (%p407) target = $region40
        $region39: #{osblock_forward.1} parent=11 // pred_region
          _
        $region40: #{osblock_forward.1} parent=11 // pred_fallthru
          _
        // Predicated region
        $region41: #{osblock_forward.1} parent=11 // pred_check
          %p410 = pneg %p221
        $region42: #{osblock_forward.1} parent=11 // pred_check_branch
          %412 = sbr.rel (%p410) target = $region44
        $region43: #{osblock_forward.1} parent=11 // pred_region
          _
        $region44: #{osblock_forward.1} parent=11 // pred_fallthru
          _
        // Predicated region
        $region45: #{osblock_forward.1} parent=11 // pred_check
          %p413 = pneg %p242
        $region46: #{osblock_forward.1} parent=11 // pred_check_branch
          %415 = sbr.rel (%p413) target = $region48
        $region47: #{osblock_forward.1} parent=11 // pred_region
          %417 = vsyncadd [#allocation6], 0
          %s419 = sshll.u32 %s9, 4
          %s420 = int_to_ptr.hbm [resolvable:$true] %s419
          %s421 = sshll.u32 [#allocation7], 4
          %s422 = int_to_ptr.vmem [resolvable:$true] %s421
          %424 = dma.hbm_to_vmem [thread:$0]  %s420, 128, %s422, [#allocation6]
        $region48: #{osblock_forward.1} parent=11 // pred_fallthru
          _
        // Predicated region
        $region49: #{osblock_forward.1} parent=11 // pred_check
          %p425 = pneg %p263
        $region50: #{osblock_forward.1} parent=11 // pred_check_branch
          %427 = sbr.rel (%p425) target = $region52
        $region51: #{osblock_forward.1} parent=11 // pred_region
          _
        $region52: #{osblock_forward.1} parent=11 // pred_fallthru
          _
        // Predicated region
        $region53: #{osblock_forward.1} parent=11 // pred_check
          %p428 = pneg %p284
        $region54: #{osblock_forward.1} parent=11 // pred_check_branch
          %430 = sbr.rel (%p428) target = $region56
        $region55: #{osblock_forward.1} parent=11 // pred_region
          %432 = vsyncadd [#allocation9], 0
          %s433 = sshll.u32 %s11, 4
          %s434 = int_to_ptr.hbm [resolvable:$true] %s433
          %s435 = sshll.u32 [#allocation8], 4
          %s436 = int_to_ptr.vmem [resolvable:$true] %s435
          %441 = dma.hbm_to_vmem [thread:$0]  %s434, 1024, %s436, [#allocation9], 64, 64, 4
        $region56: #{osblock_forward.1} parent=11 // pred_fallthru
          _
        // Predicated region
        $region57: #{osblock_forward.1} parent=11 // pred_check
          %p442 = pneg %p305
        $region58: #{osblock_forward.1} parent=11 // pred_check_branch
          %444 = sbr.rel (%p442) target = $region60
        $region59: #{osblock_forward.1} parent=11 // pred_region
          %446 = vsyncadd [#allocation9], 0
          %s447 = sshll.u32 %s12, 4
          %s448 = int_to_ptr.hbm [resolvable:$true] %s447
          %s449 = sshll.u32 [#allocation10], 4
          %s450 = int_to_ptr.vmem [resolvable:$true] %s449
          %455 = dma.hbm_to_vmem [thread:$0]  %s448, 512, %s450, [#allocation9], 64, 64, 4
        $region60: #{osblock_forward.1} parent=11 // pred_fallthru
          _
        // Predicated region
        $region61: #{osblock_forward.1} parent=11 // pred_check
          %p456 = pneg %p326
        $region62: #{osblock_forward.1} parent=11 // pred_check_branch
          %458 = sbr.rel (%p456) target = $region64
        $region63: #{osblock_forward.1} parent=11 // pred_region
          %460 = vsyncadd [#allocation12], 0
          %s462 = sshll.u32 %s13, 4
          %s463 = int_to_ptr.hbm [resolvable:$true] %s462
          %s464 = sshll.u32 [#allocation11], 4
          %s465 = int_to_ptr.vmem [resolvable:$true] %s464
          %467 = dma.hbm_to_vmem [thread:$0]  %s463, 16, %s465, [#allocation12]
        $region64: #{osblock_forward.1} parent=11 // pred_fallthru
          _
      $region12: #{osblock_forward.1} parent=5 // pred_fallthru
        _
      %p468 = scmp.lt.s32.totalorder %s27, 2
      // Predicated region
      $region65: #{osblock_forward.1} parent=5 // pred_check
        %p469 = pneg %p468
      $region66: #{osblock_forward.1} parent=5 // pred_check_branch
        %471 = sbr.rel (%p469) target = $region68
      $region67: #{osblock_forward.1} parent=5 // pred_region
        // Predicated region
        $region69: #{osblock_forward.1} parent=67 // pred_check
          %p472 = pneg %p47
        $region70: #{osblock_forward.1} parent=67 // pred_check_branch
          %474 = sbr.rel (%p472) target = $region72
        $region71: #{osblock_forward.1} parent=67 // pred_region
          %p475 = scmp.lt.s32.totalorder %s27, 1
          %s476 = scalar_select %p475, %s27, 1
          %s477 = smul.addr %s476, 32
          %s478 = smul.addr %s477, 8
          %s479 = scalar_lea.vmem %s0, %s478
        $region72: #{osblock_forward.1} parent=67 // pred_fallthru
          _
      $region68: #{osblock_forward.1} parent=5 // pred_fallthru
        _
      %p480 = scmp.le.s32.totalorder 1, %s27
      %p481 = scmp.lt.s32.totalorder %s27, 3
      %p482 = pnand %p480, %p481
      %p483 = pneg %p482
      // Predicated region
      $region73: #{osblock_forward.1} parent=5 // pred_check
        _
      $region74: #{osblock_forward.1} parent=5 // pred_check_branch
        %485 = sbr.rel (%p482) target = $region76
      $region75: #{osblock_forward.1} parent=5 // pred_region
        %s486 = ssub.s32 %s27, 1
        // Predicated region
        $region77: #{osblock_forward.1} parent=75 // pred_check
          %p487 = pneg %p95
        $region78: #{osblock_forward.1} parent=75 // pred_check_branch
          %489 = sbr.rel (%p487) target = $region80
        $region79: #{osblock_forward.1} parent=75 // pred_region
          %491 = dma.done [#allocation3], 512
        $region80: #{osblock_forward.1} parent=75 // pred_fallthru
          _
        // Predicated region
        $region81: #{osblock_forward.1} parent=75 // pred_check
          %p492 = pneg %p137
        $region82: #{osblock_forward.1} parent=75 // pred_check_branch
          %494 = sbr.rel (%p492) target = $region84
        $region83: #{osblock_forward.1} parent=75 // pred_region
          %496 = dma.done [#allocation6], 4096
        $region84: #{osblock_forward.1} parent=75 // pred_fallthru
          _
        // Predicated region
        $region85: #{osblock_forward.1} parent=75 // pred_check
          %p497 = pneg %p242
        $region86: #{osblock_forward.1} parent=75 // pred_check_branch
          %499 = sbr.rel (%p497) target = $region88
        $region87: #{osblock_forward.1} parent=75 // pred_region
          %501 = dma.done [#allocation6], 128
        $region88: #{osblock_forward.1} parent=75 // pred_fallthru
          _
        // Predicated region
        $region89: #{osblock_forward.1} parent=75 // pred_check
          %p502 = pneg %p284
        $region90: #{osblock_forward.1} parent=75 // pred_check_branch
          %504 = sbr.rel (%p502) target = $region92
        $region91: #{osblock_forward.1} parent=75 // pred_region
          %506 = dma.done [#allocation9], 1024
        $region92: #{osblock_forward.1} parent=75 // pred_fallthru
          _
        // Predicated region
        $region93: #{osblock_forward.1} parent=75 // pred_check
          %p507 = pneg %p305
        $region94: #{osblock_forward.1} parent=75 // pred_check_branch
          %509 = sbr.rel (%p507) target = $region96
        $region95: #{osblock_forward.1} parent=75 // pred_region
          %511 = dma.done [#allocation9], 512
        $region96: #{osblock_forward.1} parent=75 // pred_fallthru
          _
        // Predicated region
        $region97: #{osblock_forward.1} parent=75 // pred_check
          %p512 = pneg %p326
        $region98: #{osblock_forward.1} parent=75 // pred_check_branch
          %514 = sbr.rel (%p512) target = $region100
        $region99: #{osblock_forward.1} parent=75 // pred_region
          %516 = dma.done [#allocation12], 16
        $region100: #{osblock_forward.1} parent=75 // pred_fallthru
          _
        %p517 = scmp.lt.s32.totalorder %s32, 1
        %s518 = scalar_select %p517, %s32, 1
        %s519 = smul.addr %s518, 32
        %s520 = smul.addr %s519, 8
        %s521 = scalar_lea.vmem %s0, %s520
        %p522 = pneg %p53
        %p523 = pneg %p50
        %p524 = pneg %p74
        %p525 = pneg %p71
        %p526 = pneg %p95
        %p527 = pneg %p92
        %p528 = pneg %p116
        %p529 = pneg %p113
        %p530 = pneg %p137
        %p531 = pneg %p134
        %p532 = pneg %p158
        %p533 = pneg %p155
        %p534 = pneg %p179
        %p535 = pneg %p176
        %p536 = pneg %p200
        %p537 = pneg %p197
        %p538 = pneg %p221
        %p539 = pneg %p218
        %p540 = pneg %p242
        %p541 = pneg %p239
        %p542 = pneg %p263
        %p543 = pneg %p260
        %p544 = pneg %p284
        %p545 = pneg %p281
        %p546 = pneg %p305
        %p547 = pneg %p302
        %p548 = pneg %p326
        %p549 = pneg %p323
        %p550 = pneg %p352
        %p551 = pneg %p349
        %s552 = sand.u32 %s339, 1
        %s553 = scalar_lea.sflag [#allocation4], %s552
        %s554 = sand.u32 %s339, 1
        %s555 = smul.addr %s554, 256
        %s556 = scalar_lea.vmem [#allocation13], %s555
        %p557 = scmp.lt.s32.totalorder %s32, 1
        %s558 = scalar_select %p557, %s32, 1
        %s559 = smul.addr %s558, 32
        %s560 = smul.addr %s559, 8
        %s561 = scalar_lea.vmem %s0, %s560
        %v563 = vld [vmem:[%s561] sm:$0xff]
        %v564 = vld [vmem:[%s561 + $0x8] sm:$0xff]
        %v565 = vld [vmem:[%s561 + $0x10] sm:$0xff]
        %v566 = vld [vmem:[%s561 + $0x18] sm:$0xff]
        %v567 = vld [vmem:[%s561 + $0x20] sm:$0xff]
        %v568 = vld [vmem:[%s561 + $0x28] sm:$0xff]
        %v569 = vld [vmem:[%s561 + $0x30] sm:$0xff]
        %v570 = vld [vmem:[%s561 + $0x38] sm:$0xff]
        %v571 = vld [vmem:[%s561 + $0x40] sm:$0xff]
        %v572 = vld [vmem:[%s561 + $0x48] sm:$0xff]
        %v573 = vld [vmem:[%s561 + $0x50] sm:$0xff]
        %v574 = vld [vmem:[%s561 + $0x58] sm:$0xff]
        %v575 = vld [vmem:[%s561 + $0x60] sm:$0xff]
        %v576 = vld [vmem:[%s561 + $0x68] sm:$0xff]
        %v577 = vld [vmem:[%s561 + $0x70] sm:$0xff]
        %v578 = vld [vmem:[%s561 + $0x78] sm:$0xff]
        %v579 = vld [vmem:[%s561 + $0x80] sm:$0xff]
        %v580 = vld [vmem:[%s561 + $0x88] sm:$0xff]
        %v581 = vld [vmem:[%s561 + $0x90] sm:$0xff]
        %v582 = vld [vmem:[%s561 + $0x98] sm:$0xff]
        %v583 = vld [vmem:[%s561 + $0xa0] sm:$0xff]
        %v584 = vld [vmem:[%s561 + $0xa8] sm:$0xff]
        %v585 = vld [vmem:[%s561 + $0xb0] sm:$0xff]
        %v586 = vld [vmem:[%s561 + $0xb8] sm:$0xff]
        %v587 = vld [vmem:[%s561 + $0xc0] sm:$0xff]
        %v588 = vld [vmem:[%s561 + $0xc8] sm:$0xff]
        %v589 = vld [vmem:[%s561 + $0xd0] sm:$0xff]
        %v590 = vld [vmem:[%s561 + $0xd8] sm:$0xff]
        %v591 = vld [vmem:[%s561 + $0xe0] sm:$0xff]
        %v592 = vld [vmem:[%s561 + $0xe8] sm:$0xff]
        %v593 = vld [vmem:[%s561 + $0xf0] sm:$0xff]
        %v594 = vld [vmem:[%s561 + $0xf8] sm:$0xff]
        %v595 = vpack.c.bf16 %v564, %v563
        %v596 = vpack.c.bf16 %v566, %v565
        %v597 = vpack.c.bf16 %v568, %v567
        %v598 = vpack.c.bf16 %v570, %v569
        %v599 = vpack.c.bf16 %v572, %v571
        %v600 = vpack.c.bf16 %v574, %v573
        %v601 = vpack.c.bf16 %v576, %v575
        %v602 = vpack.c.bf16 %v578, %v577
        %v603 = vpack.c.bf16 %v580, %v579
        %v604 = vpack.c.bf16 %v582, %v581
        %v605 = vpack.c.bf16 %v584, %v583
        %v606 = vpack.c.bf16 %v586, %v585
        %v607 = vpack.c.bf16 %v588, %v587
        %v608 = vpack.c.bf16 %v590, %v589
        %v609 = vpack.c.bf16 %v592, %v591
        %v610 = vpack.c.bf16 %v594, %v593
        %v611 = vld [vmem:[#allocation2] sm:$0xf]
        %v612 = vld [vmem:[#allocation2 + $0x4] sm:$0xf]
        %v613 = vld [vmem:[#allocation2 + $0x8] sm:$0xf]
        %v614 = vld [vmem:[#allocation2 + $0xc] sm:$0xf]
        %v615 = vld [vmem:[#allocation2 + $0x10] sm:$0xf]
        %v616 = vld [vmem:[#allocation2 + $0x14] sm:$0xf]
        %v617 = vld [vmem:[#allocation2 + $0x18] sm:$0xf]
        %v618 = vld [vmem:[#allocation2 + $0x1c] sm:$0xf]
        %v619 = vld [vmem:[%s3] sm:$0x1]
        %v621 = vperm.slane %v619, 0
        %v631 = vunpack.c.l.b16 %v611
        %v632 = vunpack.c.l.b16 %v612
        %v633 = vunpack.c.l.b16 %v613
        %v634 = vunpack.c.l.b16 %v614
        %v635 = vunpack.c.l.b16 %v615
        %v636 = vunpack.c.l.b16 %v616
        %v637 = vunpack.c.l.b16 %v617
        %v638 = vunpack.c.l.b16 %v618
        %v639 = vpack.c.b16 %v632, %v631
        %v640 = vpack.c.b16 %v634, %v633
        %v641 = vpack.c.b16 %v636, %v635
        %v642 = vpack.c.b16 %v638, %v637
        %vm647 = vcmask 523264
        %v649 = vsel %vm647, %v595, 0
        %v652 = vsel %vm647, %v596, 0
        %v655 = vsel %vm647, %v597, 0
        %v658 = vsel %vm647, %v598, 0
        %v661 = vsel %vm647, %v599, 0
        %v664 = vsel %vm647, %v600, 0
        %v667 = vsel %vm647, %v601, 0
        %v670 = vsel %vm647, %v602, 0
        %v673 = vsel %vm647, %v603, 0
        %v676 = vsel %vm647, %v604, 0
        %v679 = vsel %vm647, %v605, 0
        %v682 = vsel %vm647, %v606, 0
        %v685 = vsel %vm647, %v607, 0
        %v688 = vsel %vm647, %v608, 0
        %v691 = vsel %vm647, %v609, 0
        %v694 = vsel %vm647, %v610, 0
        %696 = vmatpush.bf16.msra.mxu0 0
        %697 = vmatpush.bf16.msra.mxu0 0
        %698 = vmatpush.bf16.msra.mxu0 0
        %699 = vmatpush.bf16.msra.mxu0 0
        %700 = vmatpush.bf16.msra.mxu0 %v642
        %701 = vmatpush.bf16.msra.mxu0 %v641
        %702 = vmatpush.bf16.msra.mxu0 %v640
        %703 = vmatpush.bf16.msra.mxu0 %v639
        %704 = vmatmul.bf16.gmra.mxu0 %v649
        %v705 = vpop.f32.mrf.mxu0
        %v706 = vadd.f32 %v621, %v705
        %v707 = vpop.f32.mrf.mxu0
        %v708 = vadd.f32 %v621, %v707
        %709 = vmatmul.bf16.gmra.mxu0 %v652
        %v710 = vpop.f32.mrf.mxu0
        %v711 = vadd.f32 %v621, %v710
        %v712 = vpop.f32.mrf.mxu0
        %v713 = vadd.f32 %v621, %v712
        %714 = vmatmul.bf16.gmra.mxu0 %v655
        %v715 = vpop.f32.mrf.mxu0
        %v716 = vadd.f32 %v621, %v715
        %v717 = vpop.f32.mrf.mxu0
        %v718 = vadd.f32 %v621, %v717
        %719 = vmatmul.bf16.gmra.mxu0 %v658
        %v720 = vpop.f32.mrf.mxu0
        %v721 = vadd.f32 %v621, %v720
        %v722 = vpop.f32.mrf.mxu0
        %v723 = vadd.f32 %v621, %v722
        %724 = vmatmul.bf16.gmra.mxu0 %v661
        %v725 = vpop.f32.mrf.mxu0
        %v726 = vadd.f32 %v621, %v725
        %v727 = vpop.f32.mrf.mxu0
        %v728 = vadd.f32 %v621, %v727
        %729 = vmatmul.bf16.gmra.mxu0 %v664
        %v730 = vpop.f32.mrf.mxu0
        %v731 = vadd.f32 %v621, %v730
        %v732 = vpop.f32.mrf.mxu0
        %v733 = vadd.f32 %v621, %v732
        %734 = vmatmul.bf16.gmra.mxu0 %v667
        %v735 = vpop.f32.mrf.mxu0
        %v736 = vadd.f32 %v621, %v735
        %v737 = vpop.f32.mrf.mxu0
        %v738 = vadd.f32 %v621, %v737
        %739 = vmatmul.bf16.gmra.mxu0 %v670
        %v740 = vpop.f32.mrf.mxu0
        %v741 = vadd.f32 %v621, %v740
        %v742 = vpop.f32.mrf.mxu0
        %v743 = vadd.f32 %v621, %v742
        %744 = vmatmul.bf16.gmra.mxu0 %v673
        %v745 = vpop.f32.mrf.mxu0
        %v746 = vadd.f32 %v621, %v745
        %v747 = vpop.f32.mrf.mxu0
        %v748 = vadd.f32 %v621, %v747
        %749 = vmatmul.bf16.gmra.mxu0 %v676
        %v750 = vpop.f32.mrf.mxu0
        %v751 = vadd.f32 %v621, %v750
        %v752 = vpop.f32.mrf.mxu0
        %v753 = vadd.f32 %v621, %v752
        %754 = vmatmul.bf16.gmra.mxu0 %v679
        %v755 = vpop.f32.mrf.mxu0
        %v756 = vadd.f32 %v621, %v755
        %v757 = vpop.f32.mrf.mxu0
        %v758 = vadd.f32 %v621, %v757
        %759 = vmatmul.bf16.gmra.mxu0 %v682
        %v760 = vpop.f32.mrf.mxu0
        %v761 = vadd.f32 %v621, %v760
        %v762 = vpop.f32.mrf.mxu0
        %v763 = vadd.f32 %v621, %v762
        %764 = vmatmul.bf16.gmra.mxu0 %v685
        %v765 = vpop.f32.mrf.mxu0
        %v766 = vadd.f32 %v621, %v765
        %v767 = vpop.f32.mrf.mxu0
        %v768 = vadd.f32 %v621, %v767
        %769 = vmatmul.bf16.gmra.mxu0 %v688
        %v770 = vpop.f32.mrf.mxu0
        %v771 = vadd.f32 %v621, %v770
        %v772 = vpop.f32.mrf.mxu0
        %v773 = vadd.f32 %v621, %v772
        %774 = vmatmul.bf16.gmra.mxu0 %v691
        %v775 = vpop.f32.mrf.mxu0
        %v776 = vadd.f32 %v621, %v775
        %v777 = vpop.f32.mrf.mxu0
        %v778 = vadd.f32 %v621, %v777
        %779 = vmatmul.bf16.gmra.mxu0 %v694
        %v780 = vpop.f32.mrf.mxu0
        %v781 = vadd.f32 %v621, %v780
        %v782 = vpop.f32.mrf.mxu0
        %v783 = vadd.f32 %v621, %v782
        %784 = vdwg.mxu0
        %v785 = vmax.f32 %v706, 0.0
        %v786 = vmax.f32 %v708, 0.0
        %v787 = vmax.f32 %v711, 0.0
        %v788 = vmax.f32 %v713, 0.0
        %v789 = vmax.f32 %v716, 0.0
        %v790 = vmax.f32 %v718, 0.0
        %v791 = vmax.f32 %v721, 0.0
        %v792 = vmax.f32 %v723, 0.0
        %v793 = vmax.f32 %v726, 0.0
        %v794 = vmax.f32 %v728, 0.0
        %v795 = vmax.f32 %v731, 0.0
        %v796 = vmax.f32 %v733, 0.0
        %v797 = vmax.f32 %v736, 0.0
        %v798 = vmax.f32 %v738, 0.0
        %v799 = vmax.f32 %v741, 0.0
        %v800 = vmax.f32 %v743, 0.0
        %v801 = vmax.f32 %v746, 0.0
        %v802 = vmax.f32 %v748, 0.0
        %v803 = vmax.f32 %v751, 0.0
        %v804 = vmax.f32 %v753, 0.0
        %v805 = vmax.f32 %v756, 0.0
        %v806 = vmax.f32 %v758, 0.0
        %v807 = vmax.f32 %v761, 0.0
        %v808 = vmax.f32 %v763, 0.0
        %v809 = vmax.f32 %v766, 0.0
        %v810 = vmax.f32 %v768, 0.0
        %v811 = vmax.f32 %v771, 0.0
        %v812 = vmax.f32 %v773, 0.0
        %v813 = vmax.f32 %v776, 0.0
        %v814 = vmax.f32 %v778, 0.0
        %v815 = vmax.f32 %v781, 0.0
        %v816 = vmax.f32 %v783, 0.0
        %v817 = vld [vmem:[%s1] sm:$0xff]
        %v818 = vld [vmem:[%s1 + $0x8] sm:$0xff]
        %v819 = vld [vmem:[%s1 + $0x10] sm:$0xff]
        %v820 = vld [vmem:[%s1 + $0x18] sm:$0xff]
        %v821 = vld [vmem:[%s1 + $0x20] sm:$0xff]
        %v822 = vld [vmem:[%s1 + $0x28] sm:$0xff]
        %v823 = vld [vmem:[%s1 + $0x30] sm:$0xff]
        %v824 = vld [vmem:[%s1 + $0x38] sm:$0xff]
        %v825 = vld [vmem:[%s1 + $0x40] sm:$0xff]
        %v826 = vld [vmem:[%s1 + $0x48] sm:$0xff]
        %v827 = vld [vmem:[%s1 + $0x50] sm:$0xff]
        %v828 = vld [vmem:[%s1 + $0x58] sm:$0xff]
        %v829 = vld [vmem:[%s1 + $0x60] sm:$0xff]
        %v830 = vld [vmem:[%s1 + $0x68] sm:$0xff]
        %v831 = vld [vmem:[%s1 + $0x70] sm:$0xff]
        %v832 = vld [vmem:[%s1 + $0x78] sm:$0xff]
        %v833 = vld [vmem:[%s1 + $0x80] sm:$0xff]
        %v834 = vld [vmem:[%s1 + $0x88] sm:$0xff]
        %v835 = vld [vmem:[%s1 + $0x90] sm:$0xff]
        %v836 = vld [vmem:[%s1 + $0x98] sm:$0xff]
        %v837 = vld [vmem:[%s1 + $0xa0] sm:$0xff]
        %v838 = vld [vmem:[%s1 + $0xa8] sm:$0xff]
        %v839 = vld [vmem:[%s1 + $0xb0] sm:$0xff]
        %v840 = vld [vmem:[%s1 + $0xb8] sm:$0xff]
        %v841 = vld [vmem:[%s1 + $0xc0] sm:$0xff]
        %v842 = vld [vmem:[%s1 + $0xc8] sm:$0xff]
        %v843 = vld [vmem:[%s1 + $0xd0] sm:$0xff]
        %v844 = vld [vmem:[%s1 + $0xd8] sm:$0xff]
        %v845 = vld [vmem:[%s1 + $0xe0] sm:$0xff]
        %v846 = vld [vmem:[%s1 + $0xe8] sm:$0xff]
        %v847 = vld [vmem:[%s1 + $0xf0] sm:$0xff]
        %v848 = vld [vmem:[%s1 + $0xf8] sm:$0xff]
        %850 = vset.pattern.permute.xlu0 0
        %851 = vperm.xlu0 %850, %v817
        %v852 = vpop.permute.xlu0 %851
        %855 = vset.pattern.permute.xlu0 0
        %856 = vperm.xlu0 %855, %v818
        %v857 = vpop.permute.xlu0 %856
        %860 = vset.pattern.permute.xlu0 0
        %861 = vperm.xlu0 %860, %v819
        %v862 = vpop.permute.xlu0 %861
        %865 = vset.pattern.permute.xlu0 0
        %866 = vperm.xlu0 %865, %v820
        %v867 = vpop.permute.xlu0 %866
        %870 = vset.pattern.permute.xlu0 0
        %871 = vperm.xlu0 %870, %v821
        %v872 = vpop.permute.xlu0 %871
        %875 = vset.pattern.permute.xlu0 0
        %876 = vperm.xlu0 %875, %v822
        %v877 = vpop.permute.xlu0 %876
        %880 = vset.pattern.permute.xlu0 0
        %881 = vperm.xlu0 %880, %v823
        %v882 = vpop.permute.xlu0 %881
        %885 = vset.pattern.permute.xlu0 0
        %886 = vperm.xlu0 %885, %v824
        %v887 = vpop.permute.xlu0 %886
        %890 = vset.pattern.permute.xlu0 0
        %891 = vperm.xlu0 %890, %v825
        %v892 = vpop.permute.xlu0 %891
        %895 = vset.pattern.permute.xlu0 0
        %896 = vperm.xlu0 %895, %v826
        %v897 = vpop.permute.xlu0 %896
        %900 = vset.pattern.permute.xlu0 0
        %901 = vperm.xlu0 %900, %v827
        %v902 = vpop.permute.xlu0 %901
        %905 = vset.pattern.permute.xlu0 0
        %906 = vperm.xlu0 %905, %v828
        %v907 = vpop.permute.xlu0 %906
        %910 = vset.pattern.permute.xlu0 0
        %911 = vperm.xlu0 %910, %v829
        %v912 = vpop.permute.xlu0 %911
        %915 = vset.pattern.permute.xlu0 0
        %916 = vperm.xlu0 %915, %v830
        %v917 = vpop.permute.xlu0 %916
        %920 = vset.pattern.permute.xlu0 0
        %921 = vperm.xlu0 %920, %v831
        %v922 = vpop.permute.xlu0 %921
        %925 = vset.pattern.permute.xlu0 0
        %926 = vperm.xlu0 %925, %v832
        %v927 = vpop.permute.xlu0 %926
        %930 = vset.pattern.permute.xlu0 0
        %931 = vperm.xlu0 %930, %v833
        %v932 = vpop.permute.xlu0 %931
        %935 = vset.pattern.permute.xlu0 0
        %936 = vperm.xlu0 %935, %v834
        %v937 = vpop.permute.xlu0 %936
        %940 = vset.pattern.permute.xlu0 0
        %941 = vperm.xlu0 %940, %v835
        %v942 = vpop.permute.xlu0 %941
        %945 = vset.pattern.permute.xlu0 0
        %946 = vperm.xlu0 %945, %v836
        %v947 = vpop.permute.xlu0 %946
        %950 = vset.pattern.permute.xlu0 0
        %951 = vperm.xlu0 %950, %v837
        %v952 = vpop.permute.xlu0 %951
        %955 = vset.pattern.permute.xlu0 0
        %956 = vperm.xlu0 %955, %v838
        %v957 = vpop.permute.xlu0 %956
        %960 = vset.pattern.permute.xlu0 0
        %961 = vperm.xlu0 %960, %v839
        %v962 = vpop.permute.xlu0 %961
        %965 = vset.pattern.permute.xlu0 0
        %966 = vperm.xlu0 %965, %v840
        %v967 = vpop.permute.xlu0 %966
        %970 = vset.pattern.permute.xlu0 0
        %971 = vperm.xlu0 %970, %v841
        %v972 = vpop.permute.xlu0 %971
        %975 = vset.pattern.permute.xlu0 0
        %976 = vperm.xlu0 %975, %v842
        %v977 = vpop.permute.xlu0 %976
        %980 = vset.pattern.permute.xlu0 0
        %981 = vperm.xlu0 %980, %v843
        %v982 = vpop.permute.xlu0 %981
        %985 = vset.pattern.permute.xlu0 0
        %986 = vperm.xlu0 %985, %v844
        %v987 = vpop.permute.xlu0 %986
        %990 = vset.pattern.permute.xlu0 0
        %991 = vperm.xlu0 %990, %v845
        %v992 = vpop.permute.xlu0 %991
        %995 = vset.pattern.permute.xlu0 0
        %996 = vperm.xlu0 %995, %v846
        %v997 = vpop.permute.xlu0 %996
        %1000 = vset.pattern.permute.xlu0 0
        %1001 = vperm.xlu0 %1000, %v847
        %v1002 = vpop.permute.xlu0 %1001
        %1005 = vset.pattern.permute.xlu0 0
        %1006 = vperm.xlu0 %1005, %v848
        %v1007 = vpop.permute.xlu0 %1006
        %1009 = vset.pattern.permute.xlu0 1
        %1010 = vperm.xlu0 %1009, %v817
        %v1011 = vpop.permute.xlu0 %1010
        %1013 = vset.pattern.permute.xlu0 1
        %1014 = vperm.xlu0 %1013, %v818
        %v1015 = vpop.permute.xlu0 %1014
        %1017 = vset.pattern.permute.xlu0 1
        %1018 = vperm.xlu0 %1017, %v819
        %v1019 = vpop.permute.xlu0 %1018
        %1021 = vset.pattern.permute.xlu0 1
        %1022 = vperm.xlu0 %1021, %v820
        %v1023 = vpop.permute.xlu0 %1022
        %1025 = vset.pattern.permute.xlu0 1
        %1026 = vperm.xlu0 %1025, %v821
        %v1027 = vpop.permute.xlu0 %1026
        %1029 = vset.pattern.permute.xlu0 1
        %1030 = vperm.xlu0 %1029, %v822
        %v1031 = vpop.permute.xlu0 %1030
        %1033 = vset.pattern.permute.xlu0 1
        %1034 = vperm.xlu0 %1033, %v823
        %v1035 = vpop.permute.xlu0 %1034
        %1037 = vset.pattern.permute.xlu0 1
        %1038 = vperm.xlu0 %1037, %v824
        %v1039 = vpop.permute.xlu0 %1038
        %1041 = vset.pattern.permute.xlu0 1
        %1042 = vperm.xlu0 %1041, %v825
        %v1043 = vpop.permute.xlu0 %1042
        %1045 = vset.pattern.permute.xlu0 1
        %1046 = vperm.xlu0 %1045, %v826
        %v1047 = vpop.permute.xlu0 %1046
        %1049 = vset.pattern.permute.xlu0 1
        %1050 = vperm.xlu0 %1049, %v827
        %v1051 = vpop.permute.xlu0 %1050
        %1053 = vset.pattern.permute.xlu0 1
        %1054 = vperm.xlu0 %1053, %v828
        %v1055 = vpop.permute.xlu0 %1054
        %1057 = vset.pattern.permute.xlu0 1
        %1058 = vperm.xlu0 %1057, %v829
        %v1059 = vpop.permute.xlu0 %1058
        %1061 = vset.pattern.permute.xlu0 1
        %1062 = vperm.xlu0 %1061, %v830
        %v1063 = vpop.permute.xlu0 %1062
        %1065 = vset.pattern.permute.xlu0 1
        %1066 = vperm.xlu0 %1065, %v831
        %v1067 = vpop.permute.xlu0 %1066
        %1069 = vset.pattern.permute.xlu0 1
        %1070 = vperm.xlu0 %1069, %v832
        %v1071 = vpop.permute.xlu0 %1070
        %1073 = vset.pattern.permute.xlu0 1
        %1074 = vperm.xlu0 %1073, %v833
        %v1075 = vpop.permute.xlu0 %1074
        %1077 = vset.pattern.permute.xlu0 1
        %1078 = vperm.xlu0 %1077, %v834
        %v1079 = vpop.permute.xlu0 %1078
        %1081 = vset.pattern.permute.xlu0 1
        %1082 = vperm.xlu0 %1081, %v835
        %v1083 = vpop.permute.xlu0 %1082
        %1085 = vset.pattern.permute.xlu0 1
        %1086 = vperm.xlu0 %1085, %v836
        %v1087 = vpop.permute.xlu0 %1086
        %1089 = vset.pattern.permute.xlu0 1
        %1090 = vperm.xlu0 %1089, %v837
        %v1091 = vpop.permute.xlu0 %1090
        %1093 = vset.pattern.permute.xlu0 1
        %1094 = vperm.xlu0 %1093, %v838
        %v1095 = vpop.permute.xlu0 %1094
        %1097 = vset.pattern.permute.xlu0 1
        %1098 = vperm.xlu0 %1097, %v839
        %v1099 = vpop.permute.xlu0 %1098
        %1101 = vset.pattern.permute.xlu0 1
        %1102 = vperm.xlu0 %1101, %v840
        %v1103 = vpop.permute.xlu0 %1102
        %1105 = vset.pattern.permute.xlu0 1
        %1106 = vperm.xlu0 %1105, %v841
        %v1107 = vpop.permute.xlu0 %1106
        %1109 = vset.pattern.permute.xlu0 1
        %1110 = vperm.xlu0 %1109, %v842
        %v1111 = vpop.permute.xlu0 %1110
        %1113 = vset.pattern.permute.xlu0 1
        %1114 = vperm.xlu0 %1113, %v843
        %v1115 = vpop.permute.xlu0 %1114
        %1117 = vset.pattern.permute.xlu0 1
        %1118 = vperm.xlu0 %1117, %v844
        %v1119 = vpop.permute.xlu0 %1118
        %1121 = vset.pattern.permute.xlu0 1
        %1122 = vperm.xlu0 %1121, %v845
        %v1123 = vpop.permute.xlu0 %1122
        %1125 = vset.pattern.permute.xlu0 1
        %1126 = vperm.xlu0 %1125, %v846
        %v1127 = vpop.permute.xlu0 %1126
        %1129 = vset.pattern.permute.xlu0 1
        %1130 = vperm.xlu0 %1129, %v847
        %v1131 = vpop.permute.xlu0 %1130
        %1133 = vset.pattern.permute.xlu0 1
        %1134 = vperm.xlu0 %1133, %v848
        %v1135 = vpop.permute.xlu0 %1134
        %1137 = vset.pattern.permute.xlu0 2
        %1138 = vperm.xlu0 %1137, %v817
        %v1139 = vpop.permute.xlu0 %1138
        %1141 = vset.pattern.permute.xlu0 2
        %1142 = vperm.xlu0 %1141, %v818
        %v1143 = vpop.permute.xlu0 %1142
        %1145 = vset.pattern.permute.xlu0 2
        %1146 = vperm.xlu0 %1145, %v819
        %v1147 = vpop.permute.xlu0 %1146
        %1149 = vset.pattern.permute.xlu0 2
        %1150 = vperm.xlu0 %1149, %v820
        %v1151 = vpop.permute.xlu0 %1150
        %1153 = vset.pattern.permute.xlu0 2
        %1154 = vperm.xlu0 %1153, %v821
        %v1155 = vpop.permute.xlu0 %1154
        %1157 = vset.pattern.permute.xlu0 2
        %1158 = vperm.xlu0 %1157, %v822
        %v1159 = vpop.permute.xlu0 %1158
        %1161 = vset.pattern.permute.xlu0 2
        %1162 = vperm.xlu0 %1161, %v823
        %v1163 = vpop.permute.xlu0 %1162
        %1165 = vset.pattern.permute.xlu0 2
        %1166 = vperm.xlu0 %1165, %v824
        %v1167 = vpop.permute.xlu0 %1166
        %1169 = vset.pattern.permute.xlu0 2
        %1170 = vperm.xlu0 %1169, %v825
        %v1171 = vpop.permute.xlu0 %1170
        %1173 = vset.pattern.permute.xlu0 2
        %1174 = vperm.xlu0 %1173, %v826
        %v1175 = vpop.permute.xlu0 %1174
        %1177 = vset.pattern.permute.xlu0 2
        %1178 = vperm.xlu0 %1177, %v827
        %v1179 = vpop.permute.xlu0 %1178
        %1181 = vset.pattern.permute.xlu0 2
        %1182 = vperm.xlu0 %1181, %v828
        %v1183 = vpop.permute.xlu0 %1182
        %1185 = vset.pattern.permute.xlu0 2
        %1186 = vperm.xlu0 %1185, %v829
        %v1187 = vpop.permute.xlu0 %1186
        %1189 = vset.pattern.permute.xlu0 2
        %1190 = vperm.xlu0 %1189, %v830
        %v1191 = vpop.permute.xlu0 %1190
        %1193 = vset.pattern.permute.xlu0 2
        %1194 = vperm.xlu0 %1193, %v831
        %v1195 = vpop.permute.xlu0 %1194
        %1197 = vset.pattern.permute.xlu0 2
        %1198 = vperm.xlu0 %1197, %v832
        %v1199 = vpop.permute.xlu0 %1198
        %1201 = vset.pattern.permute.xlu0 2
        %1202 = vperm.xlu0 %1201, %v833
        %v1203 = vpop.permute.xlu0 %1202
        %1205 = vset.pattern.permute.xlu0 2
        %1206 = vperm.xlu0 %1205, %v834
        %v1207 = vpop.permute.xlu0 %1206
        %1209 = vset.pattern.permute.xlu0 2
        %1210 = vperm.xlu0 %1209, %v835
        %v1211 = vpop.permute.xlu0 %1210
        %1213 = vset.pattern.permute.xlu0 2
        %1214 = vperm.xlu0 %1213, %v836
        %v1215 = vpop.permute.xlu0 %1214
        %1217 = vset.pattern.permute.xlu0 2
        %1218 = vperm.xlu0 %1217, %v837
        %v1219 = vpop.permute.xlu0 %1218
        %1221 = vset.pattern.permute.xlu0 2
        %1222 = vperm.xlu0 %1221, %v838
        %v1223 = vpop.permute.xlu0 %1222
        %1225 = vset.pattern.permute.xlu0 2
        %1226 = vperm.xlu0 %1225, %v839
        %v1227 = vpop.permute.xlu0 %1226
        %1229 = vset.pattern.permute.xlu0 2
        %1230 = vperm.xlu0 %1229, %v840
        %v1231 = vpop.permute.xlu0 %1230
        %1233 = vset.pattern.permute.xlu0 2
        %1234 = vperm.xlu0 %1233, %v841
        %v1235 = vpop.permute.xlu0 %1234
        %1237 = vset.pattern.permute.xlu0 2
        %1238 = vperm.xlu0 %1237, %v842
        %v1239 = vpop.permute.xlu0 %1238
        %1241 = vset.pattern.permute.xlu0 2
        %1242 = vperm.xlu0 %1241, %v843
        %v1243 = vpop.permute.xlu0 %1242
        %1245 = vset.pattern.permute.xlu0 2
        %1246 = vperm.xlu0 %1245, %v844
        %v1247 = vpop.permute.xlu0 %1246
        %1249 = vset.pattern.permute.xlu0 2
        %1250 = vperm.xlu0 %1249, %v845
        %v1251 = vpop.permute.xlu0 %1250
        %1253 = vset.pattern.permute.xlu0 2
        %1254 = vperm.xlu0 %1253, %v846
        %v1255 = vpop.permute.xlu0 %1254
        %1257 = vset.pattern.permute.xlu0 2
        %1258 = vperm.xlu0 %1257, %v847
        %v1259 = vpop.permute.xlu0 %1258
        %1261 = vset.pattern.permute.xlu0 2
        %1262 = vperm.xlu0 %1261, %v848
        %v1263 = vpop.permute.xlu0 %1262
        %1265 = vset.pattern.permute.xlu0 3
        %1266 = vperm.xlu0 %1265, %v817
        %v1267 = vpop.permute.xlu0 %1266
        %1269 = vset.pattern.permute.xlu0 3
        %1270 = vperm.xlu0 %1269, %v818
        %v1271 = vpop.permute.xlu0 %1270
        %1273 = vset.pattern.permute.xlu0 3
        %1274 = vperm.xlu0 %1273, %v819
        %v1275 = vpop.permute.xlu0 %1274
        %1277 = vset.pattern.permute.xlu0 3
        %1278 = vperm.xlu0 %1277, %v820
        %v1279 = vpop.permute.xlu0 %1278
        %1281 = vset.pattern.permute.xlu0 3
        %1282 = vperm.xlu0 %1281, %v821
        %v1283 = vpop.permute.xlu0 %1282
        %1285 = vset.pattern.permute.xlu0 3
        %1286 = vperm.xlu0 %1285, %v822
        %v1287 = vpop.permute.xlu0 %1286
        %1289 = vset.pattern.permute.xlu0 3
        %1290 = vperm.xlu0 %1289, %v823
        %v1291 = vpop.permute.xlu0 %1290
        %1293 = vset.pattern.permute.xlu0 3
        %1294 = vperm.xlu0 %1293, %v824
        %v1295 = vpop.permute.xlu0 %1294
        %1297 = vset.pattern.permute.xlu0 3
        %1298 = vperm.xlu0 %1297, %v825
        %v1299 = vpop.permute.xlu0 %1298
        %1301 = vset.pattern.permute.xlu0 3
        %1302 = vperm.xlu0 %1301, %v826
        %v1303 = vpop.permute.xlu0 %1302
        %1305 = vset.pattern.permute.xlu0 3
        %1306 = vperm.xlu0 %1305, %v827
        %v1307 = vpop.permute.xlu0 %1306
        %1309 = vset.pattern.permute.xlu0 3
        %1310 = vperm.xlu0 %1309, %v828
        %v1311 = vpop.permute.xlu0 %1310
        %1313 = vset.pattern.permute.xlu0 3
        %1314 = vperm.xlu0 %1313, %v829
        %v1315 = vpop.permute.xlu0 %1314
        %1317 = vset.pattern.permute.xlu0 3
        %1318 = vperm.xlu0 %1317, %v830
        %v1319 = vpop.permute.xlu0 %1318
        %1321 = vset.pattern.permute.xlu0 3
        %1322 = vperm.xlu0 %1321, %v831
        %v1323 = vpop.permute.xlu0 %1322
        %1325 = vset.pattern.permute.xlu0 3
        %1326 = vperm.xlu0 %1325, %v832
        %v1327 = vpop.permute.xlu0 %1326
        %1329 = vset.pattern.permute.xlu0 3
        %1330 = vperm.xlu0 %1329, %v833
        %v1331 = vpop.permute.xlu0 %1330
        %1333 = vset.pattern.permute.xlu0 3
        %1334 = vperm.xlu0 %1333, %v834
        %v1335 = vpop.permute.xlu0 %1334
        %1337 = vset.pattern.permute.xlu0 3
        %1338 = vperm.xlu0 %1337, %v835
        %v1339 = vpop.permute.xlu0 %1338
        %1341 = vset.pattern.permute.xlu0 3
        %1342 = vperm.xlu0 %1341, %v836
        %v1343 = vpop.permute.xlu0 %1342
        %1345 = vset.pattern.permute.xlu0 3
        %1346 = vperm.xlu0 %1345, %v837
        %v1347 = vpop.permute.xlu0 %1346
        %1349 = vset.pattern.permute.xlu0 3
        %1350 = vperm.xlu0 %1349, %v838
        %v1351 = vpop.permute.xlu0 %1350
        %1353 = vset.pattern.permute.xlu0 3
        %1354 = vperm.xlu0 %1353, %v839
        %v1355 = vpop.permute.xlu0 %1354
        %1357 = vset.pattern.permute.xlu0 3
        %1358 = vperm.xlu0 %1357, %v840
        %v1359 = vpop.permute.xlu0 %1358
        %1361 = vset.pattern.permute.xlu0 3
        %1362 = vperm.xlu0 %1361, %v841
        %v1363 = vpop.permute.xlu0 %1362
        %1365 = vset.pattern.permute.xlu0 3
        %1366 = vperm.xlu0 %1365, %v842
        %v1367 = vpop.permute.xlu0 %1366
        %1369 = vset.pattern.permute.xlu0 3
        %1370 = vperm.xlu0 %1369, %v843
        %v1371 = vpop.permute.xlu0 %1370
        %1373 = vset.pattern.permute.xlu0 3
        %1374 = vperm.xlu0 %1373, %v844
        %v1375 = vpop.permute.xlu0 %1374
        %1377 = vset.pattern.permute.xlu0 3
        %1378 = vperm.xlu0 %1377, %v845
        %v1379 = vpop.permute.xlu0 %1378
        %1381 = vset.pattern.permute.xlu0 3
        %1382 = vperm.xlu0 %1381, %v846
        %v1383 = vpop.permute.xlu0 %1382
        %1385 = vset.pattern.permute.xlu0 3
        %1386 = vperm.xlu0 %1385, %v847
        %v1387 = vpop.permute.xlu0 %1386
        %1389 = vset.pattern.permute.xlu0 3
        %1390 = vperm.xlu0 %1389, %v848
        %v1391 = vpop.permute.xlu0 %1390
        %v1393 = vpack.c.bf16 %v786, %v785
        %v1394 = vpack.c.bf16 %v788, %v787
        %v1395 = vpack.c.bf16 %v790, %v789
        %v1396 = vpack.c.bf16 %v792, %v791
        %v1397 = vpack.c.bf16 %v794, %v793
        %v1398 = vpack.c.bf16 %v796, %v795
        %v1399 = vpack.c.bf16 %v798, %v797
        %v1400 = vpack.c.bf16 %v800, %v799
        %v1401 = vpack.c.bf16 %v802, %v801
        %v1402 = vpack.c.bf16 %v804, %v803
        %v1403 = vpack.c.bf16 %v806, %v805
        %v1404 = vpack.c.bf16 %v808, %v807
        %v1405 = vpack.c.bf16 %v810, %v809
        %v1406 = vpack.c.bf16 %v812, %v811
        %v1407 = vpack.c.bf16 %v814, %v813
        %v1408 = vpack.c.bf16 %v816, %v815
        %v1409 = vld [vmem:[#allocation5] sm:$0xf]
        %v1410 = vld [vmem:[#allocation5 + $0x4] sm:$0xf]
        %v1411 = vld [vmem:[#allocation5 + $0x8] sm:$0xf]
        %v1412 = vld [vmem:[#allocation5 + $0xc] sm:$0xf]
        %v1413 = vld [vmem:[#allocation5 + $0x10] sm:$0xf]
        %v1414 = vld [vmem:[#allocation5 + $0x14] sm:$0xf]
        %v1415 = vld [vmem:[#allocation5 + $0x18] sm:$0xf]
        %v1416 = vld [vmem:[#allocation5 + $0x1c] sm:$0xf]
        %v1417 = vld [vmem:[#allocation5 + $0x20] sm:$0xf]
        %v1418 = vld [vmem:[#allocation5 + $0x24] sm:$0xf]
        %v1419 = vld [vmem:[#allocation5 + $0x28] sm:$0xf]
        %v1420 = vld [vmem:[#allocation5 + $0x2c] sm:$0xf]
        %v1421 = vld [vmem:[#allocation5 + $0x30] sm:$0xf]
        %v1422 = vld [vmem:[#allocation5 + $0x34] sm:$0xf]
        %v1423 = vld [vmem:[#allocation5 + $0x38] sm:$0xf]
        %v1424 = vld [vmem:[#allocation5 + $0x3c] sm:$0xf]
        %v1441 = vunpack.c.l.b16 %v1409
        %v1442 = vunpack.c.l.b16 %v1410
        %v1443 = vunpack.c.l.b16 %v1411
        %v1444 = vunpack.c.l.b16 %v1412
        %v1445 = vunpack.c.l.b16 %v1413
        %v1446 = vunpack.c.l.b16 %v1414
        %v1447 = vunpack.c.l.b16 %v1415
        %v1448 = vunpack.c.l.b16 %v1416
        %v1449 = vunpack.c.l.b16 %v1417
        %v1450 = vunpack.c.l.b16 %v1418
        %v1451 = vunpack.c.l.b16 %v1419
        %v1452 = vunpack.c.l.b16 %v1420
        %v1453 = vunpack.c.l.b16 %v1421
        %v1454 = vunpack.c.l.b16 %v1422
        %v1455 = vunpack.c.l.b16 %v1423
        %v1456 = vunpack.c.l.b16 %v1424
        %v1457 = vpack.c.b16 %v1442, %v1441
        %v1458 = vpack.c.b16 %v1444, %v1443
        %v1459 = vpack.c.b16 %v1446, %v1445
        %v1460 = vpack.c.b16 %v1448, %v1447
        %v1461 = vpack.c.b16 %v1450, %v1449
        %v1462 = vpack.c.b16 %v1452, %v1451
        %v1463 = vpack.c.b16 %v1454, %v1453
        %v1464 = vpack.c.b16 %v1456, %v1455
        %1473 = vmatpush.bf16.msra.mxu0 %v1464
        %1474 = vmatpush.bf16.msra.mxu0 %v1463
        %1475 = vmatpush.bf16.msra.mxu0 %v1462
        %1476 = vmatpush.bf16.msra.mxu0 %v1461
        %1477 = vmatpush.bf16.msra.mxu0 %v1460
        %1478 = vmatpush.bf16.msra.mxu0 %v1459
        %1479 = vmatpush.bf16.msra.mxu0 %v1458
        %1480 = vmatpush.bf16.msra.mxu0 %v1457
        %1481 = vmatmul.bf16.gmra.mxu0 %v1393
        %v1482 = vpop.f32.mrf.mxu0
        %v1483 = vadd.f32 0.0, %v1482
        %v1484 = vpop.f32.mrf.mxu0
        %v1485 = vadd.f32 0.0, %v1484
        %1486 = vmatmul.bf16.gmra.mxu0 %v1394
        %v1487 = vpop.f32.mrf.mxu0
        %v1488 = vadd.f32 0.0, %v1487
        %v1489 = vpop.f32.mrf.mxu0
        %v1490 = vadd.f32 0.0, %v1489
        %1491 = vmatmul.bf16.gmra.mxu0 %v1395
        %v1492 = vpop.f32.mrf.mxu0
        %v1493 = vadd.f32 0.0, %v1492
        %v1494 = vpop.f32.mrf.mxu0
        %v1495 = vadd.f32 0.0, %v1494
        %1496 = vmatmul.bf16.gmra.mxu0 %v1396
        %v1497 = vpop.f32.mrf.mxu0
        %v1498 = vadd.f32 0.0, %v1497
        %v1499 = vpop.f32.mrf.mxu0
        %v1500 = vadd.f32 0.0, %v1499
        %1501 = vmatmul.bf16.gmra.mxu0 %v1397
        %v1502 = vpop.f32.mrf.mxu0
        %v1503 = vadd.f32 0.0, %v1502
        %v1504 = vpop.f32.mrf.mxu0
        %v1505 = vadd.f32 0.0, %v1504
        %1506 = vmatmul.bf16.gmra.mxu0 %v1398
        %v1507 = vpop.f32.mrf.mxu0
        %v1508 = vadd.f32 0.0, %v1507
        %v1509 = vpop.f32.mrf.mxu0
        %v1510 = vadd.f32 0.0, %v1509
        %1511 = vmatmul.bf16.gmra.mxu0 %v1399
        %v1512 = vpop.f32.mrf.mxu0
        %v1513 = vadd.f32 0.0, %v1512
        %v1514 = vpop.f32.mrf.mxu0
        %v1515 = vadd.f32 0.0, %v1514
        %1516 = vmatmul.bf16.gmra.mxu0 %v1400
        %v1517 = vpop.f32.mrf.mxu0
        %v1518 = vadd.f32 0.0, %v1517
        %v1519 = vpop.f32.mrf.mxu0
        %v1520 = vadd.f32 0.0, %v1519
        %1521 = vmatmul.bf16.gmra.mxu0 %v1401
        %v1522 = vpop.f32.mrf.mxu0
        %v1523 = vadd.f32 0.0, %v1522
        %v1524 = vpop.f32.mrf.mxu0
        %v1525 = vadd.f32 0.0, %v1524
        %1526 = vmatmul.bf16.gmra.mxu0 %v1402
        %v1527 = vpop.f32.mrf.mxu0
        %v1528 = vadd.f32 0.0, %v1527
        %v1529 = vpop.f32.mrf.mxu0
        %v1530 = vadd.f32 0.0, %v1529
        %1531 = vmatmul.bf16.gmra.mxu0 %v1403
        %v1532 = vpop.f32.mrf.mxu0
        %v1533 = vadd.f32 0.0, %v1532
        %v1534 = vpop.f32.mrf.mxu0
        %v1535 = vadd.f32 0.0, %v1534
        %1536 = vmatmul.bf16.gmra.mxu0 %v1404
        %v1537 = vpop.f32.mrf.mxu0
        %v1538 = vadd.f32 0.0, %v1537
        %v1539 = vpop.f32.mrf.mxu0
        %v1540 = vadd.f32 0.0, %v1539
        %1541 = vmatmul.bf16.gmra.mxu0 %v1405
        %v1542 = vpop.f32.mrf.mxu0
        %v1543 = vadd.f32 0.0, %v1542
        %v1544 = vpop.f32.mrf.mxu0
        %v1545 = vadd.f32 0.0, %v1544
        %1546 = vmatmul.bf16.gmra.mxu0 %v1406
        %v1547 = vpop.f32.mrf.mxu0
        %v1548 = vadd.f32 0.0, %v1547
        %v1549 = vpop.f32.mrf.mxu0
        %v1550 = vadd.f32 0.0, %v1549
        %1551 = vmatmul.bf16.gmra.mxu0 %v1407
        %v1552 = vpop.f32.mrf.mxu0
        %v1553 = vadd.f32 0.0, %v1552
        %v1554 = vpop.f32.mrf.mxu0
        %v1555 = vadd.f32 0.0, %v1554
        %1556 = vmatmul.bf16.gmra.mxu0 %v1408
        %v1557 = vpop.f32.mrf.mxu0
        %v1558 = vadd.f32 0.0, %v1557
        %v1559 = vpop.f32.mrf.mxu0
        %v1560 = vadd.f32 0.0, %v1559
        %1561 = vdwg.mxu0
        %v1562 = vld [vmem:[%s5] sm:$0xff]
        %v1563 = vld [vmem:[%s5 + $0x8] sm:$0x1]
        %v1564 = vrot.slane %v1483, 7
        %v1565 = vrot.slane %v1485, 7
        %v1566 = vrot.slane %v1488, 7
        %v1567 = vrot.slane %v1490, 7
        %v1568 = vrot.slane %v1493, 7
        %v1569 = vrot.slane %v1495, 7
        %v1570 = vrot.slane %v1498, 7
        %v1571 = vrot.slane %v1500, 7
        %v1572 = vrot.slane %v1503, 7
        %v1573 = vrot.slane %v1505, 7
        %v1574 = vrot.slane %v1508, 7
        %v1575 = vrot.slane %v1510, 7
        %v1576 = vrot.slane %v1513, 7
        %v1577 = vrot.slane %v1515, 7
        %v1578 = vrot.slane %v1518, 7
        %v1579 = vrot.slane %v1520, 7
        %v1580 = vrot.slane %v1523, 7
        %v1581 = vrot.slane %v1525, 7
        %v1582 = vrot.slane %v1528, 7
        %v1583 = vrot.slane %v1530, 7
        %v1584 = vrot.slane %v1533, 7
        %v1585 = vrot.slane %v1535, 7
        %v1586 = vrot.slane %v1538, 7
        %v1587 = vrot.slane %v1540, 7
        %v1588 = vrot.slane %v1543, 7
        %v1589 = vrot.slane %v1545, 7
        %v1590 = vrot.slane %v1548, 7
        %v1591 = vrot.slane %v1550, 7
        %v1592 = vrot.slane %v1553, 7
        %v1593 = vrot.slane %v1555, 7
        %v1594 = vrot.slane %v1558, 7
        %v1595 = vrot.slane %v1560, 7
        %v1596 = vlaneseq
        %v1597 = vshrl.u32 %v1596, 7
        %vm1598 = vcmp.lt.s32.totalorder %v1597, 1
        %v1599 = vsel %vm1598, %v1594, %v1595
        %v1600 = vsel %vm1598, %v1593, %v1594
        %v1601 = vsel %vm1598, %v1592, %v1593
        %v1602 = vsel %vm1598, %v1591, %v1592
        %v1603 = vsel %vm1598, %v1590, %v1591
        %v1604 = vsel %vm1598, %v1589, %v1590
        %v1605 = vsel %vm1598, %v1588, %v1589
        %v1606 = vsel %vm1598, %v1587, %v1588
        %v1607 = vsel %vm1598, %v1586, %v1587
        %v1608 = vsel %vm1598, %v1585, %v1586
        %v1609 = vsel %vm1598, %v1584, %v1585
        %v1610 = vsel %vm1598, %v1583, %v1584
        %v1611 = vsel %vm1598, %v1582, %v1583
        %v1612 = vsel %vm1598, %v1581, %v1582
        %v1613 = vsel %vm1598, %v1580, %v1581
        %v1614 = vsel %vm1598, %v1579, %v1580
        %v1615 = vsel %vm1598, %v1578, %v1579
        %v1616 = vsel %vm1598, %v1577, %v1578
        %v1617 = vsel %vm1598, %v1576, %v1577
        %v1618 = vsel %vm1598, %v1575, %v1576
        %v1619 = vsel %vm1598, %v1574, %v1575
        %v1620 = vsel %vm1598, %v1573, %v1574
        %v1621 = vsel %vm1598, %v1572, %v1573
        %v1622 = vsel %vm1598, %v1571, %v1572
        %v1623 = vsel %vm1598, %v1570, %v1571
        %v1624 = vsel %vm1598, %v1569, %v1570
        %v1625 = vsel %vm1598, %v1568, %v1569
        %v1626 = vsel %vm1598, %v1567, %v1568
        %v1627 = vsel %vm1598, %v1566, %v1567
        %v1628 = vsel %vm1598, %v1565, %v1566
        %v1629 = vsel %vm1598, %v1564, %v1565
        %v1630 = vsel %vm1598, %v1595, %v1564
        %v1631 = vmul.f32 %v1630, %v852
        %v1632 = vmul.f32 %v1629, %v857
        %v1633 = vmul.f32 %v1628, %v862
        %v1634 = vmul.f32 %v1627, %v867
        %v1635 = vmul.f32 %v1626, %v872
        %v1636 = vmul.f32 %v1625, %v877
        %v1637 = vmul.f32 %v1624, %v882
        %v1638 = vmul.f32 %v1623, %v887
        %v1639 = vmul.f32 %v1622, %v892
        %v1640 = vmul.f32 %v1621, %v897
        %v1641 = vmul.f32 %v1620, %v902
        %v1642 = vmul.f32 %v1619, %v907
        %v1643 = vmul.f32 %v1618, %v912
        %v1644 = vmul.f32 %v1617, %v917
        %v1645 = vmul.f32 %v1616, %v922
        %v1646 = vmul.f32 %v1615, %v927
        %v1647 = vmul.f32 %v1614, %v932
        %v1648 = vmul.f32 %v1613, %v937
        %v1649 = vmul.f32 %v1612, %v942
        %v1650 = vmul.f32 %v1611, %v947
        %v1651 = vmul.f32 %v1610, %v952
        %v1652 = vmul.f32 %v1609, %v957
        %v1653 = vmul.f32 %v1608, %v962
        %v1654 = vmul.f32 %v1607, %v967
        %v1655 = vmul.f32 %v1606, %v972
        %v1656 = vmul.f32 %v1605, %v977
        %v1657 = vmul.f32 %v1604, %v982
        %v1658 = vmul.f32 %v1603, %v987
        %v1659 = vmul.f32 %v1602, %v992
        %v1660 = vmul.f32 %v1601, %v997
        %v1661 = vmul.f32 %v1600, %v1002
        %v1662 = vmul.f32 %v1599, %v1007
        %v1663 = vrot.slane %v1483, 1
        %v1664 = vrot.slane %v1485, 1
        %v1665 = vrot.slane %v1488, 1
        %v1666 = vrot.slane %v1490, 1
        %v1667 = vrot.slane %v1493, 1
        %v1668 = vrot.slane %v1495, 1
        %v1669 = vrot.slane %v1498, 1
        %v1670 = vrot.slane %v1500, 1
        %v1671 = vrot.slane %v1503, 1
        %v1672 = vrot.slane %v1505, 1
        %v1673 = vrot.slane %v1508, 1
        %v1674 = vrot.slane %v1510, 1
        %v1675 = vrot.slane %v1513, 1
        %v1676 = vrot.slane %v1515, 1
        %v1677 = vrot.slane %v1518, 1
        %v1678 = vrot.slane %v1520, 1
        %v1679 = vrot.slane %v1523, 1
        %v1680 = vrot.slane %v1525, 1
        %v1681 = vrot.slane %v1528, 1
        %v1682 = vrot.slane %v1530, 1
        %v1683 = vrot.slane %v1533, 1
        %v1684 = vrot.slane %v1535, 1
        %v1685 = vrot.slane %v1538, 1
        %v1686 = vrot.slane %v1540, 1
        %v1687 = vrot.slane %v1543, 1
        %v1688 = vrot.slane %v1545, 1
        %v1689 = vrot.slane %v1548, 1
        %v1690 = vrot.slane %v1550, 1
        %v1691 = vrot.slane %v1553, 1
        %v1692 = vrot.slane %v1555, 1
        %v1693 = vrot.slane %v1558, 1
        %v1694 = vrot.slane %v1560, 1
        %vm1695 = vcmp.lt.s32.totalorder %v1597, 7
        %v1696 = vsel %vm1695, %v1693, %v1694
        %v1697 = vsel %vm1695, %v1692, %v1693
        %v1698 = vsel %vm1695, %v1691, %v1692
        %v1699 = vsel %vm1695, %v1690, %v1691
        %v1700 = vsel %vm1695, %v1689, %v1690
        %v1701 = vsel %vm1695, %v1688, %v1689
        %v1702 = vsel %vm1695, %v1687, %v1688
        %v1703 = vsel %vm1695, %v1686, %v1687
        %v1704 = vsel %vm1695, %v1685, %v1686
        %v1705 = vsel %vm1695, %v1684, %v1685
        %v1706 = vsel %vm1695, %v1683, %v1684
        %v1707 = vsel %vm1695, %v1682, %v1683
        %v1708 = vsel %vm1695, %v1681, %v1682
        %v1709 = vsel %vm1695, %v1680, %v1681
        %v1710 = vsel %vm1695, %v1679, %v1680
        %v1711 = vsel %vm1695, %v1678, %v1679
        %v1712 = vsel %vm1695, %v1677, %v1678
        %v1713 = vsel %vm1695, %v1676, %v1677
        %v1714 = vsel %vm1695, %v1675, %v1676
        %v1715 = vsel %vm1695, %v1674, %v1675
        %v1716 = vsel %vm1695, %v1673, %v1674
        %v1717 = vsel %vm1695, %v1672, %v1673
        %v1718 = vsel %vm1695, %v1671, %v1672
        %v1719 = vsel %vm1695, %v1670, %v1671
        %v1720 = vsel %vm1695, %v1669, %v1670
        %v1721 = vsel %vm1695, %v1668, %v1669
        %v1722 = vsel %vm1695, %v1667, %v1668
        %v1723 = vsel %vm1695, %v1666, %v1667
        %v1724 = vsel %vm1695, %v1665, %v1666
        %v1725 = vsel %vm1695, %v1664, %v1665
        %v1726 = vsel %vm1695, %v1663, %v1664
        %v1727 = vsel %vm1695, %v1694, %v1663
        %v1728 = vmul.f32 %v1726, %v1011
        %v1729 = vmul.f32 %v1725, %v1015
        %v1730 = vmul.f32 %v1724, %v1019
        %v1731 = vmul.f32 %v1723, %v1023
        %v1732 = vmul.f32 %v1722, %v1027
        %v1733 = vmul.f32 %v1721, %v1031
        %v1734 = vmul.f32 %v1720, %v1035
        %v1735 = vmul.f32 %v1719, %v1039
        %v1736 = vmul.f32 %v1718, %v1043
        %v1737 = vmul.f32 %v1717, %v1047
        %v1738 = vmul.f32 %v1716, %v1051
        %v1739 = vmul.f32 %v1715, %v1055
        %v1740 = vmul.f32 %v1714, %v1059
        %v1741 = vmul.f32 %v1713, %v1063
        %v1742 = vmul.f32 %v1712, %v1067
        %v1743 = vmul.f32 %v1711, %v1071
        %v1744 = vmul.f32 %v1710, %v1075
        %v1745 = vmul.f32 %v1709, %v1079
        %v1746 = vmul.f32 %v1708, %v1083
        %v1747 = vmul.f32 %v1707, %v1087
        %v1748 = vmul.f32 %v1706, %v1091
        %v1749 = vmul.f32 %v1705, %v1095
        %v1750 = vmul.f32 %v1704, %v1099
        %v1751 = vmul.f32 %v1703, %v1103
        %v1752 = vmul.f32 %v1702, %v1107
        %v1753 = vmul.f32 %v1701, %v1111
        %v1754 = vmul.f32 %v1700, %v1115
        %v1755 = vmul.f32 %v1699, %v1119
        %v1756 = vmul.f32 %v1698, %v1123
        %v1757 = vmul.f32 %v1697, %v1127
        %v1758 = vmul.f32 %v1696, %v1131
        %v1759 = vmul.f32 %v1727, %v1135
        %v1760 = vperm.slane %v1562, 0
        %v1761 = vmul.f32 %v1631, %v1760
        %v1762 = vmul.f32 %v1632, %v1760
        %v1763 = vmul.f32 %v1633, %v1760
        %v1764 = vmul.f32 %v1634, %v1760
        %v1765 = vmul.f32 %v1635, %v1760
        %v1766 = vmul.f32 %v1636, %v1760
        %v1767 = vmul.f32 %v1637, %v1760
        %v1768 = vmul.f32 %v1638, %v1760
        %v1769 = vmul.f32 %v1639, %v1760
        %v1770 = vmul.f32 %v1640, %v1760
        %v1771 = vmul.f32 %v1641, %v1760
        %v1772 = vmul.f32 %v1642, %v1760
        %v1773 = vmul.f32 %v1643, %v1760
        %v1774 = vmul.f32 %v1644, %v1760
        %v1775 = vmul.f32 %v1645, %v1760
        %v1776 = vmul.f32 %v1646, %v1760
        %v1777 = vmul.f32 %v1647, %v1760
        %v1778 = vmul.f32 %v1648, %v1760
        %v1779 = vmul.f32 %v1649, %v1760
        %v1780 = vmul.f32 %v1650, %v1760
        %v1781 = vmul.f32 %v1651, %v1760
        %v1782 = vmul.f32 %v1652, %v1760
        %v1783 = vmul.f32 %v1653, %v1760
        %v1784 = vmul.f32 %v1654, %v1760
        %v1785 = vmul.f32 %v1655, %v1760
        %v1786 = vmul.f32 %v1656, %v1760
        %v1787 = vmul.f32 %v1657, %v1760
        %v1788 = vmul.f32 %v1658, %v1760
        %v1789 = vmul.f32 %v1659, %v1760
        %v1790 = vmul.f32 %v1660, %v1760
        %v1791 = vmul.f32 %v1661, %v1760
        %v1792 = vmul.f32 %v1662, %v1760
        %v1793 = vperm.slane %v1562, 1
        %v1794 = vmul.f32 %v1483, %v1793
        %v1795 = vmul.f32 %v1485, %v1793
        %v1796 = vmul.f32 %v1488, %v1793
        %v1797 = vmul.f32 %v1490, %v1793
        %v1798 = vmul.f32 %v1493, %v1793
        %v1799 = vmul.f32 %v1495, %v1793
        %v1800 = vmul.f32 %v1498, %v1793
        %v1801 = vmul.f32 %v1500, %v1793
        %v1802 = vmul.f32 %v1503, %v1793
        %v1803 = vmul.f32 %v1505, %v1793
        %v1804 = vmul.f32 %v1508, %v1793
        %v1805 = vmul.f32 %v1510, %v1793
        %v1806 = vmul.f32 %v1513, %v1793
        %v1807 = vmul.f32 %v1515, %v1793
        %v1808 = vmul.f32 %v1518, %v1793
        %v1809 = vmul.f32 %v1520, %v1793
        %v1810 = vmul.f32 %v1523, %v1793
        %v1811 = vmul.f32 %v1525, %v1793
        %v1812 = vmul.f32 %v1528, %v1793
        %v1813 = vmul.f32 %v1530, %v1793
        %v1814 = vmul.f32 %v1533, %v1793
        %v1815 = vmul.f32 %v1535, %v1793
        %v1816 = vmul.f32 %v1538, %v1793
        %v1817 = vmul.f32 %v1540, %v1793
        %v1818 = vmul.f32 %v1543, %v1793
        %v1819 = vmul.f32 %v1545, %v1793
        %v1820 = vmul.f32 %v1548, %v1793
        %v1821 = vmul.f32 %v1550, %v1793
        %v1822 = vmul.f32 %v1553, %v1793
        %v1823 = vmul.f32 %v1555, %v1793
        %v1824 = vmul.f32 %v1558, %v1793
        %v1825 = vmul.f32 %v1560, %v1793
        %v1826 = vadd.f32 %v1761, %v1794
        %v1827 = vadd.f32 %v1762, %v1795
        %v1828 = vadd.f32 %v1763, %v1796
        %v1829 = vadd.f32 %v1764, %v1797
        %v1830 = vadd.f32 %v1765, %v1798
        %v1831 = vadd.f32 %v1766, %v1799
        %v1832 = vadd.f32 %v1767, %v1800
        %v1833 = vadd.f32 %v1768, %v1801
        %v1834 = vadd.f32 %v1769, %v1802
        %v1835 = vadd.f32 %v1770, %v1803
        %v1836 = vadd.f32 %v1771, %v1804
        %v1837 = vadd.f32 %v1772, %v1805
        %v1838 = vadd.f32 %v1773, %v1806
        %v1839 = vadd.f32 %v1774, %v1807
        %v1840 = vadd.f32 %v1775, %v1808
        %v1841 = vadd.f32 %v1776, %v1809
        %v1842 = vadd.f32 %v1777, %v1810
        %v1843 = vadd.f32 %v1778, %v1811
        %v1844 = vadd.f32 %v1779, %v1812
        %v1845 = vadd.f32 %v1780, %v1813
        %v1846 = vadd.f32 %v1781, %v1814
        %v1847 = vadd.f32 %v1782, %v1815
        %v1848 = vadd.f32 %v1783, %v1816
        %v1849 = vadd.f32 %v1784, %v1817
        %v1850 = vadd.f32 %v1785, %v1818
        %v1851 = vadd.f32 %v1786, %v1819
        %v1852 = vadd.f32 %v1787, %v1820
        %v1853 = vadd.f32 %v1788, %v1821
        %v1854 = vadd.f32 %v1789, %v1822
        %v1855 = vadd.f32 %v1790, %v1823
        %v1856 = vadd.f32 %v1791, %v1824
        %v1857 = vadd.f32 %v1792, %v1825
        %v1858 = vperm.slane %v1562, 2
        %v1859 = vmul.f32 %v1728, %v1858
        %v1860 = vmul.f32 %v1729, %v1858
        %v1861 = vmul.f32 %v1730, %v1858
        %v1862 = vmul.f32 %v1731, %v1858
        %v1863 = vmul.f32 %v1732, %v1858
        %v1864 = vmul.f32 %v1733, %v1858
        %v1865 = vmul.f32 %v1734, %v1858
        %v1866 = vmul.f32 %v1735, %v1858
        %v1867 = vmul.f32 %v1736, %v1858
        %v1868 = vmul.f32 %v1737, %v1858
        %v1869 = vmul.f32 %v1738, %v1858
        %v1870 = vmul.f32 %v1739, %v1858
        %v1871 = vmul.f32 %v1740, %v1858
        %v1872 = vmul.f32 %v1741, %v1858
        %v1873 = vmul.f32 %v1742, %v1858
        %v1874 = vmul.f32 %v1743, %v1858
        %v1875 = vmul.f32 %v1744, %v1858
        %v1876 = vmul.f32 %v1745, %v1858
        %v1877 = vmul.f32 %v1746, %v1858
        %v1878 = vmul.f32 %v1747, %v1858
        %v1879 = vmul.f32 %v1748, %v1858
        %v1880 = vmul.f32 %v1749, %v1858
        %v1881 = vmul.f32 %v1750, %v1858
        %v1882 = vmul.f32 %v1751, %v1858
        %v1883 = vmul.f32 %v1752, %v1858
        %v1884 = vmul.f32 %v1753, %v1858
        %v1885 = vmul.f32 %v1754, %v1858
        %v1886 = vmul.f32 %v1755, %v1858
        %v1887 = vmul.f32 %v1756, %v1858
        %v1888 = vmul.f32 %v1757, %v1858
        %v1889 = vmul.f32 %v1758, %v1858
        %v1890 = vmul.f32 %v1759, %v1858
        %v1891 = vadd.f32 %v1826, %v1859
        %v1892 = vadd.f32 %v1827, %v1860
        %v1893 = vadd.f32 %v1828, %v1861
        %v1894 = vadd.f32 %v1829, %v1862
        %v1895 = vadd.f32 %v1830, %v1863
        %v1896 = vadd.f32 %v1831, %v1864
        %v1897 = vadd.f32 %v1832, %v1865
        %v1898 = vadd.f32 %v1833, %v1866
        %v1899 = vadd.f32 %v1834, %v1867
        %v1900 = vadd.f32 %v1835, %v1868
        %v1901 = vadd.f32 %v1836, %v1869
        %v1902 = vadd.f32 %v1837, %v1870
        %v1903 = vadd.f32 %v1838, %v1871
        %v1904 = vadd.f32 %v1839, %v1872
        %v1905 = vadd.f32 %v1840, %v1873
        %v1906 = vadd.f32 %v1841, %v1874
        %v1907 = vadd.f32 %v1842, %v1875
        %v1908 = vadd.f32 %v1843, %v1876
        %v1909 = vadd.f32 %v1844, %v1877
        %v1910 = vadd.f32 %v1845, %v1878
        %v1911 = vadd.f32 %v1846, %v1879
        %v1912 = vadd.f32 %v1847, %v1880
        %v1913 = vadd.f32 %v1848, %v1881
        %v1914 = vadd.f32 %v1849, %v1882
        %v1915 = vadd.f32 %v1850, %v1883
        %v1916 = vadd.f32 %v1851, %v1884
        %v1917 = vadd.f32 %v1852, %v1885
        %v1918 = vadd.f32 %v1853, %v1886
        %v1919 = vadd.f32 %v1854, %v1887
        %v1920 = vadd.f32 %v1855, %v1888
        %v1921 = vadd.f32 %v1856, %v1889
        %v1922 = vadd.f32 %v1857, %v1890
        %v1923 = vperm.slane %v1562, 3
        %v1924 = vmul.f32 %v1631, %v1923
        %v1925 = vmul.f32 %v1632, %v1923
        %v1926 = vmul.f32 %v1633, %v1923
        %v1927 = vmul.f32 %v1634, %v1923
        %v1928 = vmul.f32 %v1635, %v1923
        %v1929 = vmul.f32 %v1636, %v1923
        %v1930 = vmul.f32 %v1637, %v1923
        %v1931 = vmul.f32 %v1638, %v1923
        %v1932 = vmul.f32 %v1639, %v1923
        %v1933 = vmul.f32 %v1640, %v1923
        %v1934 = vmul.f32 %v1641, %v1923
        %v1935 = vmul.f32 %v1642, %v1923
        %v1936 = vmul.f32 %v1643, %v1923
        %v1937 = vmul.f32 %v1644, %v1923
        %v1938 = vmul.f32 %v1645, %v1923
        %v1939 = vmul.f32 %v1646, %v1923
        %v1940 = vmul.f32 %v1647, %v1923
        %v1941 = vmul.f32 %v1648, %v1923
        %v1942 = vmul.f32 %v1649, %v1923
        %v1943 = vmul.f32 %v1650, %v1923
        %v1944 = vmul.f32 %v1651, %v1923
        %v1945 = vmul.f32 %v1652, %v1923
        %v1946 = vmul.f32 %v1653, %v1923
        %v1947 = vmul.f32 %v1654, %v1923
        %v1948 = vmul.f32 %v1655, %v1923
        %v1949 = vmul.f32 %v1656, %v1923
        %v1950 = vmul.f32 %v1657, %v1923
        %v1951 = vmul.f32 %v1658, %v1923
        %v1952 = vmul.f32 %v1659, %v1923
        %v1953 = vmul.f32 %v1660, %v1923
        %v1954 = vmul.f32 %v1661, %v1923
        %v1955 = vmul.f32 %v1662, %v1923
        %v1956 = vperm.slane %v1562, 4
        %v1957 = vmul.f32 %v1483, %v1956
        %v1958 = vmul.f32 %v1485, %v1956
        %v1959 = vmul.f32 %v1488, %v1956
        %v1960 = vmul.f32 %v1490, %v1956
        %v1961 = vmul.f32 %v1493, %v1956
        %v1962 = vmul.f32 %v1495, %v1956
        %v1963 = vmul.f32 %v1498, %v1956
        %v1964 = vmul.f32 %v1500, %v1956
        %v1965 = vmul.f32 %v1503, %v1956
        %v1966 = vmul.f32 %v1505, %v1956
        %v1967 = vmul.f32 %v1508, %v1956
        %v1968 = vmul.f32 %v1510, %v1956
        %v1969 = vmul.f32 %v1513, %v1956
        %v1970 = vmul.f32 %v1515, %v1956
        %v1971 = vmul.f32 %v1518, %v1956
        %v1972 = vmul.f32 %v1520, %v1956
        %v1973 = vmul.f32 %v1523, %v1956
        %v1974 = vmul.f32 %v1525, %v1956
        %v1975 = vmul.f32 %v1528, %v1956
        %v1976 = vmul.f32 %v1530, %v1956
        %v1977 = vmul.f32 %v1533, %v1956
        %v1978 = vmul.f32 %v1535, %v1956
        %v1979 = vmul.f32 %v1538, %v1956
        %v1980 = vmul.f32 %v1540, %v1956
        %v1981 = vmul.f32 %v1543, %v1956
        %v1982 = vmul.f32 %v1545, %v1956
        %v1983 = vmul.f32 %v1548, %v1956
        %v1984 = vmul.f32 %v1550, %v1956
        %v1985 = vmul.f32 %v1553, %v1956
        %v1986 = vmul.f32 %v1555, %v1956
        %v1987 = vmul.f32 %v1558, %v1956
        %v1988 = vmul.f32 %v1560, %v1956
        %v1989 = vadd.f32 %v1924, %v1957
        %v1990 = vadd.f32 %v1925, %v1958
        %v1991 = vadd.f32 %v1926, %v1959
        %v1992 = vadd.f32 %v1927, %v1960
        %v1993 = vadd.f32 %v1928, %v1961
        %v1994 = vadd.f32 %v1929, %v1962
        %v1995 = vadd.f32 %v1930, %v1963
        %v1996 = vadd.f32 %v1931, %v1964
        %v1997 = vadd.f32 %v1932, %v1965
        %v1998 = vadd.f32 %v1933, %v1966
        %v1999 = vadd.f32 %v1934, %v1967
        %v2000 = vadd.f32 %v1935, %v1968
        %v2001 = vadd.f32 %v1936, %v1969
        %v2002 = vadd.f32 %v1937, %v1970
        %v2003 = vadd.f32 %v1938, %v1971
        %v2004 = vadd.f32 %v1939, %v1972
        %v2005 = vadd.f32 %v1940, %v1973
        %v2006 = vadd.f32 %v1941, %v1974
        %v2007 = vadd.f32 %v1942, %v1975
        %v2008 = vadd.f32 %v1943, %v1976
        %v2009 = vadd.f32 %v1944, %v1977
        %v2010 = vadd.f32 %v1945, %v1978
        %v2011 = vadd.f32 %v1946, %v1979
        %v2012 = vadd.f32 %v1947, %v1980
        %v2013 = vadd.f32 %v1948, %v1981
        %v2014 = vadd.f32 %v1949, %v1982
        %v2015 = vadd.f32 %v1950, %v1983
        %v2016 = vadd.f32 %v1951, %v1984
        %v2017 = vadd.f32 %v1952, %v1985
        %v2018 = vadd.f32 %v1953, %v1986
        %v2019 = vadd.f32 %v1954, %v1987
        %v2020 = vadd.f32 %v1955, %v1988
        %v2021 = vperm.slane %v1562, 5
        %v2022 = vmul.f32 %v1728, %v2021
        %v2023 = vmul.f32 %v1729, %v2021
        %v2024 = vmul.f32 %v1730, %v2021
        %v2025 = vmul.f32 %v1731, %v2021
        %v2026 = vmul.f32 %v1732, %v2021
        %v2027 = vmul.f32 %v1733, %v2021
        %v2028 = vmul.f32 %v1734, %v2021
        %v2029 = vmul.f32 %v1735, %v2021
        %v2030 = vmul.f32 %v1736, %v2021
        %v2031 = vmul.f32 %v1737, %v2021
        %v2032 = vmul.f32 %v1738, %v2021
        %v2033 = vmul.f32 %v1739, %v2021
        %v2034 = vmul.f32 %v1740, %v2021
        %v2035 = vmul.f32 %v1741, %v2021
        %v2036 = vmul.f32 %v1742, %v2021
        %v2037 = vmul.f32 %v1743, %v2021
        %v2038 = vmul.f32 %v1744, %v2021
        %v2039 = vmul.f32 %v1745, %v2021
        %v2040 = vmul.f32 %v1746, %v2021
        %v2041 = vmul.f32 %v1747, %v2021
        %v2042 = vmul.f32 %v1748, %v2021
        %v2043 = vmul.f32 %v1749, %v2021
        %v2044 = vmul.f32 %v1750, %v2021
        %v2045 = vmul.f32 %v1751, %v2021
        %v2046 = vmul.f32 %v1752, %v2021
        %v2047 = vmul.f32 %v1753, %v2021
        %v2048 = vmul.f32 %v1754, %v2021
        %v2049 = vmul.f32 %v1755, %v2021
        %v2050 = vmul.f32 %v1756, %v2021
        %v2051 = vmul.f32 %v1757, %v2021
        %v2052 = vmul.f32 %v1758, %v2021
        %v2053 = vmul.f32 %v1759, %v2021
        %v2054 = vadd.f32 %v1989, %v2022
        %v2055 = vadd.f32 %v1990, %v2023
        %v2056 = vadd.f32 %v1991, %v2024
        %v2057 = vadd.f32 %v1992, %v2025
        %v2058 = vadd.f32 %v1993, %v2026
        %v2059 = vadd.f32 %v1994, %v2027
        %v2060 = vadd.f32 %v1995, %v2028
        %v2061 = vadd.f32 %v1996, %v2029
        %v2062 = vadd.f32 %v1997, %v2030
        %v2063 = vadd.f32 %v1998, %v2031
        %v2064 = vadd.f32 %v1999, %v2032
        %v2065 = vadd.f32 %v2000, %v2033
        %v2066 = vadd.f32 %v2001, %v2034
        %v2067 = vadd.f32 %v2002, %v2035
        %v2068 = vadd.f32 %v2003, %v2036
        %v2069 = vadd.f32 %v2004, %v2037
        %v2070 = vadd.f32 %v2005, %v2038
        %v2071 = vadd.f32 %v2006, %v2039
        %v2072 = vadd.f32 %v2007, %v2040
        %v2073 = vadd.f32 %v2008, %v2041
        %v2074 = vadd.f32 %v2009, %v2042
        %v2075 = vadd.f32 %v2010, %v2043
        %v2076 = vadd.f32 %v2011, %v2044
        %v2077 = vadd.f32 %v2012, %v2045
        %v2078 = vadd.f32 %v2013, %v2046
        %v2079 = vadd.f32 %v2014, %v2047
        %v2080 = vadd.f32 %v2015, %v2048
        %v2081 = vadd.f32 %v2016, %v2049
        %v2082 = vadd.f32 %v2017, %v2050
        %v2083 = vadd.f32 %v2018, %v2051
        %v2084 = vadd.f32 %v2019, %v2052
        %v2085 = vadd.f32 %v2020, %v2053
        %v2086 = vperm.slane %v1562, 6
        %v2087 = vmul.f32 %v1631, %v2086
        %v2088 = vmul.f32 %v1632, %v2086
        %v2089 = vmul.f32 %v1633, %v2086
        %v2090 = vmul.f32 %v1634, %v2086
        %v2091 = vmul.f32 %v1635, %v2086
        %v2092 = vmul.f32 %v1636, %v2086
        %v2093 = vmul.f32 %v1637, %v2086
        %v2094 = vmul.f32 %v1638, %v2086
        %v2095 = vmul.f32 %v1639, %v2086
        %v2096 = vmul.f32 %v1640, %v2086
        %v2097 = vmul.f32 %v1641, %v2086
        %v2098 = vmul.f32 %v1642, %v2086
        %v2099 = vmul.f32 %v1643, %v2086
        %v2100 = vmul.f32 %v1644, %v2086
        %v2101 = vmul.f32 %v1645, %v2086
        %v2102 = vmul.f32 %v1646, %v2086
        %v2103 = vmul.f32 %v1647, %v2086
        %v2104 = vmul.f32 %v1648, %v2086
        %v2105 = vmul.f32 %v1649, %v2086
        %v2106 = vmul.f32 %v1650, %v2086
        %v2107 = vmul.f32 %v1651, %v2086
        %v2108 = vmul.f32 %v1652, %v2086
        %v2109 = vmul.f32 %v1653, %v2086
        %v2110 = vmul.f32 %v1654, %v2086
        %v2111 = vmul.f32 %v1655, %v2086
        %v2112 = vmul.f32 %v1656, %v2086
        %v2113 = vmul.f32 %v1657, %v2086
        %v2114 = vmul.f32 %v1658, %v2086
        %v2115 = vmul.f32 %v1659, %v2086
        %v2116 = vmul.f32 %v1660, %v2086
        %v2117 = vmul.f32 %v1661, %v2086
        %v2118 = vmul.f32 %v1662, %v2086
        %v2119 = vperm.slane %v1562, 7
        %v2120 = vmul.f32 %v1483, %v2119
        %v2121 = vmul.f32 %v1485, %v2119
        %v2122 = vmul.f32 %v1488, %v2119
        %v2123 = vmul.f32 %v1490, %v2119
        %v2124 = vmul.f32 %v1493, %v2119
        %v2125 = vmul.f32 %v1495, %v2119
        %v2126 = vmul.f32 %v1498, %v2119
        %v2127 = vmul.f32 %v1500, %v2119
        %v2128 = vmul.f32 %v1503, %v2119
        %v2129 = vmul.f32 %v1505, %v2119
        %v2130 = vmul.f32 %v1508, %v2119
        %v2131 = vmul.f32 %v1510, %v2119
        %v2132 = vmul.f32 %v1513, %v2119
        %v2133 = vmul.f32 %v1515, %v2119
        %v2134 = vmul.f32 %v1518, %v2119
        %v2135 = vmul.f32 %v1520, %v2119
        %v2136 = vmul.f32 %v1523, %v2119
        %v2137 = vmul.f32 %v1525, %v2119
        %v2138 = vmul.f32 %v1528, %v2119
        %v2139 = vmul.f32 %v1530, %v2119
        %v2140 = vmul.f32 %v1533, %v2119
        %v2141 = vmul.f32 %v1535, %v2119
        %v2142 = vmul.f32 %v1538, %v2119
        %v2143 = vmul.f32 %v1540, %v2119
        %v2144 = vmul.f32 %v1543, %v2119
        %v2145 = vmul.f32 %v1545, %v2119
        %v2146 = vmul.f32 %v1548, %v2119
        %v2147 = vmul.f32 %v1550, %v2119
        %v2148 = vmul.f32 %v1553, %v2119
        %v2149 = vmul.f32 %v1555, %v2119
        %v2150 = vmul.f32 %v1558, %v2119
        %v2151 = vmul.f32 %v1560, %v2119
        %v2152 = vadd.f32 %v2087, %v2120
        %v2153 = vadd.f32 %v2088, %v2121
        %v2154 = vadd.f32 %v2089, %v2122
        %v2155 = vadd.f32 %v2090, %v2123
        %v2156 = vadd.f32 %v2091, %v2124
        %v2157 = vadd.f32 %v2092, %v2125
        %v2158 = vadd.f32 %v2093, %v2126
        %v2159 = vadd.f32 %v2094, %v2127
        %v2160 = vadd.f32 %v2095, %v2128
        %v2161 = vadd.f32 %v2096, %v2129
        %v2162 = vadd.f32 %v2097, %v2130
        %v2163 = vadd.f32 %v2098, %v2131
        %v2164 = vadd.f32 %v2099, %v2132
        %v2165 = vadd.f32 %v2100, %v2133
        %v2166 = vadd.f32 %v2101, %v2134
        %v2167 = vadd.f32 %v2102, %v2135
        %v2168 = vadd.f32 %v2103, %v2136
        %v2169 = vadd.f32 %v2104, %v2137
        %v2170 = vadd.f32 %v2105, %v2138
        %v2171 = vadd.f32 %v2106, %v2139
        %v2172 = vadd.f32 %v2107, %v2140
        %v2173 = vadd.f32 %v2108, %v2141
        %v2174 = vadd.f32 %v2109, %v2142
        %v2175 = vadd.f32 %v2110, %v2143
        %v2176 = vadd.f32 %v2111, %v2144
        %v2177 = vadd.f32 %v2112, %v2145
        %v2178 = vadd.f32 %v2113, %v2146
        %v2179 = vadd.f32 %v2114, %v2147
        %v2180 = vadd.f32 %v2115, %v2148
        %v2181 = vadd.f32 %v2116, %v2149
        %v2182 = vadd.f32 %v2117, %v2150
        %v2183 = vadd.f32 %v2118, %v2151
        %v2184 = vperm.slane %v1563, 0
        %v2185 = vmul.f32 %v1728, %v2184
        %v2186 = vmul.f32 %v1729, %v2184
        %v2187 = vmul.f32 %v1730, %v2184
        %v2188 = vmul.f32 %v1731, %v2184
        %v2189 = vmul.f32 %v1732, %v2184
        %v2190 = vmul.f32 %v1733, %v2184
        %v2191 = vmul.f32 %v1734, %v2184
        %v2192 = vmul.f32 %v1735, %v2184
        %v2193 = vmul.f32 %v1736, %v2184
        %v2194 = vmul.f32 %v1737, %v2184
        %v2195 = vmul.f32 %v1738, %v2184
        %v2196 = vmul.f32 %v1739, %v2184
        %v2197 = vmul.f32 %v1740, %v2184
        %v2198 = vmul.f32 %v1741, %v2184
        %v2199 = vmul.f32 %v1742, %v2184
        %v2200 = vmul.f32 %v1743, %v2184
        %v2201 = vmul.f32 %v1744, %v2184
        %v2202 = vmul.f32 %v1745, %v2184
        %v2203 = vmul.f32 %v1746, %v2184
        %v2204 = vmul.f32 %v1747, %v2184
        %v2205 = vmul.f32 %v1748, %v2184
        %v2206 = vmul.f32 %v1749, %v2184
        %v2207 = vmul.f32 %v1750, %v2184
        %v2208 = vmul.f32 %v1751, %v2184
        %v2209 = vmul.f32 %v1752, %v2184
        %v2210 = vmul.f32 %v1753, %v2184
        %v2211 = vmul.f32 %v1754, %v2184
        %v2212 = vmul.f32 %v1755, %v2184
        %v2213 = vmul.f32 %v1756, %v2184
        %v2214 = vmul.f32 %v1757, %v2184
        %v2215 = vmul.f32 %v1758, %v2184
        %v2216 = vmul.f32 %v1759, %v2184
        %v2217 = vadd.f32 %v2152, %v2185
        %v2218 = vadd.f32 %v2153, %v2186
        %v2219 = vadd.f32 %v2154, %v2187
        %v2220 = vadd.f32 %v2155, %v2188
        %v2221 = vadd.f32 %v2156, %v2189
        %v2222 = vadd.f32 %v2157, %v2190
        %v2223 = vadd.f32 %v2158, %v2191
        %v2224 = vadd.f32 %v2159, %v2192
        %v2225 = vadd.f32 %v2160, %v2193
        %v2226 = vadd.f32 %v2161, %v2194
        %v2227 = vadd.f32 %v2162, %v2195
        %v2228 = vadd.f32 %v2163, %v2196
        %v2229 = vadd.f32 %v2164, %v2197
        %v2230 = vadd.f32 %v2165, %v2198
        %v2231 = vadd.f32 %v2166, %v2199
        %v2232 = vadd.f32 %v2167, %v2200
        %v2233 = vadd.f32 %v2168, %v2201
        %v2234 = vadd.f32 %v2169, %v2202
        %v2235 = vadd.f32 %v2170, %v2203
        %v2236 = vadd.f32 %v2171, %v2204
        %v2237 = vadd.f32 %v2172, %v2205
        %v2238 = vadd.f32 %v2173, %v2206
        %v2239 = vadd.f32 %v2174, %v2207
        %v2240 = vadd.f32 %v2175, %v2208
        %v2241 = vadd.f32 %v2176, %v2209
        %v2242 = vadd.f32 %v2177, %v2210
        %v2243 = vadd.f32 %v2178, %v2211
        %v2244 = vadd.f32 %v2179, %v2212
        %v2245 = vadd.f32 %v2180, %v2213
        %v2246 = vadd.f32 %v2181, %v2214
        %v2247 = vadd.f32 %v2182, %v2215
        %v2248 = vadd.f32 %v2183, %v2216
        %v2249 = vmul.f32 %v1921, %v1139
        %v2250 = vmul.f32 %v1922, %v1143
        %v2251 = vmul.f32 %v1891, %v1147
        %v2252 = vmul.f32 %v1892, %v1151
        %v2253 = vmul.f32 %v1893, %v1155
        %v2254 = vmul.f32 %v1894, %v1159
        %v2255 = vmul.f32 %v1895, %v1163
        %v2256 = vmul.f32 %v1896, %v1167
        %v2257 = vmul.f32 %v1897, %v1171
        %v2258 = vmul.f32 %v1898, %v1175
        %v2259 = vmul.f32 %v1899, %v1179
        %v2260 = vmul.f32 %v1900, %v1183
        %v2261 = vmul.f32 %v1901, %v1187
        %v2262 = vmul.f32 %v1902, %v1191
        %v2263 = vmul.f32 %v1903, %v1195
        %v2264 = vmul.f32 %v1904, %v1199
        %v2265 = vmul.f32 %v1905, %v1203
        %v2266 = vmul.f32 %v1906, %v1207
        %v2267 = vmul.f32 %v1907, %v1211
        %v2268 = vmul.f32 %v1908, %v1215
        %v2269 = vmul.f32 %v1909, %v1219
        %v2270 = vmul.f32 %v1910, %v1223
        %v2271 = vmul.f32 %v1911, %v1227
        %v2272 = vmul.f32 %v1912, %v1231
        %v2273 = vmul.f32 %v1913, %v1235
        %v2274 = vmul.f32 %v1914, %v1239
        %v2275 = vmul.f32 %v1915, %v1243
        %v2276 = vmul.f32 %v1916, %v1247
        %v2277 = vmul.f32 %v1917, %v1251
        %v2278 = vmul.f32 %v1918, %v1255
        %v2279 = vmul.f32 %v1919, %v1259
        %v2280 = vmul.f32 %v1920, %v1263
        %v2281 = vadd.f32 %v2054, %v2249
        %v2282 = vadd.f32 %v2055, %v2250
        %v2283 = vadd.f32 %v2056, %v2251
        %v2284 = vadd.f32 %v2057, %v2252
        %v2285 = vadd.f32 %v2058, %v2253
        %v2286 = vadd.f32 %v2059, %v2254
        %v2287 = vadd.f32 %v2060, %v2255
        %v2288 = vadd.f32 %v2061, %v2256
        %v2289 = vadd.f32 %v2062, %v2257
        %v2290 = vadd.f32 %v2063, %v2258
        %v2291 = vadd.f32 %v2064, %v2259
        %v2292 = vadd.f32 %v2065, %v2260
        %v2293 = vadd.f32 %v2066, %v2261
        %v2294 = vadd.f32 %v2067, %v2262
        %v2295 = vadd.f32 %v2068, %v2263
        %v2296 = vadd.f32 %v2069, %v2264
        %v2297 = vadd.f32 %v2070, %v2265
        %v2298 = vadd.f32 %v2071, %v2266
        %v2299 = vadd.f32 %v2072, %v2267
        %v2300 = vadd.f32 %v2073, %v2268
        %v2301 = vadd.f32 %v2074, %v2269
        %v2302 = vadd.f32 %v2075, %v2270
        %v2303 = vadd.f32 %v2076, %v2271
        %v2304 = vadd.f32 %v2077, %v2272
        %v2305 = vadd.f32 %v2078, %v2273
        %v2306 = vadd.f32 %v2079, %v2274
        %v2307 = vadd.f32 %v2080, %v2275
        %v2308 = vadd.f32 %v2081, %v2276
        %v2309 = vadd.f32 %v2082, %v2277
        %v2310 = vadd.f32 %v2083, %v2278
        %v2311 = vadd.f32 %v2084, %v2279
        %v2312 = vadd.f32 %v2085, %v2280
        %v2313 = vmul.f32 %v2219, %v1267
        %v2314 = vmul.f32 %v2220, %v1271
        %v2315 = vmul.f32 %v2221, %v1275
        %v2316 = vmul.f32 %v2222, %v1279
        %v2317 = vmul.f32 %v2223, %v1283
        %v2318 = vmul.f32 %v2224, %v1287
        %v2319 = vmul.f32 %v2225, %v1291
        %v2320 = vmul.f32 %v2226, %v1295
        %v2321 = vmul.f32 %v2227, %v1299
        %v2322 = vmul.f32 %v2228, %v1303
        %v2323 = vmul.f32 %v2229, %v1307
        %v2324 = vmul.f32 %v2230, %v1311
        %v2325 = vmul.f32 %v2231, %v1315
        %v2326 = vmul.f32 %v2232, %v1319
        %v2327 = vmul.f32 %v2233, %v1323
        %v2328 = vmul.f32 %v2234, %v1327
        %v2329 = vmul.f32 %v2235, %v1331
        %v2330 = vmul.f32 %v2236, %v1335
        %v2331 = vmul.f32 %v2237, %v1339
        %v2332 = vmul.f32 %v2238, %v1343
        %v2333 = vmul.f32 %v2239, %v1347
        %v2334 = vmul.f32 %v2240, %v1351
        %v2335 = vmul.f32 %v2241, %v1355
        %v2336 = vmul.f32 %v2242, %v1359
        %v2337 = vmul.f32 %v2243, %v1363
        %v2338 = vmul.f32 %v2244, %v1367
        %v2339 = vmul.f32 %v2245, %v1371
        %v2340 = vmul.f32 %v2246, %v1375
        %v2341 = vmul.f32 %v2247, %v1379
        %v2342 = vmul.f32 %v2248, %v1383
        %v2343 = vmul.f32 %v2217, %v1387
        %v2344 = vmul.f32 %v2218, %v1391
        %v2345 = vadd.f32 %v2281, %v2313
        %v2346 = vadd.f32 %v2282, %v2314
        %v2347 = vadd.f32 %v2283, %v2315
        %v2348 = vadd.f32 %v2284, %v2316
        %v2349 = vadd.f32 %v2285, %v2317
        %v2350 = vadd.f32 %v2286, %v2318
        %v2351 = vadd.f32 %v2287, %v2319
        %v2352 = vadd.f32 %v2288, %v2320
        %v2353 = vadd.f32 %v2289, %v2321
        %v2354 = vadd.f32 %v2290, %v2322
        %v2355 = vadd.f32 %v2291, %v2323
        %v2356 = vadd.f32 %v2292, %v2324
        %v2357 = vadd.f32 %v2293, %v2325
        %v2358 = vadd.f32 %v2294, %v2326
        %v2359 = vadd.f32 %v2295, %v2327
        %v2360 = vadd.f32 %v2296, %v2328
        %v2361 = vadd.f32 %v2297, %v2329
        %v2362 = vadd.f32 %v2298, %v2330
        %v2363 = vadd.f32 %v2299, %v2331
        %v2364 = vadd.f32 %v2300, %v2332
        %v2365 = vadd.f32 %v2301, %v2333
        %v2366 = vadd.f32 %v2302, %v2334
        %v2367 = vadd.f32 %v2303, %v2335
        %v2368 = vadd.f32 %v2304, %v2336
        %v2369 = vadd.f32 %v2305, %v2337
        %v2370 = vadd.f32 %v2306, %v2338
        %v2371 = vadd.f32 %v2307, %v2339
        %v2372 = vadd.f32 %v2308, %v2340
        %v2373 = vadd.f32 %v2309, %v2341
        %v2374 = vadd.f32 %v2310, %v2342
        %v2375 = vadd.f32 %v2311, %v2343
        %v2376 = vadd.f32 %v2312, %v2344
        %v2377 = vld [vmem:[%s6] sm:$0x1]
        %v2378 = vperm.slane %v2377, 0
        %v2379 = vadd.f32 %v2345, %v2378
        %v2380 = vadd.f32 %v2346, %v2378
        %v2381 = vadd.f32 %v2347, %v2378
        %v2382 = vadd.f32 %v2348, %v2378
        %v2383 = vadd.f32 %v2349, %v2378
        %v2384 = vadd.f32 %v2350, %v2378
        %v2385 = vadd.f32 %v2351, %v2378
        %v2386 = vadd.f32 %v2352, %v2378
        %v2387 = vadd.f32 %v2353, %v2378
        %v2388 = vadd.f32 %v2354, %v2378
        %v2389 = vadd.f32 %v2355, %v2378
        %v2390 = vadd.f32 %v2356, %v2378
        %v2391 = vadd.f32 %v2357, %v2378
        %v2392 = vadd.f32 %v2358, %v2378
        %v2393 = vadd.f32 %v2359, %v2378
        %v2394 = vadd.f32 %v2360, %v2378
        %v2395 = vadd.f32 %v2361, %v2378
        %v2396 = vadd.f32 %v2362, %v2378
        %v2397 = vadd.f32 %v2363, %v2378
        %v2398 = vadd.f32 %v2364, %v2378
        %v2399 = vadd.f32 %v2365, %v2378
        %v2400 = vadd.f32 %v2366, %v2378
        %v2401 = vadd.f32 %v2367, %v2378
        %v2402 = vadd.f32 %v2368, %v2378
        %v2403 = vadd.f32 %v2369, %v2378
        %v2404 = vadd.f32 %v2370, %v2378
        %v2405 = vadd.f32 %v2371, %v2378
        %v2406 = vadd.f32 %v2372, %v2378
        %v2407 = vadd.f32 %v2373, %v2378
        %v2408 = vadd.f32 %v2374, %v2378
        %v2409 = vadd.f32 %v2375, %v2378
        %v2410 = vadd.f32 %v2376, %v2378
        %v2411 = vmax.f32 %v2379, 0.0
        %v2412 = vmax.f32 %v2380, 0.0
        %v2413 = vmax.f32 %v2381, 0.0
        %v2414 = vmax.f32 %v2382, 0.0
        %v2415 = vmax.f32 %v2383, 0.0
        %v2416 = vmax.f32 %v2384, 0.0
        %v2417 = vmax.f32 %v2385, 0.0
        %v2418 = vmax.f32 %v2386, 0.0
        %v2419 = vmax.f32 %v2387, 0.0
        %v2420 = vmax.f32 %v2388, 0.0
        %v2421 = vmax.f32 %v2389, 0.0
        %v2422 = vmax.f32 %v2390, 0.0
        %v2423 = vmax.f32 %v2391, 0.0
        %v2424 = vmax.f32 %v2392, 0.0
        %v2425 = vmax.f32 %v2393, 0.0
        %v2426 = vmax.f32 %v2394, 0.0
        %v2427 = vmax.f32 %v2395, 0.0
        %v2428 = vmax.f32 %v2396, 0.0
        %v2429 = vmax.f32 %v2397, 0.0
        %v2430 = vmax.f32 %v2398, 0.0
        %v2431 = vmax.f32 %v2399, 0.0
        %v2432 = vmax.f32 %v2400, 0.0
        %v2433 = vmax.f32 %v2401, 0.0
        %v2434 = vmax.f32 %v2402, 0.0
        %v2435 = vmax.f32 %v2403, 0.0
        %v2436 = vmax.f32 %v2404, 0.0
        %v2437 = vmax.f32 %v2405, 0.0
        %v2438 = vmax.f32 %v2406, 0.0
        %v2439 = vmax.f32 %v2407, 0.0
        %v2440 = vmax.f32 %v2408, 0.0
        %v2441 = vmax.f32 %v2409, 0.0
        %v2442 = vmax.f32 %v2410, 0.0
        %v2443 = vpack.c.bf16 %v2412, %v2411
        %v2444 = vpack.c.bf16 %v2414, %v2413
        %v2445 = vpack.c.bf16 %v2416, %v2415
        %v2446 = vpack.c.bf16 %v2418, %v2417
        %v2447 = vpack.c.bf16 %v2420, %v2419
        %v2448 = vpack.c.bf16 %v2422, %v2421
        %v2449 = vpack.c.bf16 %v2424, %v2423
        %v2450 = vpack.c.bf16 %v2426, %v2425
        %v2451 = vpack.c.bf16 %v2428, %v2427
        %v2452 = vpack.c.bf16 %v2430, %v2429
        %v2453 = vpack.c.bf16 %v2432, %v2431
        %v2454 = vpack.c.bf16 %v2434, %v2433
        %v2455 = vpack.c.bf16 %v2436, %v2435
        %v2456 = vpack.c.bf16 %v2438, %v2437
        %v2457 = vpack.c.bf16 %v2440, %v2439
        %v2458 = vpack.c.bf16 %v2442, %v2441
        %s2459 = scalar_lea.vmem [#allocation5], 64
        %v2460 = vld [vmem:[%s2459] sm:$0xf]
        %v2461 = vld [vmem:[%s2459 + $0x4] sm:$0xf]
        %v2462 = vld [vmem:[%s2459 + $0x8] sm:$0xf]
        %v2463 = vld [vmem:[%s2459 + $0xc] sm:$0xf]
        %v2464 = vld [vmem:[%s2459 + $0x10] sm:$0xf]
        %v2465 = vld [vmem:[%s2459 + $0x14] sm:$0xf]
        %v2466 = vld [vmem:[%s2459 + $0x18] sm:$0xf]
        %v2467 = vld [vmem:[%s2459 + $0x1c] sm:$0xf]
        %v2468 = vld [vmem:[%s2459 + $0x20] sm:$0xf]
        %v2469 = vld [vmem:[%s2459 + $0x24] sm:$0xf]
        %v2470 = vld [vmem:[%s2459 + $0x28] sm:$0xf]
        %v2471 = vld [vmem:[%s2459 + $0x2c] sm:$0xf]
        %v2472 = vld [vmem:[%s2459 + $0x30] sm:$0xf]
        %v2473 = vld [vmem:[%s2459 + $0x34] sm:$0xf]
        %v2474 = vld [vmem:[%s2459 + $0x38] sm:$0xf]
        %v2475 = vld [vmem:[%s2459 + $0x3c] sm:$0xf]
        %v2492 = vunpack.c.l.b16 %v2460
        %v2493 = vunpack.c.l.b16 %v2461
        %v2494 = vunpack.c.l.b16 %v2462
        %v2495 = vunpack.c.l.b16 %v2463
        %v2496 = vunpack.c.l.b16 %v2464
        %v2497 = vunpack.c.l.b16 %v2465
        %v2498 = vunpack.c.l.b16 %v2466
        %v2499 = vunpack.c.l.b16 %v2467
        %v2500 = vunpack.c.l.b16 %v2468
        %v2501 = vunpack.c.l.b16 %v2469
        %v2502 = vunpack.c.l.b16 %v2470
        %v2503 = vunpack.c.l.b16 %v2471
        %v2504 = vunpack.c.l.b16 %v2472
        %v2505 = vunpack.c.l.b16 %v2473
        %v2506 = vunpack.c.l.b16 %v2474
        %v2507 = vunpack.c.l.b16 %v2475
        %v2508 = vpack.c.b16 %v2493, %v2492
        %v2509 = vpack.c.b16 %v2495, %v2494
        %v2510 = vpack.c.b16 %v2497, %v2496
        %v2511 = vpack.c.b16 %v2499, %v2498
        %v2512 = vpack.c.b16 %v2501, %v2500
        %v2513 = vpack.c.b16 %v2503, %v2502
        %v2514 = vpack.c.b16 %v2505, %v2504
        %v2515 = vpack.c.b16 %v2507, %v2506
        %2524 = vmatpush.bf16.msra.mxu0 %v2515
        %2525 = vmatpush.bf16.msra.mxu0 %v2514
        %2526 = vmatpush.bf16.msra.mxu0 %v2513
        %2527 = vmatpush.bf16.msra.mxu0 %v2512
        %2528 = vmatpush.bf16.msra.mxu0 %v2511
        %2529 = vmatpush.bf16.msra.mxu0 %v2510
        %2530 = vmatpush.bf16.msra.mxu0 %v2509
        %2531 = vmatpush.bf16.msra.mxu0 %v2508
        %2532 = vmatmul.bf16.gmra.mxu0 %v2443
        %v2533 = vpop.f32.mrf.mxu0
        %v2534 = vadd.f32 0.0, %v2533
        %v2535 = vpop.f32.mrf.mxu0
        %v2536 = vadd.f32 0.0, %v2535
        %2537 = vmatmul.bf16.gmra.mxu0 %v2444
        %v2538 = vpop.f32.mrf.mxu0
        %v2539 = vadd.f32 0.0, %v2538
        %v2540 = vpop.f32.mrf.mxu0
        %v2541 = vadd.f32 0.0, %v2540
        %2542 = vmatmul.bf16.gmra.mxu0 %v2445
        %v2543 = vpop.f32.mrf.mxu0
        %v2544 = vadd.f32 0.0, %v2543
        %v2545 = vpop.f32.mrf.mxu0
        %v2546 = vadd.f32 0.0, %v2545
        %2547 = vmatmul.bf16.gmra.mxu0 %v2446
        %v2548 = vpop.f32.mrf.mxu0
        %v2549 = vadd.f32 0.0, %v2548
        %v2550 = vpop.f32.mrf.mxu0
        %v2551 = vadd.f32 0.0, %v2550
        %2552 = vmatmul.bf16.gmra.mxu0 %v2447
        %v2553 = vpop.f32.mrf.mxu0
        %v2554 = vadd.f32 0.0, %v2553
        %v2555 = vpop.f32.mrf.mxu0
        %v2556 = vadd.f32 0.0, %v2555
        %2557 = vmatmul.bf16.gmra.mxu0 %v2448
        %v2558 = vpop.f32.mrf.mxu0
        %v2559 = vadd.f32 0.0, %v2558
        %v2560 = vpop.f32.mrf.mxu0
        %v2561 = vadd.f32 0.0, %v2560
        %2562 = vmatmul.bf16.gmra.mxu0 %v2449
        %v2563 = vpop.f32.mrf.mxu0
        %v2564 = vadd.f32 0.0, %v2563
        %v2565 = vpop.f32.mrf.mxu0
        %v2566 = vadd.f32 0.0, %v2565
        %2567 = vmatmul.bf16.gmra.mxu0 %v2450
        %v2568 = vpop.f32.mrf.mxu0
        %v2569 = vadd.f32 0.0, %v2568
        %v2570 = vpop.f32.mrf.mxu0
        %v2571 = vadd.f32 0.0, %v2570
        %2572 = vmatmul.bf16.gmra.mxu0 %v2451
        %v2573 = vpop.f32.mrf.mxu0
        %v2574 = vadd.f32 0.0, %v2573
        %v2575 = vpop.f32.mrf.mxu0
        %v2576 = vadd.f32 0.0, %v2575
        %2577 = vmatmul.bf16.gmra.mxu0 %v2452
        %v2578 = vpop.f32.mrf.mxu0
        %v2579 = vadd.f32 0.0, %v2578
        %v2580 = vpop.f32.mrf.mxu0
        %v2581 = vadd.f32 0.0, %v2580
        %2582 = vmatmul.bf16.gmra.mxu0 %v2453
        %v2583 = vpop.f32.mrf.mxu0
        %v2584 = vadd.f32 0.0, %v2583
        %v2585 = vpop.f32.mrf.mxu0
        %v2586 = vadd.f32 0.0, %v2585
        %2587 = vmatmul.bf16.gmra.mxu0 %v2454
        %v2588 = vpop.f32.mrf.mxu0
        %v2589 = vadd.f32 0.0, %v2588
        %v2590 = vpop.f32.mrf.mxu0
        %v2591 = vadd.f32 0.0, %v2590
        %2592 = vmatmul.bf16.gmra.mxu0 %v2455
        %v2593 = vpop.f32.mrf.mxu0
        %v2594 = vadd.f32 0.0, %v2593
        %v2595 = vpop.f32.mrf.mxu0
        %v2596 = vadd.f32 0.0, %v2595
        %2597 = vmatmul.bf16.gmra.mxu0 %v2456
        %v2598 = vpop.f32.mrf.mxu0
        %v2599 = vadd.f32 0.0, %v2598
        %v2600 = vpop.f32.mrf.mxu0
        %v2601 = vadd.f32 0.0, %v2600
        %2602 = vmatmul.bf16.gmra.mxu0 %v2457
        %v2603 = vpop.f32.mrf.mxu0
        %v2604 = vadd.f32 0.0, %v2603
        %v2605 = vpop.f32.mrf.mxu0
        %v2606 = vadd.f32 0.0, %v2605
        %2607 = vmatmul.bf16.gmra.mxu0 %v2458
        %v2608 = vpop.f32.mrf.mxu0
        %v2609 = vadd.f32 0.0, %v2608
        %v2610 = vpop.f32.mrf.mxu0
        %v2611 = vadd.f32 0.0, %v2610
        %2612 = vdwg.mxu0
        %s2613 = scalar_lea.vmem %s5, 16
        %v2614 = vld [vmem:[%s2613] sm:$0xff]
        %v2615 = vld [vmem:[%s2613 + $0x8] sm:$0x1]
        %v2616 = vrot.slane %v2534, 7
        %v2617 = vrot.slane %v2536, 7
        %v2618 = vrot.slane %v2539, 7
        %v2619 = vrot.slane %v2541, 7
        %v2620 = vrot.slane %v2544, 7
        %v2621 = vrot.slane %v2546, 7
        %v2622 = vrot.slane %v2549, 7
        %v2623 = vrot.slane %v2551, 7
        %v2624 = vrot.slane %v2554, 7
        %v2625 = vrot.slane %v2556, 7
        %v2626 = vrot.slane %v2559, 7
        %v2627 = vrot.slane %v2561, 7
        %v2628 = vrot.slane %v2564, 7
        %v2629 = vrot.slane %v2566, 7
        %v2630 = vrot.slane %v2569, 7
        %v2631 = vrot.slane %v2571, 7
        %v2632 = vrot.slane %v2574, 7
        %v2633 = vrot.slane %v2576, 7
        %v2634 = vrot.slane %v2579, 7
        %v2635 = vrot.slane %v2581, 7
        %v2636 = vrot.slane %v2584, 7
        %v2637 = vrot.slane %v2586, 7
        %v2638 = vrot.slane %v2589, 7
        %v2639 = vrot.slane %v2591, 7
        %v2640 = vrot.slane %v2594, 7
        %v2641 = vrot.slane %v2596, 7
        %v2642 = vrot.slane %v2599, 7
        %v2643 = vrot.slane %v2601, 7
        %v2644 = vrot.slane %v2604, 7
        %v2645 = vrot.slane %v2606, 7
        %v2646 = vrot.slane %v2609, 7
        %v2647 = vrot.slane %v2611, 7
        %v2648 = vsel %vm1598, %v2646, %v2647
        %v2649 = vsel %vm1598, %v2645, %v2646
        %v2650 = vsel %vm1598, %v2644, %v2645
        %v2651 = vsel %vm1598, %v2643, %v2644
        %v2652 = vsel %vm1598, %v2642, %v2643
        %v2653 = vsel %vm1598, %v2641, %v2642
        %v2654 = vsel %vm1598, %v2640, %v2641
        %v2655 = vsel %vm1598, %v2639, %v2640
        %v2656 = vsel %vm1598, %v2638, %v2639
        %v2657 = vsel %vm1598, %v2637, %v2638
        %v2658 = vsel %vm1598, %v2636, %v2637
        %v2659 = vsel %vm1598, %v2635, %v2636
        %v2660 = vsel %vm1598, %v2634, %v2635
        %v2661 = vsel %vm1598, %v2633, %v2634
        %v2662 = vsel %vm1598, %v2632, %v2633
        %v2663 = vsel %vm1598, %v2631, %v2632
        %v2664 = vsel %vm1598, %v2630, %v2631
        %v2665 = vsel %vm1598, %v2629, %v2630
        %v2666 = vsel %vm1598, %v2628, %v2629
        %v2667 = vsel %vm1598, %v2627, %v2628
        %v2668 = vsel %vm1598, %v2626, %v2627
        %v2669 = vsel %vm1598, %v2625, %v2626
        %v2670 = vsel %vm1598, %v2624, %v2625
        %v2671 = vsel %vm1598, %v2623, %v2624
        %v2672 = vsel %vm1598, %v2622, %v2623
        %v2673 = vsel %vm1598, %v2621, %v2622
        %v2674 = vsel %vm1598, %v2620, %v2621
        %v2675 = vsel %vm1598, %v2619, %v2620
        %v2676 = vsel %vm1598, %v2618, %v2619
        %v2677 = vsel %vm1598, %v2617, %v2618
        %v2678 = vsel %vm1598, %v2616, %v2617
        %v2679 = vsel %vm1598, %v2647, %v2616
        %v2680 = vmul.f32 %v2679, %v852
        %v2681 = vmul.f32 %v2678, %v857
        %v2682 = vmul.f32 %v2677, %v862
        %v2683 = vmul.f32 %v2676, %v867
        %v2684 = vmul.f32 %v2675, %v872
        %v2685 = vmul.f32 %v2674, %v877
        %v2686 = vmul.f32 %v2673, %v882
        %v2687 = vmul.f32 %v2672, %v887
        %v2688 = vmul.f32 %v2671, %v892
        %v2689 = vmul.f32 %v2670, %v897
        %v2690 = vmul.f32 %v2669, %v902
        %v2691 = vmul.f32 %v2668, %v907
        %v2692 = vmul.f32 %v2667, %v912
        %v2693 = vmul.f32 %v2666, %v917
        %v2694 = vmul.f32 %v2665, %v922
        %v2695 = vmul.f32 %v2664, %v927
        %v2696 = vmul.f32 %v2663, %v932
        %v2697 = vmul.f32 %v2662, %v937
        %v2698 = vmul.f32 %v2661, %v942
        %v2699 = vmul.f32 %v2660, %v947
        %v2700 = vmul.f32 %v2659, %v952
        %v2701 = vmul.f32 %v2658, %v957
        %v2702 = vmul.f32 %v2657, %v962
        %v2703 = vmul.f32 %v2656, %v967
        %v2704 = vmul.f32 %v2655, %v972
        %v2705 = vmul.f32 %v2654, %v977
        %v2706 = vmul.f32 %v2653, %v982
        %v2707 = vmul.f32 %v2652, %v987
        %v2708 = vmul.f32 %v2651, %v992
        %v2709 = vmul.f32 %v2650, %v997
        %v2710 = vmul.f32 %v2649, %v1002
        %v2711 = vmul.f32 %v2648, %v1007
        %v2712 = vrot.slane %v2534, 1
        %v2713 = vrot.slane %v2536, 1
        %v2714 = vrot.slane %v2539, 1
        %v2715 = vrot.slane %v2541, 1
        %v2716 = vrot.slane %v2544, 1
        %v2717 = vrot.slane %v2546, 1
        %v2718 = vrot.slane %v2549, 1
        %v2719 = vrot.slane %v2551, 1
        %v2720 = vrot.slane %v2554, 1
        %v2721 = vrot.slane %v2556, 1
        %v2722 = vrot.slane %v2559, 1
        %v2723 = vrot.slane %v2561, 1
        %v2724 = vrot.slane %v2564, 1
        %v2725 = vrot.slane %v2566, 1
        %v2726 = vrot.slane %v2569, 1
        %v2727 = vrot.slane %v2571, 1
        %v2728 = vrot.slane %v2574, 1
        %v2729 = vrot.slane %v2576, 1
        %v2730 = vrot.slane %v2579, 1
        %v2731 = vrot.slane %v2581, 1
        %v2732 = vrot.slane %v2584, 1
        %v2733 = vrot.slane %v2586, 1
        %v2734 = vrot.slane %v2589, 1
        %v2735 = vrot.slane %v2591, 1
        %v2736 = vrot.slane %v2594, 1
        %v2737 = vrot.slane %v2596, 1
        %v2738 = vrot.slane %v2599, 1
        %v2739 = vrot.slane %v2601, 1
        %v2740 = vrot.slane %v2604, 1
        %v2741 = vrot.slane %v2606, 1
        %v2742 = vrot.slane %v2609, 1
        %v2743 = vrot.slane %v2611, 1
        %v2744 = vsel %vm1695, %v2742, %v2743
        %v2745 = vsel %vm1695, %v2741, %v2742
        %v2746 = vsel %vm1695, %v2740, %v2741
        %v2747 = vsel %vm1695, %v2739, %v2740
        %v2748 = vsel %vm1695, %v2738, %v2739
        %v2749 = vsel %vm1695, %v2737, %v2738
        %v2750 = vsel %vm1695, %v2736, %v2737
        %v2751 = vsel %vm1695, %v2735, %v2736
        %v2752 = vsel %vm1695, %v2734, %v2735
        %v2753 = vsel %vm1695, %v2733, %v2734
        %v2754 = vsel %vm1695, %v2732, %v2733
        %v2755 = vsel %vm1695, %v2731, %v2732
        %v2756 = vsel %vm1695, %v2730, %v2731
        %v2757 = vsel %vm1695, %v2729, %v2730
        %v2758 = vsel %vm1695, %v2728, %v2729
        %v2759 = vsel %vm1695, %v2727, %v2728
        %v2760 = vsel %vm1695, %v2726, %v2727
        %v2761 = vsel %vm1695, %v2725, %v2726
        %v2762 = vsel %vm1695, %v2724, %v2725
        %v2763 = vsel %vm1695, %v2723, %v2724
        %v2764 = vsel %vm1695, %v2722, %v2723
        %v2765 = vsel %vm1695, %v2721, %v2722
        %v2766 = vsel %vm1695, %v2720, %v2721
        %v2767 = vsel %vm1695, %v2719, %v2720
        %v2768 = vsel %vm1695, %v2718, %v2719
        %v2769 = vsel %vm1695, %v2717, %v2718
        %v2770 = vsel %vm1695, %v2716, %v2717
        %v2771 = vsel %vm1695, %v2715, %v2716
        %v2772 = vsel %vm1695, %v2714, %v2715
        %v2773 = vsel %vm1695, %v2713, %v2714
        %v2774 = vsel %vm1695, %v2712, %v2713
        %v2775 = vsel %vm1695, %v2743, %v2712
        %v2776 = vmul.f32 %v2774, %v1011
        %v2777 = vmul.f32 %v2773, %v1015
        %v2778 = vmul.f32 %v2772, %v1019
        %v2779 = vmul.f32 %v2771, %v1023
        %v2780 = vmul.f32 %v2770, %v1027
        %v2781 = vmul.f32 %v2769, %v1031
        %v2782 = vmul.f32 %v2768, %v1035
        %v2783 = vmul.f32 %v2767, %v1039
        %v2784 = vmul.f32 %v2766, %v1043
        %v2785 = vmul.f32 %v2765, %v1047
        %v2786 = vmul.f32 %v2764, %v1051
        %v2787 = vmul.f32 %v2763, %v1055
        %v2788 = vmul.f32 %v2762, %v1059
        %v2789 = vmul.f32 %v2761, %v1063
        %v2790 = vmul.f32 %v2760, %v1067
        %v2791 = vmul.f32 %v2759, %v1071
        %v2792 = vmul.f32 %v2758, %v1075
        %v2793 = vmul.f32 %v2757, %v1079
        %v2794 = vmul.f32 %v2756, %v1083
        %v2795 = vmul.f32 %v2755, %v1087
        %v2796 = vmul.f32 %v2754, %v1091
        %v2797 = vmul.f32 %v2753, %v1095
        %v2798 = vmul.f32 %v2752, %v1099
        %v2799 = vmul.f32 %v2751, %v1103
        %v2800 = vmul.f32 %v2750, %v1107
        %v2801 = vmul.f32 %v2749, %v1111
        %v2802 = vmul.f32 %v2748, %v1115
        %v2803 = vmul.f32 %v2747, %v1119
        %v2804 = vmul.f32 %v2746, %v1123
        %v2805 = vmul.f32 %v2745, %v1127
        %v2806 = vmul.f32 %v2744, %v1131
        %v2807 = vmul.f32 %v2775, %v1135
        %v2808 = vperm.slane %v2614, 0
        %v2809 = vmul.f32 %v2680, %v2808
        %v2810 = vmul.f32 %v2681, %v2808
        %v2811 = vmul.f32 %v2682, %v2808
        %v2812 = vmul.f32 %v2683, %v2808
        %v2813 = vmul.f32 %v2684, %v2808
        %v2814 = vmul.f32 %v2685, %v2808
        %v2815 = vmul.f32 %v2686, %v2808
        %v2816 = vmul.f32 %v2687, %v2808
        %v2817 = vmul.f32 %v2688, %v2808
        %v2818 = vmul.f32 %v2689, %v2808
        %v2819 = vmul.f32 %v2690, %v2808
        %v2820 = vmul.f32 %v2691, %v2808
        %v2821 = vmul.f32 %v2692, %v2808
        %v2822 = vmul.f32 %v2693, %v2808
        %v2823 = vmul.f32 %v2694, %v2808
        %v2824 = vmul.f32 %v2695, %v2808
        %v2825 = vmul.f32 %v2696, %v2808
        %v2826 = vmul.f32 %v2697, %v2808
        %v2827 = vmul.f32 %v2698, %v2808
        %v2828 = vmul.f32 %v2699, %v2808
        %v2829 = vmul.f32 %v2700, %v2808
        %v2830 = vmul.f32 %v2701, %v2808
        %v2831 = vmul.f32 %v2702, %v2808
        %v2832 = vmul.f32 %v2703, %v2808
        %v2833 = vmul.f32 %v2704, %v2808
        %v2834 = vmul.f32 %v2705, %v2808
        %v2835 = vmul.f32 %v2706, %v2808
        %v2836 = vmul.f32 %v2707, %v2808
        %v2837 = vmul.f32 %v2708, %v2808
        %v2838 = vmul.f32 %v2709, %v2808
        %v2839 = vmul.f32 %v2710, %v2808
        %v2840 = vmul.f32 %v2711, %v2808
        %v2841 = vperm.slane %v2614, 1
        %v2842 = vmul.f32 %v2534, %v2841
        %v2843 = vmul.f32 %v2536, %v2841
        %v2844 = vmul.f32 %v2539, %v2841
        %v2845 = vmul.f32 %v2541, %v2841
        %v2846 = vmul.f32 %v2544, %v2841
        %v2847 = vmul.f32 %v2546, %v2841
        %v2848 = vmul.f32 %v2549, %v2841
        %v2849 = vmul.f32 %v2551, %v2841
        %v2850 = vmul.f32 %v2554, %v2841
        %v2851 = vmul.f32 %v2556, %v2841
        %v2852 = vmul.f32 %v2559, %v2841
        %v2853 = vmul.f32 %v2561, %v2841
        %v2854 = vmul.f32 %v2564, %v2841
        %v2855 = vmul.f32 %v2566, %v2841
        %v2856 = vmul.f32 %v2569, %v2841
        %v2857 = vmul.f32 %v2571, %v2841
        %v2858 = vmul.f32 %v2574, %v2841
        %v2859 = vmul.f32 %v2576, %v2841
        %v2860 = vmul.f32 %v2579, %v2841
        %v2861 = vmul.f32 %v2581, %v2841
        %v2862 = vmul.f32 %v2584, %v2841
        %v2863 = vmul.f32 %v2586, %v2841
        %v2864 = vmul.f32 %v2589, %v2841
        %v2865 = vmul.f32 %v2591, %v2841
        %v2866 = vmul.f32 %v2594, %v2841
        %v2867 = vmul.f32 %v2596, %v2841
        %v2868 = vmul.f32 %v2599, %v2841
        %v2869 = vmul.f32 %v2601, %v2841
        %v2870 = vmul.f32 %v2604, %v2841
        %v2871 = vmul.f32 %v2606, %v2841
        %v2872 = vmul.f32 %v2609, %v2841
        %v2873 = vmul.f32 %v2611, %v2841
        %v2874 = vadd.f32 %v2809, %v2842
        %v2875 = vadd.f32 %v2810, %v2843
        %v2876 = vadd.f32 %v2811, %v2844
        %v2877 = vadd.f32 %v2812, %v2845
        %v2878 = vadd.f32 %v2813, %v2846
        %v2879 = vadd.f32 %v2814, %v2847
        %v2880 = vadd.f32 %v2815, %v2848
        %v2881 = vadd.f32 %v2816, %v2849
        %v2882 = vadd.f32 %v2817, %v2850
        %v2883 = vadd.f32 %v2818, %v2851
        %v2884 = vadd.f32 %v2819, %v2852
        %v2885 = vadd.f32 %v2820, %v2853
        %v2886 = vadd.f32 %v2821, %v2854
        %v2887 = vadd.f32 %v2822, %v2855
        %v2888 = vadd.f32 %v2823, %v2856
        %v2889 = vadd.f32 %v2824, %v2857
        %v2890 = vadd.f32 %v2825, %v2858
        %v2891 = vadd.f32 %v2826, %v2859
        %v2892 = vadd.f32 %v2827, %v2860
        %v2893 = vadd.f32 %v2828, %v2861
        %v2894 = vadd.f32 %v2829, %v2862
        %v2895 = vadd.f32 %v2830, %v2863
        %v2896 = vadd.f32 %v2831, %v2864
        %v2897 = vadd.f32 %v2832, %v2865
        %v2898 = vadd.f32 %v2833, %v2866
        %v2899 = vadd.f32 %v2834, %v2867
        %v2900 = vadd.f32 %v2835, %v2868
        %v2901 = vadd.f32 %v2836, %v2869
        %v2902 = vadd.f32 %v2837, %v2870
        %v2903 = vadd.f32 %v2838, %v2871
        %v2904 = vadd.f32 %v2839, %v2872
        %v2905 = vadd.f32 %v2840, %v2873
        %v2906 = vperm.slane %v2614, 2
        %v2907 = vmul.f32 %v2776, %v2906
        %v2908 = vmul.f32 %v2777, %v2906
        %v2909 = vmul.f32 %v2778, %v2906
        %v2910 = vmul.f32 %v2779, %v2906
        %v2911 = vmul.f32 %v2780, %v2906
        %v2912 = vmul.f32 %v2781, %v2906
        %v2913 = vmul.f32 %v2782, %v2906
        %v2914 = vmul.f32 %v2783, %v2906
        %v2915 = vmul.f32 %v2784, %v2906
        %v2916 = vmul.f32 %v2785, %v2906
        %v2917 = vmul.f32 %v2786, %v2906
        %v2918 = vmul.f32 %v2787, %v2906
        %v2919 = vmul.f32 %v2788, %v2906
        %v2920 = vmul.f32 %v2789, %v2906
        %v2921 = vmul.f32 %v2790, %v2906
        %v2922 = vmul.f32 %v2791, %v2906
        %v2923 = vmul.f32 %v2792, %v2906
        %v2924 = vmul.f32 %v2793, %v2906
        %v2925 = vmul.f32 %v2794, %v2906
        %v2926 = vmul.f32 %v2795, %v2906
        %v2927 = vmul.f32 %v2796, %v2906
        %v2928 = vmul.f32 %v2797, %v2906
        %v2929 = vmul.f32 %v2798, %v2906
        %v2930 = vmul.f32 %v2799, %v2906
        %v2931 = vmul.f32 %v2800, %v2906
        %v2932 = vmul.f32 %v2801, %v2906
        %v2933 = vmul.f32 %v2802, %v2906
        %v2934 = vmul.f32 %v2803, %v2906
        %v2935 = vmul.f32 %v2804, %v2906
        %v2936 = vmul.f32 %v2805, %v2906
        %v2937 = vmul.f32 %v2806, %v2906
        %v2938 = vmul.f32 %v2807, %v2906
        %v2939 = vadd.f32 %v2874, %v2907
        %v2940 = vadd.f32 %v2875, %v2908
        %v2941 = vadd.f32 %v2876, %v2909
        %v2942 = vadd.f32 %v2877, %v2910
        %v2943 = vadd.f32 %v2878, %v2911
        %v2944 = vadd.f32 %v2879, %v2912
        %v2945 = vadd.f32 %v2880, %v2913
        %v2946 = vadd.f32 %v2881, %v2914
        %v2947 = vadd.f32 %v2882, %v2915
        %v2948 = vadd.f32 %v2883, %v2916
        %v2949 = vadd.f32 %v2884, %v2917
        %v2950 = vadd.f32 %v2885, %v2918
        %v2951 = vadd.f32 %v2886, %v2919
        %v2952 = vadd.f32 %v2887, %v2920
        %v2953 = vadd.f32 %v2888, %v2921
        %v2954 = vadd.f32 %v2889, %v2922
        %v2955 = vadd.f32 %v2890, %v2923
        %v2956 = vadd.f32 %v2891, %v2924
        %v2957 = vadd.f32 %v2892, %v2925
        %v2958 = vadd.f32 %v2893, %v2926
        %v2959 = vadd.f32 %v2894, %v2927
        %v2960 = vadd.f32 %v2895, %v2928
        %v2961 = vadd.f32 %v2896, %v2929
        %v2962 = vadd.f32 %v2897, %v2930
        %v2963 = vadd.f32 %v2898, %v2931
        %v2964 = vadd.f32 %v2899, %v2932
        %v2965 = vadd.f32 %v2900, %v2933
        %v2966 = vadd.f32 %v2901, %v2934
        %v2967 = vadd.f32 %v2902, %v2935
        %v2968 = vadd.f32 %v2903, %v2936
        %v2969 = vadd.f32 %v2904, %v2937
        %v2970 = vadd.f32 %v2905, %v2938
        %v2971 = vperm.slane %v2614, 3
        %v2972 = vmul.f32 %v2680, %v2971
        %v2973 = vmul.f32 %v2681, %v2971
        %v2974 = vmul.f32 %v2682, %v2971
        %v2975 = vmul.f32 %v2683, %v2971
        %v2976 = vmul.f32 %v2684, %v2971
        %v2977 = vmul.f32 %v2685, %v2971
        %v2978 = vmul.f32 %v2686, %v2971
        %v2979 = vmul.f32 %v2687, %v2971
        %v2980 = vmul.f32 %v2688, %v2971
        %v2981 = vmul.f32 %v2689, %v2971
        %v2982 = vmul.f32 %v2690, %v2971
        %v2983 = vmul.f32 %v2691, %v2971
        %v2984 = vmul.f32 %v2692, %v2971
        %v2985 = vmul.f32 %v2693, %v2971
        %v2986 = vmul.f32 %v2694, %v2971
        %v2987 = vmul.f32 %v2695, %v2971
        %v2988 = vmul.f32 %v2696, %v2971
        %v2989 = vmul.f32 %v2697, %v2971
        %v2990 = vmul.f32 %v2698, %v2971
        %v2991 = vmul.f32 %v2699, %v2971
        %v2992 = vmul.f32 %v2700, %v2971
        %v2993 = vmul.f32 %v2701, %v2971
        %v2994 = vmul.f32 %v2702, %v2971
        %v2995 = vmul.f32 %v2703, %v2971
        %v2996 = vmul.f32 %v2704, %v2971
        %v2997 = vmul.f32 %v2705, %v2971
        %v2998 = vmul.f32 %v2706, %v2971
        %v2999 = vmul.f32 %v2707, %v2971
        %v3000 = vmul.f32 %v2708, %v2971
        %v3001 = vmul.f32 %v2709, %v2971
        %v3002 = vmul.f32 %v2710, %v2971
        %v3003 = vmul.f32 %v2711, %v2971
        %v3004 = vperm.slane %v2614, 4
        %v3005 = vmul.f32 %v2534, %v3004
        %v3006 = vmul.f32 %v2536, %v3004
        %v3007 = vmul.f32 %v2539, %v3004
        %v3008 = vmul.f32 %v2541, %v3004
        %v3009 = vmul.f32 %v2544, %v3004
        %v3010 = vmul.f32 %v2546, %v3004
        %v3011 = vmul.f32 %v2549, %v3004
        %v3012 = vmul.f32 %v2551, %v3004
        %v3013 = vmul.f32 %v2554, %v3004
        %v3014 = vmul.f32 %v2556, %v3004
        %v3015 = vmul.f32 %v2559, %v3004
        %v3016 = vmul.f32 %v2561, %v3004
        %v3017 = vmul.f32 %v2564, %v3004
        %v3018 = vmul.f32 %v2566, %v3004
        %v3019 = vmul.f32 %v2569, %v3004
        %v3020 = vmul.f32 %v2571, %v3004
        %v3021 = vmul.f32 %v2574, %v3004
        %v3022 = vmul.f32 %v2576, %v3004
        %v3023 = vmul.f32 %v2579, %v3004
        %v3024 = vmul.f32 %v2581, %v3004
        %v3025 = vmul.f32 %v2584, %v3004
        %v3026 = vmul.f32 %v2586, %v3004
        %v3027 = vmul.f32 %v2589, %v3004
        %v3028 = vmul.f32 %v2591, %v3004
        %v3029 = vmul.f32 %v2594, %v3004
        %v3030 = vmul.f32 %v2596, %v3004
        %v3031 = vmul.f32 %v2599, %v3004
        %v3032 = vmul.f32 %v2601, %v3004
        %v3033 = vmul.f32 %v2604, %v3004
        %v3034 = vmul.f32 %v2606, %v3004
        %v3035 = vmul.f32 %v2609, %v3004
        %v3036 = vmul.f32 %v2611, %v3004
        %v3037 = vadd.f32 %v2972, %v3005
        %v3038 = vadd.f32 %v2973, %v3006
        %v3039 = vadd.f32 %v2974, %v3007
        %v3040 = vadd.f32 %v2975, %v3008
        %v3041 = vadd.f32 %v2976, %v3009
        %v3042 = vadd.f32 %v2977, %v3010
        %v3043 = vadd.f32 %v2978, %v3011
        %v3044 = vadd.f32 %v2979, %v3012
        %v3045 = vadd.f32 %v2980, %v3013
        %v3046 = vadd.f32 %v2981, %v3014
        %v3047 = vadd.f32 %v2982, %v3015
        %v3048 = vadd.f32 %v2983, %v3016
        %v3049 = vadd.f32 %v2984, %v3017
        %v3050 = vadd.f32 %v2985, %v3018
        %v3051 = vadd.f32 %v2986, %v3019
        %v3052 = vadd.f32 %v2987, %v3020
        %v3053 = vadd.f32 %v2988, %v3021
        %v3054 = vadd.f32 %v2989, %v3022
        %v3055 = vadd.f32 %v2990, %v3023
        %v3056 = vadd.f32 %v2991, %v3024
        %v3057 = vadd.f32 %v2992, %v3025
        %v3058 = vadd.f32 %v2993, %v3026
        %v3059 = vadd.f32 %v2994, %v3027
        %v3060 = vadd.f32 %v2995, %v3028
        %v3061 = vadd.f32 %v2996, %v3029
        %v3062 = vadd.f32 %v2997, %v3030
        %v3063 = vadd.f32 %v2998, %v3031
        %v3064 = vadd.f32 %v2999, %v3032
        %v3065 = vadd.f32 %v3000, %v3033
        %v3066 = vadd.f32 %v3001, %v3034
        %v3067 = vadd.f32 %v3002, %v3035
        %v3068 = vadd.f32 %v3003, %v3036
        %v3069 = vperm.slane %v2614, 5
        %v3070 = vmul.f32 %v2776, %v3069
        %v3071 = vmul.f32 %v2777, %v3069
        %v3072 = vmul.f32 %v2778, %v3069
        %v3073 = vmul.f32 %v2779, %v3069
        %v3074 = vmul.f32 %v2780, %v3069
        %v3075 = vmul.f32 %v2781, %v3069
        %v3076 = vmul.f32 %v2782, %v3069
        %v3077 = vmul.f32 %v2783, %v3069
        %v3078 = vmul.f32 %v2784, %v3069
        %v3079 = vmul.f32 %v2785, %v3069
        %v3080 = vmul.f32 %v2786, %v3069
        %v3081 = vmul.f32 %v2787, %v3069
        %v3082 = vmul.f32 %v2788, %v3069
        %v3083 = vmul.f32 %v2789, %v3069
        %v3084 = vmul.f32 %v2790, %v3069
        %v3085 = vmul.f32 %v2791, %v3069
        %v3086 = vmul.f32 %v2792, %v3069
        %v3087 = vmul.f32 %v2793, %v3069
        %v3088 = vmul.f32 %v2794, %v3069
        %v3089 = vmul.f32 %v2795, %v3069
        %v3090 = vmul.f32 %v2796, %v3069
        %v3091 = vmul.f32 %v2797, %v3069
        %v3092 = vmul.f32 %v2798, %v3069
        %v3093 = vmul.f32 %v2799, %v3069
        %v3094 = vmul.f32 %v2800, %v3069
        %v3095 = vmul.f32 %v2801, %v3069
        %v3096 = vmul.f32 %v2802, %v3069
        %v3097 = vmul.f32 %v2803, %v3069
        %v3098 = vmul.f32 %v2804, %v3069
        %v3099 = vmul.f32 %v2805, %v3069
        %v3100 = vmul.f32 %v2806, %v3069
        %v3101 = vmul.f32 %v2807, %v3069
        %v3102 = vadd.f32 %v3037, %v3070
        %v3103 = vadd.f32 %v3038, %v3071
        %v3104 = vadd.f32 %v3039, %v3072
        %v3105 = vadd.f32 %v3040, %v3073
        %v3106 = vadd.f32 %v3041, %v3074
        %v3107 = vadd.f32 %v3042, %v3075
        %v3108 = vadd.f32 %v3043, %v3076
        %v3109 = vadd.f32 %v3044, %v3077
        %v3110 = vadd.f32 %v3045, %v3078
        %v3111 = vadd.f32 %v3046, %v3079
        %v3112 = vadd.f32 %v3047, %v3080
        %v3113 = vadd.f32 %v3048, %v3081
        %v3114 = vadd.f32 %v3049, %v3082
        %v3115 = vadd.f32 %v3050, %v3083
        %v3116 = vadd.f32 %v3051, %v3084
        %v3117 = vadd.f32 %v3052, %v3085
        %v3118 = vadd.f32 %v3053, %v3086
        %v3119 = vadd.f32 %v3054, %v3087
        %v3120 = vadd.f32 %v3055, %v3088
        %v3121 = vadd.f32 %v3056, %v3089
        %v3122 = vadd.f32 %v3057, %v3090
        %v3123 = vadd.f32 %v3058, %v3091
        %v3124 = vadd.f32 %v3059, %v3092
        %v3125 = vadd.f32 %v3060, %v3093
        %v3126 = vadd.f32 %v3061, %v3094
        %v3127 = vadd.f32 %v3062, %v3095
        %v3128 = vadd.f32 %v3063, %v3096
        %v3129 = vadd.f32 %v3064, %v3097
        %v3130 = vadd.f32 %v3065, %v3098
        %v3131 = vadd.f32 %v3066, %v3099
        %v3132 = vadd.f32 %v3067, %v3100
        %v3133 = vadd.f32 %v3068, %v3101
        %v3134 = vperm.slane %v2614, 6
        %v3135 = vmul.f32 %v2680, %v3134
        %v3136 = vmul.f32 %v2681, %v3134
        %v3137 = vmul.f32 %v2682, %v3134
        %v3138 = vmul.f32 %v2683, %v3134
        %v3139 = vmul.f32 %v2684, %v3134
        %v3140 = vmul.f32 %v2685, %v3134
        %v3141 = vmul.f32 %v2686, %v3134
        %v3142 = vmul.f32 %v2687, %v3134
        %v3143 = vmul.f32 %v2688, %v3134
        %v3144 = vmul.f32 %v2689, %v3134
        %v3145 = vmul.f32 %v2690, %v3134
        %v3146 = vmul.f32 %v2691, %v3134
        %v3147 = vmul.f32 %v2692, %v3134
        %v3148 = vmul.f32 %v2693, %v3134
        %v3149 = vmul.f32 %v2694, %v3134
        %v3150 = vmul.f32 %v2695, %v3134
        %v3151 = vmul.f32 %v2696, %v3134
        %v3152 = vmul.f32 %v2697, %v3134
        %v3153 = vmul.f32 %v2698, %v3134
        %v3154 = vmul.f32 %v2699, %v3134
        %v3155 = vmul.f32 %v2700, %v3134
        %v3156 = vmul.f32 %v2701, %v3134
        %v3157 = vmul.f32 %v2702, %v3134
        %v3158 = vmul.f32 %v2703, %v3134
        %v3159 = vmul.f32 %v2704, %v3134
        %v3160 = vmul.f32 %v2705, %v3134
        %v3161 = vmul.f32 %v2706, %v3134
        %v3162 = vmul.f32 %v2707, %v3134
        %v3163 = vmul.f32 %v2708, %v3134
        %v3164 = vmul.f32 %v2709, %v3134
        %v3165 = vmul.f32 %v2710, %v3134
        %v3166 = vmul.f32 %v2711, %v3134
        %v3167 = vperm.slane %v2614, 7
        %v3168 = vmul.f32 %v2534, %v3167
        %v3169 = vmul.f32 %v2536, %v3167
        %v3170 = vmul.f32 %v2539, %v3167
        %v3171 = vmul.f32 %v2541, %v3167
        %v3172 = vmul.f32 %v2544, %v3167
        %v3173 = vmul.f32 %v2546, %v3167
        %v3174 = vmul.f32 %v2549, %v3167
        %v3175 = vmul.f32 %v2551, %v3167
        %v3176 = vmul.f32 %v2554, %v3167
        %v3177 = vmul.f32 %v2556, %v3167
        %v3178 = vmul.f32 %v2559, %v3167
        %v3179 = vmul.f32 %v2561, %v3167
        %v3180 = vmul.f32 %v2564, %v3167
        %v3181 = vmul.f32 %v2566, %v3167
        %v3182 = vmul.f32 %v2569, %v3167
        %v3183 = vmul.f32 %v2571, %v3167
        %v3184 = vmul.f32 %v2574, %v3167
        %v3185 = vmul.f32 %v2576, %v3167
        %v3186 = vmul.f32 %v2579, %v3167
        %v3187 = vmul.f32 %v2581, %v3167
        %v3188 = vmul.f32 %v2584, %v3167
        %v3189 = vmul.f32 %v2586, %v3167
        %v3190 = vmul.f32 %v2589, %v3167
        %v3191 = vmul.f32 %v2591, %v3167
        %v3192 = vmul.f32 %v2594, %v3167
        %v3193 = vmul.f32 %v2596, %v3167
        %v3194 = vmul.f32 %v2599, %v3167
        %v3195 = vmul.f32 %v2601, %v3167
        %v3196 = vmul.f32 %v2604, %v3167
        %v3197 = vmul.f32 %v2606, %v3167
        %v3198 = vmul.f32 %v2609, %v3167
        %v3199 = vmul.f32 %v2611, %v3167
        %v3200 = vadd.f32 %v3135, %v3168
        %v3201 = vadd.f32 %v3136, %v3169
        %v3202 = vadd.f32 %v3137, %v3170
        %v3203 = vadd.f32 %v3138, %v3171
        %v3204 = vadd.f32 %v3139, %v3172
        %v3205 = vadd.f32 %v3140, %v3173
        %v3206 = vadd.f32 %v3141, %v3174
        %v3207 = vadd.f32 %v3142, %v3175
        %v3208 = vadd.f32 %v3143, %v3176
        %v3209 = vadd.f32 %v3144, %v3177
        %v3210 = vadd.f32 %v3145, %v3178
        %v3211 = vadd.f32 %v3146, %v3179
        %v3212 = vadd.f32 %v3147, %v3180
        %v3213 = vadd.f32 %v3148, %v3181
        %v3214 = vadd.f32 %v3149, %v3182
        %v3215 = vadd.f32 %v3150, %v3183
        %v3216 = vadd.f32 %v3151, %v3184
        %v3217 = vadd.f32 %v3152, %v3185
        %v3218 = vadd.f32 %v3153, %v3186
        %v3219 = vadd.f32 %v3154, %v3187
        %v3220 = vadd.f32 %v3155, %v3188
        %v3221 = vadd.f32 %v3156, %v3189
        %v3222 = vadd.f32 %v3157, %v3190
        %v3223 = vadd.f32 %v3158, %v3191
        %v3224 = vadd.f32 %v3159, %v3192
        %v3225 = vadd.f32 %v3160, %v3193
        %v3226 = vadd.f32 %v3161, %v3194
        %v3227 = vadd.f32 %v3162, %v3195
        %v3228 = vadd.f32 %v3163, %v3196
        %v3229 = vadd.f32 %v3164, %v3197
        %v3230 = vadd.f32 %v3165, %v3198
        %v3231 = vadd.f32 %v3166, %v3199
        %v3232 = vperm.slane %v2615, 0
        %v3233 = vmul.f32 %v2776, %v3232
        %v3234 = vmul.f32 %v2777, %v3232
        %v3235 = vmul.f32 %v2778, %v3232
        %v3236 = vmul.f32 %v2779, %v3232
        %v3237 = vmul.f32 %v2780, %v3232
        %v3238 = vmul.f32 %v2781, %v3232
        %v3239 = vmul.f32 %v2782, %v3232
        %v3240 = vmul.f32 %v2783, %v3232
        %v3241 = vmul.f32 %v2784, %v3232
        %v3242 = vmul.f32 %v2785, %v3232
        %v3243 = vmul.f32 %v2786, %v3232
        %v3244 = vmul.f32 %v2787, %v3232
        %v3245 = vmul.f32 %v2788, %v3232
        %v3246 = vmul.f32 %v2789, %v3232
        %v3247 = vmul.f32 %v2790, %v3232
        %v3248 = vmul.f32 %v2791, %v3232
        %v3249 = vmul.f32 %v2792, %v3232
        %v3250 = vmul.f32 %v2793, %v3232
        %v3251 = vmul.f32 %v2794, %v3232
        %v3252 = vmul.f32 %v2795, %v3232
        %v3253 = vmul.f32 %v2796, %v3232
        %v3254 = vmul.f32 %v2797, %v3232
        %v3255 = vmul.f32 %v2798, %v3232
        %v3256 = vmul.f32 %v2799, %v3232
        %v3257 = vmul.f32 %v2800, %v3232
        %v3258 = vmul.f32 %v2801, %v3232
        %v3259 = vmul.f32 %v2802, %v3232
        %v3260 = vmul.f32 %v2803, %v3232
        %v3261 = vmul.f32 %v2804, %v3232
        %v3262 = vmul.f32 %v2805, %v3232
        %v3263 = vmul.f32 %v2806, %v3232
        %v3264 = vmul.f32 %v2807, %v3232
        %v3265 = vadd.f32 %v3200, %v3233
        %v3266 = vadd.f32 %v3201, %v3234
        %v3267 = vadd.f32 %v3202, %v3235
        %v3268 = vadd.f32 %v3203, %v3236
        %v3269 = vadd.f32 %v3204, %v3237
        %v3270 = vadd.f32 %v3205, %v3238
        %v3271 = vadd.f32 %v3206, %v3239
        %v3272 = vadd.f32 %v3207, %v3240
        %v3273 = vadd.f32 %v3208, %v3241
        %v3274 = vadd.f32 %v3209, %v3242
        %v3275 = vadd.f32 %v3210, %v3243
        %v3276 = vadd.f32 %v3211, %v3244
        %v3277 = vadd.f32 %v3212, %v3245
        %v3278 = vadd.f32 %v3213, %v3246
        %v3279 = vadd.f32 %v3214, %v3247
        %v3280 = vadd.f32 %v3215, %v3248
        %v3281 = vadd.f32 %v3216, %v3249
        %v3282 = vadd.f32 %v3217, %v3250
        %v3283 = vadd.f32 %v3218, %v3251
        %v3284 = vadd.f32 %v3219, %v3252
        %v3285 = vadd.f32 %v3220, %v3253
        %v3286 = vadd.f32 %v3221, %v3254
        %v3287 = vadd.f32 %v3222, %v3255
        %v3288 = vadd.f32 %v3223, %v3256
        %v3289 = vadd.f32 %v3224, %v3257
        %v3290 = vadd.f32 %v3225, %v3258
        %v3291 = vadd.f32 %v3226, %v3259
        %v3292 = vadd.f32 %v3227, %v3260
        %v3293 = vadd.f32 %v3228, %v3261
        %v3294 = vadd.f32 %v3229, %v3262
        %v3295 = vadd.f32 %v3230, %v3263
        %v3296 = vadd.f32 %v3231, %v3264
        %v3297 = vmul.f32 %v2969, %v1139
        %v3298 = vmul.f32 %v2970, %v1143
        %v3299 = vmul.f32 %v2939, %v1147
        %v3300 = vmul.f32 %v2940, %v1151
        %v3301 = vmul.f32 %v2941, %v1155
        %v3302 = vmul.f32 %v2942, %v1159
        %v3303 = vmul.f32 %v2943, %v1163
        %v3304 = vmul.f32 %v2944, %v1167
        %v3305 = vmul.f32 %v2945, %v1171
        %v3306 = vmul.f32 %v2946, %v1175
        %v3307 = vmul.f32 %v2947, %v1179
        %v3308 = vmul.f32 %v2948, %v1183
        %v3309 = vmul.f32 %v2949, %v1187
        %v3310 = vmul.f32 %v2950, %v1191
        %v3311 = vmul.f32 %v2951, %v1195
        %v3312 = vmul.f32 %v2952, %v1199
        %v3313 = vmul.f32 %v2953, %v1203
        %v3314 = vmul.f32 %v2954, %v1207
        %v3315 = vmul.f32 %v2955, %v1211
        %v3316 = vmul.f32 %v2956, %v1215
        %v3317 = vmul.f32 %v2957, %v1219
        %v3318 = vmul.f32 %v2958, %v1223
        %v3319 = vmul.f32 %v2959, %v1227
        %v3320 = vmul.f32 %v2960, %v1231
        %v3321 = vmul.f32 %v2961, %v1235
        %v3322 = vmul.f32 %v2962, %v1239
        %v3323 = vmul.f32 %v2963, %v1243
        %v3324 = vmul.f32 %v2964, %v1247
        %v3325 = vmul.f32 %v2965, %v1251
        %v3326 = vmul.f32 %v2966, %v1255
        %v3327 = vmul.f32 %v2967, %v1259
        %v3328 = vmul.f32 %v2968, %v1263
        %v3329 = vadd.f32 %v3102, %v3297
        %v3330 = vadd.f32 %v3103, %v3298
        %v3331 = vadd.f32 %v3104, %v3299
        %v3332 = vadd.f32 %v3105, %v3300
        %v3333 = vadd.f32 %v3106, %v3301
        %v3334 = vadd.f32 %v3107, %v3302
        %v3335 = vadd.f32 %v3108, %v3303
        %v3336 = vadd.f32 %v3109, %v3304
        %v3337 = vadd.f32 %v3110, %v3305
        %v3338 = vadd.f32 %v3111, %v3306
        %v3339 = vadd.f32 %v3112, %v3307
        %v3340 = vadd.f32 %v3113, %v3308
        %v3341 = vadd.f32 %v3114, %v3309
        %v3342 = vadd.f32 %v3115, %v3310
        %v3343 = vadd.f32 %v3116, %v3311
        %v3344 = vadd.f32 %v3117, %v3312
        %v3345 = vadd.f32 %v3118, %v3313
        %v3346 = vadd.f32 %v3119, %v3314
        %v3347 = vadd.f32 %v3120, %v3315
        %v3348 = vadd.f32 %v3121, %v3316
        %v3349 = vadd.f32 %v3122, %v3317
        %v3350 = vadd.f32 %v3123, %v3318
        %v3351 = vadd.f32 %v3124, %v3319
        %v3352 = vadd.f32 %v3125, %v3320
        %v3353 = vadd.f32 %v3126, %v3321
        %v3354 = vadd.f32 %v3127, %v3322
        %v3355 = vadd.f32 %v3128, %v3323
        %v3356 = vadd.f32 %v3129, %v3324
        %v3357 = vadd.f32 %v3130, %v3325
        %v3358 = vadd.f32 %v3131, %v3326
        %v3359 = vadd.f32 %v3132, %v3327
        %v3360 = vadd.f32 %v3133, %v3328
        %v3361 = vmul.f32 %v3267, %v1267
        %v3362 = vmul.f32 %v3268, %v1271
        %v3363 = vmul.f32 %v3269, %v1275
        %v3364 = vmul.f32 %v3270, %v1279
        %v3365 = vmul.f32 %v3271, %v1283
        %v3366 = vmul.f32 %v3272, %v1287
        %v3367 = vmul.f32 %v3273, %v1291
        %v3368 = vmul.f32 %v3274, %v1295
        %v3369 = vmul.f32 %v3275, %v1299
        %v3370 = vmul.f32 %v3276, %v1303
        %v3371 = vmul.f32 %v3277, %v1307
        %v3372 = vmul.f32 %v3278, %v1311
        %v3373 = vmul.f32 %v3279, %v1315
        %v3374 = vmul.f32 %v3280, %v1319
        %v3375 = vmul.f32 %v3281, %v1323
        %v3376 = vmul.f32 %v3282, %v1327
        %v3377 = vmul.f32 %v3283, %v1331
        %v3378 = vmul.f32 %v3284, %v1335
        %v3379 = vmul.f32 %v3285, %v1339
        %v3380 = vmul.f32 %v3286, %v1343
        %v3381 = vmul.f32 %v3287, %v1347
        %v3382 = vmul.f32 %v3288, %v1351
        %v3383 = vmul.f32 %v3289, %v1355
        %v3384 = vmul.f32 %v3290, %v1359
        %v3385 = vmul.f32 %v3291, %v1363
        %v3386 = vmul.f32 %v3292, %v1367
        %v3387 = vmul.f32 %v3293, %v1371
        %v3388 = vmul.f32 %v3294, %v1375
        %v3389 = vmul.f32 %v3295, %v1379
        %v3390 = vmul.f32 %v3296, %v1383
        %v3391 = vmul.f32 %v3265, %v1387
        %v3392 = vmul.f32 %v3266, %v1391
        %v3393 = vadd.f32 %v3329, %v3361
        %v3394 = vadd.f32 %v3330, %v3362
        %v3395 = vadd.f32 %v3331, %v3363
        %v3396 = vadd.f32 %v3332, %v3364
        %v3397 = vadd.f32 %v3333, %v3365
        %v3398 = vadd.f32 %v3334, %v3366
        %v3399 = vadd.f32 %v3335, %v3367
        %v3400 = vadd.f32 %v3336, %v3368
        %v3401 = vadd.f32 %v3337, %v3369
        %v3402 = vadd.f32 %v3338, %v3370
        %v3403 = vadd.f32 %v3339, %v3371
        %v3404 = vadd.f32 %v3340, %v3372
        %v3405 = vadd.f32 %v3341, %v3373
        %v3406 = vadd.f32 %v3342, %v3374
        %v3407 = vadd.f32 %v3343, %v3375
        %v3408 = vadd.f32 %v3344, %v3376
        %v3409 = vadd.f32 %v3345, %v3377
        %v3410 = vadd.f32 %v3346, %v3378
        %v3411 = vadd.f32 %v3347, %v3379
        %v3412 = vadd.f32 %v3348, %v3380
        %v3413 = vadd.f32 %v3349, %v3381
        %v3414 = vadd.f32 %v3350, %v3382
        %v3415 = vadd.f32 %v3351, %v3383
        %v3416 = vadd.f32 %v3352, %v3384
        %v3417 = vadd.f32 %v3353, %v3385
        %v3418 = vadd.f32 %v3354, %v3386
        %v3419 = vadd.f32 %v3355, %v3387
        %v3420 = vadd.f32 %v3356, %v3388
        %v3421 = vadd.f32 %v3357, %v3389
        %v3422 = vadd.f32 %v3358, %v3390
        %v3423 = vadd.f32 %v3359, %v3391
        %v3424 = vadd.f32 %v3360, %v3392
        %v3425 = vld [vmem:[%s6 + $0x1] sm:$0x1]
        %v3426 = vperm.slane %v3425, 0
        %v3427 = vadd.f32 %v3393, %v3426
        %v3428 = vadd.f32 %v3394, %v3426
        %v3429 = vadd.f32 %v3395, %v3426
        %v3430 = vadd.f32 %v3396, %v3426
        %v3431 = vadd.f32 %v3397, %v3426
        %v3432 = vadd.f32 %v3398, %v3426
        %v3433 = vadd.f32 %v3399, %v3426
        %v3434 = vadd.f32 %v3400, %v3426
        %v3435 = vadd.f32 %v3401, %v3426
        %v3436 = vadd.f32 %v3402, %v3426
        %v3437 = vadd.f32 %v3403, %v3426
        %v3438 = vadd.f32 %v3404, %v3426
        %v3439 = vadd.f32 %v3405, %v3426
        %v3440 = vadd.f32 %v3406, %v3426
        %v3441 = vadd.f32 %v3407, %v3426
        %v3442 = vadd.f32 %v3408, %v3426
        %v3443 = vadd.f32 %v3409, %v3426
        %v3444 = vadd.f32 %v3410, %v3426
        %v3445 = vadd.f32 %v3411, %v3426
        %v3446 = vadd.f32 %v3412, %v3426
        %v3447 = vadd.f32 %v3413, %v3426
        %v3448 = vadd.f32 %v3414, %v3426
        %v3449 = vadd.f32 %v3415, %v3426
        %v3450 = vadd.f32 %v3416, %v3426
        %v3451 = vadd.f32 %v3417, %v3426
        %v3452 = vadd.f32 %v3418, %v3426
        %v3453 = vadd.f32 %v3419, %v3426
        %v3454 = vadd.f32 %v3420, %v3426
        %v3455 = vadd.f32 %v3421, %v3426
        %v3456 = vadd.f32 %v3422, %v3426
        %v3457 = vadd.f32 %v3423, %v3426
        %v3458 = vadd.f32 %v3424, %v3426
        %v3459 = vmax.f32 %v3427, 0.0
        %v3460 = vmax.f32 %v3428, 0.0
        %v3461 = vmax.f32 %v3429, 0.0
        %v3462 = vmax.f32 %v3430, 0.0
        %v3463 = vmax.f32 %v3431, 0.0
        %v3464 = vmax.f32 %v3432, 0.0
        %v3465 = vmax.f32 %v3433, 0.0
        %v3466 = vmax.f32 %v3434, 0.0
        %v3467 = vmax.f32 %v3435, 0.0
        %v3468 = vmax.f32 %v3436, 0.0
        %v3469 = vmax.f32 %v3437, 0.0
        %v3470 = vmax.f32 %v3438, 0.0
        %v3471 = vmax.f32 %v3439, 0.0
        %v3472 = vmax.f32 %v3440, 0.0
        %v3473 = vmax.f32 %v3441, 0.0
        %v3474 = vmax.f32 %v3442, 0.0
        %v3475 = vmax.f32 %v3443, 0.0
        %v3476 = vmax.f32 %v3444, 0.0
        %v3477 = vmax.f32 %v3445, 0.0
        %v3478 = vmax.f32 %v3446, 0.0
        %v3479 = vmax.f32 %v3447, 0.0
        %v3480 = vmax.f32 %v3448, 0.0
        %v3481 = vmax.f32 %v3449, 0.0
        %v3482 = vmax.f32 %v3450, 0.0
        %v3483 = vmax.f32 %v3451, 0.0
        %v3484 = vmax.f32 %v3452, 0.0
        %v3485 = vmax.f32 %v3453, 0.0
        %v3486 = vmax.f32 %v3454, 0.0
        %v3487 = vmax.f32 %v3455, 0.0
        %v3488 = vmax.f32 %v3456, 0.0
        %v3489 = vmax.f32 %v3457, 0.0
        %v3490 = vmax.f32 %v3458, 0.0
        %v3491 = vpack.c.bf16 %v3460, %v3459
        %v3492 = vpack.c.bf16 %v3462, %v3461
        %v3493 = vpack.c.bf16 %v3464, %v3463
        %v3494 = vpack.c.bf16 %v3466, %v3465
        %v3495 = vpack.c.bf16 %v3468, %v3467
        %v3496 = vpack.c.bf16 %v3470, %v3469
        %v3497 = vpack.c.bf16 %v3472, %v3471
        %v3498 = vpack.c.bf16 %v3474, %v3473
        %v3499 = vpack.c.bf16 %v3476, %v3475
        %v3500 = vpack.c.bf16 %v3478, %v3477
        %v3501 = vpack.c.bf16 %v3480, %v3479
        %v3502 = vpack.c.bf16 %v3482, %v3481
        %v3503 = vpack.c.bf16 %v3484, %v3483
        %v3504 = vpack.c.bf16 %v3486, %v3485
        %v3505 = vpack.c.bf16 %v3488, %v3487
        %v3506 = vpack.c.bf16 %v3490, %v3489
        %s3507 = scalar_lea.vmem [#allocation5], 128
        %v3508 = vld [vmem:[%s3507] sm:$0xf]
        %v3509 = vld [vmem:[%s3507 + $0x4] sm:$0xf]
        %v3510 = vld [vmem:[%s3507 + $0x8] sm:$0xf]
        %v3511 = vld [vmem:[%s3507 + $0xc] sm:$0xf]
        %v3512 = vld [vmem:[%s3507 + $0x10] sm:$0xf]
        %v3513 = vld [vmem:[%s3507 + $0x14] sm:$0xf]
        %v3514 = vld [vmem:[%s3507 + $0x18] sm:$0xf]
        %v3515 = vld [vmem:[%s3507 + $0x1c] sm:$0xf]
        %v3516 = vld [vmem:[%s3507 + $0x20] sm:$0xf]
        %v3517 = vld [vmem:[%s3507 + $0x24] sm:$0xf]
        %v3518 = vld [vmem:[%s3507 + $0x28] sm:$0xf]
        %v3519 = vld [vmem:[%s3507 + $0x2c] sm:$0xf]
        %v3520 = vld [vmem:[%s3507 + $0x30] sm:$0xf]
        %v3521 = vld [vmem:[%s3507 + $0x34] sm:$0xf]
        %v3522 = vld [vmem:[%s3507 + $0x38] sm:$0xf]
        %v3523 = vld [vmem:[%s3507 + $0x3c] sm:$0xf]
        %v3540 = vunpack.c.l.b16 %v3508
        %v3541 = vunpack.c.l.b16 %v3509
        %v3542 = vunpack.c.l.b16 %v3510
        %v3543 = vunpack.c.l.b16 %v3511
        %v3544 = vunpack.c.l.b16 %v3512
        %v3545 = vunpack.c.l.b16 %v3513
        %v3546 = vunpack.c.l.b16 %v3514
        %v3547 = vunpack.c.l.b16 %v3515
        %v3548 = vunpack.c.l.b16 %v3516
        %v3549 = vunpack.c.l.b16 %v3517
        %v3550 = vunpack.c.l.b16 %v3518
        %v3551 = vunpack.c.l.b16 %v3519
        %v3552 = vunpack.c.l.b16 %v3520
        %v3553 = vunpack.c.l.b16 %v3521
        %v3554 = vunpack.c.l.b16 %v3522
        %v3555 = vunpack.c.l.b16 %v3523
        %v3556 = vpack.c.b16 %v3541, %v3540
        %v3557 = vpack.c.b16 %v3543, %v3542
        %v3558 = vpack.c.b16 %v3545, %v3544
        %v3559 = vpack.c.b16 %v3547, %v3546
        %v3560 = vpack.c.b16 %v3549, %v3548
        %v3561 = vpack.c.b16 %v3551, %v3550
        %v3562 = vpack.c.b16 %v3553, %v3552
        %v3563 = vpack.c.b16 %v3555, %v3554
        %3572 = vmatpush.bf16.msra.mxu0 %v3563
        %3573 = vmatpush.bf16.msra.mxu0 %v3562
        %3574 = vmatpush.bf16.msra.mxu0 %v3561
        %3575 = vmatpush.bf16.msra.mxu0 %v3560
        %3576 = vmatpush.bf16.msra.mxu0 %v3559
        %3577 = vmatpush.bf16.msra.mxu0 %v3558
        %3578 = vmatpush.bf16.msra.mxu0 %v3557
        %3579 = vmatpush.bf16.msra.mxu0 %v3556
        %3580 = vmatmul.bf16.gmra.mxu0 %v3491
        %v3581 = vpop.f32.mrf.mxu0
        %v3582 = vadd.f32 0.0, %v3581
        %v3583 = vpop.f32.mrf.mxu0
        %v3584 = vadd.f32 0.0, %v3583
        %3585 = vmatmul.bf16.gmra.mxu0 %v3492
        %v3586 = vpop.f32.mrf.mxu0
        %v3587 = vadd.f32 0.0, %v3586
        %v3588 = vpop.f32.mrf.mxu0
        %v3589 = vadd.f32 0.0, %v3588
        %3590 = vmatmul.bf16.gmra.mxu0 %v3493
        %v3591 = vpop.f32.mrf.mxu0
        %v3592 = vadd.f32 0.0, %v3591
        %v3593 = vpop.f32.mrf.mxu0
        %v3594 = vadd.f32 0.0, %v3593
        %3595 = vmatmul.bf16.gmra.mxu0 %v3494
        %v3596 = vpop.f32.mrf.mxu0
        %v3597 = vadd.f32 0.0, %v3596
        %v3598 = vpop.f32.mrf.mxu0
        %v3599 = vadd.f32 0.0, %v3598
        %3600 = vmatmul.bf16.gmra.mxu0 %v3495
        %v3601 = vpop.f32.mrf.mxu0
        %v3602 = vadd.f32 0.0, %v3601
        %v3603 = vpop.f32.mrf.mxu0
        %v3604 = vadd.f32 0.0, %v3603
        %3605 = vmatmul.bf16.gmra.mxu0 %v3496
        %v3606 = vpop.f32.mrf.mxu0
        %v3607 = vadd.f32 0.0, %v3606
        %v3608 = vpop.f32.mrf.mxu0
        %v3609 = vadd.f32 0.0, %v3608
        %3610 = vmatmul.bf16.gmra.mxu0 %v3497
        %v3611 = vpop.f32.mrf.mxu0
        %v3612 = vadd.f32 0.0, %v3611
        %v3613 = vpop.f32.mrf.mxu0
        %v3614 = vadd.f32 0.0, %v3613
        %3615 = vmatmul.bf16.gmra.mxu0 %v3498
        %v3616 = vpop.f32.mrf.mxu0
        %v3617 = vadd.f32 0.0, %v3616
        %v3618 = vpop.f32.mrf.mxu0
        %v3619 = vadd.f32 0.0, %v3618
        %3620 = vmatmul.bf16.gmra.mxu0 %v3499
        %v3621 = vpop.f32.mrf.mxu0
        %v3622 = vadd.f32 0.0, %v3621
        %v3623 = vpop.f32.mrf.mxu0
        %v3624 = vadd.f32 0.0, %v3623
        %3625 = vmatmul.bf16.gmra.mxu0 %v3500
        %v3626 = vpop.f32.mrf.mxu0
        %v3627 = vadd.f32 0.0, %v3626
        %v3628 = vpop.f32.mrf.mxu0
        %v3629 = vadd.f32 0.0, %v3628
        %3630 = vmatmul.bf16.gmra.mxu0 %v3501
        %v3631 = vpop.f32.mrf.mxu0
        %v3632 = vadd.f32 0.0, %v3631
        %v3633 = vpop.f32.mrf.mxu0
        %v3634 = vadd.f32 0.0, %v3633
        %3635 = vmatmul.bf16.gmra.mxu0 %v3502
        %v3636 = vpop.f32.mrf.mxu0
        %v3637 = vadd.f32 0.0, %v3636
        %v3638 = vpop.f32.mrf.mxu0
        %v3639 = vadd.f32 0.0, %v3638
        %3640 = vmatmul.bf16.gmra.mxu0 %v3503
        %v3641 = vpop.f32.mrf.mxu0
        %v3642 = vadd.f32 0.0, %v3641
        %v3643 = vpop.f32.mrf.mxu0
        %v3644 = vadd.f32 0.0, %v3643
        %3645 = vmatmul.bf16.gmra.mxu0 %v3504
        %v3646 = vpop.f32.mrf.mxu0
        %v3647 = vadd.f32 0.0, %v3646
        %v3648 = vpop.f32.mrf.mxu0
        %v3649 = vadd.f32 0.0, %v3648
        %3650 = vmatmul.bf16.gmra.mxu0 %v3505
        %v3651 = vpop.f32.mrf.mxu0
        %v3652 = vadd.f32 0.0, %v3651
        %v3653 = vpop.f32.mrf.mxu0
        %v3654 = vadd.f32 0.0, %v3653
        %3655 = vmatmul.bf16.gmra.mxu0 %v3506
        %v3656 = vpop.f32.mrf.mxu0
        %v3657 = vadd.f32 0.0, %v3656
        %v3658 = vpop.f32.mrf.mxu0
        %v3659 = vadd.f32 0.0, %v3658
        %3660 = vdwg.mxu0
        %s3661 = scalar_lea.vmem %s5, 32
        %v3662 = vld [vmem:[%s3661] sm:$0xff]
        %v3663 = vld [vmem:[%s3661 + $0x8] sm:$0x1]
        %v3664 = vrot.slane %v3582, 7
        %v3665 = vrot.slane %v3584, 7
        %v3666 = vrot.slane %v3587, 7
        %v3667 = vrot.slane %v3589, 7
        %v3668 = vrot.slane %v3592, 7
        %v3669 = vrot.slane %v3594, 7
        %v3670 = vrot.slane %v3597, 7
        %v3671 = vrot.slane %v3599, 7
        %v3672 = vrot.slane %v3602, 7
        %v3673 = vrot.slane %v3604, 7
        %v3674 = vrot.slane %v3607, 7
        %v3675 = vrot.slane %v3609, 7
        %v3676 = vrot.slane %v3612, 7
        %v3677 = vrot.slane %v3614, 7
        %v3678 = vrot.slane %v3617, 7
        %v3679 = vrot.slane %v3619, 7
        %v3680 = vrot.slane %v3622, 7
        %v3681 = vrot.slane %v3624, 7
        %v3682 = vrot.slane %v3627, 7
        %v3683 = vrot.slane %v3629, 7
        %v3684 = vrot.slane %v3632, 7
        %v3685 = vrot.slane %v3634, 7
        %v3686 = vrot.slane %v3637, 7
        %v3687 = vrot.slane %v3639, 7
        %v3688 = vrot.slane %v3642, 7
        %v3689 = vrot.slane %v3644, 7
        %v3690 = vrot.slane %v3647, 7
        %v3691 = vrot.slane %v3649, 7
        %v3692 = vrot.slane %v3652, 7
        %v3693 = vrot.slane %v3654, 7
        %v3694 = vrot.slane %v3657, 7
        %v3695 = vrot.slane %v3659, 7
        %v3696 = vsel %vm1598, %v3694, %v3695
        %v3697 = vsel %vm1598, %v3693, %v3694
        %v3698 = vsel %vm1598, %v3692, %v3693
        %v3699 = vsel %vm1598, %v3691, %v3692
        %v3700 = vsel %vm1598, %v3690, %v3691
        %v3701 = vsel %vm1598, %v3689, %v3690
        %v3702 = vsel %vm1598, %v3688, %v3689
        %v3703 = vsel %vm1598, %v3687, %v3688
        %v3704 = vsel %vm1598, %v3686, %v3687
        %v3705 = vsel %vm1598, %v3685, %v3686
        %v3706 = vsel %vm1598, %v3684, %v3685
        %v3707 = vsel %vm1598, %v3683, %v3684
        %v3708 = vsel %vm1598, %v3682, %v3683
        %v3709 = vsel %vm1598, %v3681, %v3682
        %v3710 = vsel %vm1598, %v3680, %v3681
        %v3711 = vsel %vm1598, %v3679, %v3680
        %v3712 = vsel %vm1598, %v3678, %v3679
        %v3713 = vsel %vm1598, %v3677, %v3678
        %v3714 = vsel %vm1598, %v3676, %v3677
        %v3715 = vsel %vm1598, %v3675, %v3676
        %v3716 = vsel %vm1598, %v3674, %v3675
        %v3717 = vsel %vm1598, %v3673, %v3674
        %v3718 = vsel %vm1598, %v3672, %v3673
        %v3719 = vsel %vm1598, %v3671, %v3672
        %v3720 = vsel %vm1598, %v3670, %v3671
        %v3721 = vsel %vm1598, %v3669, %v3670
        %v3722 = vsel %vm1598, %v3668, %v3669
        %v3723 = vsel %vm1598, %v3667, %v3668
        %v3724 = vsel %vm1598, %v3666, %v3667
        %v3725 = vsel %vm1598, %v3665, %v3666
        %v3726 = vsel %vm1598, %v3664, %v3665
        %v3727 = vsel %vm1598, %v3695, %v3664
        %v3728 = vmul.f32 %v3727, %v852
        %v3729 = vmul.f32 %v3726, %v857
        %v3730 = vmul.f32 %v3725, %v862
        %v3731 = vmul.f32 %v3724, %v867
        %v3732 = vmul.f32 %v3723, %v872
        %v3733 = vmul.f32 %v3722, %v877
        %v3734 = vmul.f32 %v3721, %v882
        %v3735 = vmul.f32 %v3720, %v887
        %v3736 = vmul.f32 %v3719, %v892
        %v3737 = vmul.f32 %v3718, %v897
        %v3738 = vmul.f32 %v3717, %v902
        %v3739 = vmul.f32 %v3716, %v907
        %v3740 = vmul.f32 %v3715, %v912
        %v3741 = vmul.f32 %v3714, %v917
        %v3742 = vmul.f32 %v3713, %v922
        %v3743 = vmul.f32 %v3712, %v927
        %v3744 = vmul.f32 %v3711, %v932
        %v3745 = vmul.f32 %v3710, %v937
        %v3746 = vmul.f32 %v3709, %v942
        %v3747 = vmul.f32 %v3708, %v947
        %v3748 = vmul.f32 %v3707, %v952
        %v3749 = vmul.f32 %v3706, %v957
        %v3750 = vmul.f32 %v3705, %v962
        %v3751 = vmul.f32 %v3704, %v967
        %v3752 = vmul.f32 %v3703, %v972
        %v3753 = vmul.f32 %v3702, %v977
        %v3754 = vmul.f32 %v3701, %v982
        %v3755 = vmul.f32 %v3700, %v987
        %v3756 = vmul.f32 %v3699, %v992
        %v3757 = vmul.f32 %v3698, %v997
        %v3758 = vmul.f32 %v3697, %v1002
        %v3759 = vmul.f32 %v3696, %v1007
        %v3760 = vrot.slane %v3582, 1
        %v3761 = vrot.slane %v3584, 1
        %v3762 = vrot.slane %v3587, 1
        %v3763 = vrot.slane %v3589, 1
        %v3764 = vrot.slane %v3592, 1
        %v3765 = vrot.slane %v3594, 1
        %v3766 = vrot.slane %v3597, 1
        %v3767 = vrot.slane %v3599, 1
        %v3768 = vrot.slane %v3602, 1
        %v3769 = vrot.slane %v3604, 1
        %v3770 = vrot.slane %v3607, 1
        %v3771 = vrot.slane %v3609, 1
        %v3772 = vrot.slane %v3612, 1
        %v3773 = vrot.slane %v3614, 1
        %v3774 = vrot.slane %v3617, 1
        %v3775 = vrot.slane %v3619, 1
        %v3776 = vrot.slane %v3622, 1
        %v3777 = vrot.slane %v3624, 1
        %v3778 = vrot.slane %v3627, 1
        %v3779 = vrot.slane %v3629, 1
        %v3780 = vrot.slane %v3632, 1
        %v3781 = vrot.slane %v3634, 1
        %v3782 = vrot.slane %v3637, 1
        %v3783 = vrot.slane %v3639, 1
        %v3784 = vrot.slane %v3642, 1
        %v3785 = vrot.slane %v3644, 1
        %v3786 = vrot.slane %v3647, 1
        %v3787 = vrot.slane %v3649, 1
        %v3788 = vrot.slane %v3652, 1
        %v3789 = vrot.slane %v3654, 1
        %v3790 = vrot.slane %v3657, 1
        %v3791 = vrot.slane %v3659, 1
        %v3792 = vsel %vm1695, %v3790, %v3791
        %v3793 = vsel %vm1695, %v3789, %v3790
        %v3794 = vsel %vm1695, %v3788, %v3789
        %v3795 = vsel %vm1695, %v3787, %v3788
        %v3796 = vsel %vm1695, %v3786, %v3787
        %v3797 = vsel %vm1695, %v3785, %v3786
        %v3798 = vsel %vm1695, %v3784, %v3785
        %v3799 = vsel %vm1695, %v3783, %v3784
        %v3800 = vsel %vm1695, %v3782, %v3783
        %v3801 = vsel %vm1695, %v3781, %v3782
        %v3802 = vsel %vm1695, %v3780, %v3781
        %v3803 = vsel %vm1695, %v3779, %v3780
        %v3804 = vsel %vm1695, %v3778, %v3779
        %v3805 = vsel %vm1695, %v3777, %v3778
        %v3806 = vsel %vm1695, %v3776, %v3777
        %v3807 = vsel %vm1695, %v3775, %v3776
        %v3808 = vsel %vm1695, %v3774, %v3775
        %v3809 = vsel %vm1695, %v3773, %v3774
        %v3810 = vsel %vm1695, %v3772, %v3773
        %v3811 = vsel %vm1695, %v3771, %v3772
        %v3812 = vsel %vm1695, %v3770, %v3771
        %v3813 = vsel %vm1695, %v3769, %v3770
        %v3814 = vsel %vm1695, %v3768, %v3769
        %v3815 = vsel %vm1695, %v3767, %v3768
        %v3816 = vsel %vm1695, %v3766, %v3767
        %v3817 = vsel %vm1695, %v3765, %v3766
        %v3818 = vsel %vm1695, %v3764, %v3765
        %v3819 = vsel %vm1695, %v3763, %v3764
        %v3820 = vsel %vm1695, %v3762, %v3763
        %v3821 = vsel %vm1695, %v3761, %v3762
        %v3822 = vsel %vm1695, %v3760, %v3761
        %v3823 = vsel %vm1695, %v3791, %v3760
        %v3824 = vmul.f32 %v3822, %v1011
        %v3825 = vmul.f32 %v3821, %v1015
        %v3826 = vmul.f32 %v3820, %v1019
        %v3827 = vmul.f32 %v3819, %v1023
        %v3828 = vmul.f32 %v3818, %v1027
        %v3829 = vmul.f32 %v3817, %v1031
        %v3830 = vmul.f32 %v3816, %v1035
        %v3831 = vmul.f32 %v3815, %v1039
        %v3832 = vmul.f32 %v3814, %v1043
        %v3833 = vmul.f32 %v3813, %v1047
        %v3834 = vmul.f32 %v3812, %v1051
        %v3835 = vmul.f32 %v3811, %v1055
        %v3836 = vmul.f32 %v3810, %v1059
        %v3837 = vmul.f32 %v3809, %v1063
        %v3838 = vmul.f32 %v3808, %v1067
        %v3839 = vmul.f32 %v3807, %v1071
        %v3840 = vmul.f32 %v3806, %v1075
        %v3841 = vmul.f32 %v3805, %v1079
        %v3842 = vmul.f32 %v3804, %v1083
        %v3843 = vmul.f32 %v3803, %v1087
        %v3844 = vmul.f32 %v3802, %v1091
        %v3845 = vmul.f32 %v3801, %v1095
        %v3846 = vmul.f32 %v3800, %v1099
        %v3847 = vmul.f32 %v3799, %v1103
        %v3848 = vmul.f32 %v3798, %v1107
        %v3849 = vmul.f32 %v3797, %v1111
        %v3850 = vmul.f32 %v3796, %v1115
        %v3851 = vmul.f32 %v3795, %v1119
        %v3852 = vmul.f32 %v3794, %v1123
        %v3853 = vmul.f32 %v3793, %v1127
        %v3854 = vmul.f32 %v3792, %v1131
        %v3855 = vmul.f32 %v3823, %v1135
        %v3856 = vperm.slane %v3662, 0
        %v3857 = vmul.f32 %v3728, %v3856
        %v3858 = vmul.f32 %v3729, %v3856
        %v3859 = vmul.f32 %v3730, %v3856
        %v3860 = vmul.f32 %v3731, %v3856
        %v3861 = vmul.f32 %v3732, %v3856
        %v3862 = vmul.f32 %v3733, %v3856
        %v3863 = vmul.f32 %v3734, %v3856
        %v3864 = vmul.f32 %v3735, %v3856
        %v3865 = vmul.f32 %v3736, %v3856
        %v3866 = vmul.f32 %v3737, %v3856
        %v3867 = vmul.f32 %v3738, %v3856
        %v3868 = vmul.f32 %v3739, %v3856
        %v3869 = vmul.f32 %v3740, %v3856
        %v3870 = vmul.f32 %v3741, %v3856
        %v3871 = vmul.f32 %v3742, %v3856
        %v3872 = vmul.f32 %v3743, %v3856
        %v3873 = vmul.f32 %v3744, %v3856
        %v3874 = vmul.f32 %v3745, %v3856
        %v3875 = vmul.f32 %v3746, %v3856
        %v3876 = vmul.f32 %v3747, %v3856
        %v3877 = vmul.f32 %v3748, %v3856
        %v3878 = vmul.f32 %v3749, %v3856
        %v3879 = vmul.f32 %v3750, %v3856
        %v3880 = vmul.f32 %v3751, %v3856
        %v3881 = vmul.f32 %v3752, %v3856
        %v3882 = vmul.f32 %v3753, %v3856
        %v3883 = vmul.f32 %v3754, %v3856
        %v3884 = vmul.f32 %v3755, %v3856
        %v3885 = vmul.f32 %v3756, %v3856
        %v3886 = vmul.f32 %v3757, %v3856
        %v3887 = vmul.f32 %v3758, %v3856
        %v3888 = vmul.f32 %v3759, %v3856
        %v3889 = vperm.slane %v3662, 1
        %v3890 = vmul.f32 %v3582, %v3889
        %v3891 = vmul.f32 %v3584, %v3889
        %v3892 = vmul.f32 %v3587, %v3889
        %v3893 = vmul.f32 %v3589, %v3889
        %v3894 = vmul.f32 %v3592, %v3889
        %v3895 = vmul.f32 %v3594, %v3889
        %v3896 = vmul.f32 %v3597, %v3889
        %v3897 = vmul.f32 %v3599, %v3889
        %v3898 = vmul.f32 %v3602, %v3889
        %v3899 = vmul.f32 %v3604, %v3889
        %v3900 = vmul.f32 %v3607, %v3889
        %v3901 = vmul.f32 %v3609, %v3889
        %v3902 = vmul.f32 %v3612, %v3889
        %v3903 = vmul.f32 %v3614, %v3889
        %v3904 = vmul.f32 %v3617, %v3889
        %v3905 = vmul.f32 %v3619, %v3889
        %v3906 = vmul.f32 %v3622, %v3889
        %v3907 = vmul.f32 %v3624, %v3889
        %v3908 = vmul.f32 %v3627, %v3889
        %v3909 = vmul.f32 %v3629, %v3889
        %v3910 = vmul.f32 %v3632, %v3889
        %v3911 = vmul.f32 %v3634, %v3889
        %v3912 = vmul.f32 %v3637, %v3889
        %v3913 = vmul.f32 %v3639, %v3889
        %v3914 = vmul.f32 %v3642, %v3889
        %v3915 = vmul.f32 %v3644, %v3889
        %v3916 = vmul.f32 %v3647, %v3889
        %v3917 = vmul.f32 %v3649, %v3889
        %v3918 = vmul.f32 %v3652, %v3889
        %v3919 = vmul.f32 %v3654, %v3889
        %v3920 = vmul.f32 %v3657, %v3889
        %v3921 = vmul.f32 %v3659, %v3889
        %v3922 = vadd.f32 %v3857, %v3890
        %v3923 = vadd.f32 %v3858, %v3891
        %v3924 = vadd.f32 %v3859, %v3892
        %v3925 = vadd.f32 %v3860, %v3893
        %v3926 = vadd.f32 %v3861, %v3894
        %v3927 = vadd.f32 %v3862, %v3895
        %v3928 = vadd.f32 %v3863, %v3896
        %v3929 = vadd.f32 %v3864, %v3897
        %v3930 = vadd.f32 %v3865, %v3898
        %v3931 = vadd.f32 %v3866, %v3899
        %v3932 = vadd.f32 %v3867, %v3900
        %v3933 = vadd.f32 %v3868, %v3901
        %v3934 = vadd.f32 %v3869, %v3902
        %v3935 = vadd.f32 %v3870, %v3903
        %v3936 = vadd.f32 %v3871, %v3904
        %v3937 = vadd.f32 %v3872, %v3905
        %v3938 = vadd.f32 %v3873, %v3906
        %v3939 = vadd.f32 %v3874, %v3907
        %v3940 = vadd.f32 %v3875, %v3908
        %v3941 = vadd.f32 %v3876, %v3909
        %v3942 = vadd.f32 %v3877, %v3910
        %v3943 = vadd.f32 %v3878, %v3911
        %v3944 = vadd.f32 %v3879, %v3912
        %v3945 = vadd.f32 %v3880, %v3913
        %v3946 = vadd.f32 %v3881, %v3914
        %v3947 = vadd.f32 %v3882, %v3915
        %v3948 = vadd.f32 %v3883, %v3916
        %v3949 = vadd.f32 %v3884, %v3917
        %v3950 = vadd.f32 %v3885, %v3918
        %v3951 = vadd.f32 %v3886, %v3919
        %v3952 = vadd.f32 %v3887, %v3920
        %v3953 = vadd.f32 %v3888, %v3921
        %v3954 = vperm.slane %v3662, 2
        %v3955 = vmul.f32 %v3824, %v3954
        %v3956 = vmul.f32 %v3825, %v3954
        %v3957 = vmul.f32 %v3826, %v3954
        %v3958 = vmul.f32 %v3827, %v3954
        %v3959 = vmul.f32 %v3828, %v3954
        %v3960 = vmul.f32 %v3829, %v3954
        %v3961 = vmul.f32 %v3830, %v3954
        %v3962 = vmul.f32 %v3831, %v3954
        %v3963 = vmul.f32 %v3832, %v3954
        %v3964 = vmul.f32 %v3833, %v3954
        %v3965 = vmul.f32 %v3834, %v3954
        %v3966 = vmul.f32 %v3835, %v3954
        %v3967 = vmul.f32 %v3836, %v3954
        %v3968 = vmul.f32 %v3837, %v3954
        %v3969 = vmul.f32 %v3838, %v3954
        %v3970 = vmul.f32 %v3839, %v3954
        %v3971 = vmul.f32 %v3840, %v3954
        %v3972 = vmul.f32 %v3841, %v3954
        %v3973 = vmul.f32 %v3842, %v3954
        %v3974 = vmul.f32 %v3843, %v3954
        %v3975 = vmul.f32 %v3844, %v3954
        %v3976 = vmul.f32 %v3845, %v3954
        %v3977 = vmul.f32 %v3846, %v3954
        %v3978 = vmul.f32 %v3847, %v3954
        %v3979 = vmul.f32 %v3848, %v3954
        %v3980 = vmul.f32 %v3849, %v3954
        %v3981 = vmul.f32 %v3850, %v3954
        %v3982 = vmul.f32 %v3851, %v3954
        %v3983 = vmul.f32 %v3852, %v3954
        %v3984 = vmul.f32 %v3853, %v3954
        %v3985 = vmul.f32 %v3854, %v3954
        %v3986 = vmul.f32 %v3855, %v3954
        %v3987 = vadd.f32 %v3922, %v3955
        %v3988 = vadd.f32 %v3923, %v3956
        %v3989 = vadd.f32 %v3924, %v3957
        %v3990 = vadd.f32 %v3925, %v3958
        %v3991 = vadd.f32 %v3926, %v3959
        %v3992 = vadd.f32 %v3927, %v3960
        %v3993 = vadd.f32 %v3928, %v3961
        %v3994 = vadd.f32 %v3929, %v3962
        %v3995 = vadd.f32 %v3930, %v3963
        %v3996 = vadd.f32 %v3931, %v3964
        %v3997 = vadd.f32 %v3932, %v3965
        %v3998 = vadd.f32 %v3933, %v3966
        %v3999 = vadd.f32 %v3934, %v3967
        %v4000 = vadd.f32 %v3935, %v3968
        %v4001 = vadd.f32 %v3936, %v3969
        %v4002 = vadd.f32 %v3937, %v3970
        %v4003 = vadd.f32 %v3938, %v3971
        %v4004 = vadd.f32 %v3939, %v3972
        %v4005 = vadd.f32 %v3940, %v3973
        %v4006 = vadd.f32 %v3941, %v3974
        %v4007 = vadd.f32 %v3942, %v3975
        %v4008 = vadd.f32 %v3943, %v3976
        %v4009 = vadd.f32 %v3944, %v3977
        %v4010 = vadd.f32 %v3945, %v3978
        %v4011 = vadd.f32 %v3946, %v3979
        %v4012 = vadd.f32 %v3947, %v3980
        %v4013 = vadd.f32 %v3948, %v3981
        %v4014 = vadd.f32 %v3949, %v3982
        %v4015 = vadd.f32 %v3950, %v3983
        %v4016 = vadd.f32 %v3951, %v3984
        %v4017 = vadd.f32 %v3952, %v3985
        %v4018 = vadd.f32 %v3953, %v3986
        %v4019 = vperm.slane %v3662, 3
        %v4020 = vmul.f32 %v3728, %v4019
        %v4021 = vmul.f32 %v3729, %v4019
        %v4022 = vmul.f32 %v3730, %v4019
        %v4023 = vmul.f32 %v3731, %v4019
        %v4024 = vmul.f32 %v3732, %v4019
        %v4025 = vmul.f32 %v3733, %v4019
        %v4026 = vmul.f32 %v3734, %v4019
        %v4027 = vmul.f32 %v3735, %v4019
        %v4028 = vmul.f32 %v3736, %v4019
        %v4029 = vmul.f32 %v3737, %v4019
        %v4030 = vmul.f32 %v3738, %v4019
        %v4031 = vmul.f32 %v3739, %v4019
        %v4032 = vmul.f32 %v3740, %v4019
        %v4033 = vmul.f32 %v3741, %v4019
        %v4034 = vmul.f32 %v3742, %v4019
        %v4035 = vmul.f32 %v3743, %v4019
        %v4036 = vmul.f32 %v3744, %v4019
        %v4037 = vmul.f32 %v3745, %v4019
        %v4038 = vmul.f32 %v3746, %v4019
        %v4039 = vmul.f32 %v3747, %v4019
        %v4040 = vmul.f32 %v3748, %v4019
        %v4041 = vmul.f32 %v3749, %v4019
        %v4042 = vmul.f32 %v3750, %v4019
        %v4043 = vmul.f32 %v3751, %v4019
        %v4044 = vmul.f32 %v3752, %v4019
        %v4045 = vmul.f32 %v3753, %v4019
        %v4046 = vmul.f32 %v3754, %v4019
        %v4047 = vmul.f32 %v3755, %v4019
        %v4048 = vmul.f32 %v3756, %v4019
        %v4049 = vmul.f32 %v3757, %v4019
        %v4050 = vmul.f32 %v3758, %v4019
        %v4051 = vmul.f32 %v3759, %v4019
        %v4052 = vperm.slane %v3662, 4
        %v4053 = vmul.f32 %v3582, %v4052
        %v4054 = vmul.f32 %v3584, %v4052
        %v4055 = vmul.f32 %v3587, %v4052
        %v4056 = vmul.f32 %v3589, %v4052
        %v4057 = vmul.f32 %v3592, %v4052
        %v4058 = vmul.f32 %v3594, %v4052
        %v4059 = vmul.f32 %v3597, %v4052
        %v4060 = vmul.f32 %v3599, %v4052
        %v4061 = vmul.f32 %v3602, %v4052
        %v4062 = vmul.f32 %v3604, %v4052
        %v4063 = vmul.f32 %v3607, %v4052
        %v4064 = vmul.f32 %v3609, %v4052
        %v4065 = vmul.f32 %v3612, %v4052
        %v4066 = vmul.f32 %v3614, %v4052
        %v4067 = vmul.f32 %v3617, %v4052
        %v4068 = vmul.f32 %v3619, %v4052
        %v4069 = vmul.f32 %v3622, %v4052
        %v4070 = vmul.f32 %v3624, %v4052
        %v4071 = vmul.f32 %v3627, %v4052
        %v4072 = vmul.f32 %v3629, %v4052
        %v4073 = vmul.f32 %v3632, %v4052
        %v4074 = vmul.f32 %v3634, %v4052
        %v4075 = vmul.f32 %v3637, %v4052
        %v4076 = vmul.f32 %v3639, %v4052
        %v4077 = vmul.f32 %v3642, %v4052
        %v4078 = vmul.f32 %v3644, %v4052
        %v4079 = vmul.f32 %v3647, %v4052
        %v4080 = vmul.f32 %v3649, %v4052
        %v4081 = vmul.f32 %v3652, %v4052
        %v4082 = vmul.f32 %v3654, %v4052
        %v4083 = vmul.f32 %v3657, %v4052
        %v4084 = vmul.f32 %v3659, %v4052
        %v4085 = vadd.f32 %v4020, %v4053
        %v4086 = vadd.f32 %v4021, %v4054
        %v4087 = vadd.f32 %v4022, %v4055
        %v4088 = vadd.f32 %v4023, %v4056
        %v4089 = vadd.f32 %v4024, %v4057
        %v4090 = vadd.f32 %v4025, %v4058
        %v4091 = vadd.f32 %v4026, %v4059
        %v4092 = vadd.f32 %v4027, %v4060
        %v4093 = vadd.f32 %v4028, %v4061
        %v4094 = vadd.f32 %v4029, %v4062
        %v4095 = vadd.f32 %v4030, %v4063
        %v4096 = vadd.f32 %v4031, %v4064
        %v4097 = vadd.f32 %v4032, %v4065
        %v4098 = vadd.f32 %v4033, %v4066
        %v4099 = vadd.f32 %v4034, %v4067
        %v4100 = vadd.f32 %v4035, %v4068
        %v4101 = vadd.f32 %v4036, %v4069
        %v4102 = vadd.f32 %v4037, %v4070
        %v4103 = vadd.f32 %v4038, %v4071
        %v4104 = vadd.f32 %v4039, %v4072
        %v4105 = vadd.f32 %v4040, %v4073
        %v4106 = vadd.f32 %v4041, %v4074
        %v4107 = vadd.f32 %v4042, %v4075
        %v4108 = vadd.f32 %v4043, %v4076
        %v4109 = vadd.f32 %v4044, %v4077
        %v4110 = vadd.f32 %v4045, %v4078
        %v4111 = vadd.f32 %v4046, %v4079
        %v4112 = vadd.f32 %v4047, %v4080
        %v4113 = vadd.f32 %v4048, %v4081
        %v4114 = vadd.f32 %v4049, %v4082
        %v4115 = vadd.f32 %v4050, %v4083
        %v4116 = vadd.f32 %v4051, %v4084
        %v4117 = vperm.slane %v3662, 5
        %v4118 = vmul.f32 %v3824, %v4117
        %v4119 = vmul.f32 %v3825, %v4117
        %v4120 = vmul.f32 %v3826, %v4117
        %v4121 = vmul.f32 %v3827, %v4117
        %v4122 = vmul.f32 %v3828, %v4117
        %v4123 = vmul.f32 %v3829, %v4117
        %v4124 = vmul.f32 %v3830, %v4117
        %v4125 = vmul.f32 %v3831, %v4117
        %v4126 = vmul.f32 %v3832, %v4117
        %v4127 = vmul.f32 %v3833, %v4117
        %v4128 = vmul.f32 %v3834, %v4117
        %v4129 = vmul.f32 %v3835, %v4117
        %v4130 = vmul.f32 %v3836, %v4117
        %v4131 = vmul.f32 %v3837, %v4117
        %v4132 = vmul.f32 %v3838, %v4117
        %v4133 = vmul.f32 %v3839, %v4117
        %v4134 = vmul.f32 %v3840, %v4117
        %v4135 = vmul.f32 %v3841, %v4117
        %v4136 = vmul.f32 %v3842, %v4117
        %v4137 = vmul.f32 %v3843, %v4117
        %v4138 = vmul.f32 %v3844, %v4117
        %v4139 = vmul.f32 %v3845, %v4117
        %v4140 = vmul.f32 %v3846, %v4117
        %v4141 = vmul.f32 %v3847, %v4117
        %v4142 = vmul.f32 %v3848, %v4117
        %v4143 = vmul.f32 %v3849, %v4117
        %v4144 = vmul.f32 %v3850, %v4117
        %v4145 = vmul.f32 %v3851, %v4117
        %v4146 = vmul.f32 %v3852, %v4117
        %v4147 = vmul.f32 %v3853, %v4117
        %v4148 = vmul.f32 %v3854, %v4117
        %v4149 = vmul.f32 %v3855, %v4117
        %v4150 = vadd.f32 %v4085, %v4118
        %v4151 = vadd.f32 %v4086, %v4119
        %v4152 = vadd.f32 %v4087, %v4120
        %v4153 = vadd.f32 %v4088, %v4121
        %v4154 = vadd.f32 %v4089, %v4122
        %v4155 = vadd.f32 %v4090, %v4123
        %v4156 = vadd.f32 %v4091, %v4124
        %v4157 = vadd.f32 %v4092, %v4125
        %v4158 = vadd.f32 %v4093, %v4126
        %v4159 = vadd.f32 %v4094, %v4127
        %v4160 = vadd.f32 %v4095, %v4128
        %v4161 = vadd.f32 %v4096, %v4129
        %v4162 = vadd.f32 %v4097, %v4130
        %v4163 = vadd.f32 %v4098, %v4131
        %v4164 = vadd.f32 %v4099, %v4132
        %v4165 = vadd.f32 %v4100, %v4133
        %v4166 = vadd.f32 %v4101, %v4134
        %v4167 = vadd.f32 %v4102, %v4135
        %v4168 = vadd.f32 %v4103, %v4136
        %v4169 = vadd.f32 %v4104, %v4137
        %v4170 = vadd.f32 %v4105, %v4138
        %v4171 = vadd.f32 %v4106, %v4139
        %v4172 = vadd.f32 %v4107, %v4140
        %v4173 = vadd.f32 %v4108, %v4141
        %v4174 = vadd.f32 %v4109, %v4142
        %v4175 = vadd.f32 %v4110, %v4143
        %v4176 = vadd.f32 %v4111, %v4144
        %v4177 = vadd.f32 %v4112, %v4145
        %v4178 = vadd.f32 %v4113, %v4146
        %v4179 = vadd.f32 %v4114, %v4147
        %v4180 = vadd.f32 %v4115, %v4148
        %v4181 = vadd.f32 %v4116, %v4149
        %v4182 = vperm.slane %v3662, 6
        %v4183 = vmul.f32 %v3728, %v4182
        %v4184 = vmul.f32 %v3729, %v4182
        %v4185 = vmul.f32 %v3730, %v4182
        %v4186 = vmul.f32 %v3731, %v4182
        %v4187 = vmul.f32 %v3732, %v4182
        %v4188 = vmul.f32 %v3733, %v4182
        %v4189 = vmul.f32 %v3734, %v4182
        %v4190 = vmul.f32 %v3735, %v4182
        %v4191 = vmul.f32 %v3736, %v4182
        %v4192 = vmul.f32 %v3737, %v4182
        %v4193 = vmul.f32 %v3738, %v4182
        %v4194 = vmul.f32 %v3739, %v4182
        %v4195 = vmul.f32 %v3740, %v4182
        %v4196 = vmul.f32 %v3741, %v4182
        %v4197 = vmul.f32 %v3742, %v4182
        %v4198 = vmul.f32 %v3743, %v4182
        %v4199 = vmul.f32 %v3744, %v4182
        %v4200 = vmul.f32 %v3745, %v4182
        %v4201 = vmul.f32 %v3746, %v4182
        %v4202 = vmul.f32 %v3747, %v4182
        %v4203 = vmul.f32 %v3748, %v4182
        %v4204 = vmul.f32 %v3749, %v4182
        %v4205 = vmul.f32 %v3750, %v4182
        %v4206 = vmul.f32 %v3751, %v4182
        %v4207 = vmul.f32 %v3752, %v4182
        %v4208 = vmul.f32 %v3753, %v4182
        %v4209 = vmul.f32 %v3754, %v4182
        %v4210 = vmul.f32 %v3755, %v4182
        %v4211 = vmul.f32 %v3756, %v4182
        %v4212 = vmul.f32 %v3757, %v4182
        %v4213 = vmul.f32 %v3758, %v4182
        %v4214 = vmul.f32 %v3759, %v4182
        %v4215 = vperm.slane %v3662, 7
        %v4216 = vmul.f32 %v3582, %v4215
        %v4217 = vmul.f32 %v3584, %v4215
        %v4218 = vmul.f32 %v3587, %v4215
        %v4219 = vmul.f32 %v3589, %v4215
        %v4220 = vmul.f32 %v3592, %v4215
        %v4221 = vmul.f32 %v3594, %v4215
        %v4222 = vmul.f32 %v3597, %v4215
        %v4223 = vmul.f32 %v3599, %v4215
        %v4224 = vmul.f32 %v3602, %v4215
        %v4225 = vmul.f32 %v3604, %v4215
        %v4226 = vmul.f32 %v3607, %v4215
        %v4227 = vmul.f32 %v3609, %v4215
        %v4228 = vmul.f32 %v3612, %v4215
        %v4229 = vmul.f32 %v3614, %v4215
        %v4230 = vmul.f32 %v3617, %v4215
        %v4231 = vmul.f32 %v3619, %v4215
        %v4232 = vmul.f32 %v3622, %v4215
        %v4233 = vmul.f32 %v3624, %v4215
        %v4234 = vmul.f32 %v3627, %v4215
        %v4235 = vmul.f32 %v3629, %v4215
        %v4236 = vmul.f32 %v3632, %v4215
        %v4237 = vmul.f32 %v3634, %v4215
        %v4238 = vmul.f32 %v3637, %v4215
        %v4239 = vmul.f32 %v3639, %v4215
        %v4240 = vmul.f32 %v3642, %v4215
        %v4241 = vmul.f32 %v3644, %v4215
        %v4242 = vmul.f32 %v3647, %v4215
        %v4243 = vmul.f32 %v3649, %v4215
        %v4244 = vmul.f32 %v3652, %v4215
        %v4245 = vmul.f32 %v3654, %v4215
        %v4246 = vmul.f32 %v3657, %v4215
        %v4247 = vmul.f32 %v3659, %v4215
        %v4248 = vadd.f32 %v4183, %v4216
        %v4249 = vadd.f32 %v4184, %v4217
        %v4250 = vadd.f32 %v4185, %v4218
        %v4251 = vadd.f32 %v4186, %v4219
        %v4252 = vadd.f32 %v4187, %v4220
        %v4253 = vadd.f32 %v4188, %v4221
        %v4254 = vadd.f32 %v4189, %v4222
        %v4255 = vadd.f32 %v4190, %v4223
        %v4256 = vadd.f32 %v4191, %v4224
        %v4257 = vadd.f32 %v4192, %v4225
        %v4258 = vadd.f32 %v4193, %v4226
        %v4259 = vadd.f32 %v4194, %v4227
        %v4260 = vadd.f32 %v4195, %v4228
        %v4261 = vadd.f32 %v4196, %v4229
        %v4262 = vadd.f32 %v4197, %v4230
        %v4263 = vadd.f32 %v4198, %v4231
        %v4264 = vadd.f32 %v4199, %v4232
        %v4265 = vadd.f32 %v4200, %v4233
        %v4266 = vadd.f32 %v4201, %v4234
        %v4267 = vadd.f32 %v4202, %v4235
        %v4268 = vadd.f32 %v4203, %v4236
        %v4269 = vadd.f32 %v4204, %v4237
        %v4270 = vadd.f32 %v4205, %v4238
        %v4271 = vadd.f32 %v4206, %v4239
        %v4272 = vadd.f32 %v4207, %v4240
        %v4273 = vadd.f32 %v4208, %v4241
        %v4274 = vadd.f32 %v4209, %v4242
        %v4275 = vadd.f32 %v4210, %v4243
        %v4276 = vadd.f32 %v4211, %v4244
        %v4277 = vadd.f32 %v4212, %v4245
        %v4278 = vadd.f32 %v4213, %v4246
        %v4279 = vadd.f32 %v4214, %v4247
        %v4280 = vperm.slane %v3663, 0
        %v4281 = vmul.f32 %v3824, %v4280
        %v4282 = vmul.f32 %v3825, %v4280
        %v4283 = vmul.f32 %v3826, %v4280
        %v4284 = vmul.f32 %v3827, %v4280
        %v4285 = vmul.f32 %v3828, %v4280
        %v4286 = vmul.f32 %v3829, %v4280
        %v4287 = vmul.f32 %v3830, %v4280
        %v4288 = vmul.f32 %v3831, %v4280
        %v4289 = vmul.f32 %v3832, %v4280
        %v4290 = vmul.f32 %v3833, %v4280
        %v4291 = vmul.f32 %v3834, %v4280
        %v4292 = vmul.f32 %v3835, %v4280
        %v4293 = vmul.f32 %v3836, %v4280
        %v4294 = vmul.f32 %v3837, %v4280
        %v4295 = vmul.f32 %v3838, %v4280
        %v4296 = vmul.f32 %v3839, %v4280
        %v4297 = vmul.f32 %v3840, %v4280
        %v4298 = vmul.f32 %v3841, %v4280
        %v4299 = vmul.f32 %v3842, %v4280
        %v4300 = vmul.f32 %v3843, %v4280
        %v4301 = vmul.f32 %v3844, %v4280
        %v4302 = vmul.f32 %v3845, %v4280
        %v4303 = vmul.f32 %v3846, %v4280
        %v4304 = vmul.f32 %v3847, %v4280
        %v4305 = vmul.f32 %v3848, %v4280
        %v4306 = vmul.f32 %v3849, %v4280
        %v4307 = vmul.f32 %v3850, %v4280
        %v4308 = vmul.f32 %v3851, %v4280
        %v4309 = vmul.f32 %v3852, %v4280
        %v4310 = vmul.f32 %v3853, %v4280
        %v4311 = vmul.f32 %v3854, %v4280
        %v4312 = vmul.f32 %v3855, %v4280
        %v4313 = vadd.f32 %v4248, %v4281
        %v4314 = vadd.f32 %v4249, %v4282
        %v4315 = vadd.f32 %v4250, %v4283
        %v4316 = vadd.f32 %v4251, %v4284
        %v4317 = vadd.f32 %v4252, %v4285
        %v4318 = vadd.f32 %v4253, %v4286
        %v4319 = vadd.f32 %v4254, %v4287
        %v4320 = vadd.f32 %v4255, %v4288
        %v4321 = vadd.f32 %v4256, %v4289
        %v4322 = vadd.f32 %v4257, %v4290
        %v4323 = vadd.f32 %v4258, %v4291
        %v4324 = vadd.f32 %v4259, %v4292
        %v4325 = vadd.f32 %v4260, %v4293
        %v4326 = vadd.f32 %v4261, %v4294
        %v4327 = vadd.f32 %v4262, %v4295
        %v4328 = vadd.f32 %v4263, %v4296
        %v4329 = vadd.f32 %v4264, %v4297
        %v4330 = vadd.f32 %v4265, %v4298
        %v4331 = vadd.f32 %v4266, %v4299
        %v4332 = vadd.f32 %v4267, %v4300
        %v4333 = vadd.f32 %v4268, %v4301
        %v4334 = vadd.f32 %v4269, %v4302
        %v4335 = vadd.f32 %v4270, %v4303
        %v4336 = vadd.f32 %v4271, %v4304
        %v4337 = vadd.f32 %v4272, %v4305
        %v4338 = vadd.f32 %v4273, %v4306
        %v4339 = vadd.f32 %v4274, %v4307
        %v4340 = vadd.f32 %v4275, %v4308
        %v4341 = vadd.f32 %v4276, %v4309
        %v4342 = vadd.f32 %v4277, %v4310
        %v4343 = vadd.f32 %v4278, %v4311
        %v4344 = vadd.f32 %v4279, %v4312
        %v4345 = vmul.f32 %v4017, %v1139
        %v4346 = vmul.f32 %v4018, %v1143
        %v4347 = vmul.f32 %v3987, %v1147
        %v4348 = vmul.f32 %v3988, %v1151
        %v4349 = vmul.f32 %v3989, %v1155
        %v4350 = vmul.f32 %v3990, %v1159
        %v4351 = vmul.f32 %v3991, %v1163
        %v4352 = vmul.f32 %v3992, %v1167
        %v4353 = vmul.f32 %v3993, %v1171
        %v4354 = vmul.f32 %v3994, %v1175
        %v4355 = vmul.f32 %v3995, %v1179
        %v4356 = vmul.f32 %v3996, %v1183
        %v4357 = vmul.f32 %v3997, %v1187
        %v4358 = vmul.f32 %v3998, %v1191
        %v4359 = vmul.f32 %v3999, %v1195
        %v4360 = vmul.f32 %v4000, %v1199
        %v4361 = vmul.f32 %v4001, %v1203
        %v4362 = vmul.f32 %v4002, %v1207
        %v4363 = vmul.f32 %v4003, %v1211
        %v4364 = vmul.f32 %v4004, %v1215
        %v4365 = vmul.f32 %v4005, %v1219
        %v4366 = vmul.f32 %v4006, %v1223
        %v4367 = vmul.f32 %v4007, %v1227
        %v4368 = vmul.f32 %v4008, %v1231
        %v4369 = vmul.f32 %v4009, %v1235
        %v4370 = vmul.f32 %v4010, %v1239
        %v4371 = vmul.f32 %v4011, %v1243
        %v4372 = vmul.f32 %v4012, %v1247
        %v4373 = vmul.f32 %v4013, %v1251
        %v4374 = vmul.f32 %v4014, %v1255
        %v4375 = vmul.f32 %v4015, %v1259
        %v4376 = vmul.f32 %v4016, %v1263
        %v4377 = vadd.f32 %v4150, %v4345
        %v4378 = vadd.f32 %v4151, %v4346
        %v4379 = vadd.f32 %v4152, %v4347
        %v4380 = vadd.f32 %v4153, %v4348
        %v4381 = vadd.f32 %v4154, %v4349
        %v4382 = vadd.f32 %v4155, %v4350
        %v4383 = vadd.f32 %v4156, %v4351
        %v4384 = vadd.f32 %v4157, %v4352
        %v4385 = vadd.f32 %v4158, %v4353
        %v4386 = vadd.f32 %v4159, %v4354
        %v4387 = vadd.f32 %v4160, %v4355
        %v4388 = vadd.f32 %v4161, %v4356
        %v4389 = vadd.f32 %v4162, %v4357
        %v4390 = vadd.f32 %v4163, %v4358
        %v4391 = vadd.f32 %v4164, %v4359
        %v4392 = vadd.f32 %v4165, %v4360
        %v4393 = vadd.f32 %v4166, %v4361
        %v4394 = vadd.f32 %v4167, %v4362
        %v4395 = vadd.f32 %v4168, %v4363
        %v4396 = vadd.f32 %v4169, %v4364
        %v4397 = vadd.f32 %v4170, %v4365
        %v4398 = vadd.f32 %v4171, %v4366
        %v4399 = vadd.f32 %v4172, %v4367
        %v4400 = vadd.f32 %v4173, %v4368
        %v4401 = vadd.f32 %v4174, %v4369
        %v4402 = vadd.f32 %v4175, %v4370
        %v4403 = vadd.f32 %v4176, %v4371
        %v4404 = vadd.f32 %v4177, %v4372
        %v4405 = vadd.f32 %v4178, %v4373
        %v4406 = vadd.f32 %v4179, %v4374
        %v4407 = vadd.f32 %v4180, %v4375
        %v4408 = vadd.f32 %v4181, %v4376
        %v4409 = vmul.f32 %v4315, %v1267
        %v4410 = vmul.f32 %v4316, %v1271
        %v4411 = vmul.f32 %v4317, %v1275
        %v4412 = vmul.f32 %v4318, %v1279
        %v4413 = vmul.f32 %v4319, %v1283
        %v4414 = vmul.f32 %v4320, %v1287
        %v4415 = vmul.f32 %v4321, %v1291
        %v4416 = vmul.f32 %v4322, %v1295
        %v4417 = vmul.f32 %v4323, %v1299
        %v4418 = vmul.f32 %v4324, %v1303
        %v4419 = vmul.f32 %v4325, %v1307
        %v4420 = vmul.f32 %v4326, %v1311
        %v4421 = vmul.f32 %v4327, %v1315
        %v4422 = vmul.f32 %v4328, %v1319
        %v4423 = vmul.f32 %v4329, %v1323
        %v4424 = vmul.f32 %v4330, %v1327
        %v4425 = vmul.f32 %v4331, %v1331
        %v4426 = vmul.f32 %v4332, %v1335
        %v4427 = vmul.f32 %v4333, %v1339
        %v4428 = vmul.f32 %v4334, %v1343
        %v4429 = vmul.f32 %v4335, %v1347
        %v4430 = vmul.f32 %v4336, %v1351
        %v4431 = vmul.f32 %v4337, %v1355
        %v4432 = vmul.f32 %v4338, %v1359
        %v4433 = vmul.f32 %v4339, %v1363
        %v4434 = vmul.f32 %v4340, %v1367
        %v4435 = vmul.f32 %v4341, %v1371
        %v4436 = vmul.f32 %v4342, %v1375
        %v4437 = vmul.f32 %v4343, %v1379
        %v4438 = vmul.f32 %v4344, %v1383
        %v4439 = vmul.f32 %v4313, %v1387
        %v4440 = vmul.f32 %v4314, %v1391
        %v4441 = vadd.f32 %v4377, %v4409
        %v4442 = vadd.f32 %v4378, %v4410
        %v4443 = vadd.f32 %v4379, %v4411
        %v4444 = vadd.f32 %v4380, %v4412
        %v4445 = vadd.f32 %v4381, %v4413
        %v4446 = vadd.f32 %v4382, %v4414
        %v4447 = vadd.f32 %v4383, %v4415
        %v4448 = vadd.f32 %v4384, %v4416
        %v4449 = vadd.f32 %v4385, %v4417
        %v4450 = vadd.f32 %v4386, %v4418
        %v4451 = vadd.f32 %v4387, %v4419
        %v4452 = vadd.f32 %v4388, %v4420
        %v4453 = vadd.f32 %v4389, %v4421
        %v4454 = vadd.f32 %v4390, %v4422
        %v4455 = vadd.f32 %v4391, %v4423
        %v4456 = vadd.f32 %v4392, %v4424
        %v4457 = vadd.f32 %v4393, %v4425
        %v4458 = vadd.f32 %v4394, %v4426
        %v4459 = vadd.f32 %v4395, %v4427
        %v4460 = vadd.f32 %v4396, %v4428
        %v4461 = vadd.f32 %v4397, %v4429
        %v4462 = vadd.f32 %v4398, %v4430
        %v4463 = vadd.f32 %v4399, %v4431
        %v4464 = vadd.f32 %v4400, %v4432
        %v4465 = vadd.f32 %v4401, %v4433
        %v4466 = vadd.f32 %v4402, %v4434
        %v4467 = vadd.f32 %v4403, %v4435
        %v4468 = vadd.f32 %v4404, %v4436
        %v4469 = vadd.f32 %v4405, %v4437
        %v4470 = vadd.f32 %v4406, %v4438
        %v4471 = vadd.f32 %v4407, %v4439
        %v4472 = vadd.f32 %v4408, %v4440
        %v4473 = vld [vmem:[%s6 + $0x2] sm:$0x1]
        %v4474 = vperm.slane %v4473, 0
        %v4475 = vadd.f32 %v4441, %v4474
        %v4476 = vadd.f32 %v4442, %v4474
        %v4477 = vadd.f32 %v4443, %v4474
        %v4478 = vadd.f32 %v4444, %v4474
        %v4479 = vadd.f32 %v4445, %v4474
        %v4480 = vadd.f32 %v4446, %v4474
        %v4481 = vadd.f32 %v4447, %v4474
        %v4482 = vadd.f32 %v4448, %v4474
        %v4483 = vadd.f32 %v4449, %v4474
        %v4484 = vadd.f32 %v4450, %v4474
        %v4485 = vadd.f32 %v4451, %v4474
        %v4486 = vadd.f32 %v4452, %v4474
        %v4487 = vadd.f32 %v4453, %v4474
        %v4488 = vadd.f32 %v4454, %v4474
        %v4489 = vadd.f32 %v4455, %v4474
        %v4490 = vadd.f32 %v4456, %v4474
        %v4491 = vadd.f32 %v4457, %v4474
        %v4492 = vadd.f32 %v4458, %v4474
        %v4493 = vadd.f32 %v4459, %v4474
        %v4494 = vadd.f32 %v4460, %v4474
        %v4495 = vadd.f32 %v4461, %v4474
        %v4496 = vadd.f32 %v4462, %v4474
        %v4497 = vadd.f32 %v4463, %v4474
        %v4498 = vadd.f32 %v4464, %v4474
        %v4499 = vadd.f32 %v4465, %v4474
        %v4500 = vadd.f32 %v4466, %v4474
        %v4501 = vadd.f32 %v4467, %v4474
        %v4502 = vadd.f32 %v4468, %v4474
        %v4503 = vadd.f32 %v4469, %v4474
        %v4504 = vadd.f32 %v4470, %v4474
        %v4505 = vadd.f32 %v4471, %v4474
        %v4506 = vadd.f32 %v4472, %v4474
        %v4507 = vmax.f32 %v4475, 0.0
        %v4508 = vmax.f32 %v4476, 0.0
        %v4509 = vmax.f32 %v4477, 0.0
        %v4510 = vmax.f32 %v4478, 0.0
        %v4511 = vmax.f32 %v4479, 0.0
        %v4512 = vmax.f32 %v4480, 0.0
        %v4513 = vmax.f32 %v4481, 0.0
        %v4514 = vmax.f32 %v4482, 0.0
        %v4515 = vmax.f32 %v4483, 0.0
        %v4516 = vmax.f32 %v4484, 0.0
        %v4517 = vmax.f32 %v4485, 0.0
        %v4518 = vmax.f32 %v4486, 0.0
        %v4519 = vmax.f32 %v4487, 0.0
        %v4520 = vmax.f32 %v4488, 0.0
        %v4521 = vmax.f32 %v4489, 0.0
        %v4522 = vmax.f32 %v4490, 0.0
        %v4523 = vmax.f32 %v4491, 0.0
        %v4524 = vmax.f32 %v4492, 0.0
        %v4525 = vmax.f32 %v4493, 0.0
        %v4526 = vmax.f32 %v4494, 0.0
        %v4527 = vmax.f32 %v4495, 0.0
        %v4528 = vmax.f32 %v4496, 0.0
        %v4529 = vmax.f32 %v4497, 0.0
        %v4530 = vmax.f32 %v4498, 0.0
        %v4531 = vmax.f32 %v4499, 0.0
        %v4532 = vmax.f32 %v4500, 0.0
        %v4533 = vmax.f32 %v4501, 0.0
        %v4534 = vmax.f32 %v4502, 0.0
        %v4535 = vmax.f32 %v4503, 0.0
        %v4536 = vmax.f32 %v4504, 0.0
        %v4537 = vmax.f32 %v4505, 0.0
        %v4538 = vmax.f32 %v4506, 0.0
        %v4539 = vpack.c.bf16 %v4508, %v4507
        %v4540 = vpack.c.bf16 %v4510, %v4509
        %v4541 = vpack.c.bf16 %v4512, %v4511
        %v4542 = vpack.c.bf16 %v4514, %v4513
        %v4543 = vpack.c.bf16 %v4516, %v4515
        %v4544 = vpack.c.bf16 %v4518, %v4517
        %v4545 = vpack.c.bf16 %v4520, %v4519
        %v4546 = vpack.c.bf16 %v4522, %v4521
        %v4547 = vpack.c.bf16 %v4524, %v4523
        %v4548 = vpack.c.bf16 %v4526, %v4525
        %v4549 = vpack.c.bf16 %v4528, %v4527
        %v4550 = vpack.c.bf16 %v4530, %v4529
        %v4551 = vpack.c.bf16 %v4532, %v4531
        %v4552 = vpack.c.bf16 %v4534, %v4533
        %v4553 = vpack.c.bf16 %v4536, %v4535
        %v4554 = vpack.c.bf16 %v4538, %v4537
        %s4555 = scalar_lea.vmem [#allocation5], 192
        %v4556 = vld [vmem:[%s4555] sm:$0xf]
        %v4557 = vld [vmem:[%s4555 + $0x4] sm:$0xf]
        %v4558 = vld [vmem:[%s4555 + $0x8] sm:$0xf]
        %v4559 = vld [vmem:[%s4555 + $0xc] sm:$0xf]
        %v4560 = vld [vmem:[%s4555 + $0x10] sm:$0xf]
        %v4561 = vld [vmem:[%s4555 + $0x14] sm:$0xf]
        %v4562 = vld [vmem:[%s4555 + $0x18] sm:$0xf]
        %v4563 = vld [vmem:[%s4555 + $0x1c] sm:$0xf]
        %v4564 = vld [vmem:[%s4555 + $0x20] sm:$0xf]
        %v4565 = vld [vmem:[%s4555 + $0x24] sm:$0xf]
        %v4566 = vld [vmem:[%s4555 + $0x28] sm:$0xf]
        %v4567 = vld [vmem:[%s4555 + $0x2c] sm:$0xf]
        %v4568 = vld [vmem:[%s4555 + $0x30] sm:$0xf]
        %v4569 = vld [vmem:[%s4555 + $0x34] sm:$0xf]
        %v4570 = vld [vmem:[%s4555 + $0x38] sm:$0xf]
        %v4571 = vld [vmem:[%s4555 + $0x3c] sm:$0xf]
        %v4588 = vunpack.c.l.b16 %v4556
        %v4589 = vunpack.c.l.b16 %v4557
        %v4590 = vunpack.c.l.b16 %v4558
        %v4591 = vunpack.c.l.b16 %v4559
        %v4592 = vunpack.c.l.b16 %v4560
        %v4593 = vunpack.c.l.b16 %v4561
        %v4594 = vunpack.c.l.b16 %v4562
        %v4595 = vunpack.c.l.b16 %v4563
        %v4596 = vunpack.c.l.b16 %v4564
        %v4597 = vunpack.c.l.b16 %v4565
        %v4598 = vunpack.c.l.b16 %v4566
        %v4599 = vunpack.c.l.b16 %v4567
        %v4600 = vunpack.c.l.b16 %v4568
        %v4601 = vunpack.c.l.b16 %v4569
        %v4602 = vunpack.c.l.b16 %v4570
        %v4603 = vunpack.c.l.b16 %v4571
        %v4604 = vpack.c.b16 %v4589, %v4588
        %v4605 = vpack.c.b16 %v4591, %v4590
        %v4606 = vpack.c.b16 %v4593, %v4592
        %v4607 = vpack.c.b16 %v4595, %v4594
        %v4608 = vpack.c.b16 %v4597, %v4596
        %v4609 = vpack.c.b16 %v4599, %v4598
        %v4610 = vpack.c.b16 %v4601, %v4600
        %v4611 = vpack.c.b16 %v4603, %v4602
        %4620 = vmatpush.bf16.msra.mxu0 %v4611
        %4621 = vmatpush.bf16.msra.mxu0 %v4610
        %4622 = vmatpush.bf16.msra.mxu0 %v4609
        %4623 = vmatpush.bf16.msra.mxu0 %v4608
        %4624 = vmatpush.bf16.msra.mxu0 %v4607
        %4625 = vmatpush.bf16.msra.mxu0 %v4606
        %4626 = vmatpush.bf16.msra.mxu0 %v4605
        %4627 = vmatpush.bf16.msra.mxu0 %v4604
        %4628 = vmatmul.bf16.gmra.mxu0 %v4539
        %v4629 = vpop.f32.mrf.mxu0
        %v4630 = vadd.f32 0.0, %v4629
        %v4631 = vpop.f32.mrf.mxu0
        %v4632 = vadd.f32 0.0, %v4631
        %4633 = vmatmul.bf16.gmra.mxu0 %v4540
        %v4634 = vpop.f32.mrf.mxu0
        %v4635 = vadd.f32 0.0, %v4634
        %v4636 = vpop.f32.mrf.mxu0
        %v4637 = vadd.f32 0.0, %v4636
        %4638 = vmatmul.bf16.gmra.mxu0 %v4541
        %v4639 = vpop.f32.mrf.mxu0
        %v4640 = vadd.f32 0.0, %v4639
        %v4641 = vpop.f32.mrf.mxu0
        %v4642 = vadd.f32 0.0, %v4641
        %4643 = vmatmul.bf16.gmra.mxu0 %v4542
        %v4644 = vpop.f32.mrf.mxu0
        %v4645 = vadd.f32 0.0, %v4644
        %v4646 = vpop.f32.mrf.mxu0
        %v4647 = vadd.f32 0.0, %v4646
        %4648 = vmatmul.bf16.gmra.mxu0 %v4543
        %v4649 = vpop.f32.mrf.mxu0
        %v4650 = vadd.f32 0.0, %v4649
        %v4651 = vpop.f32.mrf.mxu0
        %v4652 = vadd.f32 0.0, %v4651
        %4653 = vmatmul.bf16.gmra.mxu0 %v4544
        %v4654 = vpop.f32.mrf.mxu0
        %v4655 = vadd.f32 0.0, %v4654
        %v4656 = vpop.f32.mrf.mxu0
        %v4657 = vadd.f32 0.0, %v4656
        %4658 = vmatmul.bf16.gmra.mxu0 %v4545
        %v4659 = vpop.f32.mrf.mxu0
        %v4660 = vadd.f32 0.0, %v4659
        %v4661 = vpop.f32.mrf.mxu0
        %v4662 = vadd.f32 0.0, %v4661
        %4663 = vmatmul.bf16.gmra.mxu0 %v4546
        %v4664 = vpop.f32.mrf.mxu0
        %v4665 = vadd.f32 0.0, %v4664
        %v4666 = vpop.f32.mrf.mxu0
        %v4667 = vadd.f32 0.0, %v4666
        %4668 = vmatmul.bf16.gmra.mxu0 %v4547
        %v4669 = vpop.f32.mrf.mxu0
        %v4670 = vadd.f32 0.0, %v4669
        %v4671 = vpop.f32.mrf.mxu0
        %v4672 = vadd.f32 0.0, %v4671
        %4673 = vmatmul.bf16.gmra.mxu0 %v4548
        %v4674 = vpop.f32.mrf.mxu0
        %v4675 = vadd.f32 0.0, %v4674
        %v4676 = vpop.f32.mrf.mxu0
        %v4677 = vadd.f32 0.0, %v4676
        %4678 = vmatmul.bf16.gmra.mxu0 %v4549
        %v4679 = vpop.f32.mrf.mxu0
        %v4680 = vadd.f32 0.0, %v4679
        %v4681 = vpop.f32.mrf.mxu0
        %v4682 = vadd.f32 0.0, %v4681
        %4683 = vmatmul.bf16.gmra.mxu0 %v4550
        %v4684 = vpop.f32.mrf.mxu0
        %v4685 = vadd.f32 0.0, %v4684
        %v4686 = vpop.f32.mrf.mxu0
        %v4687 = vadd.f32 0.0, %v4686
        %4688 = vmatmul.bf16.gmra.mxu0 %v4551
        %v4689 = vpop.f32.mrf.mxu0
        %v4690 = vadd.f32 0.0, %v4689
        %v4691 = vpop.f32.mrf.mxu0
        %v4692 = vadd.f32 0.0, %v4691
        %4693 = vmatmul.bf16.gmra.mxu0 %v4552
        %v4694 = vpop.f32.mrf.mxu0
        %v4695 = vadd.f32 0.0, %v4694
        %v4696 = vpop.f32.mrf.mxu0
        %v4697 = vadd.f32 0.0, %v4696
        %4698 = vmatmul.bf16.gmra.mxu0 %v4553
        %v4699 = vpop.f32.mrf.mxu0
        %v4700 = vadd.f32 0.0, %v4699
        %v4701 = vpop.f32.mrf.mxu0
        %v4702 = vadd.f32 0.0, %v4701
        %4703 = vmatmul.bf16.gmra.mxu0 %v4554
        %v4704 = vpop.f32.mrf.mxu0
        %v4705 = vadd.f32 0.0, %v4704
        %v4706 = vpop.f32.mrf.mxu0
        %v4707 = vadd.f32 0.0, %v4706
        %4708 = vdwg.mxu0
        %s4709 = scalar_lea.vmem %s5, 48
        %v4710 = vld [vmem:[%s4709] sm:$0xff]
        %v4711 = vld [vmem:[%s4709 + $0x8] sm:$0x1]
        %v4712 = vrot.slane %v4630, 7
        %v4713 = vrot.slane %v4632, 7
        %v4714 = vrot.slane %v4635, 7
        %v4715 = vrot.slane %v4637, 7
        %v4716 = vrot.slane %v4640, 7
        %v4717 = vrot.slane %v4642, 7
        %v4718 = vrot.slane %v4645, 7
        %v4719 = vrot.slane %v4647, 7
        %v4720 = vrot.slane %v4650, 7
        %v4721 = vrot.slane %v4652, 7
        %v4722 = vrot.slane %v4655, 7
        %v4723 = vrot.slane %v4657, 7
        %v4724 = vrot.slane %v4660, 7
        %v4725 = vrot.slane %v4662, 7
        %v4726 = vrot.slane %v4665, 7
        %v4727 = vrot.slane %v4667, 7
        %v4728 = vrot.slane %v4670, 7
        %v4729 = vrot.slane %v4672, 7
        %v4730 = vrot.slane %v4675, 7
        %v4731 = vrot.slane %v4677, 7
        %v4732 = vrot.slane %v4680, 7
        %v4733 = vrot.slane %v4682, 7
        %v4734 = vrot.slane %v4685, 7
        %v4735 = vrot.slane %v4687, 7
        %v4736 = vrot.slane %v4690, 7
        %v4737 = vrot.slane %v4692, 7
        %v4738 = vrot.slane %v4695, 7
        %v4739 = vrot.slane %v4697, 7
        %v4740 = vrot.slane %v4700, 7
        %v4741 = vrot.slane %v4702, 7
        %v4742 = vrot.slane %v4705, 7
        %v4743 = vrot.slane %v4707, 7
        %v4744 = vsel %vm1598, %v4742, %v4743
        %v4745 = vsel %vm1598, %v4741, %v4742
        %v4746 = vsel %vm1598, %v4740, %v4741
        %v4747 = vsel %vm1598, %v4739, %v4740
        %v4748 = vsel %vm1598, %v4738, %v4739
        %v4749 = vsel %vm1598, %v4737, %v4738
        %v4750 = vsel %vm1598, %v4736, %v4737
        %v4751 = vsel %vm1598, %v4735, %v4736
        %v4752 = vsel %vm1598, %v4734, %v4735
        %v4753 = vsel %vm1598, %v4733, %v4734
        %v4754 = vsel %vm1598, %v4732, %v4733
        %v4755 = vsel %vm1598, %v4731, %v4732
        %v4756 = vsel %vm1598, %v4730, %v4731
        %v4757 = vsel %vm1598, %v4729, %v4730
        %v4758 = vsel %vm1598, %v4728, %v4729
        %v4759 = vsel %vm1598, %v4727, %v4728
        %v4760 = vsel %vm1598, %v4726, %v4727
        %v4761 = vsel %vm1598, %v4725, %v4726
        %v4762 = vsel %vm1598, %v4724, %v4725
        %v4763 = vsel %vm1598, %v4723, %v4724
        %v4764 = vsel %vm1598, %v4722, %v4723
        %v4765 = vsel %vm1598, %v4721, %v4722
        %v4766 = vsel %vm1598, %v4720, %v4721
        %v4767 = vsel %vm1598, %v4719, %v4720
        %v4768 = vsel %vm1598, %v4718, %v4719
        %v4769 = vsel %vm1598, %v4717, %v4718
        %v4770 = vsel %vm1598, %v4716, %v4717
        %v4771 = vsel %vm1598, %v4715, %v4716
        %v4772 = vsel %vm1598, %v4714, %v4715
        %v4773 = vsel %vm1598, %v4713, %v4714
        %v4774 = vsel %vm1598, %v4712, %v4713
        %v4775 = vsel %vm1598, %v4743, %v4712
        %v4776 = vmul.f32 %v4775, %v852
        %v4777 = vmul.f32 %v4774, %v857
        %v4778 = vmul.f32 %v4773, %v862
        %v4779 = vmul.f32 %v4772, %v867
        %v4780 = vmul.f32 %v4771, %v872
        %v4781 = vmul.f32 %v4770, %v877
        %v4782 = vmul.f32 %v4769, %v882
        %v4783 = vmul.f32 %v4768, %v887
        %v4784 = vmul.f32 %v4767, %v892
        %v4785 = vmul.f32 %v4766, %v897
        %v4786 = vmul.f32 %v4765, %v902
        %v4787 = vmul.f32 %v4764, %v907
        %v4788 = vmul.f32 %v4763, %v912
        %v4789 = vmul.f32 %v4762, %v917
        %v4790 = vmul.f32 %v4761, %v922
        %v4791 = vmul.f32 %v4760, %v927
        %v4792 = vmul.f32 %v4759, %v932
        %v4793 = vmul.f32 %v4758, %v937
        %v4794 = vmul.f32 %v4757, %v942
        %v4795 = vmul.f32 %v4756, %v947
        %v4796 = vmul.f32 %v4755, %v952
        %v4797 = vmul.f32 %v4754, %v957
        %v4798 = vmul.f32 %v4753, %v962
        %v4799 = vmul.f32 %v4752, %v967
        %v4800 = vmul.f32 %v4751, %v972
        %v4801 = vmul.f32 %v4750, %v977
        %v4802 = vmul.f32 %v4749, %v982
        %v4803 = vmul.f32 %v4748, %v987
        %v4804 = vmul.f32 %v4747, %v992
        %v4805 = vmul.f32 %v4746, %v997
        %v4806 = vmul.f32 %v4745, %v1002
        %v4807 = vmul.f32 %v4744, %v1007
        %v4808 = vrot.slane %v4630, 1
        %v4809 = vrot.slane %v4632, 1
        %v4810 = vrot.slane %v4635, 1
        %v4811 = vrot.slane %v4637, 1
        %v4812 = vrot.slane %v4640, 1
        %v4813 = vrot.slane %v4642, 1
        %v4814 = vrot.slane %v4645, 1
        %v4815 = vrot.slane %v4647, 1
        %v4816 = vrot.slane %v4650, 1
        %v4817 = vrot.slane %v4652, 1
        %v4818 = vrot.slane %v4655, 1
        %v4819 = vrot.slane %v4657, 1
        %v4820 = vrot.slane %v4660, 1
        %v4821 = vrot.slane %v4662, 1
        %v4822 = vrot.slane %v4665, 1
        %v4823 = vrot.slane %v4667, 1
        %v4824 = vrot.slane %v4670, 1
        %v4825 = vrot.slane %v4672, 1
        %v4826 = vrot.slane %v4675, 1
        %v4827 = vrot.slane %v4677, 1
        %v4828 = vrot.slane %v4680, 1
        %v4829 = vrot.slane %v4682, 1
        %v4830 = vrot.slane %v4685, 1
        %v4831 = vrot.slane %v4687, 1
        %v4832 = vrot.slane %v4690, 1
        %v4833 = vrot.slane %v4692, 1
        %v4834 = vrot.slane %v4695, 1
        %v4835 = vrot.slane %v4697, 1
        %v4836 = vrot.slane %v4700, 1
        %v4837 = vrot.slane %v4702, 1
        %v4838 = vrot.slane %v4705, 1
        %v4839 = vrot.slane %v4707, 1
        %v4840 = vsel %vm1695, %v4838, %v4839
        %v4841 = vsel %vm1695, %v4837, %v4838
        %v4842 = vsel %vm1695, %v4836, %v4837
        %v4843 = vsel %vm1695, %v4835, %v4836
        %v4844 = vsel %vm1695, %v4834, %v4835
        %v4845 = vsel %vm1695, %v4833, %v4834
        %v4846 = vsel %vm1695, %v4832, %v4833
        %v4847 = vsel %vm1695, %v4831, %v4832
        %v4848 = vsel %vm1695, %v4830, %v4831
        %v4849 = vsel %vm1695, %v4829, %v4830
        %v4850 = vsel %vm1695, %v4828, %v4829
        %v4851 = vsel %vm1695, %v4827, %v4828
        %v4852 = vsel %vm1695, %v4826, %v4827
        %v4853 = vsel %vm1695, %v4825, %v4826
        %v4854 = vsel %vm1695, %v4824, %v4825
        %v4855 = vsel %vm1695, %v4823, %v4824
        %v4856 = vsel %vm1695, %v4822, %v4823
        %v4857 = vsel %vm1695, %v4821, %v4822
        %v4858 = vsel %vm1695, %v4820, %v4821
        %v4859 = vsel %vm1695, %v4819, %v4820
        %v4860 = vsel %vm1695, %v4818, %v4819
        %v4861 = vsel %vm1695, %v4817, %v4818
        %v4862 = vsel %vm1695, %v4816, %v4817
        %v4863 = vsel %vm1695, %v4815, %v4816
        %v4864 = vsel %vm1695, %v4814, %v4815
        %v4865 = vsel %vm1695, %v4813, %v4814
        %v4866 = vsel %vm1695, %v4812, %v4813
        %v4867 = vsel %vm1695, %v4811, %v4812
        %v4868 = vsel %vm1695, %v4810, %v4811
        %v4869 = vsel %vm1695, %v4809, %v4810
        %v4870 = vsel %vm1695, %v4808, %v4809
        %v4871 = vsel %vm1695, %v4839, %v4808
        %v4872 = vmul.f32 %v4870, %v1011
        %v4873 = vmul.f32 %v4869, %v1015
        %v4874 = vmul.f32 %v4868, %v1019
        %v4875 = vmul.f32 %v4867, %v1023
        %v4876 = vmul.f32 %v4866, %v1027
        %v4877 = vmul.f32 %v4865, %v1031
        %v4878 = vmul.f32 %v4864, %v1035
        %v4879 = vmul.f32 %v4863, %v1039
        %v4880 = vmul.f32 %v4862, %v1043
        %v4881 = vmul.f32 %v4861, %v1047
        %v4882 = vmul.f32 %v4860, %v1051
        %v4883 = vmul.f32 %v4859, %v1055
        %v4884 = vmul.f32 %v4858, %v1059
        %v4885 = vmul.f32 %v4857, %v1063
        %v4886 = vmul.f32 %v4856, %v1067
        %v4887 = vmul.f32 %v4855, %v1071
        %v4888 = vmul.f32 %v4854, %v1075
        %v4889 = vmul.f32 %v4853, %v1079
        %v4890 = vmul.f32 %v4852, %v1083
        %v4891 = vmul.f32 %v4851, %v1087
        %v4892 = vmul.f32 %v4850, %v1091
        %v4893 = vmul.f32 %v4849, %v1095
        %v4894 = vmul.f32 %v4848, %v1099
        %v4895 = vmul.f32 %v4847, %v1103
        %v4896 = vmul.f32 %v4846, %v1107
        %v4897 = vmul.f32 %v4845, %v1111
        %v4898 = vmul.f32 %v4844, %v1115
        %v4899 = vmul.f32 %v4843, %v1119
        %v4900 = vmul.f32 %v4842, %v1123
        %v4901 = vmul.f32 %v4841, %v1127
        %v4902 = vmul.f32 %v4840, %v1131
        %v4903 = vmul.f32 %v4871, %v1135
        %v4904 = vperm.slane %v4710, 0
        %v4905 = vmul.f32 %v4776, %v4904
        %v4906 = vmul.f32 %v4777, %v4904
        %v4907 = vmul.f32 %v4778, %v4904
        %v4908 = vmul.f32 %v4779, %v4904
        %v4909 = vmul.f32 %v4780, %v4904
        %v4910 = vmul.f32 %v4781, %v4904
        %v4911 = vmul.f32 %v4782, %v4904
        %v4912 = vmul.f32 %v4783, %v4904
        %v4913 = vmul.f32 %v4784, %v4904
        %v4914 = vmul.f32 %v4785, %v4904
        %v4915 = vmul.f32 %v4786, %v4904
        %v4916 = vmul.f32 %v4787, %v4904
        %v4917 = vmul.f32 %v4788, %v4904
        %v4918 = vmul.f32 %v4789, %v4904
        %v4919 = vmul.f32 %v4790, %v4904
        %v4920 = vmul.f32 %v4791, %v4904
        %v4921 = vmul.f32 %v4792, %v4904
        %v4922 = vmul.f32 %v4793, %v4904
        %v4923 = vmul.f32 %v4794, %v4904
        %v4924 = vmul.f32 %v4795, %v4904
        %v4925 = vmul.f32 %v4796, %v4904
        %v4926 = vmul.f32 %v4797, %v4904
        %v4927 = vmul.f32 %v4798, %v4904
        %v4928 = vmul.f32 %v4799, %v4904
        %v4929 = vmul.f32 %v4800, %v4904
        %v4930 = vmul.f32 %v4801, %v4904
        %v4931 = vmul.f32 %v4802, %v4904
        %v4932 = vmul.f32 %v4803, %v4904
        %v4933 = vmul.f32 %v4804, %v4904
        %v4934 = vmul.f32 %v4805, %v4904
        %v4935 = vmul.f32 %v4806, %v4904
        %v4936 = vmul.f32 %v4807, %v4904
        %v4937 = vperm.slane %v4710, 1
        %v4938 = vmul.f32 %v4630, %v4937
        %v4939 = vmul.f32 %v4632, %v4937
        %v4940 = vmul.f32 %v4635, %v4937
        %v4941 = vmul.f32 %v4637, %v4937
        %v4942 = vmul.f32 %v4640, %v4937
        %v4943 = vmul.f32 %v4642, %v4937
        %v4944 = vmul.f32 %v4645, %v4937
        %v4945 = vmul.f32 %v4647, %v4937
        %v4946 = vmul.f32 %v4650, %v4937
        %v4947 = vmul.f32 %v4652, %v4937
        %v4948 = vmul.f32 %v4655, %v4937
        %v4949 = vmul.f32 %v4657, %v4937
        %v4950 = vmul.f32 %v4660, %v4937
        %v4951 = vmul.f32 %v4662, %v4937
        %v4952 = vmul.f32 %v4665, %v4937
        %v4953 = vmul.f32 %v4667, %v4937
        %v4954 = vmul.f32 %v4670, %v4937
        %v4955 = vmul.f32 %v4672, %v4937
        %v4956 = vmul.f32 %v4675, %v4937
        %v4957 = vmul.f32 %v4677, %v4937
        %v4958 = vmul.f32 %v4680, %v4937
        %v4959 = vmul.f32 %v4682, %v4937
        %v4960 = vmul.f32 %v4685, %v4937
        %v4961 = vmul.f32 %v4687, %v4937
        %v4962 = vmul.f32 %v4690, %v4937
        %v4963 = vmul.f32 %v4692, %v4937
        %v4964 = vmul.f32 %v4695, %v4937
        %v4965 = vmul.f32 %v4697, %v4937
        %v4966 = vmul.f32 %v4700, %v4937
        %v4967 = vmul.f32 %v4702, %v4937
        %v4968 = vmul.f32 %v4705, %v4937
        %v4969 = vmul.f32 %v4707, %v4937
        %v4970 = vadd.f32 %v4905, %v4938
        %v4971 = vadd.f32 %v4906, %v4939
        %v4972 = vadd.f32 %v4907, %v4940
        %v4973 = vadd.f32 %v4908, %v4941
        %v4974 = vadd.f32 %v4909, %v4942
        %v4975 = vadd.f32 %v4910, %v4943
        %v4976 = vadd.f32 %v4911, %v4944
        %v4977 = vadd.f32 %v4912, %v4945
        %v4978 = vadd.f32 %v4913, %v4946
        %v4979 = vadd.f32 %v4914, %v4947
        %v4980 = vadd.f32 %v4915, %v4948
        %v4981 = vadd.f32 %v4916, %v4949
        %v4982 = vadd.f32 %v4917, %v4950
        %v4983 = vadd.f32 %v4918, %v4951
        %v4984 = vadd.f32 %v4919, %v4952
        %v4985 = vadd.f32 %v4920, %v4953
        %v4986 = vadd.f32 %v4921, %v4954
        %v4987 = vadd.f32 %v4922, %v4955
        %v4988 = vadd.f32 %v4923, %v4956
        %v4989 = vadd.f32 %v4924, %v4957
        %v4990 = vadd.f32 %v4925, %v4958
        %v4991 = vadd.f32 %v4926, %v4959
        %v4992 = vadd.f32 %v4927, %v4960
        %v4993 = vadd.f32 %v4928, %v4961
        %v4994 = vadd.f32 %v4929, %v4962
        %v4995 = vadd.f32 %v4930, %v4963
        %v4996 = vadd.f32 %v4931, %v4964
        %v4997 = vadd.f32 %v4932, %v4965
        %v4998 = vadd.f32 %v4933, %v4966
        %v4999 = vadd.f32 %v4934, %v4967
        %v5000 = vadd.f32 %v4935, %v4968
        %v5001 = vadd.f32 %v4936, %v4969
        %v5002 = vperm.slane %v4710, 2
        %v5003 = vmul.f32 %v4872, %v5002
        %v5004 = vmul.f32 %v4873, %v5002
        %v5005 = vmul.f32 %v4874, %v5002
        %v5006 = vmul.f32 %v4875, %v5002
        %v5007 = vmul.f32 %v4876, %v5002
        %v5008 = vmul.f32 %v4877, %v5002
        %v5009 = vmul.f32 %v4878, %v5002
        %v5010 = vmul.f32 %v4879, %v5002
        %v5011 = vmul.f32 %v4880, %v5002
        %v5012 = vmul.f32 %v4881, %v5002
        %v5013 = vmul.f32 %v4882, %v5002
        %v5014 = vmul.f32 %v4883, %v5002
        %v5015 = vmul.f32 %v4884, %v5002
        %v5016 = vmul.f32 %v4885, %v5002
        %v5017 = vmul.f32 %v4886, %v5002
        %v5018 = vmul.f32 %v4887, %v5002
        %v5019 = vmul.f32 %v4888, %v5002
        %v5020 = vmul.f32 %v4889, %v5002
        %v5021 = vmul.f32 %v4890, %v5002
        %v5022 = vmul.f32 %v4891, %v5002
        %v5023 = vmul.f32 %v4892, %v5002
        %v5024 = vmul.f32 %v4893, %v5002
        %v5025 = vmul.f32 %v4894, %v5002
        %v5026 = vmul.f32 %v4895, %v5002
        %v5027 = vmul.f32 %v4896, %v5002
        %v5028 = vmul.f32 %v4897, %v5002
        %v5029 = vmul.f32 %v4898, %v5002
        %v5030 = vmul.f32 %v4899, %v5002
        %v5031 = vmul.f32 %v4900, %v5002
        %v5032 = vmul.f32 %v4901, %v5002
        %v5033 = vmul.f32 %v4902, %v5002
        %v5034 = vmul.f32 %v4903, %v5002
        %v5035 = vadd.f32 %v4970, %v5003
        %v5036 = vadd.f32 %v4971, %v5004
        %v5037 = vadd.f32 %v4972, %v5005
        %v5038 = vadd.f32 %v4973, %v5006
        %v5039 = vadd.f32 %v4974, %v5007
        %v5040 = vadd.f32 %v4975, %v5008
        %v5041 = vadd.f32 %v4976, %v5009
        %v5042 = vadd.f32 %v4977, %v5010
        %v5043 = vadd.f32 %v4978, %v5011
        %v5044 = vadd.f32 %v4979, %v5012
        %v5045 = vadd.f32 %v4980, %v5013
        %v5046 = vadd.f32 %v4981, %v5014
        %v5047 = vadd.f32 %v4982, %v5015
        %v5048 = vadd.f32 %v4983, %v5016
        %v5049 = vadd.f32 %v4984, %v5017
        %v5050 = vadd.f32 %v4985, %v5018
        %v5051 = vadd.f32 %v4986, %v5019
        %v5052 = vadd.f32 %v4987, %v5020
        %v5053 = vadd.f32 %v4988, %v5021
        %v5054 = vadd.f32 %v4989, %v5022
        %v5055 = vadd.f32 %v4990, %v5023
        %v5056 = vadd.f32 %v4991, %v5024
        %v5057 = vadd.f32 %v4992, %v5025
        %v5058 = vadd.f32 %v4993, %v5026
        %v5059 = vadd.f32 %v4994, %v5027
        %v5060 = vadd.f32 %v4995, %v5028
        %v5061 = vadd.f32 %v4996, %v5029
        %v5062 = vadd.f32 %v4997, %v5030
        %v5063 = vadd.f32 %v4998, %v5031
        %v5064 = vadd.f32 %v4999, %v5032
        %v5065 = vadd.f32 %v5000, %v5033
        %v5066 = vadd.f32 %v5001, %v5034
        %v5067 = vperm.slane %v4710, 3
        %v5068 = vmul.f32 %v4776, %v5067
        %v5069 = vmul.f32 %v4777, %v5067
        %v5070 = vmul.f32 %v4778, %v5067
        %v5071 = vmul.f32 %v4779, %v5067
        %v5072 = vmul.f32 %v4780, %v5067
        %v5073 = vmul.f32 %v4781, %v5067
        %v5074 = vmul.f32 %v4782, %v5067
        %v5075 = vmul.f32 %v4783, %v5067
        %v5076 = vmul.f32 %v4784, %v5067
        %v5077 = vmul.f32 %v4785, %v5067
        %v5078 = vmul.f32 %v4786, %v5067
        %v5079 = vmul.f32 %v4787, %v5067
        %v5080 = vmul.f32 %v4788, %v5067
        %v5081 = vmul.f32 %v4789, %v5067
        %v5082 = vmul.f32 %v4790, %v5067
        %v5083 = vmul.f32 %v4791, %v5067
        %v5084 = vmul.f32 %v4792, %v5067
        %v5085 = vmul.f32 %v4793, %v5067
        %v5086 = vmul.f32 %v4794, %v5067
        %v5087 = vmul.f32 %v4795, %v5067
        %v5088 = vmul.f32 %v4796, %v5067
        %v5089 = vmul.f32 %v4797, %v5067
        %v5090 = vmul.f32 %v4798, %v5067
        %v5091 = vmul.f32 %v4799, %v5067
        %v5092 = vmul.f32 %v4800, %v5067
        %v5093 = vmul.f32 %v4801, %v5067
        %v5094 = vmul.f32 %v4802, %v5067
        %v5095 = vmul.f32 %v4803, %v5067
        %v5096 = vmul.f32 %v4804, %v5067
        %v5097 = vmul.f32 %v4805, %v5067
        %v5098 = vmul.f32 %v4806, %v5067
        %v5099 = vmul.f32 %v4807, %v5067
        %v5100 = vperm.slane %v4710, 4
        %v5101 = vmul.f32 %v4630, %v5100
        %v5102 = vmul.f32 %v4632, %v5100
        %v5103 = vmul.f32 %v4635, %v5100
        %v5104 = vmul.f32 %v4637, %v5100
        %v5105 = vmul.f32 %v4640, %v5100
        %v5106 = vmul.f32 %v4642, %v5100
        %v5107 = vmul.f32 %v4645, %v5100
        %v5108 = vmul.f32 %v4647, %v5100
        %v5109 = vmul.f32 %v4650, %v5100
        %v5110 = vmul.f32 %v4652, %v5100
        %v5111 = vmul.f32 %v4655, %v5100
        %v5112 = vmul.f32 %v4657, %v5100
        %v5113 = vmul.f32 %v4660, %v5100
        %v5114 = vmul.f32 %v4662, %v5100
        %v5115 = vmul.f32 %v4665, %v5100
        %v5116 = vmul.f32 %v4667, %v5100
        %v5117 = vmul.f32 %v4670, %v5100
        %v5118 = vmul.f32 %v4672, %v5100
        %v5119 = vmul.f32 %v4675, %v5100
        %v5120 = vmul.f32 %v4677, %v5100
        %v5121 = vmul.f32 %v4680, %v5100
        %v5122 = vmul.f32 %v4682, %v5100
        %v5123 = vmul.f32 %v4685, %v5100
        %v5124 = vmul.f32 %v4687, %v5100
        %v5125 = vmul.f32 %v4690, %v5100
        %v5126 = vmul.f32 %v4692, %v5100
        %v5127 = vmul.f32 %v4695, %v5100
        %v5128 = vmul.f32 %v4697, %v5100
        %v5129 = vmul.f32 %v4700, %v5100
        %v5130 = vmul.f32 %v4702, %v5100
        %v5131 = vmul.f32 %v4705, %v5100
        %v5132 = vmul.f32 %v4707, %v5100
        %v5133 = vadd.f32 %v5068, %v5101
        %v5134 = vadd.f32 %v5069, %v5102
        %v5135 = vadd.f32 %v5070, %v5103
        %v5136 = vadd.f32 %v5071, %v5104
        %v5137 = vadd.f32 %v5072, %v5105
        %v5138 = vadd.f32 %v5073, %v5106
        %v5139 = vadd.f32 %v5074, %v5107
        %v5140 = vadd.f32 %v5075, %v5108
        %v5141 = vadd.f32 %v5076, %v5109
        %v5142 = vadd.f32 %v5077, %v5110
        %v5143 = vadd.f32 %v5078, %v5111
        %v5144 = vadd.f32 %v5079, %v5112
        %v5145 = vadd.f32 %v5080, %v5113
        %v5146 = vadd.f32 %v5081, %v5114
        %v5147 = vadd.f32 %v5082, %v5115
        %v5148 = vadd.f32 %v5083, %v5116
        %v5149 = vadd.f32 %v5084, %v5117
        %v5150 = vadd.f32 %v5085, %v5118
        %v5151 = vadd.f32 %v5086, %v5119
        %v5152 = vadd.f32 %v5087, %v5120
        %v5153 = vadd.f32 %v5088, %v5121
        %v5154 = vadd.f32 %v5089, %v5122
        %v5155 = vadd.f32 %v5090, %v5123
        %v5156 = vadd.f32 %v5091, %v5124
        %v5157 = vadd.f32 %v5092, %v5125
        %v5158 = vadd.f32 %v5093, %v5126
        %v5159 = vadd.f32 %v5094, %v5127
        %v5160 = vadd.f32 %v5095, %v5128
        %v5161 = vadd.f32 %v5096, %v5129
        %v5162 = vadd.f32 %v5097, %v5130
        %v5163 = vadd.f32 %v5098, %v5131
        %v5164 = vadd.f32 %v5099, %v5132
        %v5165 = vperm.slane %v4710, 5
        %v5166 = vmul.f32 %v4872, %v5165
        %v5167 = vmul.f32 %v4873, %v5165
        %v5168 = vmul.f32 %v4874, %v5165
        %v5169 = vmul.f32 %v4875, %v5165
        %v5170 = vmul.f32 %v4876, %v5165
        %v5171 = vmul.f32 %v4877, %v5165
        %v5172 = vmul.f32 %v4878, %v5165
        %v5173 = vmul.f32 %v4879, %v5165
        %v5174 = vmul.f32 %v4880, %v5165
        %v5175 = vmul.f32 %v4881, %v5165
        %v5176 = vmul.f32 %v4882, %v5165
        %v5177 = vmul.f32 %v4883, %v5165
        %v5178 = vmul.f32 %v4884, %v5165
        %v5179 = vmul.f32 %v4885, %v5165
        %v5180 = vmul.f32 %v4886, %v5165
        %v5181 = vmul.f32 %v4887, %v5165
        %v5182 = vmul.f32 %v4888, %v5165
        %v5183 = vmul.f32 %v4889, %v5165
        %v5184 = vmul.f32 %v4890, %v5165
        %v5185 = vmul.f32 %v4891, %v5165
        %v5186 = vmul.f32 %v4892, %v5165
        %v5187 = vmul.f32 %v4893, %v5165
        %v5188 = vmul.f32 %v4894, %v5165
        %v5189 = vmul.f32 %v4895, %v5165
        %v5190 = vmul.f32 %v4896, %v5165
        %v5191 = vmul.f32 %v4897, %v5165
        %v5192 = vmul.f32 %v4898, %v5165
        %v5193 = vmul.f32 %v4899, %v5165
        %v5194 = vmul.f32 %v4900, %v5165
        %v5195 = vmul.f32 %v4901, %v5165
        %v5196 = vmul.f32 %v4902, %v5165
        %v5197 = vmul.f32 %v4903, %v5165
        %v5198 = vadd.f32 %v5133, %v5166
        %v5199 = vadd.f32 %v5134, %v5167
        %v5200 = vadd.f32 %v5135, %v5168
        %v5201 = vadd.f32 %v5136, %v5169
        %v5202 = vadd.f32 %v5137, %v5170
        %v5203 = vadd.f32 %v5138, %v5171
        %v5204 = vadd.f32 %v5139, %v5172
        %v5205 = vadd.f32 %v5140, %v5173
        %v5206 = vadd.f32 %v5141, %v5174
        %v5207 = vadd.f32 %v5142, %v5175
        %v5208 = vadd.f32 %v5143, %v5176
        %v5209 = vadd.f32 %v5144, %v5177
        %v5210 = vadd.f32 %v5145, %v5178
        %v5211 = vadd.f32 %v5146, %v5179
        %v5212 = vadd.f32 %v5147, %v5180
        %v5213 = vadd.f32 %v5148, %v5181
        %v5214 = vadd.f32 %v5149, %v5182
        %v5215 = vadd.f32 %v5150, %v5183
        %v5216 = vadd.f32 %v5151, %v5184
        %v5217 = vadd.f32 %v5152, %v5185
        %v5218 = vadd.f32 %v5153, %v5186
        %v5219 = vadd.f32 %v5154, %v5187
        %v5220 = vadd.f32 %v5155, %v5188
        %v5221 = vadd.f32 %v5156, %v5189
        %v5222 = vadd.f32 %v5157, %v5190
        %v5223 = vadd.f32 %v5158, %v5191
        %v5224 = vadd.f32 %v5159, %v5192
        %v5225 = vadd.f32 %v5160, %v5193
        %v5226 = vadd.f32 %v5161, %v5194
        %v5227 = vadd.f32 %v5162, %v5195
        %v5228 = vadd.f32 %v5163, %v5196
        %v5229 = vadd.f32 %v5164, %v5197
        %v5230 = vperm.slane %v4710, 6
        %v5231 = vmul.f32 %v4776, %v5230
        %v5232 = vmul.f32 %v4777, %v5230
        %v5233 = vmul.f32 %v4778, %v5230
        %v5234 = vmul.f32 %v4779, %v5230
        %v5235 = vmul.f32 %v4780, %v5230
        %v5236 = vmul.f32 %v4781, %v5230
        %v5237 = vmul.f32 %v4782, %v5230
        %v5238 = vmul.f32 %v4783, %v5230
        %v5239 = vmul.f32 %v4784, %v5230
        %v5240 = vmul.f32 %v4785, %v5230
        %v5241 = vmul.f32 %v4786, %v5230
        %v5242 = vmul.f32 %v4787, %v5230
        %v5243 = vmul.f32 %v4788, %v5230
        %v5244 = vmul.f32 %v4789, %v5230
        %v5245 = vmul.f32 %v4790, %v5230
        %v5246 = vmul.f32 %v4791, %v5230
        %v5247 = vmul.f32 %v4792, %v5230
        %v5248 = vmul.f32 %v4793, %v5230
        %v5249 = vmul.f32 %v4794, %v5230
        %v5250 = vmul.f32 %v4795, %v5230
        %v5251 = vmul.f32 %v4796, %v5230
        %v5252 = vmul.f32 %v4797, %v5230
        %v5253 = vmul.f32 %v4798, %v5230
        %v5254 = vmul.f32 %v4799, %v5230
        %v5255 = vmul.f32 %v4800, %v5230
        %v5256 = vmul.f32 %v4801, %v5230
        %v5257 = vmul.f32 %v4802, %v5230
        %v5258 = vmul.f32 %v4803, %v5230
        %v5259 = vmul.f32 %v4804, %v5230
        %v5260 = vmul.f32 %v4805, %v5230
        %v5261 = vmul.f32 %v4806, %v5230
        %v5262 = vmul.f32 %v4807, %v5230
        %v5263 = vperm.slane %v4710, 7
        %v5264 = vmul.f32 %v4630, %v5263
        %v5265 = vmul.f32 %v4632, %v5263
        %v5266 = vmul.f32 %v4635, %v5263
        %v5267 = vmul.f32 %v4637, %v5263
        %v5268 = vmul.f32 %v4640, %v5263
        %v5269 = vmul.f32 %v4642, %v5263
        %v5270 = vmul.f32 %v4645, %v5263
        %v5271 = vmul.f32 %v4647, %v5263
        %v5272 = vmul.f32 %v4650, %v5263
        %v5273 = vmul.f32 %v4652, %v5263
        %v5274 = vmul.f32 %v4655, %v5263
        %v5275 = vmul.f32 %v4657, %v5263
        %v5276 = vmul.f32 %v4660, %v5263
        %v5277 = vmul.f32 %v4662, %v5263
        %v5278 = vmul.f32 %v4665, %v5263
        %v5279 = vmul.f32 %v4667, %v5263
        %v5280 = vmul.f32 %v4670, %v5263
        %v5281 = vmul.f32 %v4672, %v5263
        %v5282 = vmul.f32 %v4675, %v5263
        %v5283 = vmul.f32 %v4677, %v5263
        %v5284 = vmul.f32 %v4680, %v5263
        %v5285 = vmul.f32 %v4682, %v5263
        %v5286 = vmul.f32 %v4685, %v5263
        %v5287 = vmul.f32 %v4687, %v5263
        %v5288 = vmul.f32 %v4690, %v5263
        %v5289 = vmul.f32 %v4692, %v5263
        %v5290 = vmul.f32 %v4695, %v5263
        %v5291 = vmul.f32 %v4697, %v5263
        %v5292 = vmul.f32 %v4700, %v5263
        %v5293 = vmul.f32 %v4702, %v5263
        %v5294 = vmul.f32 %v4705, %v5263
        %v5295 = vmul.f32 %v4707, %v5263
        %v5296 = vadd.f32 %v5231, %v5264
        %v5297 = vadd.f32 %v5232, %v5265
        %v5298 = vadd.f32 %v5233, %v5266
        %v5299 = vadd.f32 %v5234, %v5267
        %v5300 = vadd.f32 %v5235, %v5268
        %v5301 = vadd.f32 %v5236, %v5269
        %v5302 = vadd.f32 %v5237, %v5270
        %v5303 = vadd.f32 %v5238, %v5271
        %v5304 = vadd.f32 %v5239, %v5272
        %v5305 = vadd.f32 %v5240, %v5273
        %v5306 = vadd.f32 %v5241, %v5274
        %v5307 = vadd.f32 %v5242, %v5275
        %v5308 = vadd.f32 %v5243, %v5276
        %v5309 = vadd.f32 %v5244, %v5277
        %v5310 = vadd.f32 %v5245, %v5278
        %v5311 = vadd.f32 %v5246, %v5279
        %v5312 = vadd.f32 %v5247, %v5280
        %v5313 = vadd.f32 %v5248, %v5281
        %v5314 = vadd.f32 %v5249, %v5282
        %v5315 = vadd.f32 %v5250, %v5283
        %v5316 = vadd.f32 %v5251, %v5284
        %v5317 = vadd.f32 %v5252, %v5285
        %v5318 = vadd.f32 %v5253, %v5286
        %v5319 = vadd.f32 %v5254, %v5287
        %v5320 = vadd.f32 %v5255, %v5288
        %v5321 = vadd.f32 %v5256, %v5289
        %v5322 = vadd.f32 %v5257, %v5290
        %v5323 = vadd.f32 %v5258, %v5291
        %v5324 = vadd.f32 %v5259, %v5292
        %v5325 = vadd.f32 %v5260, %v5293
        %v5326 = vadd.f32 %v5261, %v5294
        %v5327 = vadd.f32 %v5262, %v5295
        %v5328 = vperm.slane %v4711, 0
        %v5329 = vmul.f32 %v4872, %v5328
        %v5330 = vmul.f32 %v4873, %v5328
        %v5331 = vmul.f32 %v4874, %v5328
        %v5332 = vmul.f32 %v4875, %v5328
        %v5333 = vmul.f32 %v4876, %v5328
        %v5334 = vmul.f32 %v4877, %v5328
        %v5335 = vmul.f32 %v4878, %v5328
        %v5336 = vmul.f32 %v4879, %v5328
        %v5337 = vmul.f32 %v4880, %v5328
        %v5338 = vmul.f32 %v4881, %v5328
        %v5339 = vmul.f32 %v4882, %v5328
        %v5340 = vmul.f32 %v4883, %v5328
        %v5341 = vmul.f32 %v4884, %v5328
        %v5342 = vmul.f32 %v4885, %v5328
        %v5343 = vmul.f32 %v4886, %v5328
        %v5344 = vmul.f32 %v4887, %v5328
        %v5345 = vmul.f32 %v4888, %v5328
        %v5346 = vmul.f32 %v4889, %v5328
        %v5347 = vmul.f32 %v4890, %v5328
        %v5348 = vmul.f32 %v4891, %v5328
        %v5349 = vmul.f32 %v4892, %v5328
        %v5350 = vmul.f32 %v4893, %v5328
        %v5351 = vmul.f32 %v4894, %v5328
        %v5352 = vmul.f32 %v4895, %v5328
        %v5353 = vmul.f32 %v4896, %v5328
        %v5354 = vmul.f32 %v4897, %v5328
        %v5355 = vmul.f32 %v4898, %v5328
        %v5356 = vmul.f32 %v4899, %v5328
        %v5357 = vmul.f32 %v4900, %v5328
        %v5358 = vmul.f32 %v4901, %v5328
        %v5359 = vmul.f32 %v4902, %v5328
        %v5360 = vmul.f32 %v4903, %v5328
        %v5361 = vadd.f32 %v5296, %v5329
        %v5362 = vadd.f32 %v5297, %v5330
        %v5363 = vadd.f32 %v5298, %v5331
        %v5364 = vadd.f32 %v5299, %v5332
        %v5365 = vadd.f32 %v5300, %v5333
        %v5366 = vadd.f32 %v5301, %v5334
        %v5367 = vadd.f32 %v5302, %v5335
        %v5368 = vadd.f32 %v5303, %v5336
        %v5369 = vadd.f32 %v5304, %v5337
        %v5370 = vadd.f32 %v5305, %v5338
        %v5371 = vadd.f32 %v5306, %v5339
        %v5372 = vadd.f32 %v5307, %v5340
        %v5373 = vadd.f32 %v5308, %v5341
        %v5374 = vadd.f32 %v5309, %v5342
        %v5375 = vadd.f32 %v5310, %v5343
        %v5376 = vadd.f32 %v5311, %v5344
        %v5377 = vadd.f32 %v5312, %v5345
        %v5378 = vadd.f32 %v5313, %v5346
        %v5379 = vadd.f32 %v5314, %v5347
        %v5380 = vadd.f32 %v5315, %v5348
        %v5381 = vadd.f32 %v5316, %v5349
        %v5382 = vadd.f32 %v5317, %v5350
        %v5383 = vadd.f32 %v5318, %v5351
        %v5384 = vadd.f32 %v5319, %v5352
        %v5385 = vadd.f32 %v5320, %v5353
        %v5386 = vadd.f32 %v5321, %v5354
        %v5387 = vadd.f32 %v5322, %v5355
        %v5388 = vadd.f32 %v5323, %v5356
        %v5389 = vadd.f32 %v5324, %v5357
        %v5390 = vadd.f32 %v5325, %v5358
        %v5391 = vadd.f32 %v5326, %v5359
        %v5392 = vadd.f32 %v5327, %v5360
        %v5393 = vmul.f32 %v5065, %v1139
        %v5394 = vmul.f32 %v5066, %v1143
        %v5395 = vmul.f32 %v5035, %v1147
        %v5396 = vmul.f32 %v5036, %v1151
        %v5397 = vmul.f32 %v5037, %v1155
        %v5398 = vmul.f32 %v5038, %v1159
        %v5399 = vmul.f32 %v5039, %v1163
        %v5400 = vmul.f32 %v5040, %v1167
        %v5401 = vmul.f32 %v5041, %v1171
        %v5402 = vmul.f32 %v5042, %v1175
        %v5403 = vmul.f32 %v5043, %v1179
        %v5404 = vmul.f32 %v5044, %v1183
        %v5405 = vmul.f32 %v5045, %v1187
        %v5406 = vmul.f32 %v5046, %v1191
        %v5407 = vmul.f32 %v5047, %v1195
        %v5408 = vmul.f32 %v5048, %v1199
        %v5409 = vmul.f32 %v5049, %v1203
        %v5410 = vmul.f32 %v5050, %v1207
        %v5411 = vmul.f32 %v5051, %v1211
        %v5412 = vmul.f32 %v5052, %v1215
        %v5413 = vmul.f32 %v5053, %v1219
        %v5414 = vmul.f32 %v5054, %v1223
        %v5415 = vmul.f32 %v5055, %v1227
        %v5416 = vmul.f32 %v5056, %v1231
        %v5417 = vmul.f32 %v5057, %v1235
        %v5418 = vmul.f32 %v5058, %v1239
        %v5419 = vmul.f32 %v5059, %v1243
        %v5420 = vmul.f32 %v5060, %v1247
        %v5421 = vmul.f32 %v5061, %v1251
        %v5422 = vmul.f32 %v5062, %v1255
        %v5423 = vmul.f32 %v5063, %v1259
        %v5424 = vmul.f32 %v5064, %v1263
        %v5425 = vadd.f32 %v5198, %v5393
        %v5426 = vadd.f32 %v5199, %v5394
        %v5427 = vadd.f32 %v5200, %v5395
        %v5428 = vadd.f32 %v5201, %v5396
        %v5429 = vadd.f32 %v5202, %v5397
        %v5430 = vadd.f32 %v5203, %v5398
        %v5431 = vadd.f32 %v5204, %v5399
        %v5432 = vadd.f32 %v5205, %v5400
        %v5433 = vadd.f32 %v5206, %v5401
        %v5434 = vadd.f32 %v5207, %v5402
        %v5435 = vadd.f32 %v5208, %v5403
        %v5436 = vadd.f32 %v5209, %v5404
        %v5437 = vadd.f32 %v5210, %v5405
        %v5438 = vadd.f32 %v5211, %v5406
        %v5439 = vadd.f32 %v5212, %v5407
        %v5440 = vadd.f32 %v5213, %v5408
        %v5441 = vadd.f32 %v5214, %v5409
        %v5442 = vadd.f32 %v5215, %v5410
        %v5443 = vadd.f32 %v5216, %v5411
        %v5444 = vadd.f32 %v5217, %v5412
        %v5445 = vadd.f32 %v5218, %v5413
        %v5446 = vadd.f32 %v5219, %v5414
        %v5447 = vadd.f32 %v5220, %v5415
        %v5448 = vadd.f32 %v5221, %v5416
        %v5449 = vadd.f32 %v5222, %v5417
        %v5450 = vadd.f32 %v5223, %v5418
        %v5451 = vadd.f32 %v5224, %v5419
        %v5452 = vadd.f32 %v5225, %v5420
        %v5453 = vadd.f32 %v5226, %v5421
        %v5454 = vadd.f32 %v5227, %v5422
        %v5455 = vadd.f32 %v5228, %v5423
        %v5456 = vadd.f32 %v5229, %v5424
        %v5457 = vmul.f32 %v5363, %v1267
        %v5458 = vmul.f32 %v5364, %v1271
        %v5459 = vmul.f32 %v5365, %v1275
        %v5460 = vmul.f32 %v5366, %v1279
        %v5461 = vmul.f32 %v5367, %v1283
        %v5462 = vmul.f32 %v5368, %v1287
        %v5463 = vmul.f32 %v5369, %v1291
        %v5464 = vmul.f32 %v5370, %v1295
        %v5465 = vmul.f32 %v5371, %v1299
        %v5466 = vmul.f32 %v5372, %v1303
        %v5467 = vmul.f32 %v5373, %v1307
        %v5468 = vmul.f32 %v5374, %v1311
        %v5469 = vmul.f32 %v5375, %v1315
        %v5470 = vmul.f32 %v5376, %v1319
        %v5471 = vmul.f32 %v5377, %v1323
        %v5472 = vmul.f32 %v5378, %v1327
        %v5473 = vmul.f32 %v5379, %v1331
        %v5474 = vmul.f32 %v5380, %v1335
        %v5475 = vmul.f32 %v5381, %v1339
        %v5476 = vmul.f32 %v5382, %v1343
        %v5477 = vmul.f32 %v5383, %v1347
        %v5478 = vmul.f32 %v5384, %v1351
        %v5479 = vmul.f32 %v5385, %v1355
        %v5480 = vmul.f32 %v5386, %v1359
        %v5481 = vmul.f32 %v5387, %v1363
        %v5482 = vmul.f32 %v5388, %v1367
        %v5483 = vmul.f32 %v5389, %v1371
        %v5484 = vmul.f32 %v5390, %v1375
        %v5485 = vmul.f32 %v5391, %v1379
        %v5486 = vmul.f32 %v5392, %v1383
        %v5487 = vmul.f32 %v5361, %v1387
        %v5488 = vmul.f32 %v5362, %v1391
        %v5489 = vadd.f32 %v5425, %v5457
        %v5490 = vadd.f32 %v5426, %v5458
        %v5491 = vadd.f32 %v5427, %v5459
        %v5492 = vadd.f32 %v5428, %v5460
        %v5493 = vadd.f32 %v5429, %v5461
        %v5494 = vadd.f32 %v5430, %v5462
        %v5495 = vadd.f32 %v5431, %v5463
        %v5496 = vadd.f32 %v5432, %v5464
        %v5497 = vadd.f32 %v5433, %v5465
        %v5498 = vadd.f32 %v5434, %v5466
        %v5499 = vadd.f32 %v5435, %v5467
        %v5500 = vadd.f32 %v5436, %v5468
        %v5501 = vadd.f32 %v5437, %v5469
        %v5502 = vadd.f32 %v5438, %v5470
        %v5503 = vadd.f32 %v5439, %v5471
        %v5504 = vadd.f32 %v5440, %v5472
        %v5505 = vadd.f32 %v5441, %v5473
        %v5506 = vadd.f32 %v5442, %v5474
        %v5507 = vadd.f32 %v5443, %v5475
        %v5508 = vadd.f32 %v5444, %v5476
        %v5509 = vadd.f32 %v5445, %v5477
        %v5510 = vadd.f32 %v5446, %v5478
        %v5511 = vadd.f32 %v5447, %v5479
        %v5512 = vadd.f32 %v5448, %v5480
        %v5513 = vadd.f32 %v5449, %v5481
        %v5514 = vadd.f32 %v5450, %v5482
        %v5515 = vadd.f32 %v5451, %v5483
        %v5516 = vadd.f32 %v5452, %v5484
        %v5517 = vadd.f32 %v5453, %v5485
        %v5518 = vadd.f32 %v5454, %v5486
        %v5519 = vadd.f32 %v5455, %v5487
        %v5520 = vadd.f32 %v5456, %v5488
        %v5521 = vld [vmem:[%s6 + $0x3] sm:$0x1]
        %v5522 = vperm.slane %v5521, 0
        %v5523 = vadd.f32 %v5489, %v5522
        %v5524 = vadd.f32 %v5490, %v5522
        %v5525 = vadd.f32 %v5491, %v5522
        %v5526 = vadd.f32 %v5492, %v5522
        %v5527 = vadd.f32 %v5493, %v5522
        %v5528 = vadd.f32 %v5494, %v5522
        %v5529 = vadd.f32 %v5495, %v5522
        %v5530 = vadd.f32 %v5496, %v5522
        %v5531 = vadd.f32 %v5497, %v5522
        %v5532 = vadd.f32 %v5498, %v5522
        %v5533 = vadd.f32 %v5499, %v5522
        %v5534 = vadd.f32 %v5500, %v5522
        %v5535 = vadd.f32 %v5501, %v5522
        %v5536 = vadd.f32 %v5502, %v5522
        %v5537 = vadd.f32 %v5503, %v5522
        %v5538 = vadd.f32 %v5504, %v5522
        %v5539 = vadd.f32 %v5505, %v5522
        %v5540 = vadd.f32 %v5506, %v5522
        %v5541 = vadd.f32 %v5507, %v5522
        %v5542 = vadd.f32 %v5508, %v5522
        %v5543 = vadd.f32 %v5509, %v5522
        %v5544 = vadd.f32 %v5510, %v5522
        %v5545 = vadd.f32 %v5511, %v5522
        %v5546 = vadd.f32 %v5512, %v5522
        %v5547 = vadd.f32 %v5513, %v5522
        %v5548 = vadd.f32 %v5514, %v5522
        %v5549 = vadd.f32 %v5515, %v5522
        %v5550 = vadd.f32 %v5516, %v5522
        %v5551 = vadd.f32 %v5517, %v5522
        %v5552 = vadd.f32 %v5518, %v5522
        %v5553 = vadd.f32 %v5519, %v5522
        %v5554 = vadd.f32 %v5520, %v5522
        %v5555 = vmax.f32 %v5523, 0.0
        %v5556 = vmax.f32 %v5524, 0.0
        %v5557 = vmax.f32 %v5525, 0.0
        %v5558 = vmax.f32 %v5526, 0.0
        %v5559 = vmax.f32 %v5527, 0.0
        %v5560 = vmax.f32 %v5528, 0.0
        %v5561 = vmax.f32 %v5529, 0.0
        %v5562 = vmax.f32 %v5530, 0.0
        %v5563 = vmax.f32 %v5531, 0.0
        %v5564 = vmax.f32 %v5532, 0.0
        %v5565 = vmax.f32 %v5533, 0.0
        %v5566 = vmax.f32 %v5534, 0.0
        %v5567 = vmax.f32 %v5535, 0.0
        %v5568 = vmax.f32 %v5536, 0.0
        %v5569 = vmax.f32 %v5537, 0.0
        %v5570 = vmax.f32 %v5538, 0.0
        %v5571 = vmax.f32 %v5539, 0.0
        %v5572 = vmax.f32 %v5540, 0.0
        %v5573 = vmax.f32 %v5541, 0.0
        %v5574 = vmax.f32 %v5542, 0.0
        %v5575 = vmax.f32 %v5543, 0.0
        %v5576 = vmax.f32 %v5544, 0.0
        %v5577 = vmax.f32 %v5545, 0.0
        %v5578 = vmax.f32 %v5546, 0.0
        %v5579 = vmax.f32 %v5547, 0.0
        %v5580 = vmax.f32 %v5548, 0.0
        %v5581 = vmax.f32 %v5549, 0.0
        %v5582 = vmax.f32 %v5550, 0.0
        %v5583 = vmax.f32 %v5551, 0.0
        %v5584 = vmax.f32 %v5552, 0.0
        %v5585 = vmax.f32 %v5553, 0.0
        %v5586 = vmax.f32 %v5554, 0.0
        %v5587 = vadd.f32 %v5555, %v5556
        %v5588 = vadd.f32 %v5587, %v5557
        %v5589 = vadd.f32 %v5588, %v5558
        %v5590 = vadd.f32 %v5589, %v5559
        %v5591 = vadd.f32 %v5590, %v5560
        %v5592 = vadd.f32 %v5591, %v5561
        %v5593 = vadd.f32 %v5592, %v5562
        %v5594 = vadd.f32 %v5593, %v5563
        %v5595 = vadd.f32 %v5594, %v5564
        %v5596 = vadd.f32 %v5595, %v5565
        %v5597 = vadd.f32 %v5596, %v5566
        %v5598 = vadd.f32 %v5597, %v5567
        %v5599 = vadd.f32 %v5598, %v5568
        %v5600 = vadd.f32 %v5599, %v5569
        %v5601 = vadd.f32 %v5600, %v5570
        %v5602 = vadd.f32 %v5601, %v5571
        %v5603 = vadd.f32 %v5602, %v5572
        %v5604 = vadd.f32 %v5603, %v5573
        %v5605 = vadd.f32 %v5604, %v5574
        %v5606 = vadd.f32 %v5605, %v5575
        %v5607 = vadd.f32 %v5606, %v5576
        %v5608 = vadd.f32 %v5607, %v5577
        %v5609 = vadd.f32 %v5608, %v5578
        %v5610 = vadd.f32 %v5609, %v5579
        %v5611 = vadd.f32 %v5610, %v5580
        %v5612 = vadd.f32 %v5611, %v5581
        %v5613 = vadd.f32 %v5612, %v5582
        %v5614 = vadd.f32 %v5613, %v5583
        %v5615 = vadd.f32 %v5614, %v5584
        %v5616 = vadd.f32 %v5615, %v5585
        %v5617 = vadd.f32 %v5616, %v5586
        %v5618 = vrot.slane %v5617, 4
        %v5619 = vadd.f32 %v5617, %v5618
        %v5620 = vrot.slane %v5619, 2
        %v5621 = vadd.f32 %v5619, %v5620
        %v5622 = vrot.slane %v5621, 1
        %v5623 = vadd.f32 %v5621, %v5622
        %v5624 = vrcp.pop 256.0
        %v5625 = vmul.f32 256.0, %v5624
        %v5626 = vsub.f32 1.0, %v5625
        %v5627 = vmul.f32 %v5624, %v5626
        %v5628 = vadd.f32 %v5624, %v5627
        %vm5629 = vweird.f32 %v5624
        %v5630 = vsel %vm5629, %v5624, %v5628
        %v5631 = vmul.f32 %v5623, %v5630
        %v5632 = vld [vmem:[%s7] sm:$0xff]
        %v5633 = vld [vmem:[%s7 + $0x8] sm:$0xff]
        %v5634 = vld [vmem:[%s7 + $0x10] sm:$0xff]
        %v5635 = vld [vmem:[%s7 + $0x18] sm:$0xff]
        %v5636 = vld [vmem:[%s7 + $0x20] sm:$0xff]
        %v5637 = vld [vmem:[%s7 + $0x28] sm:$0xff]
        %v5638 = vld [vmem:[%s7 + $0x30] sm:$0xff]
        %v5639 = vld [vmem:[%s7 + $0x38] sm:$0xff]
        %v5640 = vld [vmem:[%s7 + $0x40] sm:$0xff]
        %v5641 = vld [vmem:[%s7 + $0x48] sm:$0xff]
        %v5642 = vld [vmem:[%s7 + $0x50] sm:$0xff]
        %v5643 = vld [vmem:[%s7 + $0x58] sm:$0xff]
        %v5644 = vld [vmem:[%s7 + $0x60] sm:$0xff]
        %v5645 = vld [vmem:[%s7 + $0x68] sm:$0xff]
        %v5646 = vld [vmem:[%s7 + $0x70] sm:$0xff]
        %v5647 = vld [vmem:[%s7 + $0x78] sm:$0xff]
        %v5648 = vld [vmem:[%s8] sm:$0x1]
        %5649 = vmatpush.msra.mxu0 %v5647
        %5650 = vmatpush.msra.mxu0 %v5646
        %5651 = vmatpush.msra.mxu0 %v5645
        %5652 = vmatpush.msra.mxu0 %v5644
        %5653 = vmatpush.msra.mxu0 %v5643
        %5654 = vmatpush.msra.mxu0 %v5642
        %5655 = vmatpush.msra.mxu0 %v5641
        %5656 = vmatpush.msra.mxu0 %v5640
        %5657 = vmatpush.msra.mxu0 %v5639
        %5658 = vmatpush.msra.mxu0 %v5638
        %5659 = vmatpush.msra.mxu0 %v5637
        %5660 = vmatpush.msra.mxu0 %v5636
        %5661 = vmatpush.msra.mxu0 %v5635
        %5662 = vmatpush.msra.mxu0 %v5634
        %5663 = vmatpush.msra.mxu0 %v5633
        %5664 = vmatpush.msra.mxu0 %v5632
        %5665 = vmatmul.f32.gmra.mxu0 %v5631
        %v5666 = vpop.f32.mrf.mxu0
        %v5667 = vadd.f32 %v5648, %v5666
        %5668 = vdwg.mxu0
        %v5669 = vmax.f32 %v5667, 0.0
        %v5670 = vld [vmem:[#allocation7] sm:$0xff]
        %v5671 = vld [vmem:[%s10] sm:$0x1]
        %vm5672 = vcmask 64512
        %v5674 = vsel %vm5672, %v5669, 0
        %5676 = vmatpush.msra.mxu0 0.0
        %5677 = vmatpush.msra.mxu0 0.0
        %5678 = vmatpush.msra.mxu0 0.0
        %5679 = vmatpush.msra.mxu0 0.0
        %5680 = vmatpush.msra.mxu0 0.0
        %5681 = vmatpush.msra.mxu0 0.0
        %5682 = vmatpush.msra.mxu0 0.0
        %5683 = vmatpush.msra.mxu0 0.0
        %5684 = vmatpush.msra.mxu0 0.0
        %5685 = vmatpush.msra.mxu0 0.0
        %5686 = vmatpush.msra.mxu0 0.0
        %5687 = vmatpush.msra.mxu0 0.0
        %5688 = vmatpush.msra.mxu0 0.0
        %5689 = vmatpush.msra.mxu0 0.0
        %5690 = vmatpush.msra.mxu0 0.0
        %5691 = vmatpush.msra.mxu0 %v5670
        %5692 = vmatmul.f32.gmra.mxu0 %v5674
        %v5693 = vpop.f32.mrf.mxu0
        %v5694 = vadd.f32 %v5671, %v5693
        %5695 = vdwg.mxu0
        %v5696 = vxor.u32 %v5694, 2147483648
        %v5697 = vmul.f32 %v5696, 1.442695
        %v5698 = vpow.pop %v5697
        %v5699 = vadd.f32 %v5698, 1.0
        %v5700 = vrcp.pop %v5699
        %v5701 = vmul.f32 %v5699, %v5700
        %v5702 = vsub.f32 1.0, %v5701
        %v5703 = vmul.f32 %v5700, %v5702
        %v5704 = vadd.f32 %v5700, %v5703
        %vm5705 = vweird.f32 %v5699
        %vm5706 = vweird.f32 %v5700
        %vm5707 = vmor %vm5705, %vm5706
        %v5708 = vsel %vm5707, %v5700, %v5704
        %v5709 = vand.u32 2147483647, %v5699
        %vm5710 = vcmp.eq.f32.partialorder %v5709, 8.507059e+37
        %v5711 = vand.u32 %v5699, 2147483648
        %v5712 = vor.u32 1.1754944e-38, %v5711
        %v5713 = vsel %vm5710, %v5712, %v5708
        %v5714 = vmul.f32 1.0, %v5713
        %v5715 = vperm.slane %v5714, 0
        %v5716 = vmul.f32 %v5555, %v5715
        %v5717 = vmul.f32 %v5556, %v5715
        %v5718 = vmul.f32 %v5557, %v5715
        %v5719 = vmul.f32 %v5558, %v5715
        %v5720 = vmul.f32 %v5559, %v5715
        %v5721 = vmul.f32 %v5560, %v5715
        %v5722 = vmul.f32 %v5561, %v5715
        %v5723 = vmul.f32 %v5562, %v5715
        %v5724 = vmul.f32 %v5563, %v5715
        %v5725 = vmul.f32 %v5564, %v5715
        %v5726 = vmul.f32 %v5565, %v5715
        %v5727 = vmul.f32 %v5566, %v5715
        %v5728 = vmul.f32 %v5567, %v5715
        %v5729 = vmul.f32 %v5568, %v5715
        %v5730 = vmul.f32 %v5569, %v5715
        %v5731 = vmul.f32 %v5570, %v5715
        %v5732 = vmul.f32 %v5571, %v5715
        %v5733 = vmul.f32 %v5572, %v5715
        %v5734 = vmul.f32 %v5573, %v5715
        %v5735 = vmul.f32 %v5574, %v5715
        %v5736 = vmul.f32 %v5575, %v5715
        %v5737 = vmul.f32 %v5576, %v5715
        %v5738 = vmul.f32 %v5577, %v5715
        %v5739 = vmul.f32 %v5578, %v5715
        %v5740 = vmul.f32 %v5579, %v5715
        %v5741 = vmul.f32 %v5580, %v5715
        %v5742 = vmul.f32 %v5581, %v5715
        %v5743 = vmul.f32 %v5582, %v5715
        %v5744 = vmul.f32 %v5583, %v5715
        %v5745 = vmul.f32 %v5584, %v5715
        %v5746 = vmul.f32 %v5585, %v5715
        %v5747 = vmul.f32 %v5586, %v5715
        %v5748 = vpack.c.bf16 %v5717, %v5716
        %v5749 = vpack.c.bf16 %v5719, %v5718
        %v5750 = vpack.c.bf16 %v5721, %v5720
        %v5751 = vpack.c.bf16 %v5723, %v5722
        %v5752 = vpack.c.bf16 %v5725, %v5724
        %v5753 = vpack.c.bf16 %v5727, %v5726
        %v5754 = vpack.c.bf16 %v5729, %v5728
        %v5755 = vpack.c.bf16 %v5731, %v5730
        %v5756 = vpack.c.bf16 %v5733, %v5732
        %v5757 = vpack.c.bf16 %v5735, %v5734
        %v5758 = vpack.c.bf16 %v5737, %v5736
        %v5759 = vpack.c.bf16 %v5739, %v5738
        %v5760 = vpack.c.bf16 %v5741, %v5740
        %v5761 = vpack.c.bf16 %v5743, %v5742
        %v5762 = vpack.c.bf16 %v5745, %v5744
        %v5763 = vpack.c.bf16 %v5747, %v5746
        %v5764 = vld [vmem:[#allocation8] sm:$0xf]
        %v5765 = vld [vmem:[#allocation8 + $0x4] sm:$0xf]
        %v5766 = vld [vmem:[#allocation8 + $0x8] sm:$0xf]
        %v5767 = vld [vmem:[#allocation8 + $0xc] sm:$0xf]
        %v5768 = vld [vmem:[#allocation8 + $0x10] sm:$0xf]
        %v5769 = vld [vmem:[#allocation8 + $0x14] sm:$0xf]
        %v5770 = vld [vmem:[#allocation8 + $0x18] sm:$0xf]
        %v5771 = vld [vmem:[#allocation8 + $0x1c] sm:$0xf]
        %v5772 = vld [vmem:[#allocation8 + $0x20] sm:$0xf]
        %v5773 = vld [vmem:[#allocation8 + $0x24] sm:$0xf]
        %v5774 = vld [vmem:[#allocation8 + $0x28] sm:$0xf]
        %v5775 = vld [vmem:[#allocation8 + $0x2c] sm:$0xf]
        %v5776 = vld [vmem:[#allocation8 + $0x30] sm:$0xf]
        %v5777 = vld [vmem:[#allocation8 + $0x34] sm:$0xf]
        %v5778 = vld [vmem:[#allocation8 + $0x38] sm:$0xf]
        %v5779 = vld [vmem:[#allocation8 + $0x3c] sm:$0xf]
        %v5780 = vld [vmem:[#allocation10] sm:$0xf]
        %v5781 = vld [vmem:[#allocation10 + $0x4] sm:$0xf]
        %v5782 = vld [vmem:[#allocation10 + $0x8] sm:$0xf]
        %v5783 = vld [vmem:[#allocation10 + $0xc] sm:$0xf]
        %v5784 = vld [vmem:[#allocation10 + $0x10] sm:$0xf]
        %v5785 = vld [vmem:[#allocation10 + $0x14] sm:$0xf]
        %v5786 = vld [vmem:[#allocation10 + $0x18] sm:$0xf]
        %v5787 = vld [vmem:[#allocation10 + $0x1c] sm:$0xf]
        %v5796 = vunpack.c.l.b16 %v5780
        %v5797 = vunpack.c.l.b16 %v5781
        %v5798 = vunpack.c.l.b16 %v5782
        %v5799 = vunpack.c.l.b16 %v5783
        %v5800 = vunpack.c.l.b16 %v5784
        %v5801 = vunpack.c.l.b16 %v5785
        %v5802 = vunpack.c.l.b16 %v5786
        %v5803 = vunpack.c.l.b16 %v5787
        %v5804 = vpack.c.b16 %v5797, %v5796
        %v5805 = vpack.c.b16 %v5799, %v5798
        %v5806 = vpack.c.b16 %v5801, %v5800
        %v5807 = vpack.c.b16 %v5803, %v5802
        %5812 = vmatpush.bf16.msra.mxu0 0
        %5813 = vmatpush.bf16.msra.mxu0 0
        %5814 = vmatpush.bf16.msra.mxu0 0
        %5815 = vmatpush.bf16.msra.mxu0 0
        %5816 = vmatpush.bf16.msra.mxu0 %v5807
        %5817 = vmatpush.bf16.msra.mxu0 %v5806
        %5818 = vmatpush.bf16.msra.mxu0 %v5805
        %5819 = vmatpush.bf16.msra.mxu0 %v5804
        %5820 = vmatmul.bf16.gmra.mxu0 %v649
        %v5821 = vpop.f32.mrf.mxu0
        %v5822 = vadd.f32 0.0, %v5821
        %v5823 = vpop.f32.mrf.mxu0
        %v5824 = vadd.f32 0.0, %v5823
        %5825 = vmatmul.bf16.gmra.mxu0 %v652
        %v5826 = vpop.f32.mrf.mxu0
        %v5827 = vadd.f32 0.0, %v5826
        %v5828 = vpop.f32.mrf.mxu0
        %v5829 = vadd.f32 0.0, %v5828
        %5830 = vmatmul.bf16.gmra.mxu0 %v655
        %v5831 = vpop.f32.mrf.mxu0
        %v5832 = vadd.f32 0.0, %v5831
        %v5833 = vpop.f32.mrf.mxu0
        %v5834 = vadd.f32 0.0, %v5833
        %5835 = vmatmul.bf16.gmra.mxu0 %v658
        %v5836 = vpop.f32.mrf.mxu0
        %v5837 = vadd.f32 0.0, %v5836
        %v5838 = vpop.f32.mrf.mxu0
        %v5839 = vadd.f32 0.0, %v5838
        %5840 = vmatmul.bf16.gmra.mxu0 %v661
        %v5841 = vpop.f32.mrf.mxu0
        %v5842 = vadd.f32 0.0, %v5841
        %v5843 = vpop.f32.mrf.mxu0
        %v5844 = vadd.f32 0.0, %v5843
        %5845 = vmatmul.bf16.gmra.mxu0 %v664
        %v5846 = vpop.f32.mrf.mxu0
        %v5847 = vadd.f32 0.0, %v5846
        %v5848 = vpop.f32.mrf.mxu0
        %v5849 = vadd.f32 0.0, %v5848
        %5850 = vmatmul.bf16.gmra.mxu0 %v667
        %v5851 = vpop.f32.mrf.mxu0
        %v5852 = vadd.f32 0.0, %v5851
        %v5853 = vpop.f32.mrf.mxu0
        %v5854 = vadd.f32 0.0, %v5853
        %5855 = vmatmul.bf16.gmra.mxu0 %v670
        %v5856 = vpop.f32.mrf.mxu0
        %v5857 = vadd.f32 0.0, %v5856
        %v5858 = vpop.f32.mrf.mxu0
        %v5859 = vadd.f32 0.0, %v5858
        %5860 = vmatmul.bf16.gmra.mxu0 %v673
        %v5861 = vpop.f32.mrf.mxu0
        %v5862 = vadd.f32 0.0, %v5861
        %v5863 = vpop.f32.mrf.mxu0
        %v5864 = vadd.f32 0.0, %v5863
        %5865 = vmatmul.bf16.gmra.mxu0 %v676
        %v5866 = vpop.f32.mrf.mxu0
        %v5867 = vadd.f32 0.0, %v5866
        %v5868 = vpop.f32.mrf.mxu0
        %v5869 = vadd.f32 0.0, %v5868
        %5870 = vmatmul.bf16.gmra.mxu0 %v679
        %v5871 = vpop.f32.mrf.mxu0
        %v5872 = vadd.f32 0.0, %v5871
        %v5873 = vpop.f32.mrf.mxu0
        %v5874 = vadd.f32 0.0, %v5873
        %5875 = vmatmul.bf16.gmra.mxu0 %v682
        %v5876 = vpop.f32.mrf.mxu0
        %v5877 = vadd.f32 0.0, %v5876
        %v5878 = vpop.f32.mrf.mxu0
        %v5879 = vadd.f32 0.0, %v5878
        %5880 = vmatmul.bf16.gmra.mxu0 %v685
        %v5881 = vpop.f32.mrf.mxu0
        %v5882 = vadd.f32 0.0, %v5881
        %v5883 = vpop.f32.mrf.mxu0
        %v5884 = vadd.f32 0.0, %v5883
        %5885 = vmatmul.bf16.gmra.mxu0 %v688
        %v5886 = vpop.f32.mrf.mxu0
        %v5887 = vadd.f32 0.0, %v5886
        %v5888 = vpop.f32.mrf.mxu0
        %v5889 = vadd.f32 0.0, %v5888
        %5890 = vmatmul.bf16.gmra.mxu0 %v691
        %v5891 = vpop.f32.mrf.mxu0
        %v5892 = vadd.f32 0.0, %v5891
        %v5893 = vpop.f32.mrf.mxu0
        %v5894 = vadd.f32 0.0, %v5893
        %5895 = vmatmul.bf16.gmra.mxu0 %v694
        %v5896 = vpop.f32.mrf.mxu0
        %v5897 = vadd.f32 0.0, %v5896
        %v5898 = vpop.f32.mrf.mxu0
        %v5899 = vadd.f32 0.0, %v5898
        %5900 = vdwg.mxu0
        %v5917 = vunpack.c.l.b16 %v5764
        %v5918 = vunpack.c.l.b16 %v5765
        %v5919 = vunpack.c.l.b16 %v5766
        %v5920 = vunpack.c.l.b16 %v5767
        %v5921 = vunpack.c.l.b16 %v5768
        %v5922 = vunpack.c.l.b16 %v5769
        %v5923 = vunpack.c.l.b16 %v5770
        %v5924 = vunpack.c.l.b16 %v5771
        %v5925 = vunpack.c.l.b16 %v5772
        %v5926 = vunpack.c.l.b16 %v5773
        %v5927 = vunpack.c.l.b16 %v5774
        %v5928 = vunpack.c.l.b16 %v5775
        %v5929 = vunpack.c.l.b16 %v5776
        %v5930 = vunpack.c.l.b16 %v5777
        %v5931 = vunpack.c.l.b16 %v5778
        %v5932 = vunpack.c.l.b16 %v5779
        %v5933 = vpack.c.b16 %v5918, %v5917
        %v5934 = vpack.c.b16 %v5920, %v5919
        %v5935 = vpack.c.b16 %v5922, %v5921
        %v5936 = vpack.c.b16 %v5924, %v5923
        %v5937 = vpack.c.b16 %v5926, %v5925
        %v5938 = vpack.c.b16 %v5928, %v5927
        %v5939 = vpack.c.b16 %v5930, %v5929
        %v5940 = vpack.c.b16 %v5932, %v5931
        %5949 = vmatpush.bf16.msra.mxu0 %v5940
        %5950 = vmatpush.bf16.msra.mxu0 %v5939
        %5951 = vmatpush.bf16.msra.mxu0 %v5938
        %5952 = vmatpush.bf16.msra.mxu0 %v5937
        %5953 = vmatpush.bf16.msra.mxu0 %v5936
        %5954 = vmatpush.bf16.msra.mxu0 %v5935
        %5955 = vmatpush.bf16.msra.mxu0 %v5934
        %5956 = vmatpush.bf16.msra.mxu0 %v5933
        %5957 = vmatmul.bf16.gmra.mxu0 %v5748
        %v5958 = vpop.f32.mrf.mxu0
        %v5959 = vadd.f32 %v5822, %v5958
        %v5960 = vpop.f32.mrf.mxu0
        %v5961 = vadd.f32 %v5824, %v5960
        %5962 = vmatmul.bf16.gmra.mxu0 %v5749
        %v5963 = vpop.f32.mrf.mxu0
        %v5964 = vadd.f32 %v5827, %v5963
        %v5965 = vpop.f32.mrf.mxu0
        %v5966 = vadd.f32 %v5829, %v5965
        %5967 = vmatmul.bf16.gmra.mxu0 %v5750
        %v5968 = vpop.f32.mrf.mxu0
        %v5969 = vadd.f32 %v5832, %v5968
        %v5970 = vpop.f32.mrf.mxu0
        %v5971 = vadd.f32 %v5834, %v5970
        %5972 = vmatmul.bf16.gmra.mxu0 %v5751
        %v5973 = vpop.f32.mrf.mxu0
        %v5974 = vadd.f32 %v5837, %v5973
        %v5975 = vpop.f32.mrf.mxu0
        %v5976 = vadd.f32 %v5839, %v5975
        %5977 = vmatmul.bf16.gmra.mxu0 %v5752
        %v5978 = vpop.f32.mrf.mxu0
        %v5979 = vadd.f32 %v5842, %v5978
        %v5980 = vpop.f32.mrf.mxu0
        %v5981 = vadd.f32 %v5844, %v5980
        %5982 = vmatmul.bf16.gmra.mxu0 %v5753
        %v5983 = vpop.f32.mrf.mxu0
        %v5984 = vadd.f32 %v5847, %v5983
        %v5985 = vpop.f32.mrf.mxu0
        %v5986 = vadd.f32 %v5849, %v5985
        %5987 = vmatmul.bf16.gmra.mxu0 %v5754
        %v5988 = vpop.f32.mrf.mxu0
        %v5989 = vadd.f32 %v5852, %v5988
        %v5990 = vpop.f32.mrf.mxu0
        %v5991 = vadd.f32 %v5854, %v5990
        %5992 = vmatmul.bf16.gmra.mxu0 %v5755
        %v5993 = vpop.f32.mrf.mxu0
        %v5994 = vadd.f32 %v5857, %v5993
        %v5995 = vpop.f32.mrf.mxu0
        %v5996 = vadd.f32 %v5859, %v5995
        %5997 = vmatmul.bf16.gmra.mxu0 %v5756
        %v5998 = vpop.f32.mrf.mxu0
        %v5999 = vadd.f32 %v5862, %v5998
        %v6000 = vpop.f32.mrf.mxu0
        %v6001 = vadd.f32 %v5864, %v6000
        %6002 = vmatmul.bf16.gmra.mxu0 %v5757
        %v6003 = vpop.f32.mrf.mxu0
        %v6004 = vadd.f32 %v5867, %v6003
        %v6005 = vpop.f32.mrf.mxu0
        %v6006 = vadd.f32 %v5869, %v6005
        %6007 = vmatmul.bf16.gmra.mxu0 %v5758
        %v6008 = vpop.f32.mrf.mxu0
        %v6009 = vadd.f32 %v5872, %v6008
        %v6010 = vpop.f32.mrf.mxu0
        %v6011 = vadd.f32 %v5874, %v6010
        %6012 = vmatmul.bf16.gmra.mxu0 %v5759
        %v6013 = vpop.f32.mrf.mxu0
        %v6014 = vadd.f32 %v5877, %v6013
        %v6015 = vpop.f32.mrf.mxu0
        %v6016 = vadd.f32 %v5879, %v6015
        %6017 = vmatmul.bf16.gmra.mxu0 %v5760
        %v6018 = vpop.f32.mrf.mxu0
        %v6019 = vadd.f32 %v5882, %v6018
        %v6020 = vpop.f32.mrf.mxu0
        %v6021 = vadd.f32 %v5884, %v6020
        %6022 = vmatmul.bf16.gmra.mxu0 %v5761
        %v6023 = vpop.f32.mrf.mxu0
        %v6024 = vadd.f32 %v5887, %v6023
        %v6025 = vpop.f32.mrf.mxu0
        %v6026 = vadd.f32 %v5889, %v6025
        %6027 = vmatmul.bf16.gmra.mxu0 %v5762
        %v6028 = vpop.f32.mrf.mxu0
        %v6029 = vadd.f32 %v5892, %v6028
        %v6030 = vpop.f32.mrf.mxu0
        %v6031 = vadd.f32 %v5894, %v6030
        %6032 = vmatmul.bf16.gmra.mxu0 %v5763
        %v6033 = vpop.f32.mrf.mxu0
        %v6034 = vadd.f32 %v5897, %v6033
        %v6035 = vpop.f32.mrf.mxu0
        %v6036 = vadd.f32 %v5899, %v6035
        %6037 = vdwg.mxu0
        %v6038 = vld [vmem:[#allocation11] sm:$0x1]
        %v6040 = vperm.slane %v6038, 0
        %v6042 = vadd.f32 %v5959, %v6040
        %v6043 = vadd.f32 %v5961, %v6040
        %v6044 = vadd.f32 %v5964, %v6040
        %v6045 = vadd.f32 %v5966, %v6040
        %v6046 = vadd.f32 %v5969, %v6040
        %v6047 = vadd.f32 %v5971, %v6040
        %v6048 = vadd.f32 %v5974, %v6040
        %v6049 = vadd.f32 %v5976, %v6040
        %v6050 = vadd.f32 %v5979, %v6040
        %v6051 = vadd.f32 %v5981, %v6040
        %v6052 = vadd.f32 %v5984, %v6040
        %v6053 = vadd.f32 %v5986, %v6040
        %v6054 = vadd.f32 %v5989, %v6040
        %v6055 = vadd.f32 %v5991, %v6040
        %v6056 = vadd.f32 %v5994, %v6040
        %v6057 = vadd.f32 %v5996, %v6040
        %v6058 = vadd.f32 %v5999, %v6040
        %v6059 = vadd.f32 %v6001, %v6040
        %v6060 = vadd.f32 %v6004, %v6040
        %v6061 = vadd.f32 %v6006, %v6040
        %v6062 = vadd.f32 %v6009, %v6040
        %v6063 = vadd.f32 %v6011, %v6040
        %v6064 = vadd.f32 %v6014, %v6040
        %v6065 = vadd.f32 %v6016, %v6040
        %v6066 = vadd.f32 %v6019, %v6040
        %v6067 = vadd.f32 %v6021, %v6040
        %v6068 = vadd.f32 %v6024, %v6040
        %v6069 = vadd.f32 %v6026, %v6040
        %v6070 = vadd.f32 %v6029, %v6040
        %v6071 = vadd.f32 %v6031, %v6040
        %v6072 = vadd.f32 %v6034, %v6040
        %v6073 = vadd.f32 %v6036, %v6040
        %v6074 = vmax.f32 %v6042, 0.0
        %v6075 = vmax.f32 %v6043, 0.0
        %v6076 = vmax.f32 %v6044, 0.0
        %v6077 = vmax.f32 %v6045, 0.0
        %v6078 = vmax.f32 %v6046, 0.0
        %v6079 = vmax.f32 %v6047, 0.0
        %v6080 = vmax.f32 %v6048, 0.0
        %v6081 = vmax.f32 %v6049, 0.0
        %v6082 = vmax.f32 %v6050, 0.0
        %v6083 = vmax.f32 %v6051, 0.0
        %v6084 = vmax.f32 %v6052, 0.0
        %v6085 = vmax.f32 %v6053, 0.0
        %v6086 = vmax.f32 %v6054, 0.0
        %v6087 = vmax.f32 %v6055, 0.0
        %v6088 = vmax.f32 %v6056, 0.0
        %v6089 = vmax.f32 %v6057, 0.0
        %v6090 = vmax.f32 %v6058, 0.0
        %v6091 = vmax.f32 %v6059, 0.0
        %v6092 = vmax.f32 %v6060, 0.0
        %v6093 = vmax.f32 %v6061, 0.0
        %v6094 = vmax.f32 %v6062, 0.0
        %v6095 = vmax.f32 %v6063, 0.0
        %v6096 = vmax.f32 %v6064, 0.0
        %v6097 = vmax.f32 %v6065, 0.0
        %v6098 = vmax.f32 %v6066, 0.0
        %v6099 = vmax.f32 %v6067, 0.0
        %v6100 = vmax.f32 %v6068, 0.0
        %v6101 = vmax.f32 %v6069, 0.0
        %v6102 = vmax.f32 %v6070, 0.0
        %v6103 = vmax.f32 %v6071, 0.0
        %v6104 = vmax.f32 %v6072, 0.0
        %v6105 = vmax.f32 %v6073, 0.0
        %6106 = vst [vmem:[%s556] sm:$0xff] %v6074
        %6107 = vst [vmem:[%s556 + $0x8] sm:$0xff] %v6075
        %6108 = vst [vmem:[%s556 + $0x10] sm:$0xff] %v6076
        %6109 = vst [vmem:[%s556 + $0x18] sm:$0xff] %v6077
        %6110 = vst [vmem:[%s556 + $0x20] sm:$0xff] %v6078
        %6111 = vst [vmem:[%s556 + $0x28] sm:$0xff] %v6079
        %6112 = vst [vmem:[%s556 + $0x30] sm:$0xff] %v6080
        %6113 = vst [vmem:[%s556 + $0x38] sm:$0xff] %v6081
        %6114 = vst [vmem:[%s556 + $0x40] sm:$0xff] %v6082
        %6115 = vst [vmem:[%s556 + $0x48] sm:$0xff] %v6083
        %6116 = vst [vmem:[%s556 + $0x50] sm:$0xff] %v6084
        %6117 = vst [vmem:[%s556 + $0x58] sm:$0xff] %v6085
        %6118 = vst [vmem:[%s556 + $0x60] sm:$0xff] %v6086
        %6119 = vst [vmem:[%s556 + $0x68] sm:$0xff] %v6087
        %6120 = vst [vmem:[%s556 + $0x70] sm:$0xff] %v6088
        %6121 = vst [vmem:[%s556 + $0x78] sm:$0xff] %v6089
        %6122 = vst [vmem:[%s556 + $0x80] sm:$0xff] %v6090
        %6123 = vst [vmem:[%s556 + $0x88] sm:$0xff] %v6091
        %6124 = vst [vmem:[%s556 + $0x90] sm:$0xff] %v6092
        %6125 = vst [vmem:[%s556 + $0x98] sm:$0xff] %v6093
        %6126 = vst [vmem:[%s556 + $0xa0] sm:$0xff] %v6094
        %6127 = vst [vmem:[%s556 + $0xa8] sm:$0xff] %v6095
        %6128 = vst [vmem:[%s556 + $0xb0] sm:$0xff] %v6096
        %6129 = vst [vmem:[%s556 + $0xb8] sm:$0xff] %v6097
        %6130 = vst [vmem:[%s556 + $0xc0] sm:$0xff] %v6098
        %6131 = vst [vmem:[%s556 + $0xc8] sm:$0xff] %v6099
        %6132 = vst [vmem:[%s556 + $0xd0] sm:$0xff] %v6100
        %6133 = vst [vmem:[%s556 + $0xd8] sm:$0xff] %v6101
        %6134 = vst [vmem:[%s556 + $0xe0] sm:$0xff] %v6102
        %6135 = vst [vmem:[%s556 + $0xe8] sm:$0xff] %v6103
        %6136 = vst [vmem:[%s556 + $0xf0] sm:$0xff] %v6104
        %6137 = vst [vmem:[%s556 + $0xf8] sm:$0xff] %v6105
        %s6138 = sand.u32 %s339, 1
        %s6139 = scalar_lea.sflag [#allocation4], %s6138
        %s6140 = sand.u32 %s339, 1
        %s6141 = smul.addr %s6140, 256
        %s6142 = scalar_lea.vmem [#allocation13], %s6141
        // Predicated region
        $region101: #{osblock_forward.1} parent=75 // pred_check
          %p6143 = pneg %p349
        $region102: #{osblock_forward.1} parent=75 // pred_check_branch
          %6145 = sbr.rel (%p6143) target = $region104
        $region103: #{osblock_forward.1} parent=75 // pred_region
          %6147 = vsyncadd %s6139, 0
          %s6148 = smul.addr %s32, 32
          %s6149 = smul.addr %s6148, 8
          %s6150 = scalar_lea.hbm %s14, %s6149
          %s6151 = sshll.u32 %s6142, 4
          %s6152 = int_to_ptr.vmem [resolvable:$true] %s6151
          %s6153 = sshll.u32 %s6150, 4
          %s6154 = int_to_ptr.hbm [resolvable:$true] %s6153
          %6159 = dma.vmem_to_hbm [thread:$0]  %s6152, 4096, %s6154, %s6139, 128, 128, 8
        $region104: #{osblock_forward.1} parent=75 // pred_fallthru
          _
      $region76: #{osblock_forward.1} parent=5 // pred_fallthru
        _
      %p6160 = scmp.le.s32.totalorder 2, %s27
      // Predicated region
      $region105: #{osblock_forward.1} parent=5 // pred_check
        %p6161 = pneg %p6160
      $region106: #{osblock_forward.1} parent=5 // pred_check_branch
        %6163 = sbr.rel (%p6161) target = $region108
      $region107: #{osblock_forward.1} parent=5 // pred_region
        %s6164 = ssub.s32 %s27, 2
        // Predicated region
        $region109: #{osblock_forward.1} parent=107 // pred_check
          %p6165 = pneg %p355
        $region110: #{osblock_forward.1} parent=107 // pred_check_branch
          %6167 = sbr.rel (%p6165) target = $region112
        $region111: #{osblock_forward.1} parent=107 // pred_region
          %s6168 = sand.u32 %s340, 1
          %s6169 = scalar_lea.sflag [#allocation4], %s6168
          %s6170 = sand.u32 %s340, 1
          %s6171 = smul.addr %s6170, 256
          %s6172 = scalar_lea.vmem [#allocation13], %s6171
          %6174 = dma.done %s6169, 4096
        $region112: #{osblock_forward.1} parent=107 // pred_fallthru
          _
      $region108: #{osblock_forward.1} parent=5 // pred_fallthru
        _
    $region6: #{osblock_forward.1} parent=1 // loop_footer
      %s31 = sadd.s32 1, %s27
    $region7: #{osblock_forward.1} parent=1 // loop_footer_branch
      %26 = sbr.rel target = $region3
    $region8: #{osblock_forward.1} parent=1 // loop_exit
      _
    %6175 = vsyncpa [#allocation3], 1
    %s6176 = scalar_lea.sflag [#allocation3], 1
    %6177 = vsyncpa %s6176, 1
    %6178 = vsyncpa [#allocation6], 1
    %6179 = vsyncpa [#allocation9], 1
    %6180 = vsyncpa [#allocation12], 1
    %6181 = vsyncpa [#allocation4], 1
    %s6182 = scalar_lea.sflag [#allocation4], 1
    %6183 = vsyncpa %s6182, 1

</llo_original>
